<compile_context>
chip_gen: v7x
topology: tpu7x:2x2x1
jax: 0.10.0
libtpu: 0.0.40
codegen_flags: <defaults>
</compile_context>

<pallas_src>
import functools
import math

import numpy as np
import jax
import jax.numpy as jnp
from jax.experimental import pallas as pl
from jax.experimental.pallas import tpu as pltpu

_BF16 = jnp.bfloat16


# ---------------------------------------------------------------------------
# In-kernel helpers (traced inside pallas kernels)
# ---------------------------------------------------------------------------

def _dot(a, w):
    """bf16 x bf16 matmul with f32 accumulation (MXU-native)."""
    return jnp.dot(a.astype(_BF16), w.astype(_BF16),
                   preferred_element_type=jnp.float32)


def _ln(x, g, b, eps=1e-5):
    mean = jnp.mean(x, axis=-1, keepdims=True)
    xc = x - mean
    var = jnp.mean(xc * xc, axis=-1, keepdims=True)
    return xc * jax.lax.rsqrt(var + eps) * g + b


def _mha(q, k, v, wo, bo, n_heads, neg):
    """Multi-head attention for one (L, D) query slab.

    q: (L, D) f32, k/v: (S, D) f32, wo: (D, D) bf16 (rows = concatenated
    heads), bo: (1, D) f32, neg: optional (L, S) additive causal mask.
    Per-head score / PV matmuls are unrolled; the head outputs are
    concatenated and projected with a single (L, D) @ (D, D) matmul.
    """
    L, D = q.shape
    Dh = D // n_heads
    scale = 1.0 / math.sqrt(Dh)
    heads = []
    for h in range(n_heads):
        sl = slice(h * Dh, (h + 1) * Dh)
        qh = q[:, sl].astype(_BF16)
        kh = k[:, sl].astype(_BF16)
        vh = v[:, sl].astype(_BF16)
        s = jax.lax.dot_general(qh, kh, (((1,), (1,)), ((), ())),
                                preferred_element_type=jnp.float32) * scale
        if neg is not None:
            s = s + neg
        m = jnp.max(s, axis=-1, keepdims=True)
        p = jnp.exp(s - m)
        p = p * pl.reciprocal(jnp.sum(p, axis=-1, keepdims=True), approx=True)
        heads.append(jnp.dot(p.astype(_BF16), vh,
                             preferred_element_type=jnp.float32))
    ctx = jnp.concatenate(heads, axis=-1)          # (L, D), head-major columns
    return _dot(ctx, wo) + bo                      # single merged projection


# ---------------------------------------------------------------------------
# Pallas kernels
# ---------------------------------------------------------------------------

def _cnn_kernel(p1_ref, w1_ref, b1_ref, w2_ref, b2_ref, wp_ref, bp_ref,
                o_ref, *, ksize2):
    """conv1(+relu) -> conv2(+relu) -> proj(+relu) for one batch element."""
    L2 = o_ref.shape[1]
    h1 = jnp.maximum(_dot(p1_ref[0], w1_ref[...]) + b1_ref[...], 0.0)  # (L1, d)
    # conv2 (kernel=3, stride=1) as ONE K=3*d matmul on an in-kernel im2col
    # operand; cnn2_w is stored flattened (3*d, d), tap-major rows.
    taps = jnp.concatenate([h1[kk:kk + L2, :] for kk in range(ksize2)], axis=-1)
    h2 = jnp.maximum(_dot(taps, w2_ref[...]) + b2_ref[...], 0.0)       # (L2, d)
    o_ref[0] = jnp.maximum(_dot(h2, wp_ref[...]) + bp_ref[...], 0.0)   # (L2, ei)


def _encoder_stack_kernel(p_tok_ref, tokw_ref, pe_ref,
                          wqkv_ref, bqkv_ref, wo_ref, bo_ref,
                          ln1g_ref, ln1b_ref,
                          w1_ref, b1_ref, w2_ref, b2_ref,
                          ln2g_ref, ln2b_ref,
                          ng_ref, nb_ref,
                          o_ref, x_scr, *, n_heads):
    """Embedding + all encoder layers + final LayerNorm.

    grid = (B, e_layers): activation lives in VMEM scratch across the layer
    axis ("arbitrary"); output is written once at the last layer.
    """
    layer = pl.program_id(1)

    @pl.when(layer == 0)
    def _():
        # DataEmbedding with x_mark=None: circular token conv (bias-free) + PE.
        x_scr[...] = _dot(p_tok_ref[0], tokw_ref[...]) + pe_ref[...]

    x = x_scr[...]
    D = x.shape[-1]
    qkv = _dot(x, wqkv_ref[0]) + bqkv_ref[0]            # fused QKV projection
    q, k, v = qkv[:, :D], qkv[:, D:2 * D], qkv[:, 2 * D:]
    y = _mha(q, k, v, wo_ref[0], bo_ref[0], n_heads, None)
    x1 = _ln(x + y, ln1g_ref[0], ln1b_ref[0])
    hdn = jnp.maximum(_dot(x1, w1_ref[0]) + b1_ref[0], 0.0)
    x2 = _ln(x1 + _dot(hdn, w2_ref[0]) + b2_ref[0], ln2g_ref[0], ln2b_ref[0])
    x_scr[...] = x2

    @pl.when(layer == pl.num_programs(1) - 1)
    def _():
        o_ref[0] = _ln(x2, ng_ref[...], nb_ref[...])    # encoder final norm


def _decoder_stack_kernel(p_dec_ref, mark_ref, tokw_ref, tempw_ref, pe_ref,
                          cross_ref,
                          swqkv_ref, sbqkv_ref, swo_ref, sbo_ref,
                          ln1g_ref, ln1b_ref,
                          cwq_ref, cbq_ref, cwkv_ref, cbkv_ref, cwo_ref, cbo_ref,
                          ln2g_ref, ln2b_ref,
                          w1_ref, b1_ref, w2_ref, b2_ref,
                          ln3g_ref, ln3b_ref,
                          ng_ref, nb_ref, pw_ref, pb_ref,
                          o_ref, x_scr, *, n_heads):
    """Embedding + all decoder layers + final norm + output projection."""
    layer = pl.program_id(1)

    @pl.when(layer == 0)
    def _():
        # DataEmbedding: token conv + timeF linear (both bias-free) + PE.
        x_scr[...] = (_dot(p_dec_ref[0], tokw_ref[...]) +
                      _dot(mark_ref[0], tempw_ref[...]) + pe_ref[...])

    x = x_scr[...]
    L, D = x.shape
    # Causal mask built once per grid step (not per batch element).
    row = jax.lax.broadcasted_iota(jnp.int32, (L, L), 0)
    col = jax.lax.broadcasted_iota(jnp.int32, (L, L), 1)
    neg = jnp.where(col > row, jnp.float32(-1e30), jnp.float32(0.0))

    # causal self-attention (fused QKV)
    qkv = _dot(x, swqkv_ref[0]) + sbqkv_ref[0]
    q, k, v = qkv[:, :D], qkv[:, D:2 * D], qkv[:, 2 * D:]
    y = _mha(q, k, v, swo_ref[0], sbo_ref[0], n_heads, neg)
    x1 = _ln(x + y, ln1g_ref[0], ln1b_ref[0])

    # cross attention: Q from decoder stream, fused KV from encoder output
    cr = cross_ref[0]
    q2 = _dot(x1, cwq_ref[0]) + cbq_ref[0]
    kv = _dot(cr, cwkv_ref[0]) + cbkv_ref[0]
    y2 = _mha(q2, kv[:, :D], kv[:, D:], cwo_ref[0], cbo_ref[0], n_heads, None)
    x2 = _ln(x1 + y2, ln2g_ref[0], ln2b_ref[0])

    # FFN + residual + LN
    hdn = jnp.maximum(_dot(x2, w1_ref[0]) + b1_ref[0], 0.0)
    x3 = _ln(x2 + _dot(hdn, w2_ref[0]) + b2_ref[0], ln3g_ref[0], ln3b_ref[0])
    x_scr[...] = x3

    @pl.when(layer == pl.num_programs(1) - 1)
    def _():
        # decoder final norm + output projection, fused
        o_ref[0] = _dot(_ln(x3, ng_ref[...], nb_ref[...]), pw_ref[...]) + pb_ref[...]


# ---------------------------------------------------------------------------
# BlockSpec helpers
# ---------------------------------------------------------------------------

def _batched(shape):
    """(B, L, C) activation: one batch element per step of grid axis 0."""
    nd = len(shape)
    return pl.BlockSpec((1,) + tuple(shape[1:]),
                        lambda b, *_: (b,) + (0,) * (nd - 1))


def _resident(shape):
    """Weight/constant: same block for every grid step (stays in VMEM)."""
    nd = len(shape)
    return pl.BlockSpec(tuple(shape), lambda *_: (0,) * nd)


def _stacked(shape):
    """(n_layers, ...) per-layer weight: block chosen by layer grid axis 1."""
    nd = len(shape)
    return pl.BlockSpec((1,) + tuple(shape[1:]),
                        lambda b, l: (l,) + (0,) * (nd - 1))


# ---------------------------------------------------------------------------
# XLA-side glue (tiny static gathers / pads on kernel *inputs* only)
# ---------------------------------------------------------------------------

def _circular_pad1(x):
    return jnp.concatenate([x[:, -1:, :], x, x[:, :1, :]], axis=1)


def _im2col(x, k, stride=1):
    """x: (B, L, C) -> (B, Lout, k*C), tap-major / channel-minor patches."""
    B, L, C = x.shape
    lout = (L - k) // stride + 1
    idx = np.arange(lout)[:, None] * stride + np.arange(k)[None, :]
    return x[:, idx, :].reshape(B, lout, k * C)


def positional_embedding(L, d_model):
    position = np.arange(L, dtype=np.float32)[:, None]
    div_term = np.exp(np.arange(0, d_model, 2, dtype=np.float32)
                      * -(np.log(10000.0) / d_model))
    pe = np.zeros((L, d_model), np.float32)
    pe[:, 0::2] = np.sin(position * div_term)
    pe[:, 1::2] = np.cos(position * div_term)
    return jnp.asarray(pe)


# ---------------------------------------------------------------------------
# Full model forward (mirrors Model.forecast / Model.forward, eval mode)
# ---------------------------------------------------------------------------

def model_forward(params, x_enc, x_mark_enc, x_dec, x_mark_dec, cfg):
    B, L_enc, _ = x_enc.shape
    d = cfg["d_model"]
    nh = cfg["n_heads"]

    # --- CNN front-end on the first 80% of the encoder sequence ------------
    split = int(0.8 * L_enc)
    x_cnn = x_enc[:, :split, :]
    x_raw = x_enc[:, split:, :]
    K1, S1, K2 = 10, 2, 3
    L1 = (split - K1) // S1 + 1
    L2 = L1 - K2 + 1
    p1 = _im2col(x_cnn, K1, S1)                          # (B, L1, K1*enc_in)
    cnn_out = pl.pallas_call(
        functools.partial(_cnn_kernel, ksize2=K2),
        out_shape=jax.ShapeDtypeStruct((B, L2, cfg["enc_in"]), jnp.float32),
        grid=(B,),
        in_specs=[_batched(p1.shape),
                  _resident(params["cnn1_w"].shape),
                  _resident(params["cnn1_b"].shape),
                  _resident(params["cnn2_w"].shape),
                  _resident(params["cnn2_b"].shape),
                  _resident(params["cnn_proj_w"].shape),
                  _resident(params["cnn_proj_b"].shape)],
        out_specs=_batched((B, L2, cfg["enc_in"])),
        compiler_params=pltpu.CompilerParams(
            dimension_semantics=("parallel",)),
    )(p1, params["cnn1_w"], params["cnn1_b"], params["cnn2_w"],
      params["cnn2_b"], params["cnn_proj_w"], params["cnn_proj_b"])

    x_combined = jnp.concatenate([cnn_out, x_raw], axis=1)
    L_comb = x_combined.shape[1]

    # TODO(synk): mark_enc_interpolation (F.interpolate) in the reference
    # forward is dead code — its result is never consumed — so it is skipped.

    # --- Encoder: embedding + e_layers + final norm, ONE pallas_call -------
    p_tok = _im2col(_circular_pad1(x_combined), 3, 1)    # (B, L_comb, 3*enc_in)
    pe_enc = positional_embedding(L_comb, d)
    e = params["enc"]
    enc = pl.pallas_call(
        functools.partial(_encoder_stack_kernel, n_heads=nh),
        out_shape=jax.ShapeDtypeStruct((B, L_comb, d), jnp.float32),
        grid=(B, cfg["e_layers"]),
        in_specs=[_batched(p_tok.shape),
                  _resident(params["enc_tok_w"].shape),
                  _resident(pe_enc.shape),
                  _stacked(e["wqkv"].shape), _stacked(e["bqkv"].shape),
                  _stacked(e["wo"].shape), _stacked(e["bo"].shape),
                  _stacked(e["ln1_g"].shape), _stacked(e["ln1_b"].shape),
                  _stacked(e["w1"].shape), _stacked(e["b1"].shape),
                  _stacked(e["w2"].shape), _stacked(e["b2"].shape),
                  _stacked(e["ln2_g"].shape), _stacked(e["ln2_b"].shape),
                  _resident(params["enc_norm_g"].shape),
                  _resident(params["enc_norm_b"].shape)],
        out_specs=_batched((B, L_comb, d)),
        scratch_shapes=[pltpu.VMEM((L_comb, d), jnp.float32)],
        compiler_params=pltpu.CompilerParams(
            dimension_semantics=("parallel", "arbitrary")),
    )(p_tok, params["enc_tok_w"], pe_enc,
      e["wqkv"], e["bqkv"], e["wo"], e["bo"], e["ln1_g"], e["ln1_b"],
      e["w1"], e["b1"], e["w2"], e["b2"], e["ln2_g"], e["ln2_b"],
      params["enc_norm_g"], params["enc_norm_b"])

    # --- Decoder: embedding + d_layers + final norm + projection, ONE call -
    L_dec = x_dec.shape[1]
    p_dec = _im2col(_circular_pad1(x_dec), 3, 1)         # (B, L_dec, 3*dec_in)
    pe_dec = positional_embedding(L_dec, d)
    dd = params["dec"]
    out = pl.pallas_call(
        functools.partial(_decoder_stack_kernel, n_heads=nh),
        out_shape=jax.ShapeDtypeStruct((B, L_dec, cfg["c_out"]), jnp.float32),
        grid=(B, cfg["d_layers"]),
        in_specs=[_batched(p_dec.shape), _batched(x_mark_dec.shape),
                  _resident(params["dec_tok_w"].shape),
                  _resident(params["dec_temp_w"].shape),
                  _resident(pe_dec.shape),
                  _batched(enc.shape),
                  _stacked(dd["s_wqkv"].shape), _stacked(dd["s_bqkv"].shape),
                  _stacked(dd["s_wo"].shape), _stacked(dd["s_bo"].shape),
                  _stacked(dd["ln1_g"].shape), _stacked(dd["ln1_b"].shape),
                  _stacked(dd["c_wq"].shape), _stacked(dd["c_bq"].shape),
                  _stacked(dd["c_wkv"].shape), _stacked(dd["c_bkv"].shape),
                  _stacked(dd["c_wo"].shape), _stacked(dd["c_bo"].shape),
                  _stacked(dd["ln2_g"].shape), _stacked(dd["ln2_b"].shape),
                  _stacked(dd["w1"].shape), _stacked(dd["b1"].shape),
                  _stacked(dd["w2"].shape), _stacked(dd["b2"].shape),
                  _stacked(dd["ln3_g"].shape), _stacked(dd["ln3_b"].shape),
                  _resident(params["dec_norm_g"].shape),
                  _resident(params["dec_norm_b"].shape),
                  _resident(params["proj_w"].shape),
                  _resident(params["proj_b"].shape)],
        out_specs=_batched((B, L_dec, cfg["c_out"])),
        scratch_shapes=[pltpu.VMEM((L_dec, d), jnp.float32)],
        compiler_params=pltpu.CompilerParams(
            dimension_semantics=("parallel", "arbitrary")),
    )(p_dec, x_mark_dec, params["dec_tok_w"], params["dec_temp_w"], pe_dec,
      enc,
      dd["s_wqkv"], dd["s_bqkv"], dd["s_wo"], dd["s_bo"],
      dd["ln1_g"], dd["ln1_b"],
      dd["c_wq"], dd["c_bq"], dd["c_wkv"], dd["c_bkv"], dd["c_wo"], dd["c_bo"],
      dd["ln2_g"], dd["ln2_b"],
      dd["w1"], dd["b1"], dd["w2"], dd["b2"], dd["ln3_g"], dd["ln3_b"],
      params["dec_norm_g"], params["dec_norm_b"],
      params["proj_w"], params["proj_b"])

    return out[:, -cfg["pred_len"]:, :]


# ---------------------------------------------------------------------------
# Deterministic parameter init (synthetic weights, kernel-ready fused layout)
# ---------------------------------------------------------------------------

def init_params(key, cfg):
    d, dff = cfg["d_model"], cfg["d_ff"]
    ei, di, co, mark = cfg["enc_in"], cfg["dec_in"], cfg["c_out"], cfg["mark_dim"]
    nE, nD = cfg["e_layers"], cfg["d_layers"]
    keys = iter(jax.random.split(key, 512))

    def w(shape, scale=0.1):           # matmul weights: stored once in bf16
        return (scale * jax.random.normal(next(keys), shape, jnp.float32)
                ).astype(jnp.bfloat16)

    def b(shape, scale=0.1):           # biases: f32 (added after f32 accumulation)
        return scale * jax.random.normal(next(keys), shape, jnp.float32)

    def ones(shape):
        return jnp.ones(shape, jnp.float32)

    def zeros(shape):
        return jnp.zeros(shape, jnp.float32)

    enc = {
        "wqkv": w((nE, d, 3 * d)), "bqkv": b((nE, 1, 3 * d)),
        "wo": w((nE, d, d)), "bo": b((nE, 1, d)),          # wo rows: head-major
        "ln1_g": ones((nE, 1, d)), "ln1_b": zeros((nE, 1, d)),
        "w1": w((nE, d, dff)), "b1": b((nE, 1, dff)),
        "w2": w((nE, dff, d)), "b2": b((nE, 1, d)),
        "ln2_g": ones((nE, 1, d)), "ln2_b": zeros((nE, 1, d)),
    }
    dec = {
        "s_wqkv": w((nD, d, 3 * d)), "s_bqkv": b((nD, 1, 3 * d)),
        "s_wo": w((nD, d, d)), "s_bo": b((nD, 1, d)),
        "ln1_g": ones((nD, 1, d)), "ln1_b": zeros((nD, 1, d)),
        "c_wq": w((nD, d, d)), "c_bq": b((nD, 1, d)),
        "c_wkv": w((nD, d, 2 * d)), "c_bkv": b((nD, 1, 2 * d)),
        "c_wo": w((nD, d, d)), "c_bo": b((nD, 1, d)),
        "ln2_g": ones((nD, 1, d)), "ln2_b": zeros((nD, 1, d)),
        "w1": w((nD, d, dff)), "b1": b((nD, 1, dff)),
        "w2": w((nD, dff, d)), "b2": b((nD, 1, d)),
        "ln3_g": ones((nD, 1, d)), "ln3_b": zeros((nD, 1, d)),
    }
    return {
        "cnn1_w": w((10 * ei, d)), "cnn1_b": b((1, d)),
        "cnn2_w": w((3 * d, d)), "cnn2_b": b((1, d)),      # cnn2 flattened (3*d, d)
        "cnn_proj_w": w((d, ei)), "cnn_proj_b": b((1, ei)),
        "enc_tok_w": w((3 * ei, d)),                       # TokenEmbedding, bias=False
        "dec_tok_w": w((3 * di, d)),
        "dec_temp_w": w((mark, d)),                        # TimeFeatureEmbedding, bias=False
        "enc": enc,
        "enc_norm_g": ones((1, d)), "enc_norm_b": zeros((1, d)),
        "dec": dec,
        "dec_norm_g": ones((1, d)), "dec_norm_b": zeros((1, d)),
        "proj_w": w((d, co)), "proj_b": b((1, co)),
    }


# ---------------------------------------------------------------------------

if __name__ == "__main__":
    cfg = dict(enc_in=4, dec_in=4, c_out=4, d_model=32, n_heads=4, d_ff=64,
               e_layers=2, d_layers=1, pred_len=4, mark_dim=4)
    B, seq_len, label_len = 2, 32, 8
    L_dec = label_len + cfg["pred_len"]

    key = jax.random.PRNGKey(0)
    kp, k1, k2, k3, k4 = jax.random.split(key, 5)
    params = init_params(kp, cfg)

    x_enc = jax.random.normal(k1, (B, seq_len, cfg["enc_in"]), jnp.float32)
    x_mark_enc = jax.random.normal(k2, (B, seq_len, cfg["mark_dim"]), jnp.float32)
    x_dec = jax.random.normal(k3, (B, L_dec, cfg["dec_in"]), jnp.float32)
    x_mark_dec = jax.random.normal(k4, (B, L_dec, cfg["mark_dim"]), jnp.float32)

    fwd = jax.jit(functools.partial(model_forward, cfg=cfg))
    out = fwd(params, x_enc, x_mark_enc, x_dec, x_mark_dec)
    out = jax.block_until_ready(out)
    assert out.shape == (B, cfg["pred_len"], cfg["c_out"]), out.shape
    assert bool(jnp.all(jnp.isfinite(out)))
    print("KERNEL_OK")
</pallas_src>

<mosaic_0001>
module attributes {stable_mosaic.version = 11 : i64} {
  func.func @_cnn_kernel(%arg0: i32, %arg1: memref<1x8x40xf32, #tpu.memory_space<vmem>>, %arg2: memref<40x32xbf16, #tpu.memory_space<vmem>>, %arg3: memref<1x32xf32, #tpu.memory_space<vmem>>, %arg4: memref<96x32xbf16, #tpu.memory_space<vmem>>, %arg5: memref<1x32xf32, #tpu.memory_space<vmem>>, %arg6: memref<32x4xbf16, #tpu.memory_space<vmem>>, %arg7: memref<1x4xf32, #tpu.memory_space<vmem>>, %arg8: memref<1x6x4xf32, #tpu.memory_space<vmem>>) attributes {dimension_semantics = [#tpu.dimension_semantics<parallel>], iteration_bounds = array<i64: 2>, scalar_prefetch = 0 : i64, scratch_operands = 0 : i64, tpu.core_type = #tpu.core_type<tc>, window_params = [{transform_indices = @transform_0, window_bounds = array<i64: 1, 8, 40>}, {pipeline_mode = #tpu.pipeline_mode<synchronous>, transform_indices = @transform_1, window_bounds = array<i64: 40, 32>}, {pipeline_mode = #tpu.pipeline_mode<synchronous>, transform_indices = @transform_2, window_bounds = array<i64: 1, 32>}, {pipeline_mode = #tpu.pipeline_mode<synchronous>, transform_indices = @transform_3, window_bounds = array<i64: 96, 32>}, {pipeline_mode = #tpu.pipeline_mode<synchronous>, transform_indices = @transform_4, window_bounds = array<i64: 1, 32>}, {pipeline_mode = #tpu.pipeline_mode<synchronous>, transform_indices = @transform_5, window_bounds = array<i64: 32, 4>}, {pipeline_mode = #tpu.pipeline_mode<synchronous>, transform_indices = @transform_6, window_bounds = array<i64: 1, 4>}, {transform_indices = @transform_7, window_bounds = array<i64: 1, 6, 4>}]} {
    %c0 = arith.constant 0 : index
    %c0_0 = arith.constant 0 : index
    %c0_1 = arith.constant 0 : index
    %0 = vector.load %arg1[%c0, %c0_0, %c0_1] : memref<1x8x40xf32, #tpu.memory_space<vmem>>, vector<1x8x40xf32>
    %1 = vector.shape_cast %0 : vector<1x8x40xf32> to vector<8x40xf32>
    %c0_2 = arith.constant 0 : index
    %c0_3 = arith.constant 0 : index
    %2 = vector.load %arg2[%c0_2, %c0_3] : memref<40x32xbf16, #tpu.memory_space<vmem>>, vector<40x32xbf16>
    %3 = arith.truncf %1 : vector<8x40xf32> to vector<8x40xbf16>
    %cst = arith.constant dense<0.000000e+00> : vector<8x32xf32>
    %4 = tpu.matmul %3, %2, %cst {dimension_numbers = #tpu.dot_dimension_numbers<[1], [0], [0], [1], [0, 0, 1, 1], [], []>} : vector<8x40xbf16>, vector<40x32xbf16>, vector<8x32xf32> -> vector<8x32xf32>
    %c0_4 = arith.constant 0 : index
    %c0_5 = arith.constant 0 : index
    %5 = vector.load %arg3[%c0_4, %c0_5] : memref<1x32xf32, #tpu.memory_space<vmem>>, vector<1x32xf32>
    %6 = vector.broadcast %5 : vector<1x32xf32> to vector<8x32xf32>
    %7 = arith.addf %4, %6 : vector<8x32xf32>
    %cst_6 = arith.constant 0.000000e+00 : f32
    %8 = vector.broadcast %cst_6 : f32 to vector<8x32xf32>
    %9 = arith.maximumf %7, %8 : vector<8x32xf32>
    %10 = vector.extract_strided_slice %9 {offsets = [0, 0], sizes = [6, 32], strides = [1, 1]} : vector<8x32xf32> to vector<6x32xf32>
    %11 = vector.extract_strided_slice %9 {offsets = [1, 0], sizes = [6, 32], strides = [1, 1]} : vector<8x32xf32> to vector<6x32xf32>
    %12 = vector.extract_strided_slice %9 {offsets = [2, 0], sizes = [6, 32], strides = [1, 1]} : vector<8x32xf32> to vector<6x32xf32>
    %13 = tpu.concatenate %10, %11, %12 in 1 : vector<6x32xf32>, vector<6x32xf32>, vector<6x32xf32> -> vector<6x96xf32>
    %c0_7 = arith.constant 0 : index
    %c0_8 = arith.constant 0 : index
    %14 = vector.load %arg4[%c0_7, %c0_8] : memref<96x32xbf16, #tpu.memory_space<vmem>>, vector<96x32xbf16>
    %15 = arith.truncf %13 : vector<6x96xf32> to vector<6x96xbf16>
    %cst_9 = arith.constant dense<0.000000e+00> : vector<6x32xf32>
    %16 = tpu.matmul %15, %14, %cst_9 {dimension_numbers = #tpu.dot_dimension_numbers<[1], [0], [0], [1], [0, 0, 1, 1], [], []>} : vector<6x96xbf16>, vector<96x32xbf16>, vector<6x32xf32> -> vector<6x32xf32>
    %c0_10 = arith.constant 0 : index
    %c0_11 = arith.constant 0 : index
    %17 = vector.load %arg5[%c0_10, %c0_11] : memref<1x32xf32, #tpu.memory_space<vmem>>, vector<1x32xf32>
    %18 = vector.broadcast %17 : vector<1x32xf32> to vector<6x32xf32>
    %19 = arith.addf %16, %18 : vector<6x32xf32>
    %cst_12 = arith.constant 0.000000e+00 : f32
    %20 = vector.broadcast %cst_12 : f32 to vector<6x32xf32>
    %21 = arith.maximumf %19, %20 : vector<6x32xf32>
    %c0_13 = arith.constant 0 : index
    %c0_14 = arith.constant 0 : index
    %22 = vector.load %arg6[%c0_13, %c0_14] : memref<32x4xbf16, #tpu.memory_space<vmem>>, vector<32x4xbf16>
    %23 = arith.truncf %21 : vector<6x32xf32> to vector<6x32xbf16>
    %cst_15 = arith.constant dense<0.000000e+00> : vector<6x4xf32>
    %24 = tpu.matmul %23, %22, %cst_15 {dimension_numbers = #tpu.dot_dimension_numbers<[1], [0], [0], [1], [0, 0, 1, 1], [], []>} : vector<6x32xbf16>, vector<32x4xbf16>, vector<6x4xf32> -> vector<6x4xf32>
    %c0_16 = arith.constant 0 : index
    %c0_17 = arith.constant 0 : index
    %25 = vector.load %arg7[%c0_16, %c0_17] : memref<1x4xf32, #tpu.memory_space<vmem>>, vector<1x4xf32>
    %26 = vector.broadcast %25 : vector<1x4xf32> to vector<6x4xf32>
    %27 = arith.addf %24, %26 : vector<6x4xf32>
    %cst_18 = arith.constant 0.000000e+00 : f32
    %28 = vector.broadcast %cst_18 : f32 to vector<6x4xf32>
    %29 = arith.maximumf %27, %28 : vector<6x4xf32>
    %c0_19 = arith.constant 0 : index
    %c0_20 = arith.constant 0 : index
    %c0_21 = arith.constant 0 : index
    %30 = vector.load %arg8[%c0_19, %c0_20, %c0_21] : memref<1x6x4xf32, #tpu.memory_space<vmem>>, vector<1x6x4xf32>
    %31 = vector.shape_cast %30 : vector<1x6x4xf32> to vector<6x4xf32>
    %32 = vector.shape_cast %29 : vector<6x4xf32> to vector<1x6x4xf32>
    tpu.vector_store %arg8[%c0_19, %c0_20, %c0_21], %32 {strides = array<i32>} : memref<1x6x4xf32, #tpu.memory_space<vmem>>, vector<1x6x4xf32>,
    return
  }
  func.func @transform_0(%arg0: i32) -> (i32, i32, i32) {
    %c0_i32 = arith.constant 0 : i32
    %c0_i32_0 = arith.constant 0 : i32
    %c0_i32_1 = arith.constant 0 : i32
    return %arg0, %c0_i32, %c0_i32_0 : i32, i32, i32
  }
  func.func @transform_1(%arg0: i32) -> (i32, i32) {
    %c0_i32 = arith.constant 0 : i32
    %c0_i32_0 = arith.constant 0 : i32
    %c0_i32_1 = arith.constant 0 : i32
    return %c0_i32, %c0_i32_0 : i32, i32
  }
  func.func @transform_2(%arg0: i32) -> (i32, i32) {
    %c0_i32 = arith.constant 0 : i32
    %c0_i32_0 = arith.constant 0 : i32
    %c0_i32_1 = arith.constant 0 : i32
    return %c0_i32, %c0_i32_0 : i32, i32
  }
  func.func @transform_3(%arg0: i32) -> (i32, i32) {
    %c0_i32 = arith.constant 0 : i32
    %c0_i32_0 = arith.constant 0 : i32
    %c0_i32_1 = arith.constant 0 : i32
    return %c0_i32, %c0_i32_0 : i32, i32
  }
  func.func @transform_4(%arg0: i32) -> (i32, i32) {
    %c0_i32 = arith.constant 0 : i32
    %c0_i32_0 = arith.constant 0 : i32
    %c0_i32_1 = arith.constant 0 : i32
    return %c0_i32, %c0_i32_0 : i32, i32
  }
  func.func @transform_5(%arg0: i32) -> (i32, i32) {
    %c0_i32 = arith.constant 0 : i32
    %c0_i32_0 = arith.constant 0 : i32
    %c0_i32_1 = arith.constant 0 : i32
    return %c0_i32, %c0_i32_0 : i32, i32
  }
  func.func @transform_6(%arg0: i32) -> (i32, i32) {
    %c0_i32 = arith.constant 0 : i32
    %c0_i32_0 = arith.constant 0 : i32
    %c0_i32_1 = arith.constant 0 : i32
    return %c0_i32, %c0_i32_0 : i32, i32
  }
  func.func @transform_7(%arg0: i32) -> (i32, i32, i32) {
    %c0_i32 = arith.constant 0 : i32
    %c0_i32_0 = arith.constant 0 : i32
    %c0_i32_1 = arith.constant 0 : i32
    return %arg0, %c0_i32, %c0_i32_0 : i32, i32, i32
  }
}

module attributes {stable_mosaic.version = 11 : i64} {
  func.func @_encoder_stack_kernel(%arg0: i32, %arg1: i32, %arg2: memref<1x13x12xf32, #tpu.memory_space<vmem>>, %arg3: memref<12x32xbf16, #tpu.memory_space<vmem>>, %arg4: memref<13x32xf32, #tpu.memory_space<vmem>>, %arg5: memref<1x32x96xbf16, #tpu.memory_space<vmem>>, %arg6: memref<1x1x96xf32, #tpu.memory_space<vmem>>, %arg7: memref<1x32x32xbf16, #tpu.memory_space<vmem>>, %arg8: memref<1x1x32xf32, #tpu.memory_space<vmem>>, %arg9: memref<1x1x32xf32, #tpu.memory_space<vmem>>, %arg10: memref<1x1x32xf32, #tpu.memory_space<vmem>>, %arg11: memref<1x32x64xbf16, #tpu.memory_space<vmem>>, %arg12: memref<1x1x64xf32, #tpu.memory_space<vmem>>, %arg13: memref<1x64x32xbf16, #tpu.memory_space<vmem>>, %arg14: memref<1x1x32xf32, #tpu.memory_space<vmem>>, %arg15: memref<1x1x32xf32, #tpu.memory_space<vmem>>, %arg16: memref<1x1x32xf32, #tpu.memory_space<vmem>>, %arg17: memref<1x32xf32, #tpu.memory_space<vmem>>, %arg18: memref<1x32xf32, #tpu.memory_space<vmem>>, %arg19: memref<1x13x32xf32, #tpu.memory_space<vmem>>, %arg20: memref<13x32xf32, #tpu.memory_space<vmem>>) attributes {dimension_semantics = [#tpu.dimension_semantics<parallel>, #tpu.dimension_semantics<arbitrary>], iteration_bounds = array<i64: 2, 2>, scalar_prefetch = 0 : i64, scratch_operands = 1 : i64, tpu.core_type = #tpu.core_type<tc>, window_params = [{transform_indices = @transform_0, window_bounds = array<i64: 1, 13, 12>}, {pipeline_mode = #tpu.pipeline_mode<synchronous>, transform_indices = @transform_1, window_bounds = array<i64: 12, 32>}, {pipeline_mode = #tpu.pipeline_mode<synchronous>, transform_indices = @transform_2, window_bounds = array<i64: 13, 32>}, {transform_indices = @transform_3, window_bounds = array<i64: 1, 32, 96>}, {transform_indices = @transform_4, window_bounds = array<i64: 1, 1, 96>}, {transform_indices = @transform_5, window_bounds = array<i64: 1, 32, 32>}, {transform_indices = @transform_6, window_bounds = array<i64: 1, 1, 32>}, {transform_indices = @transform_7, window_bounds = array<i64: 1, 1, 32>}, {transform_indices = @transform_8, window_bounds = array<i64: 1, 1, 32>}, {transform_indices = @transform_9, window_bounds = array<i64: 1, 32, 64>}, {transform_indices = @transform_10, window_bounds = array<i64: 1, 1, 64>}, {transform_indices = @transform_11, window_bounds = array<i64: 1, 64, 32>}, {transform_indices = @transform_12, window_bounds = array<i64: 1, 1, 32>}, {transform_indices = @transform_13, window_bounds = array<i64: 1, 1, 32>}, {transform_indices = @transform_14, window_bounds = array<i64: 1, 1, 32>}, {pipeline_mode = #tpu.pipeline_mode<synchronous>, transform_indices = @transform_15, window_bounds = array<i64: 1, 32>}, {pipeline_mode = #tpu.pipeline_mode<synchronous>, transform_indices = @transform_16, window_bounds = array<i64: 1, 32>}, {transform_indices = @transform_17, window_bounds = array<i64: 1, 13, 32>}]} {
    %c0_i32 = arith.constant 0 : i32
    %0 = arith.cmpi eq, %arg1, %c0_i32 : i32
    %1 = arith.extui %0 : i1 to i32
    %c0_i32_0 = arith.constant 0 : i32
    %2 = arith.cmpi ne, %1, %c0_i32_0 : i32
    scf.if %2 {
      %c0_75 = arith.constant 0 : index
      %c0_76 = arith.constant 0 : index
      %c0_77 = arith.constant 0 : index
      %180 = vector.load %arg2[%c0_75, %c0_76, %c0_77] : memref<1x13x12xf32, #tpu.memory_space<vmem>>, vector<1x13x12xf32>
      %181 = vector.shape_cast %180 : vector<1x13x12xf32> to vector<13x12xf32>
      %c0_78 = arith.constant 0 : index
      %c0_79 = arith.constant 0 : index
      %182 = vector.load %arg3[%c0_78, %c0_79] : memref<12x32xbf16, #tpu.memory_space<vmem>>, vector<12x32xbf16>
      %183 = arith.truncf %181 : vector<13x12xf32> to vector<13x12xbf16>
      %cst_80 = arith.constant dense<0.000000e+00> : vector<13x32xf32>
      %184 = tpu.matmul %183, %182, %cst_80 {dimension_numbers = #tpu.dot_dimension_numbers<[1], [0], [0], [1], [0, 0, 1, 1], [], []>} : vector<13x12xbf16>, vector<12x32xbf16>, vector<13x32xf32> -> vector<13x32xf32>
      %c0_81 = arith.constant 0 : index
      %c0_82 = arith.constant 0 : index
      %185 = vector.load %arg4[%c0_81, %c0_82] : memref<13x32xf32, #tpu.memory_space<vmem>>, vector<13x32xf32>
      %186 = arith.addf %184, %185 : vector<13x32xf32>
      %c0_83 = arith.constant 0 : index
      %c0_84 = arith.constant 0 : index
      %187 = vector.load %arg20[%c0_83, %c0_84] : memref<13x32xf32, #tpu.memory_space<vmem>>, vector<13x32xf32>
      tpu.vector_store %arg20[%c0_83, %c0_84], %186 {strides = array<i32>} : memref<13x32xf32, #tpu.memory_space<vmem>>, vector<13x32xf32>,
    } else {
    }
    %c0 = arith.constant 0 : index
    %c0_1 = arith.constant 0 : index
    %3 = vector.load %arg20[%c0, %c0_1] : memref<13x32xf32, #tpu.memory_space<vmem>>, vector<13x32xf32>
    %c0_2 = arith.constant 0 : index
    %c0_3 = arith.constant 0 : index
    %c0_4 = arith.constant 0 : index
    %4 = vector.load %arg5[%c0_2, %c0_3, %c0_4] : memref<1x32x96xbf16, #tpu.memory_space<vmem>>, vector<1x32x96xbf16>
    %5 = vector.shape_cast %4 : vector<1x32x96xbf16> to vector<32x96xbf16>
    %6 = arith.truncf %3 : vector<13x32xf32> to vector<13x32xbf16>
    %cst = arith.constant dense<0.000000e+00> : vector<13x96xf32>
    %7 = tpu.matmul %6, %5, %cst {dimension_numbers = #tpu.dot_dimension_numbers<[1], [0], [0], [1], [0, 0, 1, 1], [], []>} : vector<13x32xbf16>, vector<32x96xbf16>, vector<13x96xf32> -> vector<13x96xf32>
    %c0_5 = arith.constant 0 : index
    %c0_6 = arith.constant 0 : index
    %c0_7 = arith.constant 0 : index
    %8 = vector.load %arg6[%c0_5, %c0_6, %c0_7] : memref<1x1x96xf32, #tpu.memory_space<vmem>>, vector<1x1x96xf32>
    %9 = vector.shape_cast %8 : vector<1x1x96xf32> to vector<1x96xf32>
    %10 = vector.broadcast %9 : vector<1x96xf32> to vector<13x96xf32>
    %11 = arith.addf %7, %10 : vector<13x96xf32>
    %12 = vector.extract_strided_slice %11 {offsets = [0, 0], sizes = [13, 32], strides = [1, 1]} : vector<13x96xf32> to vector<13x32xf32>
    %13 = vector.extract_strided_slice %11 {offsets = [0, 32], sizes = [13, 32], strides = [1, 1]} : vector<13x96xf32> to vector<13x32xf32>
    %14 = vector.extract_strided_slice %11 {offsets = [0, 64], sizes = [13, 32], strides = [1, 1]} : vector<13x96xf32> to vector<13x32xf32>
    %c0_8 = arith.constant 0 : index
    %c0_9 = arith.constant 0 : index
    %c0_10 = arith.constant 0 : index
    %15 = vector.load %arg7[%c0_8, %c0_9, %c0_10] : memref<1x32x32xbf16, #tpu.memory_space<vmem>>, vector<1x32x32xbf16>
    %16 = vector.shape_cast %15 : vector<1x32x32xbf16> to vector<32x32xbf16>
    %c0_11 = arith.constant 0 : index
    %c0_12 = arith.constant 0 : index
    %c0_13 = arith.constant 0 : index
    %17 = vector.load %arg8[%c0_11, %c0_12, %c0_13] : memref<1x1x32xf32, #tpu.memory_space<vmem>>, vector<1x1x32xf32>
    %18 = vector.shape_cast %17 : vector<1x1x32xf32> to vector<1x32xf32>
    %19 = vector.extract_strided_slice %12 {offsets = [0, 0], sizes = [13, 8], strides = [1, 1]} : vector<13x32xf32> to vector<13x8xf32>
    %20 = arith.truncf %19 : vector<13x8xf32> to vector<13x8xbf16>
    %21 = vector.extract_strided_slice %13 {offsets = [0, 0], sizes = [13, 8], strides = [1, 1]} : vector<13x32xf32> to vector<13x8xf32>
    %22 = arith.truncf %21 : vector<13x8xf32> to vector<13x8xbf16>
    %23 = vector.extract_strided_slice %14 {offsets = [0, 0], sizes = [13, 8], strides = [1, 1]} : vector<13x32xf32> to vector<13x8xf32>
    %24 = arith.truncf %23 : vector<13x8xf32> to vector<13x8xbf16>
    %cst_14 = arith.constant dense<0.000000e+00> : vector<13x13xf32>
    %25 = tpu.matmul %20, %22, %cst_14 {dimension_numbers = #tpu.dot_dimension_numbers<[1], [1], [0], [0], [0, 0, 1, 0], [], []>} : vector<13x8xbf16>, vector<13x8xbf16>, vector<13x13xf32> -> vector<13x13xf32>
    %cst_15 = arith.constant 0.353553385 : f32
    %26 = vector.broadcast %cst_15 : f32 to vector<13x13xf32>
    %27 = arith.mulf %25, %26 : vector<13x13xf32>
    %cst_16 = arith.constant dense<0xFF800000> : vector<13xf32>
    %28 = vector.multi_reduction <maximumf>, %27, %cst_16 [1] : vector<13x13xf32> to vector<13xf32>
    %29 = vector.shape_cast %28 : vector<13xf32> to vector<13x1xf32>
    %30 = vector.broadcast %29 : vector<13x1xf32> to vector<13x13xf32>
    %31 = arith.subf %27, %30 : vector<13x13xf32>
    %32 = math.exp %31 : vector<13x13xf32>
    %cst_17 = arith.constant dense<0.000000e+00> : vector<13xf32>
    %33 = vector.multi_reduction <add>, %32, %cst_17 [1] : vector<13x13xf32> to vector<13xf32>
    %34 = vector.shape_cast %33 : vector<13xf32> to vector<13x1xf32>
    %35 = tpu.reciprocal %34 {approx = true} : vector<13x1xf32> -> vector<13x1xf32>
    %36 = vector.broadcast %35 : vector<13x1xf32> to vector<13x13xf32>
    %37 = arith.mulf %32, %36 : vector<13x13xf32>
    %38 = arith.truncf %37 : vector<13x13xf32> to vector<13x13xbf16>
    %cst_18 = arith.constant dense<0.000000e+00> : vector<13x8xf32>
    %39 = tpu.matmul %38, %24, %cst_18 {dimension_numbers = #tpu.dot_dimension_numbers<[1], [0], [0], [1], [0, 0, 1, 1], [], []>} : vector<13x13xbf16>, vector<13x8xbf16>, vector<13x8xf32> -> vector<13x8xf32>
    %40 = vector.extract_strided_slice %12 {offsets = [0, 8], sizes = [13, 8], strides = [1, 1]} : vector<13x32xf32> to vector<13x8xf32>
    %41 = arith.truncf %40 : vector<13x8xf32> to vector<13x8xbf16>
    %42 = vector.extract_strided_slice %13 {offsets = [0, 8], sizes = [13, 8], strides = [1, 1]} : vector<13x32xf32> to vector<13x8xf32>
    %43 = arith.truncf %42 : vector<13x8xf32> to vector<13x8xbf16>
    %44 = vector.extract_strided_slice %14 {offsets = [0, 8], sizes = [13, 8], strides = [1, 1]} : vector<13x32xf32> to vector<13x8xf32>
    %45 = arith.truncf %44 : vector<13x8xf32> to vector<13x8xbf16>
    %cst_19 = arith.constant dense<0.000000e+00> : vector<13x13xf32>
    %46 = tpu.matmul %41, %43, %cst_19 {dimension_numbers = #tpu.dot_dimension_numbers<[1], [1], [0], [0], [0, 0, 1, 0], [], []>} : vector<13x8xbf16>, vector<13x8xbf16>, vector<13x13xf32> -> vector<13x13xf32>
    %cst_20 = arith.constant 0.353553385 : f32
    %47 = vector.broadcast %cst_20 : f32 to vector<13x13xf32>
    %48 = arith.mulf %46, %47 : vector<13x13xf32>
    %cst_21 = arith.constant dense<0xFF800000> : vector<13xf32>
    %49 = vector.multi_reduction <maximumf>, %48, %cst_21 [1] : vector<13x13xf32> to vector<13xf32>
    %50 = vector.shape_cast %49 : vector<13xf32> to vector<13x1xf32>
    %51 = vector.broadcast %50 : vector<13x1xf32> to vector<13x13xf32>
    %52 = arith.subf %48, %51 : vector<13x13xf32>
    %53 = math.exp %52 : vector<13x13xf32>
    %cst_22 = arith.constant dense<0.000000e+00> : vector<13xf32>
    %54 = vector.multi_reduction <add>, %53, %cst_22 [1] : vector<13x13xf32> to vector<13xf32>
    %55 = vector.shape_cast %54 : vector<13xf32> to vector<13x1xf32>
    %56 = tpu.reciprocal %55 {approx = true} : vector<13x1xf32> -> vector<13x1xf32>
    %57 = vector.broadcast %56 : vector<13x1xf32> to vector<13x13xf32>
    %58 = arith.mulf %53, %57 : vector<13x13xf32>
    %59 = arith.truncf %58 : vector<13x13xf32> to vector<13x13xbf16>
    %cst_23 = arith.constant dense<0.000000e+00> : vector<13x8xf32>
    %60 = tpu.matmul %59, %45, %cst_23 {dimension_numbers = #tpu.dot_dimension_numbers<[1], [0], [0], [1], [0, 0, 1, 1], [], []>} : vector<13x13xbf16>, vector<13x8xbf16>, vector<13x8xf32> -> vector<13x8xf32>
    %61 = vector.extract_strided_slice %12 {offsets = [0, 16], sizes = [13, 8], strides = [1, 1]} : vector<13x32xf32> to vector<13x8xf32>
    %62 = arith.truncf %61 : vector<13x8xf32> to vector<13x8xbf16>
    %63 = vector.extract_strided_slice %13 {offsets = [0, 16], sizes = [13, 8], strides = [1, 1]} : vector<13x32xf32> to vector<13x8xf32>
    %64 = arith.truncf %63 : vector<13x8xf32> to vector<13x8xbf16>
    %65 = vector.extract_strided_slice %14 {offsets = [0, 16], sizes = [13, 8], strides = [1, 1]} : vector<13x32xf32> to vector<13x8xf32>
    %66 = arith.truncf %65 : vector<13x8xf32> to vector<13x8xbf16>
    %cst_24 = arith.constant dense<0.000000e+00> : vector<13x13xf32>
    %67 = tpu.matmul %62, %64, %cst_24 {dimension_numbers = #tpu.dot_dimension_numbers<[1], [1], [0], [0], [0, 0, 1, 0], [], []>} : vector<13x8xbf16>, vector<13x8xbf16>, vector<13x13xf32> -> vector<13x13xf32>
    %cst_25 = arith.constant 0.353553385 : f32
    %68 = vector.broadcast %cst_25 : f32 to vector<13x13xf32>
    %69 = arith.mulf %67, %68 : vector<13x13xf32>
    %cst_26 = arith.constant dense<0xFF800000> : vector<13xf32>
    %70 = vector.multi_reduction <maximumf>, %69, %cst_26 [1] : vector<13x13xf32> to vector<13xf32>
    %71 = vector.shape_cast %70 : vector<13xf32> to vector<13x1xf32>
    %72 = vector.broadcast %71 : vector<13x1xf32> to vector<13x13xf32>
    %73 = arith.subf %69, %72 : vector<13x13xf32>
    %74 = math.exp %73 : vector<13x13xf32>
    %cst_27 = arith.constant dense<0.000000e+00> : vector<13xf32>
    %75 = vector.multi_reduction <add>, %74, %cst_27 [1] : vector<13x13xf32> to vector<13xf32>
    %76 = vector.shape_cast %75 : vector<13xf32> to vector<13x1xf32>
    %77 = tpu.reciprocal %76 {approx = true} : vector<13x1xf32> -> vector<13x1xf32>
    %78 = vector.broadcast %77 : vector<13x1xf32> to vector<13x13xf32>
    %79 = arith.mulf %74, %78 : vector<13x13xf32>
    %80 = arith.truncf %79 : vector<13x13xf32> to vector<13x13xbf16>
    %cst_28 = arith.constant dense<0.000000e+00> : vector<13x8xf32>
    %81 = tpu.matmul %80, %66, %cst_28 {dimension_numbers = #tpu.dot_dimension_numbers<[1], [0], [0], [1], [0, 0, 1, 1], [], []>} : vector<13x13xbf16>, vector<13x8xbf16>, vector<13x8xf32> -> vector<13x8xf32>
    %82 = vector.extract_strided_slice %12 {offsets = [0, 24], sizes = [13, 8], strides = [1, 1]} : vector<13x32xf32> to vector<13x8xf32>
    %83 = arith.truncf %82 : vector<13x8xf32> to vector<13x8xbf16>
    %84 = vector.extract_strided_slice %13 {offsets = [0, 24], sizes = [13, 8], strides = [1, 1]} : vector<13x32xf32> to vector<13x8xf32>
    %85 = arith.truncf %84 : vector<13x8xf32> to vector<13x8xbf16>
    %86 = vector.extract_strided_slice %14 {offsets = [0, 24], sizes = [13, 8], strides = [1, 1]} : vector<13x32xf32> to vector<13x8xf32>
    %87 = arith.truncf %86 : vector<13x8xf32> to vector<13x8xbf16>
    %cst_29 = arith.constant dense<0.000000e+00> : vector<13x13xf32>
    %88 = tpu.matmul %83, %85, %cst_29 {dimension_numbers = #tpu.dot_dimension_numbers<[1], [1], [0], [0], [0, 0, 1, 0], [], []>} : vector<13x8xbf16>, vector<13x8xbf16>, vector<13x13xf32> -> vector<13x13xf32>
    %cst_30 = arith.constant 0.353553385 : f32
    %89 = vector.broadcast %cst_30 : f32 to vector<13x13xf32>
    %90 = arith.mulf %88, %89 : vector<13x13xf32>
    %cst_31 = arith.constant dense<0xFF800000> : vector<13xf32>
    %91 = vector.multi_reduction <maximumf>, %90, %cst_31 [1] : vector<13x13xf32> to vector<13xf32>
    %92 = vector.shape_cast %91 : vector<13xf32> to vector<13x1xf32>
    %93 = vector.broadcast %92 : vector<13x1xf32> to vector<13x13xf32>
    %94 = arith.subf %90, %93 : vector<13x13xf32>
    %95 = math.exp %94 : vector<13x13xf32>
    %cst_32 = arith.constant dense<0.000000e+00> : vector<13xf32>
    %96 = vector.multi_reduction <add>, %95, %cst_32 [1] : vector<13x13xf32> to vector<13xf32>
    %97 = vector.shape_cast %96 : vector<13xf32> to vector<13x1xf32>
    %98 = tpu.reciprocal %97 {approx = true} : vector<13x1xf32> -> vector<13x1xf32>
    %99 = vector.broadcast %98 : vector<13x1xf32> to vector<13x13xf32>
    %100 = arith.mulf %95, %99 : vector<13x13xf32>
    %101 = arith.truncf %100 : vector<13x13xf32> to vector<13x13xbf16>
    %cst_33 = arith.constant dense<0.000000e+00> : vector<13x8xf32>
    %102 = tpu.matmul %101, %87, %cst_33 {dimension_numbers = #tpu.dot_dimension_numbers<[1], [0], [0], [1], [0, 0, 1, 1], [], []>} : vector<13x13xbf16>, vector<13x8xbf16>, vector<13x8xf32> -> vector<13x8xf32>
    %103 = tpu.concatenate %39, %60, %81, %102 in 1 : vector<13x8xf32>, vector<13x8xf32>, vector<13x8xf32>, vector<13x8xf32> -> vector<13x32xf32>
    %104 = arith.truncf %103 : vector<13x32xf32> to vector<13x32xbf16>
    %cst_34 = arith.constant dense<0.000000e+00> : vector<13x32xf32>
    %105 = tpu.matmul %104, %16, %cst_34 {dimension_numbers = #tpu.dot_dimension_numbers<[1], [0], [0], [1], [0, 0, 1, 1], [], []>} : vector<13x32xbf16>, vector<32x32xbf16>, vector<13x32xf32> -> vector<13x32xf32>
    %106 = vector.broadcast %18 : vector<1x32xf32> to vector<13x32xf32>
    %107 = arith.addf %105, %106 : vector<13x32xf32>
    %108 = arith.addf %3, %107 : vector<13x32xf32>
    %c0_35 = arith.constant 0 : index
    %c0_36 = arith.constant 0 : index
    %c0_37 = arith.constant 0 : index
    %109 = vector.load %arg9[%c0_35, %c0_36, %c0_37] : memref<1x1x32xf32, #tpu.memory_space<vmem>>, vector<1x1x32xf32>
    %110 = vector.shape_cast %109 : vector<1x1x32xf32> to vector<1x32xf32>
    %c0_38 = arith.constant 0 : index
    %c0_39 = arith.constant 0 : index
    %c0_40 = arith.constant 0 : index
    %111 = vector.load %arg10[%c0_38, %c0_39, %c0_40] : memref<1x1x32xf32, #tpu.memory_space<vmem>>, vector<1x1x32xf32>
    %112 = vector.shape_cast %111 : vector<1x1x32xf32> to vector<1x32xf32>
    %cst_41 = arith.constant dense<0.000000e+00> : vector<13xf32>
    %113 = vector.multi_reduction <add>, %108, %cst_41 [1] : vector<13x32xf32> to vector<13xf32>
    %114 = vector.shape_cast %113 : vector<13xf32> to vector<13x1xf32>
    %cst_42 = arith.constant 3.200000e+01 : f32
    %115 = vector.broadcast %cst_42 : f32 to vector<13x1xf32>
    %116 = arith.divf %114, %115 : vector<13x1xf32>
    %117 = vector.broadcast %116 : vector<13x1xf32> to vector<13x32xf32>
    %118 = arith.subf %108, %117 : vector<13x32xf32>
    %119 = arith.mulf %118, %118 : vector<13x32xf32>
    %cst_43 = arith.constant dense<0.000000e+00> : vector<13xf32>
    %120 = vector.multi_reduction <add>, %119, %cst_43 [1] : vector<13x32xf32> to vector<13xf32>
    %121 = vector.shape_cast %120 : vector<13xf32> to vector<13x1xf32>
    %cst_44 = arith.constant 3.200000e+01 : f32
    %122 = vector.broadcast %cst_44 : f32 to vector<13x1xf32>
    %123 = arith.divf %121, %122 : vector<13x1xf32>
    %cst_45 = arith.constant 9.99999974E-6 : f32
    %124 = vector.broadcast %cst_45 : f32 to vector<13x1xf32>
    %125 = arith.addf %123, %124 : vector<13x1xf32>
    %126 = math.rsqrt %125 : vector<13x1xf32>
    %127 = vector.broadcast %126 : vector<13x1xf32> to vector<13x32xf32>
    %128 = arith.mulf %118, %127 : vector<13x32xf32>
    %129 = vector.broadcast %110 : vector<1x32xf32> to vector<13x32xf32>
    %130 = arith.mulf %128, %129 : vector<13x32xf32>
    %131 = vector.broadcast %112 : vector<1x32xf32> to vector<13x32xf32>
    %132 = arith.addf %130, %131 : vector<13x32xf32>
    %c0_46 = arith.constant 0 : index
    %c0_47 = arith.constant 0 : index
    %c0_48 = arith.constant 0 : index
    %133 = vector.load %arg11[%c0_46, %c0_47, %c0_48] : memref<1x32x64xbf16, #tpu.memory_space<vmem>>, vector<1x32x64xbf16>
    %134 = vector.shape_cast %133 : vector<1x32x64xbf16> to vector<32x64xbf16>
    %135 = arith.truncf %132 : vector<13x32xf32> to vector<13x32xbf16>
    %cst_49 = arith.constant dense<0.000000e+00> : vector<13x64xf32>
    %136 = tpu.matmul %135, %134, %cst_49 {dimension_numbers = #tpu.dot_dimension_numbers<[1], [0], [0], [1], [0, 0, 1, 1], [], []>} : vector<13x32xbf16>, vector<32x64xbf16>, vector<13x64xf32> -> vector<13x64xf32>
    %c0_50 = arith.constant 0 : index
    %c0_51 = arith.constant 0 : index
    %c0_52 = arith.constant 0 : index
    %137 = vector.load %arg12[%c0_50, %c0_51, %c0_52] : memref<1x1x64xf32, #tpu.memory_space<vmem>>, vector<1x1x64xf32>
    %138 = vector.shape_cast %137 : vector<1x1x64xf32> to vector<1x64xf32>
    %139 = vector.broadcast %138 : vector<1x64xf32> to vector<13x64xf32>
    %140 = arith.addf %136, %139 : vector<13x64xf32>
    %cst_53 = arith.constant 0.000000e+00 : f32
    %141 = vector.broadcast %cst_53 : f32 to vector<13x64xf32>
    %142 = arith.maximumf %140, %141 : vector<13x64xf32>
    %c0_54 = arith.constant 0 : index
    %c0_55 = arith.constant 0 : index
    %c0_56 = arith.constant 0 : index
    %143 = vector.load %arg13[%c0_54, %c0_55, %c0_56] : memref<1x64x32xbf16, #tpu.memory_space<vmem>>, vector<1x64x32xbf16>
    %144 = vector.shape_cast %143 : vector<1x64x32xbf16> to vector<64x32xbf16>
    %145 = arith.truncf %142 : vector<13x64xf32> to vector<13x64xbf16>
    %cst_57 = arith.constant dense<0.000000e+00> : vector<13x32xf32>
    %146 = tpu.matmul %145, %144, %cst_57 {dimension_numbers = #tpu.dot_dimension_numbers<[1], [0], [0], [1], [0, 0, 1, 1], [], []>} : vector<13x64xbf16>, vector<64x32xbf16>, vector<13x32xf32> -> vector<13x32xf32>
    %147 = arith.addf %132, %146 : vector<13x32xf32>
    %c0_58 = arith.constant 0 : index
    %c0_59 = arith.constant 0 : index
    %c0_60 = arith.constant 0 : index
    %148 = vector.load %arg14[%c0_58, %c0_59, %c0_60] : memref<1x1x32xf32, #tpu.memory_space<vmem>>, vector<1x1x32xf32>
    %149 = vector.shape_cast %148 : vector<1x1x32xf32> to vector<1x32xf32>
    %150 = vector.broadcast %149 : vector<1x32xf32> to vector<13x32xf32>
    %151 = arith.addf %147, %150 : vector<13x32xf32>
    %c0_61 = arith.constant 0 : index
    %c0_62 = arith.constant 0 : index
    %c0_63 = arith.constant 0 : index
    %152 = vector.load %arg15[%c0_61, %c0_62, %c0_63] : memref<1x1x32xf32, #tpu.memory_space<vmem>>, vector<1x1x32xf32>
    %153 = vector.shape_cast %152 : vector<1x1x32xf32> to vector<1x32xf32>
    %c0_64 = arith.constant 0 : index
    %c0_65 = arith.constant 0 : index
    %c0_66 = arith.constant 0 : index
    %154 = vector.load %arg16[%c0_64, %c0_65, %c0_66] : memref<1x1x32xf32, #tpu.memory_space<vmem>>, vector<1x1x32xf32>
    %155 = vector.shape_cast %154 : vector<1x1x32xf32> to vector<1x32xf32>
    %cst_67 = arith.constant dense<0.000000e+00> : vector<13xf32>
    %156 = vector.multi_reduction <add>, %151, %cst_67 [1] : vector<13x32xf32> to vector<13xf32>
    %157 = vector.shape_cast %156 : vector<13xf32> to vector<13x1xf32>
    %cst_68 = arith.constant 3.200000e+01 : f32
    %158 = vector.broadcast %cst_68 : f32 to vector<13x1xf32>
    %159 = arith.divf %157, %158 : vector<13x1xf32>
    %160 = vector.broadcast %159 : vector<13x1xf32> to vector<13x32xf32>
    %161 = arith.subf %151, %160 : vector<13x32xf32>
    %162 = arith.mulf %161, %161 : vector<13x32xf32>
    %cst_69 = arith.constant dense<0.000000e+00> : vector<13xf32>
    %163 = vector.multi_reduction <add>, %162, %cst_69 [1] : vector<13x32xf32> to vector<13xf32>
    %164 = vector.shape_cast %163 : vector<13xf32> to vector<13x1xf32>
    %cst_70 = arith.constant 3.200000e+01 : f32
    %165 = vector.broadcast %cst_70 : f32 to vector<13x1xf32>
    %166 = arith.divf %164, %165 : vector<13x1xf32>
    %cst_71 = arith.constant 9.99999974E-6 : f32
    %167 = vector.broadcast %cst_71 : f32 to vector<13x1xf32>
    %168 = arith.addf %166, %167 : vector<13x1xf32>
    %169 = math.rsqrt %168 : vector<13x1xf32>
    %170 = vector.broadcast %169 : vector<13x1xf32> to vector<13x32xf32>
    %171 = arith.mulf %161, %170 : vector<13x32xf32>
    %172 = vector.broadcast %153 : vector<1x32xf32> to vector<13x32xf32>
    %173 = arith.mulf %171, %172 : vector<13x32xf32>
    %174 = vector.broadcast %155 : vector<1x32xf32> to vector<13x32xf32>
    %175 = arith.addf %173, %174 : vector<13x32xf32>
    %c0_72 = arith.constant 0 : index
    %c0_73 = arith.constant 0 : index
    %176 = vector.load %arg20[%c0_72, %c0_73] : memref<13x32xf32, #tpu.memory_space<vmem>>, vector<13x32xf32>
    tpu.vector_store %arg20[%c0_72, %c0_73], %175 {strides = array<i32>} : memref<13x32xf32, #tpu.memory_space<vmem>>, vector<13x32xf32>,
    %c1_i32 = arith.constant 1 : i32
    %177 = arith.cmpi eq, %arg1, %c1_i32 : i32
    %178 = arith.extui %177 : i1 to i32
    %c0_i32_74 = arith.constant 0 : i32
    %179 = arith.cmpi ne, %178, %c0_i32_74 : i32
    scf.if %179 {
      %c0_75 = arith.constant 0 : index
      %c0_76 = arith.constant 0 : index
      %180 = vector.load %arg17[%c0_75, %c0_76] : memref<1x32xf32, #tpu.memory_space<vmem>>, vector<1x32xf32>
      %c0_77 = arith.constant 0 : index
      %c0_78 = arith.constant 0 : index
      %181 = vector.load %arg18[%c0_77, %c0_78] : memref<1x32xf32, #tpu.memory_space<vmem>>, vector<1x32xf32>
      %cst_79 = arith.constant dense<0.000000e+00> : vector<13xf32>
      %182 = vector.multi_reduction <add>, %175, %cst_79 [1] : vector<13x32xf32> to vector<13xf32>
      %183 = vector.shape_cast %182 : vector<13xf32> to vector<13x1xf32>
      %cst_80 = arith.constant 3.200000e+01 : f32
      %184 = vector.broadcast %cst_80 : f32 to vector<13x1xf32>
      %185 = arith.divf %183, %184 : vector<13x1xf32>
      %186 = vector.broadcast %185 : vector<13x1xf32> to vector<13x32xf32>
      %187 = arith.subf %175, %186 : vector<13x32xf32>
      %188 = arith.mulf %187, %187 : vector<13x32xf32>
      %cst_81 = arith.constant dense<0.000000e+00> : vector<13xf32>
      %189 = vector.multi_reduction <add>, %188, %cst_81 [1] : vector<13x32xf32> to vector<13xf32>
      %190 = vector.shape_cast %189 : vector<13xf32> to vector<13x1xf32>
      %cst_82 = arith.constant 3.200000e+01 : f32
      %191 = vector.broadcast %cst_82 : f32 to vector<13x1xf32>
      %192 = arith.divf %190, %191 : vector<13x1xf32>
      %cst_83 = arith.constant 9.99999974E-6 : f32
      %193 = vector.broadcast %cst_83 : f32 to vector<13x1xf32>
      %194 = arith.addf %192, %193 : vector<13x1xf32>
      %195 = math.rsqrt %194 : vector<13x1xf32>
      %196 = vector.broadcast %195 : vector<13x1xf32> to vector<13x32xf32>
      %197 = arith.mulf %187, %196 : vector<13x32xf32>
      %198 = vector.broadcast %180 : vector<1x32xf32> to vector<13x32xf32>
      %199 = arith.mulf %197, %198 : vector<13x32xf32>
      %200 = vector.broadcast %181 : vector<1x32xf32> to vector<13x32xf32>
      %201 = arith.addf %199, %200 : vector<13x32xf32>
      %c0_84 = arith.constant 0 : index
      %c0_85 = arith.constant 0 : index
      %c0_86 = arith.constant 0 : index
      %202 = vector.load %arg19[%c0_84, %c0_85, %c0_86] : memref<1x13x32xf32, #tpu.memory_space<vmem>>, vector<1x13x32xf32>
      %203 = vector.shape_cast %202 : vector<1x13x32xf32> to vector<13x32xf32>
      %204 = vector.shape_cast %201 : vector<13x32xf32> to vector<1x13x32xf32>
      tpu.vector_store %arg19[%c0_84, %c0_85, %c0_86], %204 {strides = array<i32>} : memref<1x13x32xf32, #tpu.memory_space<vmem>>, vector<1x13x32xf32>,
    } else {
    }
    return
  }
  func.func @transform_0(%arg0: i32, %arg1: i32) -> (i32, i32, i32) {
    %c0_i32 = arith.constant 0 : i32
    %c0_i32_0 = arith.constant 0 : i32
    %c0_i32_1 = arith.constant 0 : i32
    return %arg0, %c0_i32, %c0_i32_0 : i32, i32, i32
  }
  func.func @transform_1(%arg0: i32, %arg1: i32) -> (i32, i32) {
    %c0_i32 = arith.constant 0 : i32
    %c0_i32_0 = arith.constant 0 : i32
    %c0_i32_1 = arith.constant 0 : i32
    return %c0_i32, %c0_i32_0 : i32, i32
  }
  func.func @transform_2(%arg0: i32, %arg1: i32) -> (i32, i32) {
    %c0_i32 = arith.constant 0 : i32
    %c0_i32_0 = arith.constant 0 : i32
    %c0_i32_1 = arith.constant 0 : i32
    return %c0_i32, %c0_i32_0 : i32, i32
  }
  func.func @transform_3(%arg0: i32, %arg1: i32) -> (i32, i32, i32) {
    %c0_i32 = arith.constant 0 : i32
    %c0_i32_0 = arith.constant 0 : i32
    %c0_i32_1 = arith.constant 0 : i32
    return %arg1, %c0_i32, %c0_i32_0 : i32, i32, i32
  }
  func.func @transform_4(%arg0: i32, %arg1: i32) -> (i32, i32, i32) {
    %c0_i32 = arith.constant 0 : i32
    %c0_i32_0 = arith.constant 0 : i32
    %c0_i32_1 = arith.constant 0 : i32
    return %arg1, %c0_i32, %c0_i32_0 : i32, i32, i32
  }
  func.func @transform_5(%arg0: i32, %arg1: i32) -> (i32, i32, i32) {
    %c0_i32 = arith.constant 0 : i32
    %c0_i32_0 = arith.constant 0 : i32
    %c0_i32_1 = arith.constant 0 : i32
    return %arg1, %c0_i32, %c0_i32_0 : i32, i32, i32
  }
  func.func @transform_6(%arg0: i32, %arg1: i32) -> (i32, i32, i32) {
    %c0_i32 = arith.constant 0 : i32
    %c0_i32_0 = arith.constant 0 : i32
    %c0_i32_1 = arith.constant 0 : i32
    return %arg1, %c0_i32, %c0_i32_0 : i32, i32, i32
  }
  func.func @transform_7(%arg0: i32, %arg1: i32) -> (i32, i32, i32) {
    %c0_i32 = arith.constant 0 : i32
    %c0_i32_0 = arith.constant 0 : i32
    %c0_i32_1 = arith.constant 0 : i32
    return %arg1, %c0_i32, %c0_i32_0 : i32, i32, i32
  }
  func.func @transform_8(%arg0: i32, %arg1: i32) -> (i32, i32, i32) {
    %c0_i32 = arith.constant 0 : i32
    %c0_i32_0 = arith.constant 0 : i32
    %c0_i32_1 = arith.constant 0 : i32
    return %arg1, %c0_i32, %c0_i32_0 : i32, i32, i32
  }
  func.func @transform_9(%arg0: i32, %arg1: i32) -> (i32, i32, i32) {
    %c0_i32 = arith.constant 0 : i32
    %c0_i32_0 = arith.constant 0 : i32
    %c0_i32_1 = arith.constant 0 : i32
    return %arg1, %c0_i32, %c0_i32_0 : i32, i32, i32
  }
  func.func @transform_10(%arg0: i32, %arg1: i32) -> (i32, i32, i32) {
    %c0_i32 = arith.constant 0 : i32
    %c0_i32_0 = arith.constant 0 : i32
    %c0_i32_1 = arith.constant 0 : i32
    return %arg1, %c0_i32, %c0_i32_0 : i32, i32, i32
  }
  func.func @transform_11(%arg0: i32, %arg1: i32) -> (i32, i32, i32) {
    %c0_i32 = arith.constant 0 : i32
    %c0_i32_0 = arith.constant 0 : i32
    %c0_i32_1 = arith.constant 0 : i32
    return %arg1, %c0_i32, %c0_i32_0 : i32, i32, i32
  }
  func.func @transform_12(%arg0: i32, %arg1: i32) -> (i32, i32, i32) {
    %c0_i32 = arith.constant 0 : i32
    %c0_i32_0 = arith.constant 0 : i32
    %c0_i32_1 = arith.constant 0 : i32
    return %arg1, %c0_i32, %c0_i32_0 : i32, i32, i32
  }
  func.func @transform_13(%arg0: i32, %arg1: i32) -> (i32, i32, i32) {
    %c0_i32 = arith.constant 0 : i32
    %c0_i32_0 = arith.constant 0 : i32
    %c0_i32_1 = arith.constant 0 : i32
    return %arg1, %c0_i32, %c0_i32_0 : i32, i32, i32
  }
  func.func @transform_14(%arg0: i32, %arg1: i32) -> (i32, i32, i32) {
    %c0_i32 = arith.constant 0 : i32
    %c0_i32_0 = arith.constant 0 : i32
    %c0_i32_1 = arith.constant 0 : i32
    return %arg1, %c0_i32, %c0_i32_0 : i32, i32, i32
  }
  func.func @transform_15(%arg0: i32, %arg1: i32) -> (i32, i32) {
    %c0_i32 = arith.constant 0 : i32
    %c0_i32_0 = arith.constant 0 : i32
    %c0_i32_1 = arith.constant 0 : i32
    return %c0_i32, %c0_i32_0 : i32, i32
  }
  func.func @transform_16(%arg0: i32, %arg1: i32) -> (i32, i32) {
    %c0_i32 = arith.constant 0 : i32
    %c0_i32_0 = arith.constant 0 : i32
    %c0_i32_1 = arith.constant 0 : i32
    return %c0_i32, %c0_i32_0 : i32, i32
  }
  func.func @transform_17(%arg0: i32, %arg1: i32) -> (i32, i32, i32) {
    %c0_i32 = arith.constant 0 : i32
    %c0_i32_0 = arith.constant 0 : i32
    %c0_i32_1 = arith.constant 0 : i32
    return %arg0, %c0_i32, %c0_i32_0 : i32, i32, i32
  }
}

module attributes {stable_mosaic.version = 11 : i64} {
  func.func @_decoder_stack_kernel(%arg0: i32, %arg1: i32, %arg2: memref<1x12x12xf32, #tpu.memory_space<vmem>>, %arg3: memref<1x12x4xf32, #tpu.memory_space<vmem>>, %arg4: memref<12x32xbf16, #tpu.memory_space<vmem>>, %arg5: memref<4x32xbf16, #tpu.memory_space<vmem>>, %arg6: memref<12x32xf32, #tpu.memory_space<vmem>>, %arg7: memref<1x13x32xf32, #tpu.memory_space<vmem>>, %arg8: memref<1x32x96xbf16, #tpu.memory_space<vmem>>, %arg9: memref<1x1x96xf32, #tpu.memory_space<vmem>>, %arg10: memref<1x32x32xbf16, #tpu.memory_space<vmem>>, %arg11: memref<1x1x32xf32, #tpu.memory_space<vmem>>, %arg12: memref<1x1x32xf32, #tpu.memory_space<vmem>>, %arg13: memref<1x1x32xf32, #tpu.memory_space<vmem>>, %arg14: memref<1x32x32xbf16, #tpu.memory_space<vmem>>, %arg15: memref<1x1x32xf32, #tpu.memory_space<vmem>>, %arg16: memref<1x32x64xbf16, #tpu.memory_space<vmem>>, %arg17: memref<1x1x64xf32, #tpu.memory_space<vmem>>, %arg18: memref<1x32x32xbf16, #tpu.memory_space<vmem>>, %arg19: memref<1x1x32xf32, #tpu.memory_space<vmem>>, %arg20: memref<1x1x32xf32, #tpu.memory_space<vmem>>, %arg21: memref<1x1x32xf32, #tpu.memory_space<vmem>>, %arg22: memref<1x32x64xbf16, #tpu.memory_space<vmem>>, %arg23: memref<1x1x64xf32, #tpu.memory_space<vmem>>, %arg24: memref<1x64x32xbf16, #tpu.memory_space<vmem>>, %arg25: memref<1x1x32xf32, #tpu.memory_space<vmem>>, %arg26: memref<1x1x32xf32, #tpu.memory_space<vmem>>, %arg27: memref<1x1x32xf32, #tpu.memory_space<vmem>>, %arg28: memref<1x32xf32, #tpu.memory_space<vmem>>, %arg29: memref<1x32xf32, #tpu.memory_space<vmem>>, %arg30: memref<32x4xbf16, #tpu.memory_space<vmem>>, %arg31: memref<1x4xf32, #tpu.memory_space<vmem>>, %arg32: memref<1x12x4xf32, #tpu.memory_space<vmem>>, %arg33: memref<12x32xf32, #tpu.memory_space<vmem>>) attributes {dimension_semantics = [#tpu.dimension_semantics<parallel>, #tpu.dimension_semantics<arbitrary>], iteration_bounds = array<i64: 2, 1>, scalar_prefetch = 0 : i64, scratch_operands = 1 : i64, tpu.core_type = #tpu.core_type<tc>, window_params = [{transform_indices = @transform_0, window_bounds = array<i64: 1, 12, 12>}, {transform_indices = @transform_1, window_bounds = array<i64: 1, 12, 4>}, {pipeline_mode = #tpu.pipeline_mode<synchronous>, transform_indices = @transform_2, window_bounds = array<i64: 12, 32>}, {pipeline_mode = #tpu.pipeline_mode<synchronous>, transform_indices = @transform_3, window_bounds = array<i64: 4, 32>}, {pipeline_mode = #tpu.pipeline_mode<synchronous>, transform_indices = @transform_4, window_bounds = array<i64: 12, 32>}, {transform_indices = @transform_5, window_bounds = array<i64: 1, 13, 32>}, {transform_indices = @transform_6, window_bounds = array<i64: 1, 32, 96>}, {transform_indices = @transform_7, window_bounds = array<i64: 1, 1, 96>}, {transform_indices = @transform_8, window_bounds = array<i64: 1, 32, 32>}, {transform_indices = @transform_9, window_bounds = array<i64: 1, 1, 32>}, {transform_indices = @transform_10, window_bounds = array<i64: 1, 1, 32>}, {transform_indices = @transform_11, window_bounds = array<i64: 1, 1, 32>}, {transform_indices = @transform_12, window_bounds = array<i64: 1, 32, 32>}, {transform_indices = @transform_13, window_bounds = array<i64: 1, 1, 32>}, {transform_indices = @transform_14, window_bounds = array<i64: 1, 32, 64>}, {transform_indices = @transform_15, window_bounds = array<i64: 1, 1, 64>}, {transform_indices = @transform_16, window_bounds = array<i64: 1, 32, 32>}, {transform_indices = @transform_17, window_bounds = array<i64: 1, 1, 32>}, {transform_indices = @transform_18, window_bounds = array<i64: 1, 1, 32>}, {transform_indices = @transform_19, window_bounds = array<i64: 1, 1, 32>}, {transform_indices = @transform_20, window_bounds = array<i64: 1, 32, 64>}, {transform_indices = @transform_21, window_bounds = array<i64: 1, 1, 64>}, {transform_indices = @transform_22, window_bounds = array<i64: 1, 64, 32>}, {transform_indices = @transform_23, window_bounds = array<i64: 1, 1, 32>}, {transform_indices = @transform_24, window_bounds = array<i64: 1, 1, 32>}, {transform_indices = @transform_25, window_bounds = array<i64: 1, 1, 32>}, {pipeline_mode = #tpu.pipeline_mode<synchronous>, transform_indices = @transform_26, window_bounds = array<i64: 1, 32>}, {pipeline_mode = #tpu.pipeline_mode<synchronous>, transform_indices = @transform_27, window_bounds = array<i64: 1, 32>}, {pipeline_mode = #tpu.pipeline_mode<synchronous>, transform_indices = @transform_28, window_bounds = array<i64: 32, 4>}, {pipeline_mode = #tpu.pipeline_mode<synchronous>, transform_indices = @transform_29, window_bounds = array<i64: 1, 4>}, {transform_indices = @transform_30, window_bounds = array<i64: 1, 12, 4>}]} {
    %c0_i32 = arith.constant 0 : i32
    %0 = arith.cmpi eq, %arg1, %c0_i32 : i32
    %1 = arith.extui %0 : i1 to i32
    %c0_i32_0 = arith.constant 0 : i32
    %2 = arith.cmpi ne, %1, %c0_i32_0 : i32
    scf.if %2 {
      %c0_133 = arith.constant 0 : index
      %c0_134 = arith.constant 0 : index
      %c0_135 = arith.constant 0 : index
      %328 = vector.load %arg2[%c0_133, %c0_134, %c0_135] : memref<1x12x12xf32, #tpu.memory_space<vmem>>, vector<1x12x12xf32>
      %329 = vector.shape_cast %328 : vector<1x12x12xf32> to vector<12x12xf32>
      %c0_136 = arith.constant 0 : index
      %c0_137 = arith.constant 0 : index
      %330 = vector.load %arg4[%c0_136, %c0_137] : memref<12x32xbf16, #tpu.memory_space<vmem>>, vector<12x32xbf16>
      %331 = arith.truncf %329 : vector<12x12xf32> to vector<12x12xbf16>
      %cst_138 = arith.constant dense<0.000000e+00> : vector<12x32xf32>
      %332 = tpu.matmul %331, %330, %cst_138 {dimension_numbers = #tpu.dot_dimension_numbers<[1], [0], [0], [1], [0, 0, 1, 1], [], []>} : vector<12x12xbf16>, vector<12x32xbf16>, vector<12x32xf32> -> vector<12x32xf32>
      %c0_139 = arith.constant 0 : index
      %c0_140 = arith.constant 0 : index
      %c0_141 = arith.constant 0 : index
      %333 = vector.load %arg3[%c0_139, %c0_140, %c0_141] : memref<1x12x4xf32, #tpu.memory_space<vmem>>, vector<1x12x4xf32>
      %334 = vector.shape_cast %333 : vector<1x12x4xf32> to vector<12x4xf32>
      %c0_142 = arith.constant 0 : index
      %c0_143 = arith.constant 0 : index
      %335 = vector.load %arg5[%c0_142, %c0_143] : memref<4x32xbf16, #tpu.memory_space<vmem>>, vector<4x32xbf16>
      %336 = arith.truncf %334 : vector<12x4xf32> to vector<12x4xbf16>
      %cst_144 = arith.constant dense<0.000000e+00> : vector<12x32xf32>
      %337 = tpu.matmul %336, %335, %cst_144 {dimension_numbers = #tpu.dot_dimension_numbers<[1], [0], [0], [1], [0, 0, 1, 1], [], []>} : vector<12x4xbf16>, vector<4x32xbf16>, vector<12x32xf32> -> vector<12x32xf32>
      %338 = arith.addf %332, %337 : vector<12x32xf32>
      %c0_145 = arith.constant 0 : index
      %c0_146 = arith.constant 0 : index
      %339 = vector.load %arg6[%c0_145, %c0_146] : memref<12x32xf32, #tpu.memory_space<vmem>>, vector<12x32xf32>
      %340 = arith.addf %338, %339 : vector<12x32xf32>
      %c0_147 = arith.constant 0 : index
      %c0_148 = arith.constant 0 : index
      %341 = vector.load %arg33[%c0_147, %c0_148] : memref<12x32xf32, #tpu.memory_space<vmem>>, vector<12x32xf32>
      tpu.vector_store %arg33[%c0_147, %c0_148], %340 {strides = array<i32>} : memref<12x32xf32, #tpu.memory_space<vmem>>, vector<12x32xf32>,
    } else {
    }
    %c0 = arith.constant 0 : index
    %c0_1 = arith.constant 0 : index
    %3 = vector.load %arg33[%c0, %c0_1] : memref<12x32xf32, #tpu.memory_space<vmem>>, vector<12x32xf32>
    %4 = tpu.iota {dimensions = array<i32: 0>} : vector<12x12xi32>
    %5 = tpu.iota {dimensions = array<i32: 1>} : vector<12x12xi32>
    %6 = arith.cmpi sgt, %5, %4 : vector<12x12xi32>
    %cst = arith.constant -1.000000e+30 : f32
    %cst_2 = arith.constant 0.000000e+00 : f32
    %7 = vector.broadcast %cst : f32 to vector<12x12xf32>
    %8 = vector.broadcast %cst_2 : f32 to vector<12x12xf32>
    %9 = arith.select %6, %7, %8 : vector<12x12xi1>, vector<12x12xf32>
    %c0_3 = arith.constant 0 : index
    %c0_4 = arith.constant 0 : index
    %c0_5 = arith.constant 0 : index
    %10 = vector.load %arg8[%c0_3, %c0_4, %c0_5] : memref<1x32x96xbf16, #tpu.memory_space<vmem>>, vector<1x32x96xbf16>
    %11 = vector.shape_cast %10 : vector<1x32x96xbf16> to vector<32x96xbf16>
    %12 = arith.truncf %3 : vector<12x32xf32> to vector<12x32xbf16>
    %cst_6 = arith.constant dense<0.000000e+00> : vector<12x96xf32>
    %13 = tpu.matmul %12, %11, %cst_6 {dimension_numbers = #tpu.dot_dimension_numbers<[1], [0], [0], [1], [0, 0, 1, 1], [], []>} : vector<12x32xbf16>, vector<32x96xbf16>, vector<12x96xf32> -> vector<12x96xf32>
    %c0_7 = arith.constant 0 : index
    %c0_8 = arith.constant 0 : index
    %c0_9 = arith.constant 0 : index
    %14 = vector.load %arg9[%c0_7, %c0_8, %c0_9] : memref<1x1x96xf32, #tpu.memory_space<vmem>>, vector<1x1x96xf32>
    %15 = vector.shape_cast %14 : vector<1x1x96xf32> to vector<1x96xf32>
    %16 = vector.broadcast %15 : vector<1x96xf32> to vector<12x96xf32>
    %17 = arith.addf %13, %16 : vector<12x96xf32>
    %18 = vector.extract_strided_slice %17 {offsets = [0, 0], sizes = [12, 32], strides = [1, 1]} : vector<12x96xf32> to vector<12x32xf32>
    %19 = vector.extract_strided_slice %17 {offsets = [0, 32], sizes = [12, 32], strides = [1, 1]} : vector<12x96xf32> to vector<12x32xf32>
    %20 = vector.extract_strided_slice %17 {offsets = [0, 64], sizes = [12, 32], strides = [1, 1]} : vector<12x96xf32> to vector<12x32xf32>
    %c0_10 = arith.constant 0 : index
    %c0_11 = arith.constant 0 : index
    %c0_12 = arith.constant 0 : index
    %21 = vector.load %arg10[%c0_10, %c0_11, %c0_12] : memref<1x32x32xbf16, #tpu.memory_space<vmem>>, vector<1x32x32xbf16>
    %22 = vector.shape_cast %21 : vector<1x32x32xbf16> to vector<32x32xbf16>
    %c0_13 = arith.constant 0 : index
    %c0_14 = arith.constant 0 : index
    %c0_15 = arith.constant 0 : index
    %23 = vector.load %arg11[%c0_13, %c0_14, %c0_15] : memref<1x1x32xf32, #tpu.memory_space<vmem>>, vector<1x1x32xf32>
    %24 = vector.shape_cast %23 : vector<1x1x32xf32> to vector<1x32xf32>
    %25 = vector.extract_strided_slice %18 {offsets = [0, 0], sizes = [12, 8], strides = [1, 1]} : vector<12x32xf32> to vector<12x8xf32>
    %26 = arith.truncf %25 : vector<12x8xf32> to vector<12x8xbf16>
    %27 = vector.extract_strided_slice %19 {offsets = [0, 0], sizes = [12, 8], strides = [1, 1]} : vector<12x32xf32> to vector<12x8xf32>
    %28 = arith.truncf %27 : vector<12x8xf32> to vector<12x8xbf16>
    %29 = vector.extract_strided_slice %20 {offsets = [0, 0], sizes = [12, 8], strides = [1, 1]} : vector<12x32xf32> to vector<12x8xf32>
    %30 = arith.truncf %29 : vector<12x8xf32> to vector<12x8xbf16>
    %cst_16 = arith.constant dense<0.000000e+00> : vector<12x12xf32>
    %31 = tpu.matmul %26, %28, %cst_16 {dimension_numbers = #tpu.dot_dimension_numbers<[1], [1], [0], [0], [0, 0, 1, 0], [], []>} : vector<12x8xbf16>, vector<12x8xbf16>, vector<12x12xf32> -> vector<12x12xf32>
    %cst_17 = arith.constant 0.353553385 : f32
    %32 = vector.broadcast %cst_17 : f32 to vector<12x12xf32>
    %33 = arith.mulf %31, %32 : vector<12x12xf32>
    %34 = arith.addf %33, %9 : vector<12x12xf32>
    %cst_18 = arith.constant dense<0xFF800000> : vector<12xf32>
    %35 = vector.multi_reduction <maximumf>, %34, %cst_18 [1] : vector<12x12xf32> to vector<12xf32>
    %36 = vector.shape_cast %35 : vector<12xf32> to vector<12x1xf32>
    %37 = vector.broadcast %36 : vector<12x1xf32> to vector<12x12xf32>
    %38 = arith.subf %34, %37 : vector<12x12xf32>
    %39 = math.exp %38 : vector<12x12xf32>
    %cst_19 = arith.constant dense<0.000000e+00> : vector<12xf32>
    %40 = vector.multi_reduction <add>, %39, %cst_19 [1] : vector<12x12xf32> to vector<12xf32>
    %41 = vector.shape_cast %40 : vector<12xf32> to vector<12x1xf32>
    %42 = tpu.reciprocal %41 {approx = true} : vector<12x1xf32> -> vector<12x1xf32>
    %43 = vector.broadcast %42 : vector<12x1xf32> to vector<12x12xf32>
    %44 = arith.mulf %39, %43 : vector<12x12xf32>
    %45 = arith.truncf %44 : vector<12x12xf32> to vector<12x12xbf16>
    %cst_20 = arith.constant dense<0.000000e+00> : vector<12x8xf32>
    %46 = tpu.matmul %45, %30, %cst_20 {dimension_numbers = #tpu.dot_dimension_numbers<[1], [0], [0], [1], [0, 0, 1, 1], [], []>} : vector<12x12xbf16>, vector<12x8xbf16>, vector<12x8xf32> -> vector<12x8xf32>
    %47 = vector.extract_strided_slice %18 {offsets = [0, 8], sizes = [12, 8], strides = [1, 1]} : vector<12x32xf32> to vector<12x8xf32>
    %48 = arith.truncf %47 : vector<12x8xf32> to vector<12x8xbf16>
    %49 = vector.extract_strided_slice %19 {offsets = [0, 8], sizes = [12, 8], strides = [1, 1]} : vector<12x32xf32> to vector<12x8xf32>
    %50 = arith.truncf %49 : vector<12x8xf32> to vector<12x8xbf16>
    %51 = vector.extract_strided_slice %20 {offsets = [0, 8], sizes = [12, 8], strides = [1, 1]} : vector<12x32xf32> to vector<12x8xf32>
    %52 = arith.truncf %51 : vector<12x8xf32> to vector<12x8xbf16>
    %cst_21 = arith.constant dense<0.000000e+00> : vector<12x12xf32>
    %53 = tpu.matmul %48, %50, %cst_21 {dimension_numbers = #tpu.dot_dimension_numbers<[1], [1], [0], [0], [0, 0, 1, 0], [], []>} : vector<12x8xbf16>, vector<12x8xbf16>, vector<12x12xf32> -> vector<12x12xf32>
    %cst_22 = arith.constant 0.353553385 : f32
    %54 = vector.broadcast %cst_22 : f32 to vector<12x12xf32>
    %55 = arith.mulf %53, %54 : vector<12x12xf32>
    %56 = arith.addf %55, %9 : vector<12x12xf32>
    %cst_23 = arith.constant dense<0xFF800000> : vector<12xf32>
    %57 = vector.multi_reduction <maximumf>, %56, %cst_23 [1] : vector<12x12xf32> to vector<12xf32>
    %58 = vector.shape_cast %57 : vector<12xf32> to vector<12x1xf32>
    %59 = vector.broadcast %58 : vector<12x1xf32> to vector<12x12xf32>
    %60 = arith.subf %56, %59 : vector<12x12xf32>
    %61 = math.exp %60 : vector<12x12xf32>
    %cst_24 = arith.constant dense<0.000000e+00> : vector<12xf32>
    %62 = vector.multi_reduction <add>, %61, %cst_24 [1] : vector<12x12xf32> to vector<12xf32>
    %63 = vector.shape_cast %62 : vector<12xf32> to vector<12x1xf32>
    %64 = tpu.reciprocal %63 {approx = true} : vector<12x1xf32> -> vector<12x1xf32>
    %65 = vector.broadcast %64 : vector<12x1xf32> to vector<12x12xf32>
    %66 = arith.mulf %61, %65 : vector<12x12xf32>
    %67 = arith.truncf %66 : vector<12x12xf32> to vector<12x12xbf16>
    %cst_25 = arith.constant dense<0.000000e+00> : vector<12x8xf32>
    %68 = tpu.matmul %67, %52, %cst_25 {dimension_numbers = #tpu.dot_dimension_numbers<[1], [0], [0], [1], [0, 0, 1, 1], [], []>} : vector<12x12xbf16>, vector<12x8xbf16>, vector<12x8xf32> -> vector<12x8xf32>
    %69 = vector.extract_strided_slice %18 {offsets = [0, 16], sizes = [12, 8], strides = [1, 1]} : vector<12x32xf32> to vector<12x8xf32>
    %70 = arith.truncf %69 : vector<12x8xf32> to vector<12x8xbf16>
    %71 = vector.extract_strided_slice %19 {offsets = [0, 16], sizes = [12, 8], strides = [1, 1]} : vector<12x32xf32> to vector<12x8xf32>
    %72 = arith.truncf %71 : vector<12x8xf32> to vector<12x8xbf16>
    %73 = vector.extract_strided_slice %20 {offsets = [0, 16], sizes = [12, 8], strides = [1, 1]} : vector<12x32xf32> to vector<12x8xf32>
    %74 = arith.truncf %73 : vector<12x8xf32> to vector<12x8xbf16>
    %cst_26 = arith.constant dense<0.000000e+00> : vector<12x12xf32>
    %75 = tpu.matmul %70, %72, %cst_26 {dimension_numbers = #tpu.dot_dimension_numbers<[1], [1], [0], [0], [0, 0, 1, 0], [], []>} : vector<12x8xbf16>, vector<12x8xbf16>, vector<12x12xf32> -> vector<12x12xf32>
    %cst_27 = arith.constant 0.353553385 : f32
    %76 = vector.broadcast %cst_27 : f32 to vector<12x12xf32>
    %77 = arith.mulf %75, %76 : vector<12x12xf32>
    %78 = arith.addf %77, %9 : vector<12x12xf32>
    %cst_28 = arith.constant dense<0xFF800000> : vector<12xf32>
    %79 = vector.multi_reduction <maximumf>, %78, %cst_28 [1] : vector<12x12xf32> to vector<12xf32>
    %80 = vector.shape_cast %79 : vector<12xf32> to vector<12x1xf32>
    %81 = vector.broadcast %80 : vector<12x1xf32> to vector<12x12xf32>
    %82 = arith.subf %78, %81 : vector<12x12xf32>
    %83 = math.exp %82 : vector<12x12xf32>
    %cst_29 = arith.constant dense<0.000000e+00> : vector<12xf32>
    %84 = vector.multi_reduction <add>, %83, %cst_29 [1] : vector<12x12xf32> to vector<12xf32>
    %85 = vector.shape_cast %84 : vector<12xf32> to vector<12x1xf32>
    %86 = tpu.reciprocal %85 {approx = true} : vector<12x1xf32> -> vector<12x1xf32>
    %87 = vector.broadcast %86 : vector<12x1xf32> to vector<12x12xf32>
    %88 = arith.mulf %83, %87 : vector<12x12xf32>
    %89 = arith.truncf %88 : vector<12x12xf32> to vector<12x12xbf16>
    %cst_30 = arith.constant dense<0.000000e+00> : vector<12x8xf32>
    %90 = tpu.matmul %89, %74, %cst_30 {dimension_numbers = #tpu.dot_dimension_numbers<[1], [0], [0], [1], [0, 0, 1, 1], [], []>} : vector<12x12xbf16>, vector<12x8xbf16>, vector<12x8xf32> -> vector<12x8xf32>
    %91 = vector.extract_strided_slice %18 {offsets = [0, 24], sizes = [12, 8], strides = [1, 1]} : vector<12x32xf32> to vector<12x8xf32>
    %92 = arith.truncf %91 : vector<12x8xf32> to vector<12x8xbf16>
    %93 = vector.extract_strided_slice %19 {offsets = [0, 24], sizes = [12, 8], strides = [1, 1]} : vector<12x32xf32> to vector<12x8xf32>
    %94 = arith.truncf %93 : vector<12x8xf32> to vector<12x8xbf16>
    %95 = vector.extract_strided_slice %20 {offsets = [0, 24], sizes = [12, 8], strides = [1, 1]} : vector<12x32xf32> to vector<12x8xf32>
    %96 = arith.truncf %95 : vector<12x8xf32> to vector<12x8xbf16>
    %cst_31 = arith.constant dense<0.000000e+00> : vector<12x12xf32>
    %97 = tpu.matmul %92, %94, %cst_31 {dimension_numbers = #tpu.dot_dimension_numbers<[1], [1], [0], [0], [0, 0, 1, 0], [], []>} : vector<12x8xbf16>, vector<12x8xbf16>, vector<12x12xf32> -> vector<12x12xf32>
    %cst_32 = arith.constant 0.353553385 : f32
    %98 = vector.broadcast %cst_32 : f32 to vector<12x12xf32>
    %99 = arith.mulf %97, %98 : vector<12x12xf32>
    %100 = arith.addf %99, %9 : vector<12x12xf32>
    %cst_33 = arith.constant dense<0xFF800000> : vector<12xf32>
    %101 = vector.multi_reduction <maximumf>, %100, %cst_33 [1] : vector<12x12xf32> to vector<12xf32>
    %102 = vector.shape_cast %101 : vector<12xf32> to vector<12x1xf32>
    %103 = vector.broadcast %102 : vector<12x1xf32> to vector<12x12xf32>
    %104 = arith.subf %100, %103 : vector<12x12xf32>
    %105 = math.exp %104 : vector<12x12xf32>
    %cst_34 = arith.constant dense<0.000000e+00> : vector<12xf32>
    %106 = vector.multi_reduction <add>, %105, %cst_34 [1] : vector<12x12xf32> to vector<12xf32>
    %107 = vector.shape_cast %106 : vector<12xf32> to vector<12x1xf32>
    %108 = tpu.reciprocal %107 {approx = true} : vector<12x1xf32> -> vector<12x1xf32>
    %109 = vector.broadcast %108 : vector<12x1xf32> to vector<12x12xf32>
    %110 = arith.mulf %105, %109 : vector<12x12xf32>
    %111 = arith.truncf %110 : vector<12x12xf32> to vector<12x12xbf16>
    %cst_35 = arith.constant dense<0.000000e+00> : vector<12x8xf32>
    %112 = tpu.matmul %111, %96, %cst_35 {dimension_numbers = #tpu.dot_dimension_numbers<[1], [0], [0], [1], [0, 0, 1, 1], [], []>} : vector<12x12xbf16>, vector<12x8xbf16>, vector<12x8xf32> -> vector<12x8xf32>
    %113 = tpu.concatenate %46, %68, %90, %112 in 1 : vector<12x8xf32>, vector<12x8xf32>, vector<12x8xf32>, vector<12x8xf32> -> vector<12x32xf32>
    %114 = arith.truncf %113 : vector<12x32xf32> to vector<12x32xbf16>
    %cst_36 = arith.constant dense<0.000000e+00> : vector<12x32xf32>
    %115 = tpu.matmul %114, %22, %cst_36 {dimension_numbers = #tpu.dot_dimension_numbers<[1], [0], [0], [1], [0, 0, 1, 1], [], []>} : vector<12x32xbf16>, vector<32x32xbf16>, vector<12x32xf32> -> vector<12x32xf32>
    %116 = vector.broadcast %24 : vector<1x32xf32> to vector<12x32xf32>
    %117 = arith.addf %115, %116 : vector<12x32xf32>
    %118 = arith.addf %3, %117 : vector<12x32xf32>
    %c0_37 = arith.constant 0 : index
    %c0_38 = arith.constant 0 : index
    %c0_39 = arith.constant 0 : index
    %119 = vector.load %arg12[%c0_37, %c0_38, %c0_39] : memref<1x1x32xf32, #tpu.memory_space<vmem>>, vector<1x1x32xf32>
    %120 = vector.shape_cast %119 : vector<1x1x32xf32> to vector<1x32xf32>
    %c0_40 = arith.constant 0 : index
    %c0_41 = arith.constant 0 : index
    %c0_42 = arith.constant 0 : index
    %121 = vector.load %arg13[%c0_40, %c0_41, %c0_42] : memref<1x1x32xf32, #tpu.memory_space<vmem>>, vector<1x1x32xf32>
    %122 = vector.shape_cast %121 : vector<1x1x32xf32> to vector<1x32xf32>
    %cst_43 = arith.constant dense<0.000000e+00> : vector<12xf32>
    %123 = vector.multi_reduction <add>, %118, %cst_43 [1] : vector<12x32xf32> to vector<12xf32>
    %124 = vector.shape_cast %123 : vector<12xf32> to vector<12x1xf32>
    %cst_44 = arith.constant 3.200000e+01 : f32
    %125 = vector.broadcast %cst_44 : f32 to vector<12x1xf32>
    %126 = arith.divf %124, %125 : vector<12x1xf32>
    %127 = vector.broadcast %126 : vector<12x1xf32> to vector<12x32xf32>
    %128 = arith.subf %118, %127 : vector<12x32xf32>
    %129 = arith.mulf %128, %128 : vector<12x32xf32>
    %cst_45 = arith.constant dense<0.000000e+00> : vector<12xf32>
    %130 = vector.multi_reduction <add>, %129, %cst_45 [1] : vector<12x32xf32> to vector<12xf32>
    %131 = vector.shape_cast %130 : vector<12xf32> to vector<12x1xf32>
    %cst_46 = arith.constant 3.200000e+01 : f32
    %132 = vector.broadcast %cst_46 : f32 to vector<12x1xf32>
    %133 = arith.divf %131, %132 : vector<12x1xf32>
    %cst_47 = arith.constant 9.99999974E-6 : f32
    %134 = vector.broadcast %cst_47 : f32 to vector<12x1xf32>
    %135 = arith.addf %133, %134 : vector<12x1xf32>
    %136 = math.rsqrt %135 : vector<12x1xf32>
    %137 = vector.broadcast %136 : vector<12x1xf32> to vector<12x32xf32>
    %138 = arith.mulf %128, %137 : vector<12x32xf32>
    %139 = vector.broadcast %120 : vector<1x32xf32> to vector<12x32xf32>
    %140 = arith.mulf %138, %139 : vector<12x32xf32>
    %141 = vector.broadcast %122 : vector<1x32xf32> to vector<12x32xf32>
    %142 = arith.addf %140, %141 : vector<12x32xf32>
    %c0_48 = arith.constant 0 : index
    %c0_49 = arith.constant 0 : index
    %c0_50 = arith.constant 0 : index
    %143 = vector.load %arg7[%c0_48, %c0_49, %c0_50] : memref<1x13x32xf32, #tpu.memory_space<vmem>>, vector<1x13x32xf32>
    %144 = vector.shape_cast %143 : vector<1x13x32xf32> to vector<13x32xf32>
    %c0_51 = arith.constant 0 : index
    %c0_52 = arith.constant 0 : index
    %c0_53 = arith.constant 0 : index
    %145 = vector.load %arg14[%c0_51, %c0_52, %c0_53] : memref<1x32x32xbf16, #tpu.memory_space<vmem>>, vector<1x32x32xbf16>
    %146 = vector.shape_cast %145 : vector<1x32x32xbf16> to vector<32x32xbf16>
    %147 = arith.truncf %142 : vector<12x32xf32> to vector<12x32xbf16>
    %cst_54 = arith.constant dense<0.000000e+00> : vector<12x32xf32>
    %148 = tpu.matmul %147, %146, %cst_54 {dimension_numbers = #tpu.dot_dimension_numbers<[1], [0], [0], [1], [0, 0, 1, 1], [], []>} : vector<12x32xbf16>, vector<32x32xbf16>, vector<12x32xf32> -> vector<12x32xf32>
    %c0_55 = arith.constant 0 : index
    %c0_56 = arith.constant 0 : index
    %c0_57 = arith.constant 0 : index
    %149 = vector.load %arg15[%c0_55, %c0_56, %c0_57] : memref<1x1x32xf32, #tpu.memory_space<vmem>>, vector<1x1x32xf32>
    %150 = vector.shape_cast %149 : vector<1x1x32xf32> to vector<1x32xf32>
    %151 = vector.broadcast %150 : vector<1x32xf32> to vector<12x32xf32>
    %152 = arith.addf %148, %151 : vector<12x32xf32>
    %c0_58 = arith.constant 0 : index
    %c0_59 = arith.constant 0 : index
    %c0_60 = arith.constant 0 : index
    %153 = vector.load %arg16[%c0_58, %c0_59, %c0_60] : memref<1x32x64xbf16, #tpu.memory_space<vmem>>, vector<1x32x64xbf16>
    %154 = vector.shape_cast %153 : vector<1x32x64xbf16> to vector<32x64xbf16>
    %155 = arith.truncf %144 : vector<13x32xf32> to vector<13x32xbf16>
    %cst_61 = arith.constant dense<0.000000e+00> : vector<13x64xf32>
    %156 = tpu.matmul %155, %154, %cst_61 {dimension_numbers = #tpu.dot_dimension_numbers<[1], [0], [0], [1], [0, 0, 1, 1], [], []>} : vector<13x32xbf16>, vector<32x64xbf16>, vector<13x64xf32> -> vector<13x64xf32>
    %c0_62 = arith.constant 0 : index
    %c0_63 = arith.constant 0 : index
    %c0_64 = arith.constant 0 : index
    %157 = vector.load %arg17[%c0_62, %c0_63, %c0_64] : memref<1x1x64xf32, #tpu.memory_space<vmem>>, vector<1x1x64xf32>
    %158 = vector.shape_cast %157 : vector<1x1x64xf32> to vector<1x64xf32>
    %159 = vector.broadcast %158 : vector<1x64xf32> to vector<13x64xf32>
    %160 = arith.addf %156, %159 : vector<13x64xf32>
    %161 = vector.extract_strided_slice %160 {offsets = [0, 0], sizes = [13, 32], strides = [1, 1]} : vector<13x64xf32> to vector<13x32xf32>
    %162 = vector.extract_strided_slice %160 {offsets = [0, 32], sizes = [13, 32], strides = [1, 1]} : vector<13x64xf32> to vector<13x32xf32>
    %c0_65 = arith.constant 0 : index
    %c0_66 = arith.constant 0 : index
    %c0_67 = arith.constant 0 : index
    %163 = vector.load %arg18[%c0_65, %c0_66, %c0_67] : memref<1x32x32xbf16, #tpu.memory_space<vmem>>, vector<1x32x32xbf16>
    %164 = vector.shape_cast %163 : vector<1x32x32xbf16> to vector<32x32xbf16>
    %c0_68 = arith.constant 0 : index
    %c0_69 = arith.constant 0 : index
    %c0_70 = arith.constant 0 : index
    %165 = vector.load %arg19[%c0_68, %c0_69, %c0_70] : memref<1x1x32xf32, #tpu.memory_space<vmem>>, vector<1x1x32xf32>
    %166 = vector.shape_cast %165 : vector<1x1x32xf32> to vector<1x32xf32>
    %167 = vector.extract_strided_slice %152 {offsets = [0, 0], sizes = [12, 8], strides = [1, 1]} : vector<12x32xf32> to vector<12x8xf32>
    %168 = arith.truncf %167 : vector<12x8xf32> to vector<12x8xbf16>
    %169 = vector.extract_strided_slice %161 {offsets = [0, 0], sizes = [13, 8], strides = [1, 1]} : vector<13x32xf32> to vector<13x8xf32>
    %170 = arith.truncf %169 : vector<13x8xf32> to vector<13x8xbf16>
    %171 = vector.extract_strided_slice %162 {offsets = [0, 0], sizes = [13, 8], strides = [1, 1]} : vector<13x32xf32> to vector<13x8xf32>
    %172 = arith.truncf %171 : vector<13x8xf32> to vector<13x8xbf16>
    %cst_71 = arith.constant dense<0.000000e+00> : vector<12x13xf32>
    %173 = tpu.matmul %168, %170, %cst_71 {dimension_numbers = #tpu.dot_dimension_numbers<[1], [1], [0], [0], [0, 0, 1, 0], [], []>} : vector<12x8xbf16>, vector<13x8xbf16>, vector<12x13xf32> -> vector<12x13xf32>
    %cst_72 = arith.constant 0.353553385 : f32
    %174 = vector.broadcast %cst_72 : f32 to vector<12x13xf32>
    %175 = arith.mulf %173, %174 : vector<12x13xf32>
    %cst_73 = arith.constant dense<0xFF800000> : vector<12xf32>
    %176 = vector.multi_reduction <maximumf>, %175, %cst_73 [1] : vector<12x13xf32> to vector<12xf32>
    %177 = vector.shape_cast %176 : vector<12xf32> to vector<12x1xf32>
    %178 = vector.broadcast %177 : vector<12x1xf32> to vector<12x13xf32>
    %179 = arith.subf %175, %178 : vector<12x13xf32>
    %180 = math.exp %179 : vector<12x13xf32>
    %cst_74 = arith.constant dense<0.000000e+00> : vector<12xf32>
    %181 = vector.multi_reduction <add>, %180, %cst_74 [1] : vector<12x13xf32> to vector<12xf32>
    %182 = vector.shape_cast %181 : vector<12xf32> to vector<12x1xf32>
    %183 = tpu.reciprocal %182 {approx = true} : vector<12x1xf32> -> vector<12x1xf32>
    %184 = vector.broadcast %183 : vector<12x1xf32> to vector<12x13xf32>
    %185 = arith.mulf %180, %184 : vector<12x13xf32>
    %186 = arith.truncf %185 : vector<12x13xf32> to vector<12x13xbf16>
    %cst_75 = arith.constant dense<0.000000e+00> : vector<12x8xf32>
    %187 = tpu.matmul %186, %172, %cst_75 {dimension_numbers = #tpu.dot_dimension_numbers<[1], [0], [0], [1], [0, 0, 1, 1], [], []>} : vector<12x13xbf16>, vector<13x8xbf16>, vector<12x8xf32> -> vector<12x8xf32>
    %188 = vector.extract_strided_slice %152 {offsets = [0, 8], sizes = [12, 8], strides = [1, 1]} : vector<12x32xf32> to vector<12x8xf32>
    %189 = arith.truncf %188 : vector<12x8xf32> to vector<12x8xbf16>
    %190 = vector.extract_strided_slice %161 {offsets = [0, 8], sizes = [13, 8], strides = [1, 1]} : vector<13x32xf32> to vector<13x8xf32>
    %191 = arith.truncf %190 : vector<13x8xf32> to vector<13x8xbf16>
    %192 = vector.extract_strided_slice %162 {offsets = [0, 8], sizes = [13, 8], strides = [1, 1]} : vector<13x32xf32> to vector<13x8xf32>
    %193 = arith.truncf %192 : vector<13x8xf32> to vector<13x8xbf16>
    %cst_76 = arith.constant dense<0.000000e+00> : vector<12x13xf32>
    %194 = tpu.matmul %189, %191, %cst_76 {dimension_numbers = #tpu.dot_dimension_numbers<[1], [1], [0], [0], [0, 0, 1, 0], [], []>} : vector<12x8xbf16>, vector<13x8xbf16>, vector<12x13xf32> -> vector<12x13xf32>
    %cst_77 = arith.constant 0.353553385 : f32
    %195 = vector.broadcast %cst_77 : f32 to vector<12x13xf32>
    %196 = arith.mulf %194, %195 : vector<12x13xf32>
    %cst_78 = arith.constant dense<0xFF800000> : vector<12xf32>
    %197 = vector.multi_reduction <maximumf>, %196, %cst_78 [1] : vector<12x13xf32> to vector<12xf32>
    %198 = vector.shape_cast %197 : vector<12xf32> to vector<12x1xf32>
    %199 = vector.broadcast %198 : vector<12x1xf32> to vector<12x13xf32>
    %200 = arith.subf %196, %199 : vector<12x13xf32>
    %201 = math.exp %200 : vector<12x13xf32>
    %cst_79 = arith.constant dense<0.000000e+00> : vector<12xf32>
    %202 = vector.multi_reduction <add>, %201, %cst_79 [1] : vector<12x13xf32> to vector<12xf32>
    %203 = vector.shape_cast %202 : vector<12xf32> to vector<12x1xf32>
    %204 = tpu.reciprocal %203 {approx = true} : vector<12x1xf32> -> vector<12x1xf32>
    %205 = vector.broadcast %204 : vector<12x1xf32> to vector<12x13xf32>
    %206 = arith.mulf %201, %205 : vector<12x13xf32>
    %207 = arith.truncf %206 : vector<12x13xf32> to vector<12x13xbf16>
    %cst_80 = arith.constant dense<0.000000e+00> : vector<12x8xf32>
    %208 = tpu.matmul %207, %193, %cst_80 {dimension_numbers = #tpu.dot_dimension_numbers<[1], [0], [0], [1], [0, 0, 1, 1], [], []>} : vector<12x13xbf16>, vector<13x8xbf16>, vector<12x8xf32> -> vector<12x8xf32>
    %209 = vector.extract_strided_slice %152 {offsets = [0, 16], sizes = [12, 8], strides = [1, 1]} : vector<12x32xf32> to vector<12x8xf32>
    %210 = arith.truncf %209 : vector<12x8xf32> to vector<12x8xbf16>
    %211 = vector.extract_strided_slice %161 {offsets = [0, 16], sizes = [13, 8], strides = [1, 1]} : vector<13x32xf32> to vector<13x8xf32>
    %212 = arith.truncf %211 : vector<13x8xf32> to vector<13x8xbf16>
    %213 = vector.extract_strided_slice %162 {offsets = [0, 16], sizes = [13, 8], strides = [1, 1]} : vector<13x32xf32> to vector<13x8xf32>
    %214 = arith.truncf %213 : vector<13x8xf32> to vector<13x8xbf16>
    %cst_81 = arith.constant dense<0.000000e+00> : vector<12x13xf32>
    %215 = tpu.matmul %210, %212, %cst_81 {dimension_numbers = #tpu.dot_dimension_numbers<[1], [1], [0], [0], [0, 0, 1, 0], [], []>} : vector<12x8xbf16>, vector<13x8xbf16>, vector<12x13xf32> -> vector<12x13xf32>
    %cst_82 = arith.constant 0.353553385 : f32
    %216 = vector.broadcast %cst_82 : f32 to vector<12x13xf32>
    %217 = arith.mulf %215, %216 : vector<12x13xf32>
    %cst_83 = arith.constant dense<0xFF800000> : vector<12xf32>
    %218 = vector.multi_reduction <maximumf>, %217, %cst_83 [1] : vector<12x13xf32> to vector<12xf32>
    %219 = vector.shape_cast %218 : vector<12xf32> to vector<12x1xf32>
    %220 = vector.broadcast %219 : vector<12x1xf32> to vector<12x13xf32>
    %221 = arith.subf %217, %220 : vector<12x13xf32>
    %222 = math.exp %221 : vector<12x13xf32>
    %cst_84 = arith.constant dense<0.000000e+00> : vector<12xf32>
    %223 = vector.multi_reduction <add>, %222, %cst_84 [1] : vector<12x13xf32> to vector<12xf32>
    %224 = vector.shape_cast %223 : vector<12xf32> to vector<12x1xf32>
    %225 = tpu.reciprocal %224 {approx = true} : vector<12x1xf32> -> vector<12x1xf32>
    %226 = vector.broadcast %225 : vector<12x1xf32> to vector<12x13xf32>
    %227 = arith.mulf %222, %226 : vector<12x13xf32>
    %228 = arith.truncf %227 : vector<12x13xf32> to vector<12x13xbf16>
    %cst_85 = arith.constant dense<0.000000e+00> : vector<12x8xf32>
    %229 = tpu.matmul %228, %214, %cst_85 {dimension_numbers = #tpu.dot_dimension_numbers<[1], [0], [0], [1], [0, 0, 1, 1], [], []>} : vector<12x13xbf16>, vector<13x8xbf16>, vector<12x8xf32> -> vector<12x8xf32>
    %230 = vector.extract_strided_slice %152 {offsets = [0, 24], sizes = [12, 8], strides = [1, 1]} : vector<12x32xf32> to vector<12x8xf32>
    %231 = arith.truncf %230 : vector<12x8xf32> to vector<12x8xbf16>
    %232 = vector.extract_strided_slice %161 {offsets = [0, 24], sizes = [13, 8], strides = [1, 1]} : vector<13x32xf32> to vector<13x8xf32>
    %233 = arith.truncf %232 : vector<13x8xf32> to vector<13x8xbf16>
    %234 = vector.extract_strided_slice %162 {offsets = [0, 24], sizes = [13, 8], strides = [1, 1]} : vector<13x32xf32> to vector<13x8xf32>
    %235 = arith.truncf %234 : vector<13x8xf32> to vector<13x8xbf16>
    %cst_86 = arith.constant dense<0.000000e+00> : vector<12x13xf32>
    %236 = tpu.matmul %231, %233, %cst_86 {dimension_numbers = #tpu.dot_dimension_numbers<[1], [1], [0], [0], [0, 0, 1, 0], [], []>} : vector<12x8xbf16>, vector<13x8xbf16>, vector<12x13xf32> -> vector<12x13xf32>
    %cst_87 = arith.constant 0.353553385 : f32
    %237 = vector.broadcast %cst_87 : f32 to vector<12x13xf32>
    %238 = arith.mulf %236, %237 : vector<12x13xf32>
    %cst_88 = arith.constant dense<0xFF800000> : vector<12xf32>
    %239 = vector.multi_reduction <maximumf>, %238, %cst_88 [1] : vector<12x13xf32> to vector<12xf32>
    %240 = vector.shape_cast %239 : vector<12xf32> to vector<12x1xf32>
    %241 = vector.broadcast %240 : vector<12x1xf32> to vector<12x13xf32>
    %242 = arith.subf %238, %241 : vector<12x13xf32>
    %243 = math.exp %242 : vector<12x13xf32>
    %cst_89 = arith.constant dense<0.000000e+00> : vector<12xf32>
    %244 = vector.multi_reduction <add>, %243, %cst_89 [1] : vector<12x13xf32> to vector<12xf32>
    %245 = vector.shape_cast %244 : vector<12xf32> to vector<12x1xf32>
    %246 = tpu.reciprocal %245 {approx = true} : vector<12x1xf32> -> vector<12x1xf32>
    %247 = vector.broadcast %246 : vector<12x1xf32> to vector<12x13xf32>
    %248 = arith.mulf %243, %247 : vector<12x13xf32>
    %249 = arith.truncf %248 : vector<12x13xf32> to vector<12x13xbf16>
    %cst_90 = arith.constant dense<0.000000e+00> : vector<12x8xf32>
    %250 = tpu.matmul %249, %235, %cst_90 {dimension_numbers = #tpu.dot_dimension_numbers<[1], [0], [0], [1], [0, 0, 1, 1], [], []>} : vector<12x13xbf16>, vector<13x8xbf16>, vector<12x8xf32> -> vector<12x8xf32>
    %251 = tpu.concatenate %187, %208, %229, %250 in 1 : vector<12x8xf32>, vector<12x8xf32>, vector<12x8xf32>, vector<12x8xf32> -> vector<12x32xf32>
    %252 = arith.truncf %251 : vector<12x32xf32> to vector<12x32xbf16>
    %cst_91 = arith.constant dense<0.000000e+00> : vector<12x32xf32>
    %253 = tpu.matmul %252, %164, %cst_91 {dimension_numbers = #tpu.dot_dimension_numbers<[1], [0], [0], [1], [0, 0, 1, 1], [], []>} : vector<12x32xbf16>, vector<32x32xbf16>, vector<12x32xf32> -> vector<12x32xf32>
    %254 = vector.broadcast %166 : vector<1x32xf32> to vector<12x32xf32>
    %255 = arith.addf %253, %254 : vector<12x32xf32>
    %256 = arith.addf %142, %255 : vector<12x32xf32>
    %c0_92 = arith.constant 0 : index
    %c0_93 = arith.constant 0 : index
    %c0_94 = arith.constant 0 : index
    %257 = vector.load %arg20[%c0_92, %c0_93, %c0_94] : memref<1x1x32xf32, #tpu.memory_space<vmem>>, vector<1x1x32xf32>
    %258 = vector.shape_cast %257 : vector<1x1x32xf32> to vector<1x32xf32>
    %c0_95 = arith.constant 0 : index
    %c0_96 = arith.constant 0 : index
    %c0_97 = arith.constant 0 : index
    %259 = vector.load %arg21[%c0_95, %c0_96, %c0_97] : memref<1x1x32xf32, #tpu.memory_space<vmem>>, vector<1x1x32xf32>
    %260 = vector.shape_cast %259 : vector<1x1x32xf32> to vector<1x32xf32>
    %cst_98 = arith.constant dense<0.000000e+00> : vector<12xf32>
    %261 = vector.multi_reduction <add>, %256, %cst_98 [1] : vector<12x32xf32> to vector<12xf32>
    %262 = vector.shape_cast %261 : vector<12xf32> to vector<12x1xf32>
    %cst_99 = arith.constant 3.200000e+01 : f32
    %263 = vector.broadcast %cst_99 : f32 to vector<12x1xf32>
    %264 = arith.divf %262, %263 : vector<12x1xf32>
    %265 = vector.broadcast %264 : vector<12x1xf32> to vector<12x32xf32>
    %266 = arith.subf %256, %265 : vector<12x32xf32>
    %267 = arith.mulf %266, %266 : vector<12x32xf32>
    %cst_100 = arith.constant dense<0.000000e+00> : vector<12xf32>
    %268 = vector.multi_reduction <add>, %267, %cst_100 [1] : vector<12x32xf32> to vector<12xf32>
    %269 = vector.shape_cast %268 : vector<12xf32> to vector<12x1xf32>
    %cst_101 = arith.constant 3.200000e+01 : f32
    %270 = vector.broadcast %cst_101 : f32 to vector<12x1xf32>
    %271 = arith.divf %269, %270 : vector<12x1xf32>
    %cst_102 = arith.constant 9.99999974E-6 : f32
    %272 = vector.broadcast %cst_102 : f32 to vector<12x1xf32>
    %273 = arith.addf %271, %272 : vector<12x1xf32>
    %274 = math.rsqrt %273 : vector<12x1xf32>
    %275 = vector.broadcast %274 : vector<12x1xf32> to vector<12x32xf32>
    %276 = arith.mulf %266, %275 : vector<12x32xf32>
    %277 = vector.broadcast %258 : vector<1x32xf32> to vector<12x32xf32>
    %278 = arith.mulf %276, %277 : vector<12x32xf32>
    %279 = vector.broadcast %260 : vector<1x32xf32> to vector<12x32xf32>
    %280 = arith.addf %278, %279 : vector<12x32xf32>
    %c0_103 = arith.constant 0 : index
    %c0_104 = arith.constant 0 : index
    %c0_105 = arith.constant 0 : index
    %281 = vector.load %arg22[%c0_103, %c0_104, %c0_105] : memref<1x32x64xbf16, #tpu.memory_space<vmem>>, vector<1x32x64xbf16>
    %282 = vector.shape_cast %281 : vector<1x32x64xbf16> to vector<32x64xbf16>
    %283 = arith.truncf %280 : vector<12x32xf32> to vector<12x32xbf16>
    %cst_106 = arith.constant dense<0.000000e+00> : vector<12x64xf32>
    %284 = tpu.matmul %283, %282, %cst_106 {dimension_numbers = #tpu.dot_dimension_numbers<[1], [0], [0], [1], [0, 0, 1, 1], [], []>} : vector<12x32xbf16>, vector<32x64xbf16>, vector<12x64xf32> -> vector<12x64xf32>
    %c0_107 = arith.constant 0 : index
    %c0_108 = arith.constant 0 : index
    %c0_109 = arith.constant 0 : index
    %285 = vector.load %arg23[%c0_107, %c0_108, %c0_109] : memref<1x1x64xf32, #tpu.memory_space<vmem>>, vector<1x1x64xf32>
    %286 = vector.shape_cast %285 : vector<1x1x64xf32> to vector<1x64xf32>
    %287 = vector.broadcast %286 : vector<1x64xf32> to vector<12x64xf32>
    %288 = arith.addf %284, %287 : vector<12x64xf32>
    %cst_110 = arith.constant 0.000000e+00 : f32
    %289 = vector.broadcast %cst_110 : f32 to vector<12x64xf32>
    %290 = arith.maximumf %288, %289 : vector<12x64xf32>
    %c0_111 = arith.constant 0 : index
    %c0_112 = arith.constant 0 : index
    %c0_113 = arith.constant 0 : index
    %291 = vector.load %arg24[%c0_111, %c0_112, %c0_113] : memref<1x64x32xbf16, #tpu.memory_space<vmem>>, vector<1x64x32xbf16>
    %292 = vector.shape_cast %291 : vector<1x64x32xbf16> to vector<64x32xbf16>
    %293 = arith.truncf %290 : vector<12x64xf32> to vector<12x64xbf16>
    %cst_114 = arith.constant dense<0.000000e+00> : vector<12x32xf32>
    %294 = tpu.matmul %293, %292, %cst_114 {dimension_numbers = #tpu.dot_dimension_numbers<[1], [0], [0], [1], [0, 0, 1, 1], [], []>} : vector<12x64xbf16>, vector<64x32xbf16>, vector<12x32xf32> -> vector<12x32xf32>
    %295 = arith.addf %280, %294 : vector<12x32xf32>
    %c0_115 = arith.constant 0 : index
    %c0_116 = arith.constant 0 : index
    %c0_117 = arith.constant 0 : index
    %296 = vector.load %arg25[%c0_115, %c0_116, %c0_117] : memref<1x1x32xf32, #tpu.memory_space<vmem>>, vector<1x1x32xf32>
    %297 = vector.shape_cast %296 : vector<1x1x32xf32> to vector<1x32xf32>
    %298 = vector.broadcast %297 : vector<1x32xf32> to vector<12x32xf32>
    %299 = arith.addf %295, %298 : vector<12x32xf32>
    %c0_118 = arith.constant 0 : index
    %c0_119 = arith.constant 0 : index
    %c0_120 = arith.constant 0 : index
    %300 = vector.load %arg26[%c0_118, %c0_119, %c0_120] : memref<1x1x32xf32, #tpu.memory_space<vmem>>, vector<1x1x32xf32>
    %301 = vector.shape_cast %300 : vector<1x1x32xf32> to vector<1x32xf32>
    %c0_121 = arith.constant 0 : index
    %c0_122 = arith.constant 0 : index
    %c0_123 = arith.constant 0 : index
    %302 = vector.load %arg27[%c0_121, %c0_122, %c0_123] : memref<1x1x32xf32, #tpu.memory_space<vmem>>, vector<1x1x32xf32>
    %303 = vector.shape_cast %302 : vector<1x1x32xf32> to vector<1x32xf32>
    %cst_124 = arith.constant dense<0.000000e+00> : vector<12xf32>
    %304 = vector.multi_reduction <add>, %299, %cst_124 [1] : vector<12x32xf32> to vector<12xf32>
    %305 = vector.shape_cast %304 : vector<12xf32> to vector<12x1xf32>
    %cst_125 = arith.constant 3.200000e+01 : f32
    %306 = vector.broadcast %cst_125 : f32 to vector<12x1xf32>
    %307 = arith.divf %305, %306 : vector<12x1xf32>
    %308 = vector.broadcast %307 : vector<12x1xf32> to vector<12x32xf32>
    %309 = arith.subf %299, %308 : vector<12x32xf32>
    %310 = arith.mulf %309, %309 : vector<12x32xf32>
    %cst_126 = arith.constant dense<0.000000e+00> : vector<12xf32>
    %311 = vector.multi_reduction <add>, %310, %cst_126 [1] : vector<12x32xf32> to vector<12xf32>
    %312 = vector.shape_cast %311 : vector<12xf32> to vector<12x1xf32>
    %cst_127 = arith.constant 3.200000e+01 : f32
    %313 = vector.broadcast %cst_127 : f32 to vector<12x1xf32>
    %314 = arith.divf %312, %313 : vector<12x1xf32>
    %cst_128 = arith.constant 9.99999974E-6 : f32
    %315 = vector.broadcast %cst_128 : f32 to vector<12x1xf32>
    %316 = arith.addf %314, %315 : vector<12x1xf32>
    %317 = math.rsqrt %316 : vector<12x1xf32>
    %318 = vector.broadcast %317 : vector<12x1xf32> to vector<12x32xf32>
    %319 = arith.mulf %309, %318 : vector<12x32xf32>
    %320 = vector.broadcast %301 : vector<1x32xf32> to vector<12x32xf32>
    %321 = arith.mulf %319, %320 : vector<12x32xf32>
    %322 = vector.broadcast %303 : vector<1x32xf32> to vector<12x32xf32>
    %323 = arith.addf %321, %322 : vector<12x32xf32>
    %c0_129 = arith.constant 0 : index
    %c0_130 = arith.constant 0 : index
    %324 = vector.load %arg33[%c0_129, %c0_130] : memref<12x32xf32, #tpu.memory_space<vmem>>, vector<12x32xf32>
    tpu.vector_store %arg33[%c0_129, %c0_130], %323 {strides = array<i32>} : memref<12x32xf32, #tpu.memory_space<vmem>>, vector<12x32xf32>,
    %c0_i32_131 = arith.constant 0 : i32
    %325 = arith.cmpi eq, %arg1, %c0_i32_131 : i32
    %326 = arith.extui %325 : i1 to i32
    %c0_i32_132 = arith.constant 0 : i32
    %327 = arith.cmpi ne, %326, %c0_i32_132 : i32
    scf.if %327 {
      %c0_133 = arith.constant 0 : index
      %c0_134 = arith.constant 0 : index
      %328 = vector.load %arg28[%c0_133, %c0_134] : memref<1x32xf32, #tpu.memory_space<vmem>>, vector<1x32xf32>
      %c0_135 = arith.constant 0 : index
      %c0_136 = arith.constant 0 : index
      %329 = vector.load %arg29[%c0_135, %c0_136] : memref<1x32xf32, #tpu.memory_space<vmem>>, vector<1x32xf32>
      %cst_137 = arith.constant dense<0.000000e+00> : vector<12xf32>
      %330 = vector.multi_reduction <add>, %323, %cst_137 [1] : vector<12x32xf32> to vector<12xf32>
      %331 = vector.shape_cast %330 : vector<12xf32> to vector<12x1xf32>
      %cst_138 = arith.constant 3.200000e+01 : f32
      %332 = vector.broadcast %cst_138 : f32 to vector<12x1xf32>
      %333 = arith.divf %331, %332 : vector<12x1xf32>
      %334 = vector.broadcast %333 : vector<12x1xf32> to vector<12x32xf32>
      %335 = arith.subf %323, %334 : vector<12x32xf32>
      %336 = arith.mulf %335, %335 : vector<12x32xf32>
      %cst_139 = arith.constant dense<0.000000e+00> : vector<12xf32>
      %337 = vector.multi_reduction <add>, %336, %cst_139 [1] : vector<12x32xf32> to vector<12xf32>
      %338 = vector.shape_cast %337 : vector<12xf32> to vector<12x1xf32>
      %cst_140 = arith.constant 3.200000e+01 : f32
      %339 = vector.broadcast %cst_140 : f32 to vector<12x1xf32>
      %340 = arith.divf %338, %339 : vector<12x1xf32>
      %cst_141 = arith.constant 9.99999974E-6 : f32
      %341 = vector.broadcast %cst_141 : f32 to vector<12x1xf32>
      %342 = arith.addf %340, %341 : vector<12x1xf32>
      %343 = math.rsqrt %342 : vector<12x1xf32>
      %344 = vector.broadcast %343 : vector<12x1xf32> to vector<12x32xf32>
      %345 = arith.mulf %335, %344 : vector<12x32xf32>
      %346 = vector.broadcast %328 : vector<1x32xf32> to vector<12x32xf32>
      %347 = arith.mulf %345, %346 : vector<12x32xf32>
      %348 = vector.broadcast %329 : vector<1x32xf32> to vector<12x32xf32>
      %349 = arith.addf %347, %348 : vector<12x32xf32>
      %c0_142 = arith.constant 0 : index
      %c0_143 = arith.constant 0 : index
      %350 = vector.load %arg30[%c0_142, %c0_143] : memref<32x4xbf16, #tpu.memory_space<vmem>>, vector<32x4xbf16>
      %351 = arith.truncf %349 : vector<12x32xf32> to vector<12x32xbf16>
      %cst_144 = arith.constant dense<0.000000e+00> : vector<12x4xf32>
      %352 = tpu.matmul %351, %350, %cst_144 {dimension_numbers = #tpu.dot_dimension_numbers<[1], [0], [0], [1], [0, 0, 1, 1], [], []>} : vector<12x32xbf16>, vector<32x4xbf16>, vector<12x4xf32> -> vector<12x4xf32>
      %c0_145 = arith.constant 0 : index
      %c0_146 = arith.constant 0 : index
      %353 = vector.load %arg31[%c0_145, %c0_146] : memref<1x4xf32, #tpu.memory_space<vmem>>, vector<1x4xf32>
      %354 = vector.broadcast %353 : vector<1x4xf32> to vector<12x4xf32>
      %355 = arith.addf %352, %354 : vector<12x4xf32>
      %c0_147 = arith.constant 0 : index
      %c0_148 = arith.constant 0 : index
      %c0_149 = arith.constant 0 : index
      %356 = vector.load %arg32[%c0_147, %c0_148, %c0_149] : memref<1x12x4xf32, #tpu.memory_space<vmem>>, vector<1x12x4xf32>
      %357 = vector.shape_cast %356 : vector<1x12x4xf32> to vector<12x4xf32>
      %358 = vector.shape_cast %355 : vector<12x4xf32> to vector<1x12x4xf32>
      tpu.vector_store %arg32[%c0_147, %c0_148, %c0_149], %358 {strides = array<i32>} : memref<1x12x4xf32, #tpu.memory_space<vmem>>, vector<1x12x4xf32>,
    } else {
    }
    return
  }
  func.func @transform_0(%arg0: i32, %arg1: i32) -> (i32, i32, i32) {
    %c0_i32 = arith.constant 0 : i32
    %c0_i32_0 = arith.constant 0 : i32
    %c0_i32_1 = arith.constant 0 : i32
    return %arg0, %c0_i32, %c0_i32_0 : i32, i32, i32
  }
  func.func @transform_1(%arg0: i32, %arg1: i32) -> (i32, i32, i32) {
    %c0_i32 = arith.constant 0 : i32
    %c0_i32_0 = arith.constant 0 : i32
    %c0_i32_1 = arith.constant 0 : i32
    return %arg0, %c0_i32, %c0_i32_0 : i32, i32, i32
  }
  func.func @transform_2(%arg0: i32, %arg1: i32) -> (i32, i32) {
    %c0_i32 = arith.constant 0 : i32
    %c0_i32_0 = arith.constant 0 : i32
    %c0_i32_1 = arith.constant 0 : i32
    return %c0_i32, %c0_i32_0 : i32, i32
  }
  func.func @transform_3(%arg0: i32, %arg1: i32) -> (i32, i32) {
    %c0_i32 = arith.constant 0 : i32
    %c0_i32_0 = arith.constant 0 : i32
    %c0_i32_1 = arith.constant 0 : i32
    return %c0_i32, %c0_i32_0 : i32, i32
  }
  func.func @transform_4(%arg0: i32, %arg1: i32) -> (i32, i32) {
    %c0_i32 = arith.constant 0 : i32
    %c0_i32_0 = arith.constant 0 : i32
    %c0_i32_1 = arith.constant 0 : i32
    return %c0_i32, %c0_i32_0 : i32, i32
  }
  func.func @transform_5(%arg0: i32, %arg1: i32) -> (i32, i32, i32) {
    %c0_i32 = arith.constant 0 : i32
    %c0_i32_0 = arith.constant 0 : i32
    %c0_i32_1 = arith.constant 0 : i32
    return %arg0, %c0_i32, %c0_i32_0 : i32, i32, i32
  }
  func.func @transform_6(%arg0: i32, %arg1: i32) -> (i32, i32, i32) {
    %c0_i32 = arith.constant 0 : i32
    %c0_i32_0 = arith.constant 0 : i32
    %c0_i32_1 = arith.constant 0 : i32
    return %arg1, %c0_i32, %c0_i32_0 : i32, i32, i32
  }
  func.func @transform_7(%arg0: i32, %arg1: i32) -> (i32, i32, i32) {
    %c0_i32 = arith.constant 0 : i32
    %c0_i32_0 = arith.constant 0 : i32
    %c0_i32_1 = arith.constant 0 : i32
    return %arg1, %c0_i32, %c0_i32_0 : i32, i32, i32
  }
  func.func @transform_8(%arg0: i32, %arg1: i32) -> (i32, i32, i32) {
    %c0_i32 = arith.constant 0 : i32
    %c0_i32_0 = arith.constant 0 : i32
    %c0_i32_1 = arith.constant 0 : i32
    return %arg1, %c0_i32, %c0_i32_0 : i32, i32, i32
  }
  func.func @transform_9(%arg0: i32, %arg1: i32) -> (i32, i32, i32) {
    %c0_i32 = arith.constant 0 : i32
    %c0_i32_0 = arith.constant 0 : i32
    %c0_i32_1 = arith.constant 0 : i32
    return %arg1, %c0_i32, %c0_i32_0 : i32, i32, i32
  }
  func.func @transform_10(%arg0: i32, %arg1: i32) -> (i32, i32, i32) {
    %c0_i32 = arith.constant 0 : i32
    %c0_i32_0 = arith.constant 0 : i32
    %c0_i32_1 = arith.constant 0 : i32
    return %arg1, %c0_i32, %c0_i32_0 : i32, i32, i32
  }
  func.func @transform_11(%arg0: i32, %arg1: i32) -> (i32, i32, i32) {
    %c0_i32 = arith.constant 0 : i32
    %c0_i32_0 = arith.constant 0 : i32
    %c0_i32_1 = arith.constant 0 : i32
    return %arg1, %c0_i32, %c0_i32_0 : i32, i32, i32
  }
  func.func @transform_12(%arg0: i32, %arg1: i32) -> (i32, i32, i32) {
    %c0_i32 = arith.constant 0 : i32
    %c0_i32_0 = arith.constant 0 : i32
    %c0_i32_1 = arith.constant 0 : i32
    return %arg1, %c0_i32, %c0_i32_0 : i32, i32, i32
  }
  func.func @transform_13(%arg0: i32, %arg1: i32) -> (i32, i32, i32) {
    %c0_i32 = arith.constant 0 : i32
    %c0_i32_0 = arith.constant 0 : i32
    %c0_i32_1 = arith.constant 0 : i32
    return %arg1, %c0_i32, %c0_i32_0 : i32, i32, i32
  }
  func.func @transform_14(%arg0: i32, %arg1: i32) -> (i32, i32, i32) {
    %c0_i32 = arith.constant 0 : i32
    %c0_i32_0 = arith.constant 0 : i32
    %c0_i32_1 = arith.constant 0 : i32
    return %arg1, %c0_i32, %c0_i32_0 : i32, i32, i32
  }
  func.func @transform_15(%arg0: i32, %arg1: i32) -> (i32, i32, i32) {
    %c0_i32 = arith.constant 0 : i32
    %c0_i32_0 = arith.constant 0 : i32
    %c0_i32_1 = arith.constant 0 : i32
    return %arg1, %c0_i32, %c0_i32_0 : i32, i32, i32
  }
  func.func @transform_16(%arg0: i32, %arg1: i32) -> (i32, i32, i32) {
    %c0_i32 = arith.constant 0 : i32
    %c0_i32_0 = arith.constant 0 : i32
    %c0_i32_1 = arith.constant 0 : i32
    return %arg1, %c0_i32, %c0_i32_0 : i32, i32, i32
  }
  func.func @transform_17(%arg0: i32, %arg1: i32) -> (i32, i32, i32) {
    %c0_i32 = arith.constant 0 : i32
    %c0_i32_0 = arith.constant 0 : i32
    %c0_i32_1 = arith.constant 0 : i32
    return %arg1, %c0_i32, %c0_i32_0 : i32, i32, i32
  }
  func.func @transform_18(%arg0: i32, %arg1: i32) -> (i32, i32, i32) {
    %c0_i32 = arith.constant 0 : i32
    %c0_i32_0 = arith.constant 0 : i32
    %c0_i32_1 = arith.constant 0 : i32
    return %arg1, %c0_i32, %c0_i32_0 : i32, i32, i32
  }
  func.func @transform_19(%arg0: i32, %arg1: i32) -> (i32, i32, i32) {
    %c0_i32 = arith.constant 0 : i32
    %c0_i32_0 = arith.constant 0 : i32
    %c0_i32_1 = arith.constant 0 : i32
    return %arg1, %c0_i32, %c0_i32_0 : i32, i32, i32
  }
  func.func @transform_20(%arg0: i32, %arg1: i32) -> (i32, i32, i32) {
    %c0_i32 = arith.constant 0 : i32
    %c0_i32_0 = arith.constant 0 : i32
    %c0_i32_1 = arith.constant 0 : i32
    return %arg1, %c0_i32, %c0_i32_0 : i32, i32, i32
  }
  func.func @transform_21(%arg0: i32, %arg1: i32) -> (i32, i32, i32) {
    %c0_i32 = arith.constant 0 : i32
    %c0_i32_0 = arith.constant 0 : i32
    %c0_i32_1 = arith.constant 0 : i32
    return %arg1, %c0_i32, %c0_i32_0 : i32, i32, i32
  }
  func.func @transform_22(%arg0: i32, %arg1: i32) -> (i32, i32, i32) {
    %c0_i32 = arith.constant 0 : i32
    %c0_i32_0 = arith.constant 0 : i32
    %c0_i32_1 = arith.constant 0 : i32
    return %arg1, %c0_i32, %c0_i32_0 : i32, i32, i32
  }
  func.func @transform_23(%arg0: i32, %arg1: i32) -> (i32, i32, i32) {
    %c0_i32 = arith.constant 0 : i32
    %c0_i32_0 = arith.constant 0 : i32
    %c0_i32_1 = arith.constant 0 : i32
    return %arg1, %c0_i32, %c0_i32_0 : i32, i32, i32
  }
  func.func @transform_24(%arg0: i32, %arg1: i32) -> (i32, i32, i32) {
    %c0_i32 = arith.constant 0 : i32
    %c0_i32_0 = arith.constant 0 : i32
    %c0_i32_1 = arith.constant 0 : i32
    return %arg1, %c0_i32, %c0_i32_0 : i32, i32, i32
  }
  func.func @transform_25(%arg0: i32, %arg1: i32) -> (i32, i32, i32) {
    %c0_i32 = arith.constant 0 : i32
    %c0_i32_0 = arith.constant 0 : i32
    %c0_i32_1 = arith.constant 0 : i32
    return %arg1, %c0_i32, %c0_i32_0 : i32, i32, i32
  }
  func.func @transform_26(%arg0: i32, %arg1: i32) -> (i32, i32) {
    %c0_i32 = arith.constant 0 : i32
    %c0_i32_0 = arith.constant 0 : i32
    %c0_i32_1 = arith.constant 0 : i32
    return %c0_i32, %c0_i32_0 : i32, i32
  }
  func.func @transform_27(%arg0: i32, %arg1: i32) -> (i32, i32) {
    %c0_i32 = arith.constant 0 : i32
    %c0_i32_0 = arith.constant 0 : i32
    %c0_i32_1 = arith.constant 0 : i32
    return %c0_i32, %c0_i32_0 : i32, i32
  }
  func.func @transform_28(%arg0: i32, %arg1: i32) -> (i32, i32) {
    %c0_i32 = arith.constant 0 : i32
    %c0_i32_0 = arith.constant 0 : i32
    %c0_i32_1 = arith.constant 0 : i32
    return %c0_i32, %c0_i32_0 : i32, i32
  }
  func.func @transform_29(%arg0: i32, %arg1: i32) -> (i32, i32) {
    %c0_i32 = arith.constant 0 : i32
    %c0_i32_0 = arith.constant 0 : i32
    %c0_i32_1 = arith.constant 0 : i32
    return %c0_i32, %c0_i32_0 : i32, i32
  }
  func.func @transform_30(%arg0: i32, %arg1: i32) -> (i32, i32, i32) {
    %c0_i32 = arith.constant 0 : i32
    %c0_i32_0 = arith.constant 0 : i32
    %c0_i32_1 = arith.constant 0 : i32
    return %arg0, %c0_i32, %c0_i32_0 : i32, i32, i32
  }
}

</mosaic_0001>

<llo_original>
// kernel: model_forward.3
$region0: #{model_forward.3}
  #allocation0 [shape = 'u32[]', space=smem, size = 0x4, offset = 0x4, fixed_abs, tag = 'smem constant byte address 0x4 - core index']
  #allocation1 [shape = 'u32[144,128]{1,0:T(1,128)}', space=vmem, size = 0x12000, scoped, tag = 'internal scratch']
  %s0 = inlined_call_operand.vmem [shape: f32[2,8,40], index: 0, kind: input, shape index: {}]
  %s1 = inlined_call_operand.vmem [shape: bf16[40,32], index: 1, kind: input, shape index: {}]
  %s2 = inlined_call_operand.vmem [shape: f32[1,32], index: 2, kind: input, shape index: {}]
  %s3 = inlined_call_operand.vmem [shape: bf16[96,32], index: 3, kind: input, shape index: {}]
  %s4 = inlined_call_operand.vmem [shape: f32[1,32], index: 4, kind: input, shape index: {}]
  %s5 = inlined_call_operand.vmem [shape: bf16[32,4], index: 5, kind: input, shape index: {}]
  %s6 = inlined_call_operand.vmem [shape: f32[1,4], index: 6, kind: input, shape index: {}]
  %s7 = inlined_call_operand.vmem [shape: f32[2,6,4], index: 7, kind: output, shape index: {}]
  %s8 = sld [smem:[#allocation0]]
  $region61: #{model_forward.3} parent=0
    _
  %s10 = ssub.s32 1, %s8
  %s11 = scalar_select 0, %s10, %s8
  loop: start=0, step=1, limit=4
  $region2: #{model_forward.3} parent=0 // loop_pre_header
    _
  $region3: #{model_forward.3} parent=0 // loop_header
    %s13 = sphi 0, %s17
    %p14 = scmp.ge.s32.totalorder %s13, 4
    %s23 = sphi 0, %s25
    %s26 = sphi 0, %s23
    %s27 = sphi 0, %s26
    %s43 = sphi 0, %s27
    %s47 = sphi 0, %s47
    %s49 = sphi 0, %s47
    %s50 = sphi 0, %s49
    %s64 = sphi 0, %s50
    %s68 = sphi 0, %s68
    %s70 = sphi 0, %s68
    %s71 = sphi 0, %s70
    %s85 = sphi 0, %s71
    %s89 = sphi 0, %s89
    %s91 = sphi 0, %s89
    %s92 = sphi 0, %s91
    %s106 = sphi 0, %s92
    %s110 = sphi 0, %s110
    %s112 = sphi 0, %s110
    %s113 = sphi 0, %s112
    %s127 = sphi 0, %s113
    %s131 = sphi 0, %s131
    %s133 = sphi 0, %s131
    %s134 = sphi 0, %s133
    %s148 = sphi 0, %s134
    %s152 = sphi 0, %s152
    %s154 = sphi 0, %s152
    %s155 = sphi 0, %s154
    %s169 = sphi 0, %s155
    %s175 = sphi 0, %s177
    %s178 = sphi 0, %s175
    %s179 = sphi 0, %s178
    %s195 = sphi 0, %s179
  $region4: #{model_forward.3} parent=0 // loop_header_branch
    %16 = sbr.rel (%p14) target = $region8
  $region5: #{model_forward.3} parent=0 // loop_body
    %s18 = ssub.s32 %s13, 1
    %s19 = ssub.s32 %s13, 2
    %s20 = sadd.s32 %s13, 1
    %s21 = ssub.s32 %s13, %s20
    %p22 = scmp.eq.s32.totalorder %s21, 0
    %s24 = sadd.s32 %s23, 1
    %s25 = scalar_select %p22, %s23, %s24
    %p28 = pneg %p22
    %p29 = scmp.eq.s32.totalorder %s13, 1
    %p30 = por %p28, %p29
    %p31 = scmp.ne.s32.totalorder %s23, %s26
    %p32 = scmp.eq.s32.totalorder %s13, 0
    %p33 = por %p31, %p32
    %p34 = scmp.ne.s32.totalorder %s23, %s26
    %p35 = scmp.eq.s32.totalorder %s18, 1
    %p36 = por %p34, %p35
    %p37 = scmp.ne.s32.totalorder %s26, %s27
    %p38 = scmp.eq.s32.totalorder %s18, 0
    %p39 = por %p37, %p38
    %p40 = scmp.ne.s32.totalorder %s26, %s27
    %p41 = scmp.eq.s32.totalorder %s19, 1
    %p42 = por %p40, %p41
    %p44 = scmp.ne.s32.totalorder %s27, %s43
    %p45 = scmp.eq.s32.totalorder %s19, 0
    %p46 = por %p44, %p45
    %s48 = sadd.s32 %s47, 1
    %p51 = scmp.eq.s32.totalorder %s13, 1
    %p52 = scmp.ne.s32.totalorder %s47, %s49
    %p53 = scmp.eq.s32.totalorder %s13, 0
    %p54 = por %p52, %p53
    %p55 = scmp.ne.s32.totalorder %s47, %s49
    %p56 = scmp.eq.s32.totalorder %s18, 1
    %p57 = por %p55, %p56
    %p58 = scmp.ne.s32.totalorder %s49, %s50
    %p59 = scmp.eq.s32.totalorder %s18, 0
    %p60 = por %p58, %p59
    %p61 = scmp.ne.s32.totalorder %s49, %s50
    %p62 = scmp.eq.s32.totalorder %s19, 1
    %p63 = por %p61, %p62
    %p65 = scmp.ne.s32.totalorder %s50, %s64
    %p66 = scmp.eq.s32.totalorder %s19, 0
    %p67 = por %p65, %p66
    %s69 = sadd.s32 %s68, 1
    %p72 = scmp.eq.s32.totalorder %s13, 1
    %p73 = scmp.ne.s32.totalorder %s68, %s70
    %p74 = scmp.eq.s32.totalorder %s13, 0
    %p75 = por %p73, %p74
    %p76 = scmp.ne.s32.totalorder %s68, %s70
    %p77 = scmp.eq.s32.totalorder %s18, 1
    %p78 = por %p76, %p77
    %p79 = scmp.ne.s32.totalorder %s70, %s71
    %p80 = scmp.eq.s32.totalorder %s18, 0
    %p81 = por %p79, %p80
    %p82 = scmp.ne.s32.totalorder %s70, %s71
    %p83 = scmp.eq.s32.totalorder %s19, 1
    %p84 = por %p82, %p83
    %p86 = scmp.ne.s32.totalorder %s71, %s85
    %p87 = scmp.eq.s32.totalorder %s19, 0
    %p88 = por %p86, %p87
    %s90 = sadd.s32 %s89, 1
    %p93 = scmp.eq.s32.totalorder %s13, 1
    %p94 = scmp.ne.s32.totalorder %s89, %s91
    %p95 = scmp.eq.s32.totalorder %s13, 0
    %p96 = por %p94, %p95
    %p97 = scmp.ne.s32.totalorder %s89, %s91
    %p98 = scmp.eq.s32.totalorder %s18, 1
    %p99 = por %p97, %p98
    %p100 = scmp.ne.s32.totalorder %s91, %s92
    %p101 = scmp.eq.s32.totalorder %s18, 0
    %p102 = por %p100, %p101
    %p103 = scmp.ne.s32.totalorder %s91, %s92
    %p104 = scmp.eq.s32.totalorder %s19, 1
    %p105 = por %p103, %p104
    %p107 = scmp.ne.s32.totalorder %s92, %s106
    %p108 = scmp.eq.s32.totalorder %s19, 0
    %p109 = por %p107, %p108
    %s111 = sadd.s32 %s110, 1
    %p114 = scmp.eq.s32.totalorder %s13, 1
    %p115 = scmp.ne.s32.totalorder %s110, %s112
    %p116 = scmp.eq.s32.totalorder %s13, 0
    %p117 = por %p115, %p116
    %p118 = scmp.ne.s32.totalorder %s110, %s112
    %p119 = scmp.eq.s32.totalorder %s18, 1
    %p120 = por %p118, %p119
    %p121 = scmp.ne.s32.totalorder %s112, %s113
    %p122 = scmp.eq.s32.totalorder %s18, 0
    %p123 = por %p121, %p122
    %p124 = scmp.ne.s32.totalorder %s112, %s113
    %p125 = scmp.eq.s32.totalorder %s19, 1
    %p126 = por %p124, %p125
    %p128 = scmp.ne.s32.totalorder %s113, %s127
    %p129 = scmp.eq.s32.totalorder %s19, 0
    %p130 = por %p128, %p129
    %s132 = sadd.s32 %s131, 1
    %p135 = scmp.eq.s32.totalorder %s13, 1
    %p136 = scmp.ne.s32.totalorder %s131, %s133
    %p137 = scmp.eq.s32.totalorder %s13, 0
    %p138 = por %p136, %p137
    %p139 = scmp.ne.s32.totalorder %s131, %s133
    %p140 = scmp.eq.s32.totalorder %s18, 1
    %p141 = por %p139, %p140
    %p142 = scmp.ne.s32.totalorder %s133, %s134
    %p143 = scmp.eq.s32.totalorder %s18, 0
    %p144 = por %p142, %p143
    %p145 = scmp.ne.s32.totalorder %s133, %s134
    %p146 = scmp.eq.s32.totalorder %s19, 1
    %p147 = por %p145, %p146
    %p149 = scmp.ne.s32.totalorder %s134, %s148
    %p150 = scmp.eq.s32.totalorder %s19, 0
    %p151 = por %p149, %p150
    %s153 = sadd.s32 %s152, 1
    %p156 = scmp.eq.s32.totalorder %s13, 1
    %p157 = scmp.ne.s32.totalorder %s152, %s154
    %p158 = scmp.eq.s32.totalorder %s13, 0
    %p159 = por %p157, %p158
    %p160 = scmp.ne.s32.totalorder %s152, %s154
    %p161 = scmp.eq.s32.totalorder %s18, 1
    %p162 = por %p160, %p161
    %p163 = scmp.ne.s32.totalorder %s154, %s155
    %p164 = scmp.eq.s32.totalorder %s18, 0
    %p165 = por %p163, %p164
    %p166 = scmp.ne.s32.totalorder %s154, %s155
    %p167 = scmp.eq.s32.totalorder %s19, 1
    %p168 = por %p166, %p167
    %p170 = scmp.ne.s32.totalorder %s155, %s169
    %p171 = scmp.eq.s32.totalorder %s19, 0
    %p172 = por %p170, %p171
    %s173 = ssub.s32 %s13, %s20
    %p174 = scmp.eq.s32.totalorder %s173, 0
    %s176 = sadd.s32 %s175, 1
    %s177 = scalar_select %p174, %s175, %s176
    %p180 = pneg %p174
    %p181 = scmp.eq.s32.totalorder %s13, 1
    %p182 = por %p180, %p181
    %p183 = scmp.ne.s32.totalorder %s175, %s178
    %p184 = scmp.eq.s32.totalorder %s13, 0
    %p185 = por %p183, %p184
    %p186 = scmp.ne.s32.totalorder %s175, %s178
    %p187 = scmp.eq.s32.totalorder %s18, 1
    %p188 = por %p186, %p187
    %p189 = scmp.ne.s32.totalorder %s178, %s179
    %p190 = scmp.eq.s32.totalorder %s18, 0
    %p191 = por %p189, %p190
    %p192 = scmp.ne.s32.totalorder %s178, %s179
    %p193 = scmp.eq.s32.totalorder %s19, 1
    %p194 = por %p192, %p193
    %p196 = scmp.ne.s32.totalorder %s179, %s195
    %p197 = scmp.eq.s32.totalorder %s19, 0
    %p198 = por %p196, %p197
    %p199 = scmp.le.s32.totalorder 1, %s13
    %p200 = scmp.lt.s32.totalorder %s13, 3
    %p201 = pnand %p199, %p200
    %p202 = pneg %p201
    // Predicated region
    $region9: #{model_forward.3} parent=5 // pred_check
      _
    $region10: #{model_forward.3} parent=5 // pred_check_branch
      %204 = sbr.rel (%p201) target = $region12
    $region11: #{model_forward.3} parent=5 // pred_region
      %s205 = ssub.s32 %s13, 1
      // Predicated region
      $region13: #{model_forward.3} parent=11 // pred_check
        %p206 = pneg %p60
      $region14: #{model_forward.3} parent=11 // pred_check_branch
        %208 = sbr.rel (%p206) target = $region16
      $region15: #{model_forward.3} parent=11 // pred_region
        _
      $region16: #{model_forward.3} parent=11 // pred_fallthru
        _
      // Predicated region
      $region17: #{model_forward.3} parent=11 // pred_check
        %p209 = pneg %p81
      $region18: #{model_forward.3} parent=11 // pred_check_branch
        %211 = sbr.rel (%p209) target = $region20
      $region19: #{model_forward.3} parent=11 // pred_region
        _
      $region20: #{model_forward.3} parent=11 // pred_fallthru
        _
      // Predicated region
      $region21: #{model_forward.3} parent=11 // pred_check
        %p212 = pneg %p102
      $region22: #{model_forward.3} parent=11 // pred_check_branch
        %214 = sbr.rel (%p212) target = $region24
      $region23: #{model_forward.3} parent=11 // pred_region
        _
      $region24: #{model_forward.3} parent=11 // pred_fallthru
        _
      // Predicated region
      $region25: #{model_forward.3} parent=11 // pred_check
        %p215 = pneg %p123
      $region26: #{model_forward.3} parent=11 // pred_check_branch
        %217 = sbr.rel (%p215) target = $region28
      $region27: #{model_forward.3} parent=11 // pred_region
        _
      $region28: #{model_forward.3} parent=11 // pred_fallthru
        _
      // Predicated region
      $region29: #{model_forward.3} parent=11 // pred_check
        %p218 = pneg %p144
      $region30: #{model_forward.3} parent=11 // pred_check_branch
        %220 = sbr.rel (%p218) target = $region32
      $region31: #{model_forward.3} parent=11 // pred_region
        _
      $region32: #{model_forward.3} parent=11 // pred_fallthru
        _
      // Predicated region
      $region33: #{model_forward.3} parent=11 // pred_check
        %p221 = pneg %p165
      $region34: #{model_forward.3} parent=11 // pred_check_branch
        %223 = sbr.rel (%p221) target = $region36
      $region35: #{model_forward.3} parent=11 // pred_region
        _
      $region36: #{model_forward.3} parent=11 // pred_fallthru
        _
    $region12: #{model_forward.3} parent=5 // pred_fallthru
      _
    %p224 = scmp.lt.s32.totalorder %s13, 2
    // Predicated region
    $region37: #{model_forward.3} parent=5 // pred_check
      %p225 = pneg %p224
    $region38: #{model_forward.3} parent=5 // pred_check_branch
      %227 = sbr.rel (%p225) target = $region40
    $region39: #{model_forward.3} parent=5 // pred_region
      // Predicated region
      $region41: #{model_forward.3} parent=39 // pred_check
        %p228 = pneg %p33
      $region42: #{model_forward.3} parent=39 // pred_check_branch
        %230 = sbr.rel (%p228) target = $region44
      $region43: #{model_forward.3} parent=39 // pred_region
        %p231 = scmp.lt.s32.totalorder %s13, 1
        %s232 = scalar_select %p231, %s13, 1
        %s233 = smul.addr %s232, 8
        %s234 = scalar_lea.vmem %s0, %s233
      $region44: #{model_forward.3} parent=39 // pred_fallthru
        _
    $region40: #{model_forward.3} parent=5 // pred_fallthru
      _
    %p235 = scmp.le.s32.totalorder 1, %s13
    %p236 = scmp.lt.s32.totalorder %s13, 3
    %p237 = pnand %p235, %p236
    %p238 = pneg %p237
    // Predicated region
    $region45: #{model_forward.3} parent=5 // pred_check
      _
    $region46: #{model_forward.3} parent=5 // pred_check_branch
      %240 = sbr.rel (%p237) target = $region48
    $region47: #{model_forward.3} parent=5 // pred_region
      %s241 = ssub.s32 %s13, 1
      %p242 = scmp.lt.s32.totalorder %s18, 1
      %s243 = scalar_select %p242, %s18, 1
      %s244 = smul.addr %s243, 8
      %s245 = scalar_lea.vmem %s0, %s244
      %p246 = pneg %p39
      %p247 = pneg %p36
      %p248 = pneg %p60
      %p249 = pneg %p57
      %p250 = pneg %p81
      %p251 = pneg %p78
      %p252 = pneg %p102
      %p253 = pneg %p99
      %p254 = pneg %p123
      %p255 = pneg %p120
      %p256 = pneg %p144
      %p257 = pneg %p141
      %p258 = pneg %p165
      %p259 = pneg %p162
      %p260 = pneg %p191
      %p261 = pneg %p188
      %p262 = scmp.lt.s32.totalorder %s18, 1
      %s263 = scalar_select %p262, %s18, 1
      %s264 = smul.addr %s263, 8
      %s265 = scalar_lea.vmem %s7, %s264
      %p266 = scmp.lt.s32.totalorder %s18, 1
      %s267 = scalar_select %p266, %s18, 1
      %s268 = smul.addr %s267, 8
      %s269 = scalar_lea.vmem %s0, %s268
      %p270 = scmp.lt.s32.totalorder %s18, 1
      %s271 = scalar_select %p270, %s18, 1
      %s272 = smul.addr %s271, 8
      %s273 = scalar_lea.vmem %s7, %s272
      %v275 = vld [vmem:[%s269] sm:$0xff]
      %v276 = vld [vmem:[%s1] sm:$0xf]
      %v277 = vld [vmem:[%s1 + $0x4] sm:$0xf]
      %v278 = vld [vmem:[%s1 + $0x8] sm:$0xf]
      %v279 = vld [vmem:[%s1 + $0xc] sm:$0xf]
      %v280 = vld [vmem:[%s1 + $0x10] sm:$0xf]
      %v281 = vpack.c.bf16 %v275, %v275
      %v282 = vld [vmem:[%s2] sm:$0x1]
      %v284 = vlaneseq
      %v285 = vshrl.u32 %v284, 7
      %v286 = vsub.s32 0, %v285
      %v287 = vrot.slane %v282, %v286
      %v294 = vunpack.c.l.b16 %v276
      %v295 = vunpack.c.l.b16 %v277
      %v296 = vunpack.c.l.b16 %v278
      %v297 = vunpack.c.l.b16 %v279
      %v298 = vunpack.c.l.b16 %v280
      %v299 = vpack.c.b16 %v295, %v294
      %v300 = vpack.c.b16 %v297, %v296
      %v301 = vpack.c.b16 %v298, %v298
      %vm304 = vcmask 326656
      %v306 = vsel %vm304, %v281, 0
      %vm308 = vcmask 1043456
      %v310 = vsel %vm308, %v301, 0
      %312 = vmatprep.subr.bf16.mxu0 0
      %313 = vmatpush1.bf16.msra.mxu0 %v299
      %314 = vmatprep.subr.bf16.mxu0 0
      %315 = vmatpush1.bf16.msra.mxu0 %v300
      %316 = vmatprep.subr.bf16.mxu0 0
      %317 = vmatpush1.bf16.msra.mxu0 %v310
      %318 = vmatprep.subr.bf16.mxu0 0
      %319 = vmatpush1.bf16.msra.mxu0 0
      %320 = vmatprep.subr.bf16.mxu0 0
      %321 = vmatpush1.bf16.msra.mxu0 0
      %322 = vmatprep.subr.bf16.mxu0 0
      %323 = vmatpush1.bf16.msra.mxu0 0
      %324 = vmatprep.subr.bf16.mxu0 0
      %325 = vmatpush1.bf16.msra.mxu0 0
      %326 = vmatprep.subr.bf16.mxu0 0
      %327 = vmatpush1.bf16.msra.mxu0 0
      %328 = vmatprep.subr.bf16.mxu0 0
      %329 = vmatpush1.bf16.msra.mxu0 0
      %330 = vmatprep.subr.bf16.mxu0 0
      %331 = vmatpush1.bf16.msra.mxu0 0
      %332 = vmatprep.subr.bf16.mxu0 0
      %333 = vmatpush1.bf16.msra.mxu0 0
      %334 = vmatprep.subr.bf16.mxu0 0
      %335 = vmatpush1.bf16.msra.mxu0 0
      %336 = vmatprep.subr.bf16.mxu0 0
      %337 = vmatpush1.bf16.msra.mxu0 0
      %338 = vmatprep.subr.bf16.mxu0 0
      %339 = vmatpush1.bf16.msra.mxu0 0
      %340 = vmatprep.subr.bf16.mxu0 0
      %341 = vmatpush1.bf16.msra.mxu0 0
      %342 = vmatprep.subr.bf16.mxu0 0
      %343 = vmatpush1.bf16.msra.mxu0 0
      %344 = vmatprep.mubr.bf16.mxu0 0
      %345 = vmatmul.mubr.bf16.gmra.mrb[0].mxu0 %v306
      %v346 = vpop.f32.mrb[0].mxu0
      %v347 = vadd.f32 %v287, %v346
      %v348 = vpop.f32.mrb[0].mxu0
      %v349 = vpop.f32.mrb[0].mxu0
      %v350 = vpop.f32.mrb[0].mxu0
      %351 = vdwg.mxu0
      %v352 = vmax.f32 %v347, 0.0
      %v354 = vrot.slane %v352, 1
      %355 = vrot.lane.b32.xlu0 %v354, 32
      %v356 = vpop.permute.xlu0 %355
      %v358 = vrot.slane %v352, 2
      %359 = vrot.lane.b32.xlu0 %v358, 64
      %v360 = vpop.permute.xlu0 %359
      %vm362 = vcmask 261120
      %v363 = vsel %vm362, %v352, %v356
      %vm364 = vcmask 523264
      %v365 = vsel %vm364, %v363, %v360
      %v366 = vld [vmem:[%s3] sm:$0xf]
      %v367 = vld [vmem:[%s3 + $0x4] sm:$0xf]
      %v368 = vld [vmem:[%s3 + $0x8] sm:$0xf]
      %v369 = vld [vmem:[%s3 + $0xc] sm:$0xf]
      %v370 = vld [vmem:[%s3 + $0x10] sm:$0xf]
      %v371 = vld [vmem:[%s3 + $0x14] sm:$0xf]
      %v372 = vld [vmem:[%s3 + $0x18] sm:$0xf]
      %v373 = vld [vmem:[%s3 + $0x1c] sm:$0xf]
      %v374 = vld [vmem:[%s3 + $0x20] sm:$0xf]
      %v375 = vld [vmem:[%s3 + $0x24] sm:$0xf]
      %v376 = vld [vmem:[%s3 + $0x28] sm:$0xf]
      %v377 = vld [vmem:[%s3 + $0x2c] sm:$0xf]
      %v378 = vpack.c.bf16 %v365, %v365
      %v379 = vld [vmem:[%s4] sm:$0x1]
      %v381 = vlaneseq
      %v382 = vshrl.u32 %v381, 7
      %v383 = vsub.s32 0, %v382
      %v384 = vrot.slane %v379, %v383
      %v398 = vunpack.c.l.b16 %v366
      %v399 = vunpack.c.l.b16 %v367
      %v400 = vunpack.c.l.b16 %v368
      %v401 = vunpack.c.l.b16 %v369
      %v402 = vunpack.c.l.b16 %v370
      %v403 = vunpack.c.l.b16 %v371
      %v404 = vunpack.c.l.b16 %v372
      %v405 = vunpack.c.l.b16 %v373
      %v406 = vunpack.c.l.b16 %v374
      %v407 = vunpack.c.l.b16 %v375
      %v408 = vunpack.c.l.b16 %v376
      %v409 = vunpack.c.l.b16 %v377
      %v410 = vpack.c.b16 %v399, %v398
      %v411 = vpack.c.b16 %v401, %v400
      %v412 = vpack.c.b16 %v403, %v402
      %v413 = vpack.c.b16 %v405, %v404
      %v414 = vpack.c.b16 %v407, %v406
      %v415 = vpack.c.b16 %v409, %v408
      %vm422 = vcmask 785408
      %v424 = vsel %vm422, %v378, 0
      %426 = vmatprep.subr.bf16.mxu0 0
      %427 = vmatpush1.bf16.msra.mxu0 %v410
      %428 = vmatprep.subr.bf16.mxu0 0
      %429 = vmatpush1.bf16.msra.mxu0 %v411
      %430 = vmatprep.subr.bf16.mxu0 0
      %431 = vmatpush1.bf16.msra.mxu0 %v412
      %432 = vmatprep.subr.bf16.mxu0 0
      %433 = vmatpush1.bf16.msra.mxu0 %v413
      %434 = vmatprep.subr.bf16.mxu0 0
      %435 = vmatpush1.bf16.msra.mxu0 %v414
      %436 = vmatprep.subr.bf16.mxu0 0
      %437 = vmatpush1.bf16.msra.mxu0 %v415
      %438 = vmatprep.subr.bf16.mxu0 0
      %439 = vmatpush1.bf16.msra.mxu0 0
      %440 = vmatprep.subr.bf16.mxu0 0
      %441 = vmatpush1.bf16.msra.mxu0 0
      %442 = vmatprep.subr.bf16.mxu0 0
      %443 = vmatpush1.bf16.msra.mxu0 0
      %444 = vmatprep.subr.bf16.mxu0 0
      %445 = vmatpush1.bf16.msra.mxu0 0
      %446 = vmatprep.subr.bf16.mxu0 0
      %447 = vmatpush1.bf16.msra.mxu0 0
      %448 = vmatprep.subr.bf16.mxu0 0
      %449 = vmatpush1.bf16.msra.mxu0 0
      %450 = vmatprep.subr.bf16.mxu0 0
      %451 = vmatpush1.bf16.msra.mxu0 0
      %452 = vmatprep.subr.bf16.mxu0 0
      %453 = vmatpush1.bf16.msra.mxu0 0
      %454 = vmatprep.subr.bf16.mxu0 0
      %455 = vmatpush1.bf16.msra.mxu0 0
      %456 = vmatprep.subr.bf16.mxu0 0
      %457 = vmatpush1.bf16.msra.mxu0 0
      %458 = vmatprep.mubr.bf16.mxu0 0
      %459 = vmatmul.mubr.bf16.gmra.mrb[0].mxu0 %v424
      %v460 = vpop.f32.mrb[0].mxu0
      %v461 = vadd.f32 %v384, %v460
      %v462 = vpop.f32.mrb[0].mxu0
      %v463 = vpop.f32.mrb[0].mxu0
      %v464 = vpop.f32.mrb[0].mxu0
      %465 = vdwg.mxu0
      %v466 = vmax.f32 %v461, 0.0
      %v467 = vld [vmem:[%s5] sm:$0xf]
      %v468 = vld [vmem:[%s5 + $0x4] sm:$0xf]
      %v469 = vld [vmem:[%s5 + $0x8] sm:$0xf]
      %v470 = vld [vmem:[%s5 + $0xc] sm:$0xf]
      %v471 = vpack.c.bf16 %v466, %v466
      %v472 = vld [vmem:[%s6] sm:$0x1]
      %v474 = vlaneseq
      %v475 = vshrl.u32 %v474, 7
      %v476 = vsub.s32 0, %v475
      %v477 = vrot.slane %v472, %v476
      %v483 = vunpack.c.l.b16 %v467
      %v484 = vunpack.c.l.b16 %v468
      %v485 = vunpack.c.l.b16 %v469
      %v486 = vunpack.c.l.b16 %v470
      %v487 = vpack.c.b16 %v484, %v483
      %v488 = vpack.c.b16 %v486, %v485
      %v492 = vsel %vm362, %v471, 0
      %494 = vmatprep.subr.bf16.mxu0 0
      %495 = vmatpush1.bf16.msra.mxu0 %v487
      %496 = vmatprep.subr.bf16.mxu0 0
      %497 = vmatpush1.bf16.msra.mxu0 %v488
      %498 = vmatprep.subr.bf16.mxu0 0
      %499 = vmatpush1.bf16.msra.mxu0 0
      %500 = vmatprep.subr.bf16.mxu0 0
      %501 = vmatpush1.bf16.msra.mxu0 0
      %502 = vmatprep.subr.bf16.mxu0 0
      %503 = vmatpush1.bf16.msra.mxu0 0
      %504 = vmatprep.subr.bf16.mxu0 0
      %505 = vmatpush1.bf16.msra.mxu0 0
      %506 = vmatprep.subr.bf16.mxu0 0
      %507 = vmatpush1.bf16.msra.mxu0 0
      %508 = vmatprep.subr.bf16.mxu0 0
      %509 = vmatpush1.bf16.msra.mxu0 0
      %510 = vmatprep.subr.bf16.mxu0 0
      %511 = vmatpush1.bf16.msra.mxu0 0
      %512 = vmatprep.subr.bf16.mxu0 0
      %513 = vmatpush1.bf16.msra.mxu0 0
      %514 = vmatprep.subr.bf16.mxu0 0
      %515 = vmatpush1.bf16.msra.mxu0 0
      %516 = vmatprep.subr.bf16.mxu0 0
      %517 = vmatpush1.bf16.msra.mxu0 0
      %518 = vmatprep.subr.bf16.mxu0 0
      %519 = vmatpush1.bf16.msra.mxu0 0
      %520 = vmatprep.subr.bf16.mxu0 0
      %521 = vmatpush1.bf16.msra.mxu0 0
      %522 = vmatprep.subr.bf16.mxu0 0
      %523 = vmatpush1.bf16.msra.mxu0 0
      %524 = vmatprep.subr.bf16.mxu0 0
      %525 = vmatpush1.bf16.msra.mxu0 0
      %526 = vmatprep.mubr.bf16.mxu0 0
      %527 = vmatmul.mubr.bf16.gmra.mrb[0].mxu0 %v492
      %v528 = vpop.f32.mrb[0].mxu0
      %v529 = vadd.f32 %v477, %v528
      %v530 = vpop.f32.mrb[0].mxu0
      %v531 = vpop.f32.mrb[0].mxu0
      %v532 = vpop.f32.mrb[0].mxu0
      %533 = vdwg.mxu0
      %v534 = vmax.f32 %v529, 0.0
      %vm535 = vcmask 29696
      %536 = vst.msk [vmem:[%s273] sm:$0x3f] %vm535, %v534
      %p537 = scmp.lt.s32.totalorder %s18, 1
      %s538 = scalar_select %p537, %s18, 1
      %s539 = smul.addr %s538, 8
      %s540 = scalar_lea.vmem %s7, %s539
      // Predicated region
      $region49: #{model_forward.3} parent=47 // pred_check
        %p541 = pneg %p188
      $region50: #{model_forward.3} parent=47 // pred_check_branch
        %543 = sbr.rel (%p541) target = $region52
      $region51: #{model_forward.3} parent=47 // pred_region
        _
      $region52: #{model_forward.3} parent=47 // pred_fallthru
        _
    $region48: #{model_forward.3} parent=5 // pred_fallthru
      _
    %p544 = scmp.le.s32.totalorder 2, %s13
    // Predicated region
    $region53: #{model_forward.3} parent=5 // pred_check
      %p545 = pneg %p544
    $region54: #{model_forward.3} parent=5 // pred_check_branch
      %547 = sbr.rel (%p545) target = $region56
    $region55: #{model_forward.3} parent=5 // pred_region
      %s548 = ssub.s32 %s13, 2
      // Predicated region
      $region57: #{model_forward.3} parent=55 // pred_check
        %p549 = pneg %p194
      $region58: #{model_forward.3} parent=55 // pred_check_branch
        %551 = sbr.rel (%p549) target = $region60
      $region59: #{model_forward.3} parent=55 // pred_region
        %p552 = scmp.lt.s32.totalorder %s19, 1
        %s553 = scalar_select %p552, %s19, 1
        %s554 = smul.addr %s553, 8
        %s555 = scalar_lea.vmem %s7, %s554
      $region60: #{model_forward.3} parent=55 // pred_fallthru
        _
    $region56: #{model_forward.3} parent=5 // pred_fallthru
      _
  $region6: #{model_forward.3} parent=0 // loop_footer
    %s17 = sadd.s32 1, %s13
  $region7: #{model_forward.3} parent=0 // loop_footer_branch
    %12 = sbr.rel target = $region3
  $region8: #{model_forward.3} parent=0 // loop_exit
    _

// kernel: model_forward.4
$region0: #{model_forward.4}
  #allocation0 [shape = 'u32[]', space=smem, size = 0x4, offset = 0x4, fixed_abs, tag = 'smem constant byte address 0x4 - core index']
  #allocation1 [shape = 'u32[144,128]{1,0:T(1,128)}', space=vmem, size = 0x12000, scoped, tag = 'internal scratch']
  #allocation2 [shape = 'f32[13,32]{1,0:T(8,128)}', space=vmem, size = 0x2000, scoped, tag = 'scratch operand']
  %s0 = inlined_call_operand.vmem [shape: f32[2,13,12], index: 0, kind: input, shape index: {}]
  %s1 = inlined_call_operand.vmem [shape: bf16[12,32], index: 1, kind: input, shape index: {}]
  %s2 = inlined_call_operand.vmem [shape: f32[13,32], index: 2, kind: input, shape index: {}]
  %s3 = inlined_call_operand.vmem [shape: bf16[2,32,96], index: 3, kind: input, shape index: {}]
  %s4 = inlined_call_operand.vmem [shape: f32[2,1,96], index: 4, kind: input, shape index: {}]
  %s5 = inlined_call_operand.vmem [shape: bf16[2,32,32], index: 5, kind: input, shape index: {}]
  %s6 = inlined_call_operand.vmem [shape: f32[2,1,32], index: 6, kind: input, shape index: {}]
  %s7 = inlined_call_operand.vmem [shape: f32[2,1,32], index: 7, kind: input, shape index: {}]
  %s8 = inlined_call_operand.vmem [shape: f32[2,1,32], index: 8, kind: input, shape index: {}]
  %s9 = inlined_call_operand.vmem [shape: bf16[2,32,64], index: 9, kind: input, shape index: {}]
  %s10 = inlined_call_operand.vmem [shape: f32[2,1,64], index: 10, kind: input, shape index: {}]
  %s11 = inlined_call_operand.vmem [shape: bf16[2,64,32], index: 11, kind: input, shape index: {}]
  %s12 = inlined_call_operand.vmem [shape: f32[2,1,32], index: 12, kind: input, shape index: {}]
  %s13 = inlined_call_operand.vmem [shape: f32[2,1,32], index: 13, kind: input, shape index: {}]
  %s14 = inlined_call_operand.vmem [shape: f32[2,1,32], index: 14, kind: input, shape index: {}]
  %s15 = inlined_call_operand.vmem [shape: f32[1,32], index: 15, kind: input, shape index: {}]
  %s16 = inlined_call_operand.vmem [shape: f32[1,32], index: 16, kind: input, shape index: {}]
  %s17 = inlined_call_operand.vmem [shape: f32[2,13,32], index: 17, kind: output, shape index: {}]
  %s18 = sld [smem:[#allocation0]]
  $region109: #{model_forward.4} parent=0
    _
  %s20 = ssub.s32 1, %s18
  %s21 = scalar_select 0, %s20, %s18
  loop: start=0, step=1, limit=6
  $region2: #{model_forward.4} parent=0 // loop_pre_header
    _
  $region3: #{model_forward.4} parent=0 // loop_header
    %s23 = sphi 0, %s27
    %p24 = scmp.ge.s32.totalorder %s23, 6
    %s30 = sphi 0, %s42
    %s31 = sphi 0, %s38
    %s32 = sphi 0, %s30
    %s33 = sphi 0, %s31
    %s34 = sphi 0, %s32
    %s35 = sphi 0, %s33
    %s45 = sphi 0, %s47
    %s48 = sphi 0, %s45
    %s49 = sphi 0, %s48
    %s65 = sphi 0, %s49
    %s69 = sphi 0, %s69
    %s71 = sphi 0, %s69
    %s72 = sphi 0, %s71
    %s86 = sphi 0, %s72
    %s90 = sphi 0, %s90
    %s92 = sphi 0, %s90
    %s93 = sphi 0, %s92
    %s107 = sphi 0, %s93
    %s113 = sphi 0, %s115
    %s116 = sphi 0, %s113
    %s117 = sphi 0, %s116
    %s133 = sphi 0, %s117
    %s139 = sphi 0, %s141
    %s142 = sphi 0, %s139
    %s143 = sphi 0, %s142
    %s159 = sphi 0, %s143
    %s165 = sphi 0, %s167
    %s168 = sphi 0, %s165
    %s169 = sphi 0, %s168
    %s185 = sphi 0, %s169
    %s191 = sphi 0, %s193
    %s194 = sphi 0, %s191
    %s195 = sphi 0, %s194
    %s211 = sphi 0, %s195
    %s217 = sphi 0, %s219
    %s220 = sphi 0, %s217
    %s221 = sphi 0, %s220
    %s237 = sphi 0, %s221
    %s243 = sphi 0, %s245
    %s246 = sphi 0, %s243
    %s247 = sphi 0, %s246
    %s263 = sphi 0, %s247
    %s269 = sphi 0, %s271
    %s272 = sphi 0, %s269
    %s273 = sphi 0, %s272
    %s289 = sphi 0, %s273
    %s295 = sphi 0, %s297
    %s298 = sphi 0, %s295
    %s299 = sphi 0, %s298
    %s315 = sphi 0, %s299
    %s321 = sphi 0, %s323
    %s324 = sphi 0, %s321
    %s325 = sphi 0, %s324
    %s341 = sphi 0, %s325
    %s347 = sphi 0, %s349
    %s350 = sphi 0, %s347
    %s351 = sphi 0, %s350
    %s367 = sphi 0, %s351
    %s373 = sphi 0, %s375
    %s376 = sphi 0, %s373
    %s377 = sphi 0, %s376
    %s393 = sphi 0, %s377
    %s399 = sphi 0, %s401
    %s402 = sphi 0, %s399
    %s403 = sphi 0, %s402
    %s419 = sphi 0, %s403
    %s423 = sphi 0, %s423
    %s425 = sphi 0, %s423
    %s426 = sphi 0, %s425
    %s440 = sphi 0, %s426
    %s444 = sphi 0, %s444
    %s446 = sphi 0, %s444
    %s447 = sphi 0, %s446
    %s461 = sphi 0, %s447
    %s467 = sphi 0, %s469
    %s470 = sphi 0, %s467
    %s471 = sphi 0, %s470
    %s487 = sphi 0, %s471
  $region4: #{model_forward.4} parent=0 // loop_header_branch
    %26 = sbr.rel (%p24) target = $region8
  $region5: #{model_forward.4} parent=0 // loop_body
    %s28 = ssub.s32 %s23, 1
    %s29 = ssub.s32 %s23, 2
    %s36 = sadd.s32 1, %s31
    %p37 = scmp.ge.s32.totalorder %s36, 2
    %s38 = scalar_select %p37, 0, %s36
    %s39 = sadd.s32 1, %s30
    %s40 = scalar_select %p37, %s39, %s30
    %p41 = scmp.ge.s32.totalorder %s40, 2
    %s42 = scalar_select %p41, 0, %s40
    %s43 = ssub.s32 %s30, %s42
    %p44 = scmp.eq.s32.totalorder %s43, 0
    %s46 = sadd.s32 %s45, 1
    %s47 = scalar_select %p44, %s45, %s46
    %p50 = pneg %p44
    %p51 = scmp.eq.s32.totalorder %s23, 3
    %p52 = por %p50, %p51
    %p53 = scmp.ne.s32.totalorder %s45, %s48
    %p54 = scmp.eq.s32.totalorder %s23, 0
    %p55 = por %p53, %p54
    %p56 = scmp.ne.s32.totalorder %s45, %s48
    %p57 = scmp.eq.s32.totalorder %s28, 3
    %p58 = por %p56, %p57
    %p59 = scmp.ne.s32.totalorder %s48, %s49
    %p60 = scmp.eq.s32.totalorder %s28, 0
    %p61 = por %p59, %p60
    %p62 = scmp.ne.s32.totalorder %s48, %s49
    %p63 = scmp.eq.s32.totalorder %s29, 3
    %p64 = por %p62, %p63
    %p66 = scmp.ne.s32.totalorder %s49, %s65
    %p67 = scmp.eq.s32.totalorder %s29, 0
    %p68 = por %p66, %p67
    %s70 = sadd.s32 %s69, 1
    %p73 = scmp.eq.s32.totalorder %s23, 3
    %p74 = scmp.ne.s32.totalorder %s69, %s71
    %p75 = scmp.eq.s32.totalorder %s23, 0
    %p76 = por %p74, %p75
    %p77 = scmp.ne.s32.totalorder %s69, %s71
    %p78 = scmp.eq.s32.totalorder %s28, 3
    %p79 = por %p77, %p78
    %p80 = scmp.ne.s32.totalorder %s71, %s72
    %p81 = scmp.eq.s32.totalorder %s28, 0
    %p82 = por %p80, %p81
    %p83 = scmp.ne.s32.totalorder %s71, %s72
    %p84 = scmp.eq.s32.totalorder %s29, 3
    %p85 = por %p83, %p84
    %p87 = scmp.ne.s32.totalorder %s72, %s86
    %p88 = scmp.eq.s32.totalorder %s29, 0
    %p89 = por %p87, %p88
    %s91 = sadd.s32 %s90, 1
    %p94 = scmp.eq.s32.totalorder %s23, 3
    %p95 = scmp.ne.s32.totalorder %s90, %s92
    %p96 = scmp.eq.s32.totalorder %s23, 0
    %p97 = por %p95, %p96
    %p98 = scmp.ne.s32.totalorder %s90, %s92
    %p99 = scmp.eq.s32.totalorder %s28, 3
    %p100 = por %p98, %p99
    %p101 = scmp.ne.s32.totalorder %s92, %s93
    %p102 = scmp.eq.s32.totalorder %s28, 0
    %p103 = por %p101, %p102
    %p104 = scmp.ne.s32.totalorder %s92, %s93
    %p105 = scmp.eq.s32.totalorder %s29, 3
    %p106 = por %p104, %p105
    %p108 = scmp.ne.s32.totalorder %s93, %s107
    %p109 = scmp.eq.s32.totalorder %s29, 0
    %p110 = por %p108, %p109
    %s111 = ssub.s32 %s31, %s38
    %p112 = scmp.eq.s32.totalorder %s111, 0
    %s114 = sadd.s32 %s113, 1
    %s115 = scalar_select %p112, %s113, %s114
    %p118 = pneg %p112
    %p119 = scmp.eq.s32.totalorder %s23, 3
    %p120 = por %p118, %p119
    %p121 = scmp.ne.s32.totalorder %s113, %s116
    %p122 = scmp.eq.s32.totalorder %s23, 0
    %p123 = por %p121, %p122
    %p124 = scmp.ne.s32.totalorder %s113, %s116
    %p125 = scmp.eq.s32.totalorder %s28, 3
    %p126 = por %p124, %p125
    %p127 = scmp.ne.s32.totalorder %s116, %s117
    %p128 = scmp.eq.s32.totalorder %s28, 0
    %p129 = por %p127, %p128
    %p130 = scmp.ne.s32.totalorder %s116, %s117
    %p131 = scmp.eq.s32.totalorder %s29, 3
    %p132 = por %p130, %p131
    %p134 = scmp.ne.s32.totalorder %s117, %s133
    %p135 = scmp.eq.s32.totalorder %s29, 0
    %p136 = por %p134, %p135
    %s137 = ssub.s32 %s31, %s38
    %p138 = scmp.eq.s32.totalorder %s137, 0
    %s140 = sadd.s32 %s139, 1
    %s141 = scalar_select %p138, %s139, %s140
    %p144 = pneg %p138
    %p145 = scmp.eq.s32.totalorder %s23, 3
    %p146 = por %p144, %p145
    %p147 = scmp.ne.s32.totalorder %s139, %s142
    %p148 = scmp.eq.s32.totalorder %s23, 0
    %p149 = por %p147, %p148
    %p150 = scmp.ne.s32.totalorder %s139, %s142
    %p151 = scmp.eq.s32.totalorder %s28, 3
    %p152 = por %p150, %p151
    %p153 = scmp.ne.s32.totalorder %s142, %s143
    %p154 = scmp.eq.s32.totalorder %s28, 0
    %p155 = por %p153, %p154
    %p156 = scmp.ne.s32.totalorder %s142, %s143
    %p157 = scmp.eq.s32.totalorder %s29, 3
    %p158 = por %p156, %p157
    %p160 = scmp.ne.s32.totalorder %s143, %s159
    %p161 = scmp.eq.s32.totalorder %s29, 0
    %p162 = por %p160, %p161
    %s163 = ssub.s32 %s31, %s38
    %p164 = scmp.eq.s32.totalorder %s163, 0
    %s166 = sadd.s32 %s165, 1
    %s167 = scalar_select %p164, %s165, %s166
    %p170 = pneg %p164
    %p171 = scmp.eq.s32.totalorder %s23, 3
    %p172 = por %p170, %p171
    %p173 = scmp.ne.s32.totalorder %s165, %s168
    %p174 = scmp.eq.s32.totalorder %s23, 0
    %p175 = por %p173, %p174
    %p176 = scmp.ne.s32.totalorder %s165, %s168
    %p177 = scmp.eq.s32.totalorder %s28, 3
    %p178 = por %p176, %p177
    %p179 = scmp.ne.s32.totalorder %s168, %s169
    %p180 = scmp.eq.s32.totalorder %s28, 0
    %p181 = por %p179, %p180
    %p182 = scmp.ne.s32.totalorder %s168, %s169
    %p183 = scmp.eq.s32.totalorder %s29, 3
    %p184 = por %p182, %p183
    %p186 = scmp.ne.s32.totalorder %s169, %s185
    %p187 = scmp.eq.s32.totalorder %s29, 0
    %p188 = por %p186, %p187
    %s189 = ssub.s32 %s31, %s38
    %p190 = scmp.eq.s32.totalorder %s189, 0
    %s192 = sadd.s32 %s191, 1
    %s193 = scalar_select %p190, %s191, %s192
    %p196 = pneg %p190
    %p197 = scmp.eq.s32.totalorder %s23, 3
    %p198 = por %p196, %p197
    %p199 = scmp.ne.s32.totalorder %s191, %s194
    %p200 = scmp.eq.s32.totalorder %s23, 0
    %p201 = por %p199, %p200
    %p202 = scmp.ne.s32.totalorder %s191, %s194
    %p203 = scmp.eq.s32.totalorder %s28, 3
    %p204 = por %p202, %p203
    %p205 = scmp.ne.s32.totalorder %s194, %s195
    %p206 = scmp.eq.s32.totalorder %s28, 0
    %p207 = por %p205, %p206
    %p208 = scmp.ne.s32.totalorder %s194, %s195
    %p209 = scmp.eq.s32.totalorder %s29, 3
    %p210 = por %p208, %p209
    %p212 = scmp.ne.s32.totalorder %s195, %s211
    %p213 = scmp.eq.s32.totalorder %s29, 0
    %p214 = por %p212, %p213
    %s215 = ssub.s32 %s31, %s38
    %p216 = scmp.eq.s32.totalorder %s215, 0
    %s218 = sadd.s32 %s217, 1
    %s219 = scalar_select %p216, %s217, %s218
    %p222 = pneg %p216
    %p223 = scmp.eq.s32.totalorder %s23, 3
    %p224 = por %p222, %p223
    %p225 = scmp.ne.s32.totalorder %s217, %s220
    %p226 = scmp.eq.s32.totalorder %s23, 0
    %p227 = por %p225, %p226
    %p228 = scmp.ne.s32.totalorder %s217, %s220
    %p229 = scmp.eq.s32.totalorder %s28, 3
    %p230 = por %p228, %p229
    %p231 = scmp.ne.s32.totalorder %s220, %s221
    %p232 = scmp.eq.s32.totalorder %s28, 0
    %p233 = por %p231, %p232
    %p234 = scmp.ne.s32.totalorder %s220, %s221
    %p235 = scmp.eq.s32.totalorder %s29, 3
    %p236 = por %p234, %p235
    %p238 = scmp.ne.s32.totalorder %s221, %s237
    %p239 = scmp.eq.s32.totalorder %s29, 0
    %p240 = por %p238, %p239
    %s241 = ssub.s32 %s31, %s38
    %p242 = scmp.eq.s32.totalorder %s241, 0
    %s244 = sadd.s32 %s243, 1
    %s245 = scalar_select %p242, %s243, %s244
    %p248 = pneg %p242
    %p249 = scmp.eq.s32.totalorder %s23, 3
    %p250 = por %p248, %p249
    %p251 = scmp.ne.s32.totalorder %s243, %s246
    %p252 = scmp.eq.s32.totalorder %s23, 0
    %p253 = por %p251, %p252
    %p254 = scmp.ne.s32.totalorder %s243, %s246
    %p255 = scmp.eq.s32.totalorder %s28, 3
    %p256 = por %p254, %p255
    %p257 = scmp.ne.s32.totalorder %s246, %s247
    %p258 = scmp.eq.s32.totalorder %s28, 0
    %p259 = por %p257, %p258
    %p260 = scmp.ne.s32.totalorder %s246, %s247
    %p261 = scmp.eq.s32.totalorder %s29, 3
    %p262 = por %p260, %p261
    %p264 = scmp.ne.s32.totalorder %s247, %s263
    %p265 = scmp.eq.s32.totalorder %s29, 0
    %p266 = por %p264, %p265
    %s267 = ssub.s32 %s31, %s38
    %p268 = scmp.eq.s32.totalorder %s267, 0
    %s270 = sadd.s32 %s269, 1
    %s271 = scalar_select %p268, %s269, %s270
    %p274 = pneg %p268
    %p275 = scmp.eq.s32.totalorder %s23, 3
    %p276 = por %p274, %p275
    %p277 = scmp.ne.s32.totalorder %s269, %s272
    %p278 = scmp.eq.s32.totalorder %s23, 0
    %p279 = por %p277, %p278
    %p280 = scmp.ne.s32.totalorder %s269, %s272
    %p281 = scmp.eq.s32.totalorder %s28, 3
    %p282 = por %p280, %p281
    %p283 = scmp.ne.s32.totalorder %s272, %s273
    %p284 = scmp.eq.s32.totalorder %s28, 0
    %p285 = por %p283, %p284
    %p286 = scmp.ne.s32.totalorder %s272, %s273
    %p287 = scmp.eq.s32.totalorder %s29, 3
    %p288 = por %p286, %p287
    %p290 = scmp.ne.s32.totalorder %s273, %s289
    %p291 = scmp.eq.s32.totalorder %s29, 0
    %p292 = por %p290, %p291
    %s293 = ssub.s32 %s31, %s38
    %p294 = scmp.eq.s32.totalorder %s293, 0
    %s296 = sadd.s32 %s295, 1
    %s297 = scalar_select %p294, %s295, %s296
    %p300 = pneg %p294
    %p301 = scmp.eq.s32.totalorder %s23, 3
    %p302 = por %p300, %p301
    %p303 = scmp.ne.s32.totalorder %s295, %s298
    %p304 = scmp.eq.s32.totalorder %s23, 0
    %p305 = por %p303, %p304
    %p306 = scmp.ne.s32.totalorder %s295, %s298
    %p307 = scmp.eq.s32.totalorder %s28, 3
    %p308 = por %p306, %p307
    %p309 = scmp.ne.s32.totalorder %s298, %s299
    %p310 = scmp.eq.s32.totalorder %s28, 0
    %p311 = por %p309, %p310
    %p312 = scmp.ne.s32.totalorder %s298, %s299
    %p313 = scmp.eq.s32.totalorder %s29, 3
    %p314 = por %p312, %p313
    %p316 = scmp.ne.s32.totalorder %s299, %s315
    %p317 = scmp.eq.s32.totalorder %s29, 0
    %p318 = por %p316, %p317
    %s319 = ssub.s32 %s31, %s38
    %p320 = scmp.eq.s32.totalorder %s319, 0
    %s322 = sadd.s32 %s321, 1
    %s323 = scalar_select %p320, %s321, %s322
    %p326 = pneg %p320
    %p327 = scmp.eq.s32.totalorder %s23, 3
    %p328 = por %p326, %p327
    %p329 = scmp.ne.s32.totalorder %s321, %s324
    %p330 = scmp.eq.s32.totalorder %s23, 0
    %p331 = por %p329, %p330
    %p332 = scmp.ne.s32.totalorder %s321, %s324
    %p333 = scmp.eq.s32.totalorder %s28, 3
    %p334 = por %p332, %p333
    %p335 = scmp.ne.s32.totalorder %s324, %s325
    %p336 = scmp.eq.s32.totalorder %s28, 0
    %p337 = por %p335, %p336
    %p338 = scmp.ne.s32.totalorder %s324, %s325
    %p339 = scmp.eq.s32.totalorder %s29, 3
    %p340 = por %p338, %p339
    %p342 = scmp.ne.s32.totalorder %s325, %s341
    %p343 = scmp.eq.s32.totalorder %s29, 0
    %p344 = por %p342, %p343
    %s345 = ssub.s32 %s31, %s38
    %p346 = scmp.eq.s32.totalorder %s345, 0
    %s348 = sadd.s32 %s347, 1
    %s349 = scalar_select %p346, %s347, %s348
    %p352 = pneg %p346
    %p353 = scmp.eq.s32.totalorder %s23, 3
    %p354 = por %p352, %p353
    %p355 = scmp.ne.s32.totalorder %s347, %s350
    %p356 = scmp.eq.s32.totalorder %s23, 0
    %p357 = por %p355, %p356
    %p358 = scmp.ne.s32.totalorder %s347, %s350
    %p359 = scmp.eq.s32.totalorder %s28, 3
    %p360 = por %p358, %p359
    %p361 = scmp.ne.s32.totalorder %s350, %s351
    %p362 = scmp.eq.s32.totalorder %s28, 0
    %p363 = por %p361, %p362
    %p364 = scmp.ne.s32.totalorder %s350, %s351
    %p365 = scmp.eq.s32.totalorder %s29, 3
    %p366 = por %p364, %p365
    %p368 = scmp.ne.s32.totalorder %s351, %s367
    %p369 = scmp.eq.s32.totalorder %s29, 0
    %p370 = por %p368, %p369
    %s371 = ssub.s32 %s31, %s38
    %p372 = scmp.eq.s32.totalorder %s371, 0
    %s374 = sadd.s32 %s373, 1
    %s375 = scalar_select %p372, %s373, %s374
    %p378 = pneg %p372
    %p379 = scmp.eq.s32.totalorder %s23, 3
    %p380 = por %p378, %p379
    %p381 = scmp.ne.s32.totalorder %s373, %s376
    %p382 = scmp.eq.s32.totalorder %s23, 0
    %p383 = por %p381, %p382
    %p384 = scmp.ne.s32.totalorder %s373, %s376
    %p385 = scmp.eq.s32.totalorder %s28, 3
    %p386 = por %p384, %p385
    %p387 = scmp.ne.s32.totalorder %s376, %s377
    %p388 = scmp.eq.s32.totalorder %s28, 0
    %p389 = por %p387, %p388
    %p390 = scmp.ne.s32.totalorder %s376, %s377
    %p391 = scmp.eq.s32.totalorder %s29, 3
    %p392 = por %p390, %p391
    %p394 = scmp.ne.s32.totalorder %s377, %s393
    %p395 = scmp.eq.s32.totalorder %s29, 0
    %p396 = por %p394, %p395
    %s397 = ssub.s32 %s31, %s38
    %p398 = scmp.eq.s32.totalorder %s397, 0
    %s400 = sadd.s32 %s399, 1
    %s401 = scalar_select %p398, %s399, %s400
    %p404 = pneg %p398
    %p405 = scmp.eq.s32.totalorder %s23, 3
    %p406 = por %p404, %p405
    %p407 = scmp.ne.s32.totalorder %s399, %s402
    %p408 = scmp.eq.s32.totalorder %s23, 0
    %p409 = por %p407, %p408
    %p410 = scmp.ne.s32.totalorder %s399, %s402
    %p411 = scmp.eq.s32.totalorder %s28, 3
    %p412 = por %p410, %p411
    %p413 = scmp.ne.s32.totalorder %s402, %s403
    %p414 = scmp.eq.s32.totalorder %s28, 0
    %p415 = por %p413, %p414
    %p416 = scmp.ne.s32.totalorder %s402, %s403
    %p417 = scmp.eq.s32.totalorder %s29, 3
    %p418 = por %p416, %p417
    %p420 = scmp.ne.s32.totalorder %s403, %s419
    %p421 = scmp.eq.s32.totalorder %s29, 0
    %p422 = por %p420, %p421
    %s424 = sadd.s32 %s423, 1
    %p427 = scmp.eq.s32.totalorder %s23, 3
    %p428 = scmp.ne.s32.totalorder %s423, %s425
    %p429 = scmp.eq.s32.totalorder %s23, 0
    %p430 = por %p428, %p429
    %p431 = scmp.ne.s32.totalorder %s423, %s425
    %p432 = scmp.eq.s32.totalorder %s28, 3
    %p433 = por %p431, %p432
    %p434 = scmp.ne.s32.totalorder %s425, %s426
    %p435 = scmp.eq.s32.totalorder %s28, 0
    %p436 = por %p434, %p435
    %p437 = scmp.ne.s32.totalorder %s425, %s426
    %p438 = scmp.eq.s32.totalorder %s29, 3
    %p439 = por %p437, %p438
    %p441 = scmp.ne.s32.totalorder %s426, %s440
    %p442 = scmp.eq.s32.totalorder %s29, 0
    %p443 = por %p441, %p442
    %s445 = sadd.s32 %s444, 1
    %p448 = scmp.eq.s32.totalorder %s23, 3
    %p449 = scmp.ne.s32.totalorder %s444, %s446
    %p450 = scmp.eq.s32.totalorder %s23, 0
    %p451 = por %p449, %p450
    %p452 = scmp.ne.s32.totalorder %s444, %s446
    %p453 = scmp.eq.s32.totalorder %s28, 3
    %p454 = por %p452, %p453
    %p455 = scmp.ne.s32.totalorder %s446, %s447
    %p456 = scmp.eq.s32.totalorder %s28, 0
    %p457 = por %p455, %p456
    %p458 = scmp.ne.s32.totalorder %s446, %s447
    %p459 = scmp.eq.s32.totalorder %s29, 3
    %p460 = por %p458, %p459
    %p462 = scmp.ne.s32.totalorder %s447, %s461
    %p463 = scmp.eq.s32.totalorder %s29, 0
    %p464 = por %p462, %p463
    %s465 = ssub.s32 %s30, %s42
    %p466 = scmp.eq.s32.totalorder %s465, 0
    %s468 = sadd.s32 %s467, 1
    %s469 = scalar_select %p466, %s467, %s468
    %p472 = pneg %p466
    %p473 = scmp.eq.s32.totalorder %s23, 3
    %p474 = por %p472, %p473
    %p475 = scmp.ne.s32.totalorder %s467, %s470
    %p476 = scmp.eq.s32.totalorder %s23, 0
    %p477 = por %p475, %p476
    %p478 = scmp.ne.s32.totalorder %s467, %s470
    %p479 = scmp.eq.s32.totalorder %s28, 3
    %p480 = por %p478, %p479
    %p481 = scmp.ne.s32.totalorder %s470, %s471
    %p482 = scmp.eq.s32.totalorder %s28, 0
    %p483 = por %p481, %p482
    %p484 = scmp.ne.s32.totalorder %s470, %s471
    %p485 = scmp.eq.s32.totalorder %s29, 3
    %p486 = por %p484, %p485
    %p488 = scmp.ne.s32.totalorder %s471, %s487
    %p489 = scmp.eq.s32.totalorder %s29, 0
    %p490 = por %p488, %p489
    %p491 = scmp.le.s32.totalorder 1, %s23
    %p492 = scmp.lt.s32.totalorder %s23, 5
    %p493 = pnand %p491, %p492
    %p494 = pneg %p493
    // Predicated region
    $region9: #{model_forward.4} parent=5 // pred_check
      _
    $region10: #{model_forward.4} parent=5 // pred_check_branch
      %496 = sbr.rel (%p493) target = $region12
    $region11: #{model_forward.4} parent=5 // pred_region
      %s497 = ssub.s32 %s23, 1
      // Predicated region
      $region13: #{model_forward.4} parent=11 // pred_check
        %p498 = pneg %p82
      $region14: #{model_forward.4} parent=11 // pred_check_branch
        %500 = sbr.rel (%p498) target = $region16
      $region15: #{model_forward.4} parent=11 // pred_region
        _
      $region16: #{model_forward.4} parent=11 // pred_fallthru
        _
      // Predicated region
      $region17: #{model_forward.4} parent=11 // pred_check
        %p501 = pneg %p103
      $region18: #{model_forward.4} parent=11 // pred_check_branch
        %503 = sbr.rel (%p501) target = $region20
      $region19: #{model_forward.4} parent=11 // pred_region
        _
      $region20: #{model_forward.4} parent=11 // pred_fallthru
        _
      // Predicated region
      $region21: #{model_forward.4} parent=11 // pred_check
        %p504 = pneg %p436
      $region22: #{model_forward.4} parent=11 // pred_check_branch
        %506 = sbr.rel (%p504) target = $region24
      $region23: #{model_forward.4} parent=11 // pred_region
        _
      $region24: #{model_forward.4} parent=11 // pred_fallthru
        _
      // Predicated region
      $region25: #{model_forward.4} parent=11 // pred_check
        %p507 = pneg %p457
      $region26: #{model_forward.4} parent=11 // pred_check_branch
        %509 = sbr.rel (%p507) target = $region28
      $region27: #{model_forward.4} parent=11 // pred_region
        _
      $region28: #{model_forward.4} parent=11 // pred_fallthru
        _
    $region12: #{model_forward.4} parent=5 // pred_fallthru
      _
    %p510 = scmp.lt.s32.totalorder %s23, 4
    // Predicated region
    $region29: #{model_forward.4} parent=5 // pred_check
      %p511 = pneg %p510
    $region30: #{model_forward.4} parent=5 // pred_check_branch
      %513 = sbr.rel (%p511) target = $region32
    $region31: #{model_forward.4} parent=5 // pred_region
      // Predicated region
      $region33: #{model_forward.4} parent=31 // pred_check
        %p514 = pneg %p55
      $region34: #{model_forward.4} parent=31 // pred_check_branch
        %516 = sbr.rel (%p514) target = $region36
      $region35: #{model_forward.4} parent=31 // pred_region
        %p517 = scmp.lt.s32.totalorder %s30, 1
        %s518 = scalar_select %p517, %s30, 1
        %s519 = smul.addr %s518, 2
        %s520 = smul.addr %s519, 8
        %s521 = scalar_lea.vmem %s0, %s520
      $region36: #{model_forward.4} parent=31 // pred_fallthru
        _
      // Predicated region
      $region37: #{model_forward.4} parent=31 // pred_check
        %p522 = pneg %p123
      $region38: #{model_forward.4} parent=31 // pred_check_branch
        %524 = sbr.rel (%p522) target = $region40
      $region39: #{model_forward.4} parent=31 // pred_region
        %p525 = scmp.lt.s32.totalorder %s31, 1
        %s526 = scalar_select %p525, %s31, 1
        %s527 = smul.addr %s526, 4
        %s528 = smul.addr %s527, 4
        %s529 = scalar_lea.vmem %s3, %s528
      $region40: #{model_forward.4} parent=31 // pred_fallthru
        _
      // Predicated region
      $region41: #{model_forward.4} parent=31 // pred_check
        %p530 = pneg %p149
      $region42: #{model_forward.4} parent=31 // pred_check_branch
        %532 = sbr.rel (%p530) target = $region44
      $region43: #{model_forward.4} parent=31 // pred_region
        %p533 = scmp.lt.s32.totalorder %s31, 1
        %s534 = scalar_select %p533, %s31, 1
        %s535 = scalar_lea.vmem %s4, %s534
      $region44: #{model_forward.4} parent=31 // pred_fallthru
        _
      // Predicated region
      $region45: #{model_forward.4} parent=31 // pred_check
        %p536 = pneg %p175
      $region46: #{model_forward.4} parent=31 // pred_check_branch
        %538 = sbr.rel (%p536) target = $region48
      $region47: #{model_forward.4} parent=31 // pred_region
        %p539 = scmp.lt.s32.totalorder %s31, 1
        %s540 = scalar_select %p539, %s31, 1
        %s541 = smul.addr %s540, 4
        %s542 = smul.addr %s541, 4
        %s543 = scalar_lea.vmem %s5, %s542
      $region48: #{model_forward.4} parent=31 // pred_fallthru
        _
      // Predicated region
      $region49: #{model_forward.4} parent=31 // pred_check
        %p544 = pneg %p201
      $region50: #{model_forward.4} parent=31 // pred_check_branch
        %546 = sbr.rel (%p544) target = $region52
      $region51: #{model_forward.4} parent=31 // pred_region
        %p547 = scmp.lt.s32.totalorder %s31, 1
        %s548 = scalar_select %p547, %s31, 1
        %s549 = scalar_lea.vmem %s6, %s548
      $region52: #{model_forward.4} parent=31 // pred_fallthru
        _
      // Predicated region
      $region53: #{model_forward.4} parent=31 // pred_check
        %p550 = pneg %p227
      $region54: #{model_forward.4} parent=31 // pred_check_branch
        %552 = sbr.rel (%p550) target = $region56
      $region55: #{model_forward.4} parent=31 // pred_region
        %p553 = scmp.lt.s32.totalorder %s31, 1
        %s554 = scalar_select %p553, %s31, 1
        %s555 = scalar_lea.vmem %s7, %s554
      $region56: #{model_forward.4} parent=31 // pred_fallthru
        _
      // Predicated region
      $region57: #{model_forward.4} parent=31 // pred_check
        %p556 = pneg %p253
      $region58: #{model_forward.4} parent=31 // pred_check_branch
        %558 = sbr.rel (%p556) target = $region60
      $region59: #{model_forward.4} parent=31 // pred_region
        %p559 = scmp.lt.s32.totalorder %s31, 1
        %s560 = scalar_select %p559, %s31, 1
        %s561 = scalar_lea.vmem %s8, %s560
      $region60: #{model_forward.4} parent=31 // pred_fallthru
        _
      // Predicated region
      $region61: #{model_forward.4} parent=31 // pred_check
        %p562 = pneg %p279
      $region62: #{model_forward.4} parent=31 // pred_check_branch
        %564 = sbr.rel (%p562) target = $region64
      $region63: #{model_forward.4} parent=31 // pred_region
        %p565 = scmp.lt.s32.totalorder %s31, 1
        %s566 = scalar_select %p565, %s31, 1
        %s567 = smul.addr %s566, 4
        %s568 = smul.addr %s567, 4
        %s569 = scalar_lea.vmem %s9, %s568
      $region64: #{model_forward.4} parent=31 // pred_fallthru
        _
      // Predicated region
      $region65: #{model_forward.4} parent=31 // pred_check
        %p570 = pneg %p305
      $region66: #{model_forward.4} parent=31 // pred_check_branch
        %572 = sbr.rel (%p570) target = $region68
      $region67: #{model_forward.4} parent=31 // pred_region
        %p573 = scmp.lt.s32.totalorder %s31, 1
        %s574 = scalar_select %p573, %s31, 1
        %s575 = scalar_lea.vmem %s10, %s574
      $region68: #{model_forward.4} parent=31 // pred_fallthru
        _
      // Predicated region
      $region69: #{model_forward.4} parent=31 // pred_check
        %p576 = pneg %p331
      $region70: #{model_forward.4} parent=31 // pred_check_branch
        %578 = sbr.rel (%p576) target = $region72
      $region71: #{model_forward.4} parent=31 // pred_region
        %p579 = scmp.lt.s32.totalorder %s31, 1
        %s580 = scalar_select %p579, %s31, 1
        %s581 = smul.addr %s580, 8
        %s582 = smul.addr %s581, 4
        %s583 = scalar_lea.vmem %s11, %s582
      $region72: #{model_forward.4} parent=31 // pred_fallthru
        _
      // Predicated region
      $region73: #{model_forward.4} parent=31 // pred_check
        %p584 = pneg %p357
      $region74: #{model_forward.4} parent=31 // pred_check_branch
        %586 = sbr.rel (%p584) target = $region76
      $region75: #{model_forward.4} parent=31 // pred_region
        %p587 = scmp.lt.s32.totalorder %s31, 1
        %s588 = scalar_select %p587, %s31, 1
        %s589 = scalar_lea.vmem %s12, %s588
      $region76: #{model_forward.4} parent=31 // pred_fallthru
        _
      // Predicated region
      $region77: #{model_forward.4} parent=31 // pred_check
        %p590 = pneg %p383
      $region78: #{model_forward.4} parent=31 // pred_check_branch
        %592 = sbr.rel (%p590) target = $region80
      $region79: #{model_forward.4} parent=31 // pred_region
        %p593 = scmp.lt.s32.totalorder %s31, 1
        %s594 = scalar_select %p593, %s31, 1
        %s595 = scalar_lea.vmem %s13, %s594
      $region80: #{model_forward.4} parent=31 // pred_fallthru
        _
      // Predicated region
      $region81: #{model_forward.4} parent=31 // pred_check
        %p596 = pneg %p409
      $region82: #{model_forward.4} parent=31 // pred_check_branch
        %598 = sbr.rel (%p596) target = $region84
      $region83: #{model_forward.4} parent=31 // pred_region
        %p599 = scmp.lt.s32.totalorder %s31, 1
        %s600 = scalar_select %p599, %s31, 1
        %s601 = scalar_lea.vmem %s14, %s600
      $region84: #{model_forward.4} parent=31 // pred_fallthru
        _
    $region32: #{model_forward.4} parent=5 // pred_fallthru
      _
    %p602 = scmp.le.s32.totalorder 1, %s23
    %p603 = scmp.lt.s32.totalorder %s23, 5
    %p604 = pnand %p602, %p603
    %p605 = pneg %p604
    // Predicated region
    $region85: #{model_forward.4} parent=5 // pred_check
      _
    $region86: #{model_forward.4} parent=5 // pred_check_branch
      %607 = sbr.rel (%p604) target = $region88
    $region87: #{model_forward.4} parent=5 // pred_region
      %s608 = ssub.s32 %s23, 1
      %p609 = scmp.lt.s32.totalorder %s32, 1
      %s610 = scalar_select %p609, %s32, 1
      %s611 = smul.addr %s610, 2
      %s612 = smul.addr %s611, 8
      %s613 = scalar_lea.vmem %s0, %s612
      %p614 = pneg %p61
      %p615 = pneg %p58
      %p616 = pneg %p82
      %p617 = pneg %p79
      %p618 = pneg %p103
      %p619 = pneg %p100
      %p620 = scmp.lt.s32.totalorder %s33, 1
      %s621 = scalar_select %p620, %s33, 1
      %s622 = smul.addr %s621, 4
      %s623 = smul.addr %s622, 4
      %s624 = scalar_lea.vmem %s3, %s623
      %p625 = pneg %p129
      %p626 = pneg %p126
      %p627 = scmp.lt.s32.totalorder %s33, 1
      %s628 = scalar_select %p627, %s33, 1
      %s629 = scalar_lea.vmem %s4, %s628
      %p630 = pneg %p155
      %p631 = pneg %p152
      %p632 = scmp.lt.s32.totalorder %s33, 1
      %s633 = scalar_select %p632, %s33, 1
      %s634 = smul.addr %s633, 4
      %s635 = smul.addr %s634, 4
      %s636 = scalar_lea.vmem %s5, %s635
      %p637 = pneg %p181
      %p638 = pneg %p178
      %p639 = scmp.lt.s32.totalorder %s33, 1
      %s640 = scalar_select %p639, %s33, 1
      %s641 = scalar_lea.vmem %s6, %s640
      %p642 = pneg %p207
      %p643 = pneg %p204
      %p644 = scmp.lt.s32.totalorder %s33, 1
      %s645 = scalar_select %p644, %s33, 1
      %s646 = scalar_lea.vmem %s7, %s645
      %p647 = pneg %p233
      %p648 = pneg %p230
      %p649 = scmp.lt.s32.totalorder %s33, 1
      %s650 = scalar_select %p649, %s33, 1
      %s651 = scalar_lea.vmem %s8, %s650
      %p652 = pneg %p259
      %p653 = pneg %p256
      %p654 = scmp.lt.s32.totalorder %s33, 1
      %s655 = scalar_select %p654, %s33, 1
      %s656 = smul.addr %s655, 4
      %s657 = smul.addr %s656, 4
      %s658 = scalar_lea.vmem %s9, %s657
      %p659 = pneg %p285
      %p660 = pneg %p282
      %p661 = scmp.lt.s32.totalorder %s33, 1
      %s662 = scalar_select %p661, %s33, 1
      %s663 = scalar_lea.vmem %s10, %s662
      %p664 = pneg %p311
      %p665 = pneg %p308
      %p666 = scmp.lt.s32.totalorder %s33, 1
      %s667 = scalar_select %p666, %s33, 1
      %s668 = smul.addr %s667, 8
      %s669 = smul.addr %s668, 4
      %s670 = scalar_lea.vmem %s11, %s669
      %p671 = pneg %p337
      %p672 = pneg %p334
      %p673 = scmp.lt.s32.totalorder %s33, 1
      %s674 = scalar_select %p673, %s33, 1
      %s675 = scalar_lea.vmem %s12, %s674
      %p676 = pneg %p363
      %p677 = pneg %p360
      %p678 = scmp.lt.s32.totalorder %s33, 1
      %s679 = scalar_select %p678, %s33, 1
      %s680 = scalar_lea.vmem %s13, %s679
      %p681 = pneg %p389
      %p682 = pneg %p386
      %p683 = scmp.lt.s32.totalorder %s33, 1
      %s684 = scalar_select %p683, %s33, 1
      %s685 = scalar_lea.vmem %s14, %s684
      %p686 = pneg %p415
      %p687 = pneg %p412
      %p688 = pneg %p436
      %p689 = pneg %p433
      %p690 = pneg %p457
      %p691 = pneg %p454
      %p692 = pneg %p483
      %p693 = pneg %p480
      %p694 = scmp.lt.s32.totalorder %s32, 1
      %s695 = scalar_select %p694, %s32, 1
      %s696 = smul.addr %s695, 2
      %s697 = smul.addr %s696, 8
      %s698 = scalar_lea.vmem %s17, %s697
      %p699 = scmp.lt.s32.totalorder %s32, 1
      %s700 = scalar_select %p699, %s32, 1
      %s701 = smul.addr %s700, 2
      %s702 = smul.addr %s701, 8
      %s703 = scalar_lea.vmem %s0, %s702
      %p704 = scmp.lt.s32.totalorder %s33, 1
      %s705 = scalar_select %p704, %s33, 1
      %s706 = smul.addr %s705, 4
      %s707 = smul.addr %s706, 4
      %s708 = scalar_lea.vmem %s3, %s707
      %p709 = scmp.lt.s32.totalorder %s33, 1
      %s710 = scalar_select %p709, %s33, 1
      %s711 = scalar_lea.vmem %s4, %s710
      %p712 = scmp.lt.s32.totalorder %s33, 1
      %s713 = scalar_select %p712, %s33, 1
      %s714 = smul.addr %s713, 4
      %s715 = smul.addr %s714, 4
      %s716 = scalar_lea.vmem %s5, %s715
      %p717 = scmp.lt.s32.totalorder %s33, 1
      %s718 = scalar_select %p717, %s33, 1
      %s719 = scalar_lea.vmem %s6, %s718
      %p720 = scmp.lt.s32.totalorder %s33, 1
      %s721 = scalar_select %p720, %s33, 1
      %s722 = scalar_lea.vmem %s7, %s721
      %p723 = scmp.lt.s32.totalorder %s33, 1
      %s724 = scalar_select %p723, %s33, 1
      %s725 = scalar_lea.vmem %s8, %s724
      %p726 = scmp.lt.s32.totalorder %s33, 1
      %s727 = scalar_select %p726, %s33, 1
      %s728 = smul.addr %s727, 4
      %s729 = smul.addr %s728, 4
      %s730 = scalar_lea.vmem %s9, %s729
      %p731 = scmp.lt.s32.totalorder %s33, 1
      %s732 = scalar_select %p731, %s33, 1
      %s733 = scalar_lea.vmem %s10, %s732
      %p734 = scmp.lt.s32.totalorder %s33, 1
      %s735 = scalar_select %p734, %s33, 1
      %s736 = smul.addr %s735, 8
      %s737 = smul.addr %s736, 4
      %s738 = scalar_lea.vmem %s11, %s737
      %p739 = scmp.lt.s32.totalorder %s33, 1
      %s740 = scalar_select %p739, %s33, 1
      %s741 = scalar_lea.vmem %s12, %s740
      %p742 = scmp.lt.s32.totalorder %s33, 1
      %s743 = scalar_select %p742, %s33, 1
      %s744 = scalar_lea.vmem %s13, %s743
      %p745 = scmp.lt.s32.totalorder %s33, 1
      %s746 = scalar_select %p745, %s33, 1
      %s747 = scalar_lea.vmem %s14, %s746
      %p748 = scmp.lt.s32.totalorder %s32, 1
      %s749 = scalar_select %p748, %s32, 1
      %s750 = smul.addr %s749, 2
      %s751 = smul.addr %s750, 8
      %s752 = scalar_lea.vmem %s17, %s751
      %p754 = scmp.eq.s32.totalorder %s33, 0
      // Predicated region
      $region89: #{model_forward.4} parent=87 // pred_check
        %p755 = pneg %p754
      $region90: #{model_forward.4} parent=87 // pred_check_branch
        %757 = sbr.rel (%p755) target = $region92
      $region91: #{model_forward.4} parent=87 // pred_region
        %v758 = vld [vmem:[%s703] sm:$0xff]
        %v759 = vld [vmem:[%s703 + $0x8] sm:$0x1f]
        %v760 = vld [vmem:[%s1] sm:$0xf]
        %v761 = vld [vmem:[%s1 + $0x4] sm:$0x3]
        %v762 = vpack.c.bf16 %v759, %v758
        %v763 = vld [vmem:[%s2] sm:$0xff]
        %v764 = vld [vmem:[%s2 + $0x8] sm:$0x1f]
        %v767 = vunpack.c.l.b16 %v760
        %v768 = vunpack.c.l.b16 %v761
        %v769 = vpack.c.b16 %v768, %v767
        %vm770 = vcmask 97280
        %v772 = vsel %vm770, %v762, 0
        %vm774 = vcmask 1045504
        %v776 = vsel %vm774, %v769, 0
        %778 = vmatprep.subr.bf16.mxu0 0
        %779 = vmatpush1.bf16.msra.mxu0 %v776
        %780 = vmatprep.subr.bf16.mxu0 0
        %781 = vmatpush1.bf16.msra.mxu0 0
        %782 = vmatprep.subr.bf16.mxu0 0
        %783 = vmatpush1.bf16.msra.mxu0 0
        %784 = vmatprep.subr.bf16.mxu0 0
        %785 = vmatpush1.bf16.msra.mxu0 0
        %786 = vmatprep.subr.bf16.mxu0 0
        %787 = vmatpush1.bf16.msra.mxu0 0
        %788 = vmatprep.subr.bf16.mxu0 0
        %789 = vmatpush1.bf16.msra.mxu0 0
        %790 = vmatprep.subr.bf16.mxu0 0
        %791 = vmatpush1.bf16.msra.mxu0 0
        %792 = vmatprep.subr.bf16.mxu0 0
        %793 = vmatpush1.bf16.msra.mxu0 0
        %794 = vmatprep.subr.bf16.mxu0 0
        %795 = vmatpush1.bf16.msra.mxu0 0
        %796 = vmatprep.subr.bf16.mxu0 0
        %797 = vmatpush1.bf16.msra.mxu0 0
        %798 = vmatprep.subr.bf16.mxu0 0
        %799 = vmatpush1.bf16.msra.mxu0 0
        %800 = vmatprep.subr.bf16.mxu0 0
        %801 = vmatpush1.bf16.msra.mxu0 0
        %802 = vmatprep.subr.bf16.mxu0 0
        %803 = vmatpush1.bf16.msra.mxu0 0
        %804 = vmatprep.subr.bf16.mxu0 0
        %805 = vmatpush1.bf16.msra.mxu0 0
        %806 = vmatprep.subr.bf16.mxu0 0
        %807 = vmatpush1.bf16.msra.mxu0 0
        %808 = vmatprep.subr.bf16.mxu0 0
        %809 = vmatpush1.bf16.msra.mxu0 0
        %810 = vmatprep.mubr.bf16.mxu0 0
        %811 = vmatmul.mubr.bf16.gmra.mrb[0].mxu0 %v772
        %v812 = vpop.f32.mrb[0].mxu0
        %v813 = vadd.f32 %v763, %v812
        %v814 = vpop.f32.mrb[0].mxu0
        %v815 = vpop.f32.mrb[0].mxu0
        %v816 = vadd.f32 %v764, %v815
        %v817 = vpop.f32.mrb[0].mxu0
        %818 = vdwg.mxu0
        %vm819 = vcmask 261120
        %820 = vst.msk [vmem:[#allocation2] sm:$0xff] %vm819, %v813
        %vm821 = vcmask 258048
        %822 = vst.msk [vmem:[#allocation2 + $0x8] sm:$0x1f] %vm821, %v816
      $region92: #{model_forward.4} parent=87 // pred_fallthru
        _
      %v823 = vld [vmem:[#allocation2] sm:$0xff]
      %v824 = vld [vmem:[#allocation2 + $0x8] sm:$0x1f]
      %v825 = vld [vmem:[%s708] sm:$0xf]
      %v826 = vld [vmem:[%s708 + $0x4] sm:$0xf]
      %v827 = vld [vmem:[%s708 + $0x8] sm:$0xf]
      %v828 = vld [vmem:[%s708 + $0xc] sm:$0xf]
      %v829 = vpack.c.bf16 %v824, %v823
      %v830 = vld [vmem:[%s711] sm:$0x1]
      %v832 = vlaneseq
      %v833 = vshrl.u32 %v832, 7
      %v834 = vsub.s32 0, %v833
      %v835 = vrot.slane %v830, %v834
      %v841 = vunpack.c.l.b16 %v825
      %v842 = vunpack.c.l.b16 %v826
      %v843 = vunpack.c.l.b16 %v827
      %v844 = vunpack.c.l.b16 %v828
      %v845 = vpack.c.b16 %v842, %v841
      %v846 = vpack.c.b16 %v844, %v843
      %vm849 = vcmask 261120
      %v851 = vsel %vm849, %v829, 0
      %853 = vmatprep.subr.bf16.mxu0 0
      %854 = vmatpush1.bf16.msra.mxu0 %v845
      %855 = vmatprep.subr.bf16.mxu0 0
      %856 = vmatpush1.bf16.msra.mxu0 %v846
      %857 = vmatprep.subr.bf16.mxu0 0
      %858 = vmatpush1.bf16.msra.mxu0 0
      %859 = vmatprep.subr.bf16.mxu0 0
      %860 = vmatpush1.bf16.msra.mxu0 0
      %861 = vmatprep.subr.bf16.mxu0 0
      %862 = vmatpush1.bf16.msra.mxu0 0
      %863 = vmatprep.subr.bf16.mxu0 0
      %864 = vmatpush1.bf16.msra.mxu0 0
      %865 = vmatprep.subr.bf16.mxu0 0
      %866 = vmatpush1.bf16.msra.mxu0 0
      %867 = vmatprep.subr.bf16.mxu0 0
      %868 = vmatpush1.bf16.msra.mxu0 0
      %869 = vmatprep.subr.bf16.mxu0 0
      %870 = vmatpush1.bf16.msra.mxu0 0
      %871 = vmatprep.subr.bf16.mxu0 0
      %872 = vmatpush1.bf16.msra.mxu0 0
      %873 = vmatprep.subr.bf16.mxu0 0
      %874 = vmatpush1.bf16.msra.mxu0 0
      %875 = vmatprep.subr.bf16.mxu0 0
      %876 = vmatpush1.bf16.msra.mxu0 0
      %877 = vmatprep.subr.bf16.mxu0 0
      %878 = vmatpush1.bf16.msra.mxu0 0
      %879 = vmatprep.subr.bf16.mxu0 0
      %880 = vmatpush1.bf16.msra.mxu0 0
      %881 = vmatprep.subr.bf16.mxu0 0
      %882 = vmatpush1.bf16.msra.mxu0 0
      %883 = vmatprep.subr.bf16.mxu0 0
      %884 = vmatpush1.bf16.msra.mxu0 0
      %885 = vmatprep.mubr.bf16.mxu0 0
      %886 = vmatmul.mubr.bf16.gmra.mrb[0].mxu0 %v851
      %v887 = vpop.f32.mrb[0].mxu0
      %v888 = vadd.f32 %v835, %v887
      %v889 = vpop.f32.mrb[0].mxu0
      %v890 = vpop.f32.mrb[0].mxu0
      %v891 = vadd.f32 %v835, %v890
      %v892 = vpop.f32.mrb[0].mxu0
      %893 = vdwg.mxu0
      %v894 = vld [vmem:[%s716] sm:$0xf]
      %v895 = vld [vmem:[%s716 + $0x4] sm:$0xf]
      %v896 = vld [vmem:[%s716 + $0x8] sm:$0xf]
      %v897 = vld [vmem:[%s716 + $0xc] sm:$0xf]
      %v898 = vld [vmem:[%s719] sm:$0x1]
      %v899 = vpack.c.bf16 %v891, %v888
      %901 = vrot.lane.b32.xlu0 %v899, 96
      %v902 = vpop.permute.xlu0 %901
      %vm903 = vcmask 64512
      %v905 = vsel %vm903, %v899, 0
      %v908 = vsel %vm903, %v902, 0
      %910 = vmatprep.subr.bf16.mxu0 0
      %911 = vmatpush1.bf16.xpose.msra.mxu0 %v908
      %912 = vmatprep.subr.bf16.mxu0 0
      %913 = vmatpush1.bf16.xpose.msra.mxu0 0
      %914 = vmatprep.subr.bf16.mxu0 0
      %915 = vmatpush1.bf16.xpose.msra.mxu0 0
      %916 = vmatprep.subr.bf16.mxu0 0
      %917 = vmatpush1.bf16.xpose.msra.mxu0 0
      %918 = vmatprep.subr.bf16.mxu0 0
      %919 = vmatpush1.bf16.xpose.msra.mxu0 0
      %920 = vmatprep.subr.bf16.mxu0 0
      %921 = vmatpush1.bf16.xpose.msra.mxu0 0
      %922 = vmatprep.subr.bf16.mxu0 0
      %923 = vmatpush1.bf16.xpose.msra.mxu0 0
      %924 = vmatprep.subr.bf16.mxu0 0
      %925 = vmatpush1.bf16.xpose.msra.mxu0 0
      %926 = vmatprep.subr.bf16.mxu0 0
      %927 = vmatpush1.bf16.xpose.msra.mxu0 0
      %928 = vmatprep.subr.bf16.mxu0 0
      %929 = vmatpush1.bf16.xpose.msra.mxu0 0
      %930 = vmatprep.subr.bf16.mxu0 0
      %931 = vmatpush1.bf16.xpose.msra.mxu0 0
      %932 = vmatprep.subr.bf16.mxu0 0
      %933 = vmatpush1.bf16.xpose.msra.mxu0 0
      %934 = vmatprep.subr.bf16.mxu0 0
      %935 = vmatpush1.bf16.xpose.msra.mxu0 0
      %936 = vmatprep.subr.bf16.mxu0 0
      %937 = vmatpush1.bf16.xpose.msra.mxu0 0
      %938 = vmatprep.subr.bf16.mxu0 0
      %939 = vmatpush1.bf16.xpose.msra.mxu0 0
      %940 = vmatprep.subr.bf16.mxu0 0
      %941 = vmatpush1.bf16.xpose.msra.mxu0 0
      %942 = vmatprep.mubr.bf16.mxu0 0
      %943 = vmatmul.mubr.bf16.gmra.mrb[0].mxu0 %v905
      %v944 = vpop.f32.mrb[0].mxu0
      %v945 = vadd.f32 0.0, %v944
      %v946 = vpop.f32.mrb[0].mxu0
      %v947 = vpop.f32.mrb[0].mxu0
      %v948 = vadd.f32 0.0, %v947
      %v949 = vpop.f32.mrb[0].mxu0
      %950 = vdwg.mxu0
      %v951 = vmul.f32 %v945, 0.35355338
      %v952 = vmul.f32 %v948, 0.35355338
      %vm953 = vcmask 105472
      %v954 = vsel %vm953, %v951, -inf
      %955 = vmax.xlane.f32.xlu0 %v954
      %v956 = vpop.xlane.xlu0 %955
      %vm957 = vcmask 102400
      %v958 = vsel %vm957, %v952, -inf
      %959 = vmax.xlane.f32.xlu0 %v958
      %v960 = vpop.xlane.xlu0 %959
      %v961 = vsub.f32 %v951, %v956
      %v962 = vsub.f32 %v952, %v960
      %v963 = vmul.f32 %v961, 1.442695
      %v964 = vpow.pop %v963
      %v965 = vmul.f32 %v962, 1.442695
      %v966 = vpow.pop %v965
      %v967 = vsel %vm953, %v964, 0.0
      %968 = vadd.xlane.f32.xlu0 %v967
      %v969 = vpop.xlane.xlu0 %968
      %v970 = vsel %vm957, %v966, 0.0
      %971 = vadd.xlane.f32.xlu0 %v970
      %v972 = vpop.xlane.xlu0 %971
      %v973 = vrcp.pop %v969
      %v974 = vrcp.pop %v972
      %v975 = vmul.f32 %v964, %v973
      %v976 = vmul.f32 %v966, %v974
      %v977 = vpack.c.bf16 %v976, %v975
      %978 = vrot.lane.b32.xlu0 %v899, 64
      %v979 = vpop.permute.xlu0 %978
      %v981 = vsel %vm953, %v977, 0
      %vm983 = vcmask 1045504
      %vm984 = vcmask 1046528
      %v985 = vsel %vm983, 4294967295, 65535
      %v986 = vsel %vm984, %v985, 0
      %v988 = vand.u32 %v979, %v986
      %990 = vmatprep.subr.bf16.mxu0 0
      %991 = vmatpush1.bf16.msra.mxu0 %v988
      %992 = vmatprep.subr.bf16.mxu0 0
      %993 = vmatpush1.bf16.msra.mxu0 0
      %994 = vmatprep.subr.bf16.mxu0 0
      %995 = vmatpush1.bf16.msra.mxu0 0
      %996 = vmatprep.subr.bf16.mxu0 0
      %997 = vmatpush1.bf16.msra.mxu0 0
      %998 = vmatprep.subr.bf16.mxu0 0
      %999 = vmatpush1.bf16.msra.mxu0 0
      %1000 = vmatprep.subr.bf16.mxu0 0
      %1001 = vmatpush1.bf16.msra.mxu0 0
      %1002 = vmatprep.subr.bf16.mxu0 0
      %1003 = vmatpush1.bf16.msra.mxu0 0
      %1004 = vmatprep.subr.bf16.mxu0 0
      %1005 = vmatpush1.bf16.msra.mxu0 0
      %1006 = vmatprep.subr.bf16.mxu0 0
      %1007 = vmatpush1.bf16.msra.mxu0 0
      %1008 = vmatprep.subr.bf16.mxu0 0
      %1009 = vmatpush1.bf16.msra.mxu0 0
      %1010 = vmatprep.subr.bf16.mxu0 0
      %1011 = vmatpush1.bf16.msra.mxu0 0
      %1012 = vmatprep.subr.bf16.mxu0 0
      %1013 = vmatpush1.bf16.msra.mxu0 0
      %1014 = vmatprep.subr.bf16.mxu0 0
      %1015 = vmatpush1.bf16.msra.mxu0 0
      %1016 = vmatprep.subr.bf16.mxu0 0
      %1017 = vmatpush1.bf16.msra.mxu0 0
      %1018 = vmatprep.subr.bf16.mxu0 0
      %1019 = vmatpush1.bf16.msra.mxu0 0
      %1020 = vmatprep.subr.bf16.mxu0 0
      %1021 = vmatpush1.bf16.msra.mxu0 0
      %1022 = vmatprep.mubr.bf16.mxu0 0
      %1023 = vmatmul.mubr.bf16.gmra.mrb[0].mxu0 %v981
      %v1024 = vpop.f32.mrb[0].mxu0
      %v1025 = vadd.f32 0.0, %v1024
      %v1026 = vpop.f32.mrb[0].mxu0
      %v1027 = vpop.f32.mrb[0].mxu0
      %v1028 = vadd.f32 0.0, %v1027
      %v1029 = vpop.f32.mrb[0].mxu0
      %1030 = vdwg.mxu0
      %1031 = vrot.lane.b32.xlu0 %v899, 120
      %v1032 = vpop.permute.xlu0 %1031
      %1033 = vrot.lane.b32.xlu0 %v899, 88
      %v1034 = vpop.permute.xlu0 %1033
      %v1036 = vsel %vm903, %v1032, 0
      %v1039 = vsel %vm903, %v1034, 0
      %1041 = vmatprep.subr.bf16.mxu0 0
      %1042 = vmatpush1.bf16.xpose.msra.mxu0 %v1039
      %1043 = vmatprep.subr.bf16.mxu0 0
      %1044 = vmatpush1.bf16.xpose.msra.mxu0 0
      %1045 = vmatprep.subr.bf16.mxu0 0
      %1046 = vmatpush1.bf16.xpose.msra.mxu0 0
      %1047 = vmatprep.subr.bf16.mxu0 0
      %1048 = vmatpush1.bf16.xpose.msra.mxu0 0
      %1049 = vmatprep.subr.bf16.mxu0 0
      %1050 = vmatpush1.bf16.xpose.msra.mxu0 0
      %1051 = vmatprep.subr.bf16.mxu0 0
      %1052 = vmatpush1.bf16.xpose.msra.mxu0 0
      %1053 = vmatprep.subr.bf16.mxu0 0
      %1054 = vmatpush1.bf16.xpose.msra.mxu0 0
      %1055 = vmatprep.subr.bf16.mxu0 0
      %1056 = vmatpush1.bf16.xpose.msra.mxu0 0
      %1057 = vmatprep.subr.bf16.mxu0 0
      %1058 = vmatpush1.bf16.xpose.msra.mxu0 0
      %1059 = vmatprep.subr.bf16.mxu0 0
      %1060 = vmatpush1.bf16.xpose.msra.mxu0 0
      %1061 = vmatprep.subr.bf16.mxu0 0
      %1062 = vmatpush1.bf16.xpose.msra.mxu0 0
      %1063 = vmatprep.subr.bf16.mxu0 0
      %1064 = vmatpush1.bf16.xpose.msra.mxu0 0
      %1065 = vmatprep.subr.bf16.mxu0 0
      %1066 = vmatpush1.bf16.xpose.msra.mxu0 0
      %1067 = vmatprep.subr.bf16.mxu0 0
      %1068 = vmatpush1.bf16.xpose.msra.mxu0 0
      %1069 = vmatprep.subr.bf16.mxu0 0
      %1070 = vmatpush1.bf16.xpose.msra.mxu0 0
      %1071 = vmatprep.subr.bf16.mxu0 0
      %1072 = vmatpush1.bf16.xpose.msra.mxu0 0
      %1073 = vmatprep.mubr.bf16.mxu0 0
      %1074 = vmatmul.mubr.bf16.gmra.mrb[0].mxu0 %v1036
      %v1075 = vpop.f32.mrb[0].mxu0
      %v1076 = vadd.f32 0.0, %v1075
      %v1077 = vpop.f32.mrb[0].mxu0
      %v1078 = vpop.f32.mrb[0].mxu0
      %v1079 = vadd.f32 0.0, %v1078
      %v1080 = vpop.f32.mrb[0].mxu0
      %1081 = vdwg.mxu0
      %v1082 = vmul.f32 %v1076, 0.35355338
      %v1083 = vmul.f32 %v1079, 0.35355338
      %v1084 = vsel %vm953, %v1082, -inf
      %1085 = vmax.xlane.f32.xlu0 %v1084
      %v1086 = vpop.xlane.xlu0 %1085
      %v1087 = vsel %vm957, %v1083, -inf
      %1088 = vmax.xlane.f32.xlu0 %v1087
      %v1089 = vpop.xlane.xlu0 %1088
      %v1090 = vsub.f32 %v1082, %v1086
      %v1091 = vsub.f32 %v1083, %v1089
      %v1092 = vmul.f32 %v1090, 1.442695
      %v1093 = vpow.pop %v1092
      %v1094 = vmul.f32 %v1091, 1.442695
      %v1095 = vpow.pop %v1094
      %v1096 = vsel %vm953, %v1093, 0.0
      %1097 = vadd.xlane.f32.xlu0 %v1096
      %v1098 = vpop.xlane.xlu0 %1097
      %v1099 = vsel %vm957, %v1095, 0.0
      %1100 = vadd.xlane.f32.xlu0 %v1099
      %v1101 = vpop.xlane.xlu0 %1100
      %v1102 = vrcp.pop %v1098
      %v1103 = vrcp.pop %v1101
      %v1104 = vmul.f32 %v1093, %v1102
      %v1105 = vmul.f32 %v1095, %v1103
      %v1106 = vpack.c.bf16 %v1105, %v1104
      %1107 = vrot.lane.b32.xlu0 %v899, 56
      %v1108 = vpop.permute.xlu0 %1107
      %v1110 = vsel %vm953, %v1106, 0
      %v1113 = vand.u32 %v1108, %v986
      %1115 = vmatprep.subr.bf16.mxu0 0
      %1116 = vmatpush1.bf16.msra.mxu0 %v1113
      %1117 = vmatprep.subr.bf16.mxu0 0
      %1118 = vmatpush1.bf16.msra.mxu0 0
      %1119 = vmatprep.subr.bf16.mxu0 0
      %1120 = vmatpush1.bf16.msra.mxu0 0
      %1121 = vmatprep.subr.bf16.mxu0 0
      %1122 = vmatpush1.bf16.msra.mxu0 0
      %1123 = vmatprep.subr.bf16.mxu0 0
      %1124 = vmatpush1.bf16.msra.mxu0 0
      %1125 = vmatprep.subr.bf16.mxu0 0
      %1126 = vmatpush1.bf16.msra.mxu0 0
      %1127 = vmatprep.subr.bf16.mxu0 0
      %1128 = vmatpush1.bf16.msra.mxu0 0
      %1129 = vmatprep.subr.bf16.mxu0 0
      %1130 = vmatpush1.bf16.msra.mxu0 0
      %1131 = vmatprep.subr.bf16.mxu0 0
      %1132 = vmatpush1.bf16.msra.mxu0 0
      %1133 = vmatprep.subr.bf16.mxu0 0
      %1134 = vmatpush1.bf16.msra.mxu0 0
      %1135 = vmatprep.subr.bf16.mxu0 0
      %1136 = vmatpush1.bf16.msra.mxu0 0
      %1137 = vmatprep.subr.bf16.mxu0 0
      %1138 = vmatpush1.bf16.msra.mxu0 0
      %1139 = vmatprep.subr.bf16.mxu0 0
      %1140 = vmatpush1.bf16.msra.mxu0 0
      %1141 = vmatprep.subr.bf16.mxu0 0
      %1142 = vmatpush1.bf16.msra.mxu0 0
      %1143 = vmatprep.subr.bf16.mxu0 0
      %1144 = vmatpush1.bf16.msra.mxu0 0
      %1145 = vmatprep.subr.bf16.mxu0 0
      %1146 = vmatpush1.bf16.msra.mxu0 0
      %1147 = vmatprep.mubr.bf16.mxu0 0
      %1148 = vmatmul.mubr.bf16.gmra.mrb[0].mxu0 %v1110
      %v1149 = vpop.f32.mrb[0].mxu0
      %v1150 = vadd.f32 0.0, %v1149
      %v1151 = vpop.f32.mrb[0].mxu0
      %v1152 = vpop.f32.mrb[0].mxu0
      %v1153 = vadd.f32 0.0, %v1152
      %v1154 = vpop.f32.mrb[0].mxu0
      %1155 = vdwg.mxu0
      %1156 = vrot.lane.b32.xlu0 %v899, 112
      %v1157 = vpop.permute.xlu0 %1156
      %1158 = vrot.lane.b32.xlu0 %v899, 80
      %v1159 = vpop.permute.xlu0 %1158
      %v1161 = vsel %vm903, %v1157, 0
      %v1164 = vsel %vm903, %v1159, 0
      %1166 = vmatprep.subr.bf16.mxu0 0
      %1167 = vmatpush1.bf16.xpose.msra.mxu0 %v1164
      %1168 = vmatprep.subr.bf16.mxu0 0
      %1169 = vmatpush1.bf16.xpose.msra.mxu0 0
      %1170 = vmatprep.subr.bf16.mxu0 0
      %1171 = vmatpush1.bf16.xpose.msra.mxu0 0
      %1172 = vmatprep.subr.bf16.mxu0 0
      %1173 = vmatpush1.bf16.xpose.msra.mxu0 0
      %1174 = vmatprep.subr.bf16.mxu0 0
      %1175 = vmatpush1.bf16.xpose.msra.mxu0 0
      %1176 = vmatprep.subr.bf16.mxu0 0
      %1177 = vmatpush1.bf16.xpose.msra.mxu0 0
      %1178 = vmatprep.subr.bf16.mxu0 0
      %1179 = vmatpush1.bf16.xpose.msra.mxu0 0
      %1180 = vmatprep.subr.bf16.mxu0 0
      %1181 = vmatpush1.bf16.xpose.msra.mxu0 0
      %1182 = vmatprep.subr.bf16.mxu0 0
      %1183 = vmatpush1.bf16.xpose.msra.mxu0 0
      %1184 = vmatprep.subr.bf16.mxu0 0
      %1185 = vmatpush1.bf16.xpose.msra.mxu0 0
      %1186 = vmatprep.subr.bf16.mxu0 0
      %1187 = vmatpush1.bf16.xpose.msra.mxu0 0
      %1188 = vmatprep.subr.bf16.mxu0 0
      %1189 = vmatpush1.bf16.xpose.msra.mxu0 0
      %1190 = vmatprep.subr.bf16.mxu0 0
      %1191 = vmatpush1.bf16.xpose.msra.mxu0 0
      %1192 = vmatprep.subr.bf16.mxu0 0
      %1193 = vmatpush1.bf16.xpose.msra.mxu0 0
      %1194 = vmatprep.subr.bf16.mxu0 0
      %1195 = vmatpush1.bf16.xpose.msra.mxu0 0
      %1196 = vmatprep.subr.bf16.mxu0 0
      %1197 = vmatpush1.bf16.xpose.msra.mxu0 0
      %1198 = vmatprep.mubr.bf16.mxu0 0
      %1199 = vmatmul.mubr.bf16.gmra.mrb[0].mxu0 %v1161
      %v1200 = vpop.f32.mrb[0].mxu0
      %v1201 = vadd.f32 0.0, %v1200
      %v1202 = vpop.f32.mrb[0].mxu0
      %v1203 = vpop.f32.mrb[0].mxu0
      %v1204 = vadd.f32 0.0, %v1203
      %v1205 = vpop.f32.mrb[0].mxu0
      %1206 = vdwg.mxu0
      %v1207 = vmul.f32 %v1201, 0.35355338
      %v1208 = vmul.f32 %v1204, 0.35355338
      %v1209 = vsel %vm953, %v1207, -inf
      %1210 = vmax.xlane.f32.xlu0 %v1209
      %v1211 = vpop.xlane.xlu0 %1210
      %v1212 = vsel %vm957, %v1208, -inf
      %1213 = vmax.xlane.f32.xlu0 %v1212
      %v1214 = vpop.xlane.xlu0 %1213
      %v1215 = vsub.f32 %v1207, %v1211
      %v1216 = vsub.f32 %v1208, %v1214
      %v1217 = vmul.f32 %v1215, 1.442695
      %v1218 = vpow.pop %v1217
      %v1219 = vmul.f32 %v1216, 1.442695
      %v1220 = vpow.pop %v1219
      %v1221 = vsel %vm953, %v1218, 0.0
      %1222 = vadd.xlane.f32.xlu0 %v1221
      %v1223 = vpop.xlane.xlu0 %1222
      %v1224 = vsel %vm957, %v1220, 0.0
      %1225 = vadd.xlane.f32.xlu0 %v1224
      %v1226 = vpop.xlane.xlu0 %1225
      %v1227 = vrcp.pop %v1223
      %v1228 = vrcp.pop %v1226
      %v1229 = vmul.f32 %v1218, %v1227
      %v1230 = vmul.f32 %v1220, %v1228
      %v1231 = vpack.c.bf16 %v1230, %v1229
      %1232 = vrot.lane.b32.xlu0 %v899, 48
      %v1233 = vpop.permute.xlu0 %1232
      %v1235 = vsel %vm953, %v1231, 0
      %v1238 = vand.u32 %v1233, %v986
      %1240 = vmatprep.subr.bf16.mxu0 0
      %1241 = vmatpush1.bf16.msra.mxu0 %v1238
      %1242 = vmatprep.subr.bf16.mxu0 0
      %1243 = vmatpush1.bf16.msra.mxu0 0
      %1244 = vmatprep.subr.bf16.mxu0 0
      %1245 = vmatpush1.bf16.msra.mxu0 0
      %1246 = vmatprep.subr.bf16.mxu0 0
      %1247 = vmatpush1.bf16.msra.mxu0 0
      %1248 = vmatprep.subr.bf16.mxu0 0
      %1249 = vmatpush1.bf16.msra.mxu0 0
      %1250 = vmatprep.subr.bf16.mxu0 0
      %1251 = vmatpush1.bf16.msra.mxu0 0
      %1252 = vmatprep.subr.bf16.mxu0 0
      %1253 = vmatpush1.bf16.msra.mxu0 0
      %1254 = vmatprep.subr.bf16.mxu0 0
      %1255 = vmatpush1.bf16.msra.mxu0 0
      %1256 = vmatprep.subr.bf16.mxu0 0
      %1257 = vmatpush1.bf16.msra.mxu0 0
      %1258 = vmatprep.subr.bf16.mxu0 0
      %1259 = vmatpush1.bf16.msra.mxu0 0
      %1260 = vmatprep.subr.bf16.mxu0 0
      %1261 = vmatpush1.bf16.msra.mxu0 0
      %1262 = vmatprep.subr.bf16.mxu0 0
      %1263 = vmatpush1.bf16.msra.mxu0 0
      %1264 = vmatprep.subr.bf16.mxu0 0
      %1265 = vmatpush1.bf16.msra.mxu0 0
      %1266 = vmatprep.subr.bf16.mxu0 0
      %1267 = vmatpush1.bf16.msra.mxu0 0
      %1268 = vmatprep.subr.bf16.mxu0 0
      %1269 = vmatpush1.bf16.msra.mxu0 0
      %1270 = vmatprep.subr.bf16.mxu0 0
      %1271 = vmatpush1.bf16.msra.mxu0 0
      %1272 = vmatprep.mubr.bf16.mxu0 0
      %1273 = vmatmul.mubr.bf16.gmra.mrb[0].mxu0 %v1235
      %v1274 = vpop.f32.mrb[0].mxu0
      %v1275 = vadd.f32 0.0, %v1274
      %v1276 = vpop.f32.mrb[0].mxu0
      %v1277 = vpop.f32.mrb[0].mxu0
      %v1278 = vadd.f32 0.0, %v1277
      %v1279 = vpop.f32.mrb[0].mxu0
      %1280 = vdwg.mxu0
      %1281 = vrot.lane.b32.xlu0 %v899, 104
      %v1282 = vpop.permute.xlu0 %1281
      %1283 = vrot.lane.b32.xlu0 %v899, 72
      %v1284 = vpop.permute.xlu0 %1283
      %v1286 = vsel %vm903, %v1282, 0
      %v1289 = vsel %vm903, %v1284, 0
      %1291 = vmatprep.subr.bf16.mxu0 0
      %1292 = vmatpush1.bf16.xpose.msra.mxu0 %v1289
      %1293 = vmatprep.subr.bf16.mxu0 0
      %1294 = vmatpush1.bf16.xpose.msra.mxu0 0
      %1295 = vmatprep.subr.bf16.mxu0 0
      %1296 = vmatpush1.bf16.xpose.msra.mxu0 0
      %1297 = vmatprep.subr.bf16.mxu0 0
      %1298 = vmatpush1.bf16.xpose.msra.mxu0 0
      %1299 = vmatprep.subr.bf16.mxu0 0
      %1300 = vmatpush1.bf16.xpose.msra.mxu0 0
      %1301 = vmatprep.subr.bf16.mxu0 0
      %1302 = vmatpush1.bf16.xpose.msra.mxu0 0
      %1303 = vmatprep.subr.bf16.mxu0 0
      %1304 = vmatpush1.bf16.xpose.msra.mxu0 0
      %1305 = vmatprep.subr.bf16.mxu0 0
      %1306 = vmatpush1.bf16.xpose.msra.mxu0 0
      %1307 = vmatprep.subr.bf16.mxu0 0
      %1308 = vmatpush1.bf16.xpose.msra.mxu0 0
      %1309 = vmatprep.subr.bf16.mxu0 0
      %1310 = vmatpush1.bf16.xpose.msra.mxu0 0
      %1311 = vmatprep.subr.bf16.mxu0 0
      %1312 = vmatpush1.bf16.xpose.msra.mxu0 0
      %1313 = vmatprep.subr.bf16.mxu0 0
      %1314 = vmatpush1.bf16.xpose.msra.mxu0 0
      %1315 = vmatprep.subr.bf16.mxu0 0
      %1316 = vmatpush1.bf16.xpose.msra.mxu0 0
      %1317 = vmatprep.subr.bf16.mxu0 0
      %1318 = vmatpush1.bf16.xpose.msra.mxu0 0
      %1319 = vmatprep.subr.bf16.mxu0 0
      %1320 = vmatpush1.bf16.xpose.msra.mxu0 0
      %1321 = vmatprep.subr.bf16.mxu0 0
      %1322 = vmatpush1.bf16.xpose.msra.mxu0 0
      %1323 = vmatprep.mubr.bf16.mxu0 0
      %1324 = vmatmul.mubr.bf16.gmra.mrb[0].mxu0 %v1286
      %v1325 = vpop.f32.mrb[0].mxu0
      %v1326 = vadd.f32 0.0, %v1325
      %v1327 = vpop.f32.mrb[0].mxu0
      %v1328 = vpop.f32.mrb[0].mxu0
      %v1329 = vadd.f32 0.0, %v1328
      %v1330 = vpop.f32.mrb[0].mxu0
      %1331 = vdwg.mxu0
      %v1332 = vmul.f32 %v1326, 0.35355338
      %v1333 = vmul.f32 %v1329, 0.35355338
      %v1334 = vsel %vm953, %v1332, -inf
      %1335 = vmax.xlane.f32.xlu0 %v1334
      %v1336 = vpop.xlane.xlu0 %1335
      %v1337 = vsel %vm957, %v1333, -inf
      %1338 = vmax.xlane.f32.xlu0 %v1337
      %v1339 = vpop.xlane.xlu0 %1338
      %v1340 = vsub.f32 %v1332, %v1336
      %v1341 = vsub.f32 %v1333, %v1339
      %v1342 = vmul.f32 %v1340, 1.442695
      %v1343 = vpow.pop %v1342
      %v1344 = vmul.f32 %v1341, 1.442695
      %v1345 = vpow.pop %v1344
      %v1346 = vsel %vm953, %v1343, 0.0
      %1347 = vadd.xlane.f32.xlu0 %v1346
      %v1348 = vpop.xlane.xlu0 %1347
      %v1349 = vsel %vm957, %v1345, 0.0
      %1350 = vadd.xlane.f32.xlu0 %v1349
      %v1351 = vpop.xlane.xlu0 %1350
      %v1352 = vrcp.pop %v1348
      %v1353 = vrcp.pop %v1351
      %v1354 = vmul.f32 %v1343, %v1352
      %v1355 = vmul.f32 %v1345, %v1353
      %v1356 = vpack.c.bf16 %v1355, %v1354
      %1357 = vrot.lane.b32.xlu0 %v899, 40
      %v1358 = vpop.permute.xlu0 %1357
      %v1360 = vsel %vm953, %v1356, 0
      %v1363 = vand.u32 %v1358, %v986
      %1365 = vmatprep.subr.bf16.mxu0 0
      %1366 = vmatpush1.bf16.msra.mxu0 %v1363
      %1367 = vmatprep.subr.bf16.mxu0 0
      %1368 = vmatpush1.bf16.msra.mxu0 0
      %1369 = vmatprep.subr.bf16.mxu0 0
      %1370 = vmatpush1.bf16.msra.mxu0 0
      %1371 = vmatprep.subr.bf16.mxu0 0
      %1372 = vmatpush1.bf16.msra.mxu0 0
      %1373 = vmatprep.subr.bf16.mxu0 0
      %1374 = vmatpush1.bf16.msra.mxu0 0
      %1375 = vmatprep.subr.bf16.mxu0 0
      %1376 = vmatpush1.bf16.msra.mxu0 0
      %1377 = vmatprep.subr.bf16.mxu0 0
      %1378 = vmatpush1.bf16.msra.mxu0 0
      %1379 = vmatprep.subr.bf16.mxu0 0
      %1380 = vmatpush1.bf16.msra.mxu0 0
      %1381 = vmatprep.subr.bf16.mxu0 0
      %1382 = vmatpush1.bf16.msra.mxu0 0
      %1383 = vmatprep.subr.bf16.mxu0 0
      %1384 = vmatpush1.bf16.msra.mxu0 0
      %1385 = vmatprep.subr.bf16.mxu0 0
      %1386 = vmatpush1.bf16.msra.mxu0 0
      %1387 = vmatprep.subr.bf16.mxu0 0
      %1388 = vmatpush1.bf16.msra.mxu0 0
      %1389 = vmatprep.subr.bf16.mxu0 0
      %1390 = vmatpush1.bf16.msra.mxu0 0
      %1391 = vmatprep.subr.bf16.mxu0 0
      %1392 = vmatpush1.bf16.msra.mxu0 0
      %1393 = vmatprep.subr.bf16.mxu0 0
      %1394 = vmatpush1.bf16.msra.mxu0 0
      %1395 = vmatprep.subr.bf16.mxu0 0
      %1396 = vmatpush1.bf16.msra.mxu0 0
      %1397 = vmatprep.mubr.bf16.mxu0 0
      %1398 = vmatmul.mubr.bf16.gmra.mrb[0].mxu0 %v1360
      %v1399 = vpop.f32.mrb[0].mxu0
      %v1400 = vadd.f32 0.0, %v1399
      %v1401 = vpop.f32.mrb[0].mxu0
      %v1402 = vpop.f32.mrb[0].mxu0
      %v1403 = vadd.f32 0.0, %v1402
      %v1404 = vpop.f32.mrb[0].mxu0
      %1405 = vdwg.mxu0
      %1408 = vrot.lane.b32.xlu0 %v1150, 8
      %v1409 = vpop.permute.xlu0 %1408
      %1410 = vrot.lane.b32.xlu0 %v1153, 8
      %v1411 = vpop.permute.xlu0 %1410
      %1416 = vrot.lane.b32.xlu0 %v1275, 16
      %v1417 = vpop.permute.xlu0 %1416
      %1418 = vrot.lane.b32.xlu0 %v1278, 16
      %v1419 = vpop.permute.xlu0 %1418
      %1424 = vrot.lane.b32.xlu0 %v1400, 24
      %v1425 = vpop.permute.xlu0 %1424
      %1426 = vrot.lane.b32.xlu0 %v1403, 24
      %v1427 = vpop.permute.xlu0 %1426
      %v1430 = vsel %vm903, %v1025, %v1409
      %v1431 = vsel %vm903, %v1028, %v1411
      %vm1432 = vcmask 130048
      %v1433 = vsel %vm1432, %v1430, %v1417
      %v1434 = vsel %vm1432, %v1431, %v1419
      %vm1435 = vcmask 195584
      %v1436 = vsel %vm1435, %v1433, %v1425
      %v1437 = vsel %vm1435, %v1434, %v1427
      %v1438 = vpack.c.bf16 %v1437, %v1436
      %v1440 = vlaneseq
      %v1441 = vshrl.u32 %v1440, 7
      %v1442 = vsub.s32 0, %v1441
      %v1443 = vrot.slane %v898, %v1442
      %v1449 = vunpack.c.l.b16 %v894
      %v1450 = vunpack.c.l.b16 %v895
      %v1451 = vunpack.c.l.b16 %v896
      %v1452 = vunpack.c.l.b16 %v897
      %v1453 = vpack.c.b16 %v1450, %v1449
      %v1454 = vpack.c.b16 %v1452, %v1451
      %v1458 = vsel %vm849, %v1438, 0
      %1460 = vmatprep.subr.bf16.mxu0 0
      %1461 = vmatpush1.bf16.msra.mxu0 %v1453
      %1462 = vmatprep.subr.bf16.mxu0 0
      %1463 = vmatpush1.bf16.msra.mxu0 %v1454
      %1464 = vmatprep.subr.bf16.mxu0 0
      %1465 = vmatpush1.bf16.msra.mxu0 0
      %1466 = vmatprep.subr.bf16.mxu0 0
      %1467 = vmatpush1.bf16.msra.mxu0 0
      %1468 = vmatprep.subr.bf16.mxu0 0
      %1469 = vmatpush1.bf16.msra.mxu0 0
      %1470 = vmatprep.subr.bf16.mxu0 0
      %1471 = vmatpush1.bf16.msra.mxu0 0
      %1472 = vmatprep.subr.bf16.mxu0 0
      %1473 = vmatpush1.bf16.msra.mxu0 0
      %1474 = vmatprep.subr.bf16.mxu0 0
      %1475 = vmatpush1.bf16.msra.mxu0 0
      %1476 = vmatprep.subr.bf16.mxu0 0
      %1477 = vmatpush1.bf16.msra.mxu0 0
      %1478 = vmatprep.subr.bf16.mxu0 0
      %1479 = vmatpush1.bf16.msra.mxu0 0
      %1480 = vmatprep.subr.bf16.mxu0 0
      %1481 = vmatpush1.bf16.msra.mxu0 0
      %1482 = vmatprep.subr.bf16.mxu0 0
      %1483 = vmatpush1.bf16.msra.mxu0 0
      %1484 = vmatprep.subr.bf16.mxu0 0
      %1485 = vmatpush1.bf16.msra.mxu0 0
      %1486 = vmatprep.subr.bf16.mxu0 0
      %1487 = vmatpush1.bf16.msra.mxu0 0
      %1488 = vmatprep.subr.bf16.mxu0 0
      %1489 = vmatpush1.bf16.msra.mxu0 0
      %1490 = vmatprep.subr.bf16.mxu0 0
      %1491 = vmatpush1.bf16.msra.mxu0 0
      %1492 = vmatprep.mubr.bf16.mxu0 0
      %1493 = vmatmul.mubr.bf16.gmra.mrb[0].mxu0 %v1458
      %v1494 = vpop.f32.mrb[0].mxu0
      %v1495 = vadd.f32 %v1443, %v1494
      %v1496 = vpop.f32.mrb[0].mxu0
      %v1497 = vpop.f32.mrb[0].mxu0
      %v1498 = vadd.f32 %v1443, %v1497
      %v1499 = vpop.f32.mrb[0].mxu0
      %1500 = vdwg.mxu0
      %v1501 = vadd.f32 %v823, %v1495
      %v1502 = vadd.f32 %v824, %v1498
      %v1503 = vld [vmem:[%s722] sm:$0x1]
      %v1504 = vld [vmem:[%s725] sm:$0x1]
      %v1505 = vsel %vm849, %v1501, 0.0
      %1506 = vadd.xlane.f32.xlu0 %v1505
      %v1507 = vpop.xlane.xlu0 %1506
      %vm1508 = vcmask 258048
      %v1509 = vsel %vm1508, %v1502, 0.0
      %1510 = vadd.xlane.f32.xlu0 %v1509
      %v1511 = vpop.xlane.xlu0 %1510
      %v1512 = vrcp.pop 32.0
      %v1513 = vmul.f32 %v1507, %v1512
      %v1514 = vmul.f32 %v1511, %v1512
      %v1515 = vsub.f32 %v1501, %v1513
      %v1516 = vsub.f32 %v1502, %v1514
      %v1517 = vmul.f32 %v1515, %v1515
      %v1518 = vmul.f32 %v1516, %v1516
      %v1519 = vsel %vm849, %v1517, 0.0
      %1520 = vadd.xlane.f32.xlu0 %v1519
      %v1521 = vpop.xlane.xlu0 %1520
      %v1522 = vsel %vm1508, %v1518, 0.0
      %1523 = vadd.xlane.f32.xlu0 %v1522
      %v1524 = vpop.xlane.xlu0 %1523
      %v1525 = vmul.f32 %v1521, %v1512
      %v1526 = vmul.f32 %v1524, %v1512
      %v1527 = vadd.f32 %v1525, 1e-05
      %v1528 = vadd.f32 %v1526, 1e-05
      %v1529 = vrsqrt.pop %v1527
      %v1530 = vrsqrt.pop %v1528
      %v1531 = vmul.f32 %v1515, %v1529
      %v1532 = vmul.f32 %v1516, %v1530
      %v1534 = vlaneseq
      %v1535 = vshrl.u32 %v1534, 7
      %v1536 = vsub.s32 0, %v1535
      %v1537 = vrot.slane %v1503, %v1536
      %v1539 = vmul.f32 %v1531, %v1537
      %v1540 = vmul.f32 %v1532, %v1537
      %v1542 = vlaneseq
      %v1543 = vshrl.u32 %v1542, 7
      %v1544 = vsub.s32 0, %v1543
      %v1545 = vrot.slane %v1504, %v1544
      %v1547 = vadd.f32 %v1539, %v1545
      %v1548 = vadd.f32 %v1540, %v1545
      %v1549 = vld [vmem:[%s730] sm:$0xf]
      %v1550 = vld [vmem:[%s730 + $0x4] sm:$0xf]
      %v1551 = vld [vmem:[%s730 + $0x8] sm:$0xf]
      %v1552 = vld [vmem:[%s730 + $0xc] sm:$0xf]
      %v1553 = vpack.c.bf16 %v1548, %v1547
      %v1554 = vld [vmem:[%s733] sm:$0x1]
      %v1556 = vlaneseq
      %v1557 = vshrl.u32 %v1556, 7
      %v1558 = vsub.s32 0, %v1557
      %v1559 = vrot.slane %v1554, %v1558
      %v1565 = vunpack.c.l.b16 %v1549
      %v1566 = vunpack.c.l.b16 %v1550
      %v1567 = vunpack.c.l.b16 %v1551
      %v1568 = vunpack.c.l.b16 %v1552
      %v1569 = vpack.c.b16 %v1566, %v1565
      %v1570 = vpack.c.b16 %v1568, %v1567
      %v1574 = vsel %vm849, %v1553, 0
      %1576 = vmatprep.subr.bf16.mxu0 0
      %1577 = vmatpush1.bf16.msra.mxu0 %v1569
      %1578 = vmatprep.subr.bf16.mxu0 0
      %1579 = vmatpush1.bf16.msra.mxu0 %v1570
      %1580 = vmatprep.subr.bf16.mxu0 0
      %1581 = vmatpush1.bf16.msra.mxu0 0
      %1582 = vmatprep.subr.bf16.mxu0 0
      %1583 = vmatpush1.bf16.msra.mxu0 0
      %1584 = vmatprep.subr.bf16.mxu0 0
      %1585 = vmatpush1.bf16.msra.mxu0 0
      %1586 = vmatprep.subr.bf16.mxu0 0
      %1587 = vmatpush1.bf16.msra.mxu0 0
      %1588 = vmatprep.subr.bf16.mxu0 0
      %1589 = vmatpush1.bf16.msra.mxu0 0
      %1590 = vmatprep.subr.bf16.mxu0 0
      %1591 = vmatpush1.bf16.msra.mxu0 0
      %1592 = vmatprep.subr.bf16.mxu0 0
      %1593 = vmatpush1.bf16.msra.mxu0 0
      %1594 = vmatprep.subr.bf16.mxu0 0
      %1595 = vmatpush1.bf16.msra.mxu0 0
      %1596 = vmatprep.subr.bf16.mxu0 0
      %1597 = vmatpush1.bf16.msra.mxu0 0
      %1598 = vmatprep.subr.bf16.mxu0 0
      %1599 = vmatpush1.bf16.msra.mxu0 0
      %1600 = vmatprep.subr.bf16.mxu0 0
      %1601 = vmatpush1.bf16.msra.mxu0 0
      %1602 = vmatprep.subr.bf16.mxu0 0
      %1603 = vmatpush1.bf16.msra.mxu0 0
      %1604 = vmatprep.subr.bf16.mxu0 0
      %1605 = vmatpush1.bf16.msra.mxu0 0
      %1606 = vmatprep.subr.bf16.mxu0 0
      %1607 = vmatpush1.bf16.msra.mxu0 0
      %1608 = vmatprep.mubr.bf16.mxu0 0
      %1609 = vmatmul.mubr.bf16.gmra.mrb[0].mxu0 %v1574
      %v1610 = vpop.f32.mrb[0].mxu0
      %v1611 = vadd.f32 %v1559, %v1610
      %v1612 = vpop.f32.mrb[0].mxu0
      %v1613 = vpop.f32.mrb[0].mxu0
      %v1614 = vadd.f32 %v1559, %v1613
      %v1615 = vpop.f32.mrb[0].mxu0
      %1616 = vdwg.mxu0
      %v1617 = vmax.f32 %v1611, 0.0
      %v1618 = vmax.f32 %v1614, 0.0
      %v1619 = vld [vmem:[%s738] sm:$0xf]
      %v1620 = vld [vmem:[%s738 + $0x4] sm:$0xf]
      %v1621 = vld [vmem:[%s738 + $0x8] sm:$0xf]
      %v1622 = vld [vmem:[%s738 + $0xc] sm:$0xf]
      %v1623 = vld [vmem:[%s738 + $0x10] sm:$0xf]
      %v1624 = vld [vmem:[%s738 + $0x14] sm:$0xf]
      %v1625 = vld [vmem:[%s738 + $0x18] sm:$0xf]
      %v1626 = vld [vmem:[%s738 + $0x1c] sm:$0xf]
      %v1627 = vpack.c.bf16 %v1618, %v1617
      %v1636 = vunpack.c.l.b16 %v1619
      %v1637 = vunpack.c.l.b16 %v1620
      %v1638 = vunpack.c.l.b16 %v1621
      %v1639 = vunpack.c.l.b16 %v1622
      %v1640 = vunpack.c.l.b16 %v1623
      %v1641 = vunpack.c.l.b16 %v1624
      %v1642 = vunpack.c.l.b16 %v1625
      %v1643 = vunpack.c.l.b16 %v1626
      %v1644 = vpack.c.b16 %v1637, %v1636
      %v1645 = vpack.c.b16 %v1639, %v1638
      %v1646 = vpack.c.b16 %v1641, %v1640
      %v1647 = vpack.c.b16 %v1643, %v1642
      %vm1652 = vcmask 523264
      %v1654 = vsel %vm1652, %v1627, 0
      %1656 = vmatprep.subr.bf16.mxu0 0
      %1657 = vmatpush1.bf16.msra.mxu0 %v1644
      %1658 = vmatprep.subr.bf16.mxu0 0
      %1659 = vmatpush1.bf16.msra.mxu0 %v1645
      %1660 = vmatprep.subr.bf16.mxu0 0
      %1661 = vmatpush1.bf16.msra.mxu0 %v1646
      %1662 = vmatprep.subr.bf16.mxu0 0
      %1663 = vmatpush1.bf16.msra.mxu0 %v1647
      %1664 = vmatprep.subr.bf16.mxu0 0
      %1665 = vmatpush1.bf16.msra.mxu0 0
      %1666 = vmatprep.subr.bf16.mxu0 0
      %1667 = vmatpush1.bf16.msra.mxu0 0
      %1668 = vmatprep.subr.bf16.mxu0 0
      %1669 = vmatpush1.bf16.msra.mxu0 0
      %1670 = vmatprep.subr.bf16.mxu0 0
      %1671 = vmatpush1.bf16.msra.mxu0 0
      %1672 = vmatprep.subr.bf16.mxu0 0
      %1673 = vmatpush1.bf16.msra.mxu0 0
      %1674 = vmatprep.subr.bf16.mxu0 0
      %1675 = vmatpush1.bf16.msra.mxu0 0
      %1676 = vmatprep.subr.bf16.mxu0 0
      %1677 = vmatpush1.bf16.msra.mxu0 0
      %1678 = vmatprep.subr.bf16.mxu0 0
      %1679 = vmatpush1.bf16.msra.mxu0 0
      %1680 = vmatprep.subr.bf16.mxu0 0
      %1681 = vmatpush1.bf16.msra.mxu0 0
      %1682 = vmatprep.subr.bf16.mxu0 0
      %1683 = vmatpush1.bf16.msra.mxu0 0
      %1684 = vmatprep.subr.bf16.mxu0 0
      %1685 = vmatpush1.bf16.msra.mxu0 0
      %1686 = vmatprep.subr.bf16.mxu0 0
      %1687 = vmatpush1.bf16.msra.mxu0 0
      %1688 = vmatprep.mubr.bf16.mxu0 0
      %1689 = vmatmul.mubr.bf16.gmra.mrb[0].mxu0 %v1654
      %v1690 = vpop.f32.mrb[0].mxu0
      %v1691 = vadd.f32 0.0, %v1690
      %v1692 = vpop.f32.mrb[0].mxu0
      %v1693 = vpop.f32.mrb[0].mxu0
      %v1694 = vadd.f32 0.0, %v1693
      %v1695 = vpop.f32.mrb[0].mxu0
      %1696 = vdwg.mxu0
      %v1697 = vadd.f32 %v1547, %v1691
      %v1698 = vadd.f32 %v1548, %v1694
      %v1699 = vld [vmem:[%s741] sm:$0x1]
      %v1701 = vlaneseq
      %v1702 = vshrl.u32 %v1701, 7
      %v1703 = vsub.s32 0, %v1702
      %v1704 = vrot.slane %v1699, %v1703
      %v1706 = vadd.f32 %v1697, %v1704
      %v1707 = vadd.f32 %v1698, %v1704
      %v1708 = vld [vmem:[%s744] sm:$0x1]
      %v1709 = vld [vmem:[%s747] sm:$0x1]
      %v1710 = vsel %vm849, %v1706, 0.0
      %1711 = vadd.xlane.f32.xlu0 %v1710
      %v1712 = vpop.xlane.xlu0 %1711
      %v1713 = vsel %vm1508, %v1707, 0.0
      %1714 = vadd.xlane.f32.xlu0 %v1713
      %v1715 = vpop.xlane.xlu0 %1714
      %v1716 = vmul.f32 %v1712, %v1512
      %v1717 = vmul.f32 %v1715, %v1512
      %v1718 = vsub.f32 %v1706, %v1716
      %v1719 = vsub.f32 %v1707, %v1717
      %v1720 = vmul.f32 %v1718, %v1718
      %v1721 = vmul.f32 %v1719, %v1719
      %v1722 = vsel %vm849, %v1720, 0.0
      %1723 = vadd.xlane.f32.xlu0 %v1722
      %v1724 = vpop.xlane.xlu0 %1723
      %v1725 = vsel %vm1508, %v1721, 0.0
      %1726 = vadd.xlane.f32.xlu0 %v1725
      %v1727 = vpop.xlane.xlu0 %1726
      %v1728 = vmul.f32 %v1724, %v1512
      %v1729 = vmul.f32 %v1727, %v1512
      %v1730 = vadd.f32 %v1728, 1e-05
      %v1731 = vadd.f32 %v1729, 1e-05
      %v1732 = vrsqrt.pop %v1730
      %v1733 = vrsqrt.pop %v1731
      %v1734 = vmul.f32 %v1718, %v1732
      %v1735 = vmul.f32 %v1719, %v1733
      %v1737 = vlaneseq
      %v1738 = vshrl.u32 %v1737, 7
      %v1739 = vsub.s32 0, %v1738
      %v1740 = vrot.slane %v1708, %v1739
      %v1742 = vmul.f32 %v1734, %v1740
      %v1743 = vmul.f32 %v1735, %v1740
      %v1745 = vlaneseq
      %v1746 = vshrl.u32 %v1745, 7
      %v1747 = vsub.s32 0, %v1746
      %v1748 = vrot.slane %v1709, %v1747
      %v1750 = vadd.f32 %v1742, %v1748
      %v1751 = vadd.f32 %v1743, %v1748
      %1752 = vst.msk [vmem:[#allocation2] sm:$0xff] %vm849, %v1750
      %1753 = vst.msk [vmem:[#allocation2 + $0x8] sm:$0x1f] %vm1508, %v1751
      %p1754 = scmp.eq.s32.totalorder %s33, 1
      // Predicated region
      $region93: #{model_forward.4} parent=87 // pred_check
        %p1755 = pneg %p1754
      $region94: #{model_forward.4} parent=87 // pred_check_branch
        %1757 = sbr.rel (%p1755) target = $region96
      $region95: #{model_forward.4} parent=87 // pred_region
        %v1758 = vld [vmem:[%s15] sm:$0x1]
        %v1759 = vld [vmem:[%s16] sm:$0x1]
        %v1760 = vsel %vm849, %v1750, 0.0
        %1761 = vadd.xlane.f32.xlu0 %v1760
        %v1762 = vpop.xlane.xlu0 %1761
        %v1763 = vsel %vm1508, %v1751, 0.0
        %1764 = vadd.xlane.f32.xlu0 %v1763
        %v1765 = vpop.xlane.xlu0 %1764
        %v1766 = vmul.f32 %v1762, %v1512
        %v1767 = vmul.f32 %v1765, %v1512
        %v1768 = vsub.f32 %v1750, %v1766
        %v1769 = vsub.f32 %v1751, %v1767
        %v1770 = vmul.f32 %v1768, %v1768
        %v1771 = vmul.f32 %v1769, %v1769
        %v1772 = vsel %vm849, %v1770, 0.0
        %1773 = vadd.xlane.f32.xlu0 %v1772
        %v1774 = vpop.xlane.xlu0 %1773
        %v1775 = vsel %vm1508, %v1771, 0.0
        %1776 = vadd.xlane.f32.xlu0 %v1775
        %v1777 = vpop.xlane.xlu0 %1776
        %v1778 = vmul.f32 %v1774, %v1512
        %v1779 = vmul.f32 %v1777, %v1512
        %v1780 = vadd.f32 %v1778, 1e-05
        %v1781 = vadd.f32 %v1779, 1e-05
        %v1782 = vrsqrt.pop %v1780
        %v1783 = vrsqrt.pop %v1781
        %v1784 = vmul.f32 %v1768, %v1782
        %v1785 = vmul.f32 %v1769, %v1783
        %v1787 = vlaneseq
        %v1788 = vshrl.u32 %v1787, 7
        %v1789 = vsub.s32 0, %v1788
        %v1790 = vrot.slane %v1758, %v1789
        %v1792 = vmul.f32 %v1784, %v1790
        %v1793 = vmul.f32 %v1785, %v1790
        %v1795 = vlaneseq
        %v1796 = vshrl.u32 %v1795, 7
        %v1797 = vsub.s32 0, %v1796
        %v1798 = vrot.slane %v1759, %v1797
        %v1800 = vadd.f32 %v1792, %v1798
        %v1801 = vadd.f32 %v1793, %v1798
        %1802 = vst.msk [vmem:[%s752] sm:$0xff] %vm849, %v1800
        %1803 = vst.msk [vmem:[%s752 + $0x8] sm:$0x1f] %vm1508, %v1801
      $region96: #{model_forward.4} parent=87 // pred_fallthru
        _
      %p1804 = scmp.lt.s32.totalorder %s32, 1
      %s1805 = scalar_select %p1804, %s32, 1
      %s1806 = smul.addr %s1805, 2
      %s1807 = smul.addr %s1806, 8
      %s1808 = scalar_lea.vmem %s17, %s1807
      // Predicated region
      $region97: #{model_forward.4} parent=87 // pred_check
        %p1809 = pneg %p480
      $region98: #{model_forward.4} parent=87 // pred_check_branch
        %1811 = sbr.rel (%p1809) target = $region100
      $region99: #{model_forward.4} parent=87 // pred_region
        _
      $region100: #{model_forward.4} parent=87 // pred_fallthru
        _
    $region88: #{model_forward.4} parent=5 // pred_fallthru
      _
    %p1812 = scmp.le.s32.totalorder 2, %s23
    // Predicated region
    $region101: #{model_forward.4} parent=5 // pred_check
      %p1813 = pneg %p1812
    $region102: #{model_forward.4} parent=5 // pred_check_branch
      %1815 = sbr.rel (%p1813) target = $region104
    $region103: #{model_forward.4} parent=5 // pred_region
      %s1816 = ssub.s32 %s23, 2
      // Predicated region
      $region105: #{model_forward.4} parent=103 // pred_check
        %p1817 = pneg %p486
      $region106: #{model_forward.4} parent=103 // pred_check_branch
        %1819 = sbr.rel (%p1817) target = $region108
      $region107: #{model_forward.4} parent=103 // pred_region
        %p1820 = scmp.lt.s32.totalorder %s34, 1
        %s1821 = scalar_select %p1820, %s34, 1
        %s1822 = smul.addr %s1821, 2
        %s1823 = smul.addr %s1822, 8
        %s1824 = scalar_lea.vmem %s17, %s1823
      $region108: #{model_forward.4} parent=103 // pred_fallthru
        _
    $region104: #{model_forward.4} parent=5 // pred_fallthru
      _
  $region6: #{model_forward.4} parent=0 // loop_footer
    %s27 = sadd.s32 1, %s23
  $region7: #{model_forward.4} parent=0 // loop_footer_branch
    %22 = sbr.rel target = $region3
  $region8: #{model_forward.4} parent=0 // loop_exit
    _

// kernel: model_forward.5
$region0: #{model_forward.5}
  #allocation0 [shape = 'u32[]', space=smem, size = 0x4, offset = 0x4, fixed_abs, tag = 'smem constant byte address 0x4 - core index']
  #allocation1 [shape = 'u32[144,128]{1,0:T(1,128)}', space=vmem, size = 0x12000, scoped, tag = 'internal scratch']
  #allocation2 [shape = 'f32[12,32]{1,0:T(8,128)}', space=vmem, size = 0x2000, scoped, tag = 'scratch operand']
  %s0 = inlined_call_operand.smem [shape: u32[31], index: -1, kind: input, shape index: {}]
  %s1 = sld [smem:[%s0]]
  %s2 = scalar_lea.smem %s0, 1
  %s3 = sld [smem:[%s2]]
  %s4 = scalar_lea.smem %s0, 2
  %s5 = sld [smem:[%s4]]
  %s6 = scalar_lea.smem %s0, 3
  %s7 = sld [smem:[%s6]]
  %s8 = scalar_lea.smem %s0, 4
  %s9 = sld [smem:[%s8]]
  %s10 = scalar_lea.smem %s0, 5
  %s11 = sld [smem:[%s10]]
  %s12 = scalar_lea.smem %s0, 6
  %s13 = sld [smem:[%s12]]
  %s14 = scalar_lea.smem %s0, 7
  %s15 = sld [smem:[%s14]]
  %s16 = scalar_lea.smem %s0, 8
  %s17 = sld [smem:[%s16]]
  %s18 = scalar_lea.smem %s0, 9
  %s19 = sld [smem:[%s18]]
  %s20 = scalar_lea.smem %s0, 10
  %s21 = sld [smem:[%s20]]
  %s22 = scalar_lea.smem %s0, 11
  %s23 = sld [smem:[%s22]]
  %s24 = scalar_lea.smem %s0, 12
  %s25 = sld [smem:[%s24]]
  %s26 = scalar_lea.smem %s0, 13
  %s27 = sld [smem:[%s26]]
  %s28 = scalar_lea.smem %s0, 14
  %s29 = sld [smem:[%s28]]
  %s30 = scalar_lea.smem %s0, 15
  %s31 = sld [smem:[%s30]]
  %s32 = scalar_lea.smem %s0, 16
  %s33 = sld [smem:[%s32]]
  %s34 = scalar_lea.smem %s0, 17
  %s35 = sld [smem:[%s34]]
  %s36 = scalar_lea.smem %s0, 18
  %s37 = sld [smem:[%s36]]
  %s38 = scalar_lea.smem %s0, 19
  %s39 = sld [smem:[%s38]]
  %s40 = scalar_lea.smem %s0, 20
  %s41 = sld [smem:[%s40]]
  %s42 = scalar_lea.smem %s0, 21
  %s43 = sld [smem:[%s42]]
  %s44 = scalar_lea.smem %s0, 22
  %s45 = sld [smem:[%s44]]
  %s46 = scalar_lea.smem %s0, 23
  %s47 = sld [smem:[%s46]]
  %s48 = scalar_lea.smem %s0, 24
  %s49 = sld [smem:[%s48]]
  %s50 = scalar_lea.smem %s0, 25
  %s51 = sld [smem:[%s50]]
  %s52 = scalar_lea.smem %s0, 26
  %s53 = sld [smem:[%s52]]
  %s54 = scalar_lea.smem %s0, 27
  %s55 = sld [smem:[%s54]]
  %s56 = scalar_lea.smem %s0, 28
  %s57 = sld [smem:[%s56]]
  %s58 = scalar_lea.smem %s0, 29
  %s59 = sld [smem:[%s58]]
  %s60 = scalar_lea.smem %s0, 30
  %s61 = sld [smem:[%s60]]
  %s62 = sld [smem:[#allocation0]]
  $region161: #{model_forward.5} parent=0
    _
  %s64 = ssub.s32 1, %s62
  %s65 = scalar_select 0, %s64, %s62
  loop: start=0, step=1, limit=4
  $region2: #{model_forward.5} parent=0 // loop_pre_header
    _
  $region3: #{model_forward.5} parent=0 // loop_header
    %s67 = sphi 0, %s71
    %p68 = scmp.ge.s32.totalorder %s67, 4
    %s74 = sphi 0, %s86
    %s75 = sphi 0, %s82
    %s76 = sphi 0, %s74
    %s77 = sphi 0, %s75
    %s78 = sphi 0, %s76
    %s79 = sphi 0, %s77
    %s89 = sphi 0, %s91
    %s92 = sphi 0, %s89
    %s93 = sphi 0, %s92
    %s109 = sphi 0, %s93
    %s115 = sphi 0, %s117
    %s118 = sphi 0, %s115
    %s119 = sphi 0, %s118
    %s135 = sphi 0, %s119
    %s139 = sphi 0, %s139
    %s141 = sphi 0, %s139
    %s142 = sphi 0, %s141
    %s156 = sphi 0, %s142
    %s160 = sphi 0, %s160
    %s162 = sphi 0, %s160
    %s163 = sphi 0, %s162
    %s177 = sphi 0, %s163
    %s181 = sphi 0, %s181
    %s183 = sphi 0, %s181
    %s184 = sphi 0, %s183
    %s198 = sphi 0, %s184
    %s204 = sphi 0, %s206
    %s207 = sphi 0, %s204
    %s208 = sphi 0, %s207
    %s224 = sphi 0, %s208
    %s230 = sphi 0, %s232
    %s233 = sphi 0, %s230
    %s234 = sphi 0, %s233
    %s250 = sphi 0, %s234
    %s256 = sphi 0, %s258
    %s259 = sphi 0, %s256
    %s260 = sphi 0, %s259
    %s276 = sphi 0, %s260
    %s282 = sphi 0, %s284
    %s285 = sphi 0, %s282
    %s286 = sphi 0, %s285
    %s302 = sphi 0, %s286
    %s308 = sphi 0, %s310
    %s311 = sphi 0, %s308
    %s312 = sphi 0, %s311
    %s328 = sphi 0, %s312
    %s334 = sphi 0, %s336
    %s337 = sphi 0, %s334
    %s338 = sphi 0, %s337
    %s354 = sphi 0, %s338
    %s360 = sphi 0, %s362
    %s363 = sphi 0, %s360
    %s364 = sphi 0, %s363
    %s380 = sphi 0, %s364
    %s386 = sphi 0, %s388
    %s389 = sphi 0, %s386
    %s390 = sphi 0, %s389
    %s406 = sphi 0, %s390
    %s412 = sphi 0, %s414
    %s415 = sphi 0, %s412
    %s416 = sphi 0, %s415
    %s432 = sphi 0, %s416
    %s438 = sphi 0, %s440
    %s441 = sphi 0, %s438
    %s442 = sphi 0, %s441
    %s458 = sphi 0, %s442
    %s464 = sphi 0, %s466
    %s467 = sphi 0, %s464
    %s468 = sphi 0, %s467
    %s484 = sphi 0, %s468
    %s490 = sphi 0, %s492
    %s493 = sphi 0, %s490
    %s494 = sphi 0, %s493
    %s510 = sphi 0, %s494
    %s516 = sphi 0, %s518
    %s519 = sphi 0, %s516
    %s520 = sphi 0, %s519
    %s536 = sphi 0, %s520
    %s542 = sphi 0, %s544
    %s545 = sphi 0, %s542
    %s546 = sphi 0, %s545
    %s562 = sphi 0, %s546
    %s568 = sphi 0, %s570
    %s571 = sphi 0, %s568
    %s572 = sphi 0, %s571
    %s588 = sphi 0, %s572
    %s594 = sphi 0, %s596
    %s597 = sphi 0, %s594
    %s598 = sphi 0, %s597
    %s614 = sphi 0, %s598
    %s620 = sphi 0, %s622
    %s623 = sphi 0, %s620
    %s624 = sphi 0, %s623
    %s640 = sphi 0, %s624
    %s646 = sphi 0, %s648
    %s649 = sphi 0, %s646
    %s650 = sphi 0, %s649
    %s666 = sphi 0, %s650
    %s672 = sphi 0, %s674
    %s675 = sphi 0, %s672
    %s676 = sphi 0, %s675
    %s692 = sphi 0, %s676
    %s698 = sphi 0, %s700
    %s701 = sphi 0, %s698
    %s702 = sphi 0, %s701
    %s718 = sphi 0, %s702
    %s724 = sphi 0, %s726
    %s727 = sphi 0, %s724
    %s728 = sphi 0, %s727
    %s744 = sphi 0, %s728
    %s748 = sphi 0, %s748
    %s750 = sphi 0, %s748
    %s751 = sphi 0, %s750
    %s765 = sphi 0, %s751
    %s769 = sphi 0, %s769
    %s771 = sphi 0, %s769
    %s772 = sphi 0, %s771
    %s786 = sphi 0, %s772
    %s790 = sphi 0, %s790
    %s792 = sphi 0, %s790
    %s793 = sphi 0, %s792
    %s807 = sphi 0, %s793
    %s811 = sphi 0, %s811
    %s813 = sphi 0, %s811
    %s814 = sphi 0, %s813
    %s828 = sphi 0, %s814
    %s834 = sphi 0, %s836
    %s837 = sphi 0, %s834
    %s838 = sphi 0, %s837
    %s854 = sphi 0, %s838
  $region4: #{model_forward.5} parent=0 // loop_header_branch
    %70 = sbr.rel (%p68) target = $region8
  $region5: #{model_forward.5} parent=0 // loop_body
    %s72 = ssub.s32 %s67, 1
    %s73 = ssub.s32 %s67, 2
    %s80 = sadd.s32 1, %s75
    %p81 = scmp.ge.s32.totalorder %s80, 1
    %s82 = scalar_select %p81, 0, %s80
    %s83 = sadd.s32 1, %s74
    %s84 = scalar_select %p81, %s83, %s74
    %p85 = scmp.ge.s32.totalorder %s84, 2
    %s86 = scalar_select %p85, 0, %s84
    %s87 = ssub.s32 %s74, %s86
    %p88 = scmp.eq.s32.totalorder %s87, 0
    %s90 = sadd.s32 %s89, 1
    %s91 = scalar_select %p88, %s89, %s90
    %p94 = pneg %p88
    %p95 = scmp.eq.s32.totalorder %s67, 1
    %p96 = por %p94, %p95
    %p97 = scmp.ne.s32.totalorder %s89, %s92
    %p98 = scmp.eq.s32.totalorder %s67, 0
    %p99 = por %p97, %p98
    %p100 = scmp.ne.s32.totalorder %s89, %s92
    %p101 = scmp.eq.s32.totalorder %s72, 1
    %p102 = por %p100, %p101
    %p103 = scmp.ne.s32.totalorder %s92, %s93
    %p104 = scmp.eq.s32.totalorder %s72, 0
    %p105 = por %p103, %p104
    %p106 = scmp.ne.s32.totalorder %s92, %s93
    %p107 = scmp.eq.s32.totalorder %s73, 1
    %p108 = por %p106, %p107
    %p110 = scmp.ne.s32.totalorder %s93, %s109
    %p111 = scmp.eq.s32.totalorder %s73, 0
    %p112 = por %p110, %p111
    %s113 = ssub.s32 %s74, %s86
    %p114 = scmp.eq.s32.totalorder %s113, 0
    %s116 = sadd.s32 %s115, 1
    %s117 = scalar_select %p114, %s115, %s116
    %p120 = pneg %p114
    %p121 = scmp.eq.s32.totalorder %s67, 1
    %p122 = por %p120, %p121
    %p123 = scmp.ne.s32.totalorder %s115, %s118
    %p124 = scmp.eq.s32.totalorder %s67, 0
    %p125 = por %p123, %p124
    %p126 = scmp.ne.s32.totalorder %s115, %s118
    %p127 = scmp.eq.s32.totalorder %s72, 1
    %p128 = por %p126, %p127
    %p129 = scmp.ne.s32.totalorder %s118, %s119
    %p130 = scmp.eq.s32.totalorder %s72, 0
    %p131 = por %p129, %p130
    %p132 = scmp.ne.s32.totalorder %s118, %s119
    %p133 = scmp.eq.s32.totalorder %s73, 1
    %p134 = por %p132, %p133
    %p136 = scmp.ne.s32.totalorder %s119, %s135
    %p137 = scmp.eq.s32.totalorder %s73, 0
    %p138 = por %p136, %p137
    %s140 = sadd.s32 %s139, 1
    %p143 = scmp.eq.s32.totalorder %s67, 1
    %p144 = scmp.ne.s32.totalorder %s139, %s141
    %p145 = scmp.eq.s32.totalorder %s67, 0
    %p146 = por %p144, %p145
    %p147 = scmp.ne.s32.totalorder %s139, %s141
    %p148 = scmp.eq.s32.totalorder %s72, 1
    %p149 = por %p147, %p148
    %p150 = scmp.ne.s32.totalorder %s141, %s142
    %p151 = scmp.eq.s32.totalorder %s72, 0
    %p152 = por %p150, %p151
    %p153 = scmp.ne.s32.totalorder %s141, %s142
    %p154 = scmp.eq.s32.totalorder %s73, 1
    %p155 = por %p153, %p154
    %p157 = scmp.ne.s32.totalorder %s142, %s156
    %p158 = scmp.eq.s32.totalorder %s73, 0
    %p159 = por %p157, %p158
    %s161 = sadd.s32 %s160, 1
    %p164 = scmp.eq.s32.totalorder %s67, 1
    %p165 = scmp.ne.s32.totalorder %s160, %s162
    %p166 = scmp.eq.s32.totalorder %s67, 0
    %p167 = por %p165, %p166
    %p168 = scmp.ne.s32.totalorder %s160, %s162
    %p169 = scmp.eq.s32.totalorder %s72, 1
    %p170 = por %p168, %p169
    %p171 = scmp.ne.s32.totalorder %s162, %s163
    %p172 = scmp.eq.s32.totalorder %s72, 0
    %p173 = por %p171, %p172
    %p174 = scmp.ne.s32.totalorder %s162, %s163
    %p175 = scmp.eq.s32.totalorder %s73, 1
    %p176 = por %p174, %p175
    %p178 = scmp.ne.s32.totalorder %s163, %s177
    %p179 = scmp.eq.s32.totalorder %s73, 0
    %p180 = por %p178, %p179
    %s182 = sadd.s32 %s181, 1
    %p185 = scmp.eq.s32.totalorder %s67, 1
    %p186 = scmp.ne.s32.totalorder %s181, %s183
    %p187 = scmp.eq.s32.totalorder %s67, 0
    %p188 = por %p186, %p187
    %p189 = scmp.ne.s32.totalorder %s181, %s183
    %p190 = scmp.eq.s32.totalorder %s72, 1
    %p191 = por %p189, %p190
    %p192 = scmp.ne.s32.totalorder %s183, %s184
    %p193 = scmp.eq.s32.totalorder %s72, 0
    %p194 = por %p192, %p193
    %p195 = scmp.ne.s32.totalorder %s183, %s184
    %p196 = scmp.eq.s32.totalorder %s73, 1
    %p197 = por %p195, %p196
    %p199 = scmp.ne.s32.totalorder %s184, %s198
    %p200 = scmp.eq.s32.totalorder %s73, 0
    %p201 = por %p199, %p200
    %s202 = ssub.s32 %s74, %s86
    %p203 = scmp.eq.s32.totalorder %s202, 0
    %s205 = sadd.s32 %s204, 1
    %s206 = scalar_select %p203, %s204, %s205
    %p209 = pneg %p203
    %p210 = scmp.eq.s32.totalorder %s67, 1
    %p211 = por %p209, %p210
    %p212 = scmp.ne.s32.totalorder %s204, %s207
    %p213 = scmp.eq.s32.totalorder %s67, 0
    %p214 = por %p212, %p213
    %p215 = scmp.ne.s32.totalorder %s204, %s207
    %p216 = scmp.eq.s32.totalorder %s72, 1
    %p217 = por %p215, %p216
    %p218 = scmp.ne.s32.totalorder %s207, %s208
    %p219 = scmp.eq.s32.totalorder %s72, 0
    %p220 = por %p218, %p219
    %p221 = scmp.ne.s32.totalorder %s207, %s208
    %p222 = scmp.eq.s32.totalorder %s73, 1
    %p223 = por %p221, %p222
    %p225 = scmp.ne.s32.totalorder %s208, %s224
    %p226 = scmp.eq.s32.totalorder %s73, 0
    %p227 = por %p225, %p226
    %s228 = ssub.s32 %s75, %s82
    %p229 = scmp.eq.s32.totalorder %s228, 0
    %s231 = sadd.s32 %s230, 1
    %s232 = scalar_select %p229, %s230, %s231
    %p235 = pneg %p229
    %p236 = scmp.eq.s32.totalorder %s67, 1
    %p237 = por %p235, %p236
    %p238 = scmp.ne.s32.totalorder %s230, %s233
    %p239 = scmp.eq.s32.totalorder %s67, 0
    %p240 = por %p238, %p239
    %p241 = scmp.ne.s32.totalorder %s230, %s233
    %p242 = scmp.eq.s32.totalorder %s72, 1
    %p243 = por %p241, %p242
    %p244 = scmp.ne.s32.totalorder %s233, %s234
    %p245 = scmp.eq.s32.totalorder %s72, 0
    %p246 = por %p244, %p245
    %p247 = scmp.ne.s32.totalorder %s233, %s234
    %p248 = scmp.eq.s32.totalorder %s73, 1
    %p249 = por %p247, %p248
    %p251 = scmp.ne.s32.totalorder %s234, %s250
    %p252 = scmp.eq.s32.totalorder %s73, 0
    %p253 = por %p251, %p252
    %s254 = ssub.s32 %s75, %s82
    %p255 = scmp.eq.s32.totalorder %s254, 0
    %s257 = sadd.s32 %s256, 1
    %s258 = scalar_select %p255, %s256, %s257
    %p261 = pneg %p255
    %p262 = scmp.eq.s32.totalorder %s67, 1
    %p263 = por %p261, %p262
    %p264 = scmp.ne.s32.totalorder %s256, %s259
    %p265 = scmp.eq.s32.totalorder %s67, 0
    %p266 = por %p264, %p265
    %p267 = scmp.ne.s32.totalorder %s256, %s259
    %p268 = scmp.eq.s32.totalorder %s72, 1
    %p269 = por %p267, %p268
    %p270 = scmp.ne.s32.totalorder %s259, %s260
    %p271 = scmp.eq.s32.totalorder %s72, 0
    %p272 = por %p270, %p271
    %p273 = scmp.ne.s32.totalorder %s259, %s260
    %p274 = scmp.eq.s32.totalorder %s73, 1
    %p275 = por %p273, %p274
    %p277 = scmp.ne.s32.totalorder %s260, %s276
    %p278 = scmp.eq.s32.totalorder %s73, 0
    %p279 = por %p277, %p278
    %s280 = ssub.s32 %s75, %s82
    %p281 = scmp.eq.s32.totalorder %s280, 0
    %s283 = sadd.s32 %s282, 1
    %s284 = scalar_select %p281, %s282, %s283
    %p287 = pneg %p281
    %p288 = scmp.eq.s32.totalorder %s67, 1
    %p289 = por %p287, %p288
    %p290 = scmp.ne.s32.totalorder %s282, %s285
    %p291 = scmp.eq.s32.totalorder %s67, 0
    %p292 = por %p290, %p291
    %p293 = scmp.ne.s32.totalorder %s282, %s285
    %p294 = scmp.eq.s32.totalorder %s72, 1
    %p295 = por %p293, %p294
    %p296 = scmp.ne.s32.totalorder %s285, %s286
    %p297 = scmp.eq.s32.totalorder %s72, 0
    %p298 = por %p296, %p297
    %p299 = scmp.ne.s32.totalorder %s285, %s286
    %p300 = scmp.eq.s32.totalorder %s73, 1
    %p301 = por %p299, %p300
    %p303 = scmp.ne.s32.totalorder %s286, %s302
    %p304 = scmp.eq.s32.totalorder %s73, 0
    %p305 = por %p303, %p304
    %s306 = ssub.s32 %s75, %s82
    %p307 = scmp.eq.s32.totalorder %s306, 0
    %s309 = sadd.s32 %s308, 1
    %s310 = scalar_select %p307, %s308, %s309
    %p313 = pneg %p307
    %p314 = scmp.eq.s32.totalorder %s67, 1
    %p315 = por %p313, %p314
    %p316 = scmp.ne.s32.totalorder %s308, %s311
    %p317 = scmp.eq.s32.totalorder %s67, 0
    %p318 = por %p316, %p317
    %p319 = scmp.ne.s32.totalorder %s308, %s311
    %p320 = scmp.eq.s32.totalorder %s72, 1
    %p321 = por %p319, %p320
    %p322 = scmp.ne.s32.totalorder %s311, %s312
    %p323 = scmp.eq.s32.totalorder %s72, 0
    %p324 = por %p322, %p323
    %p325 = scmp.ne.s32.totalorder %s311, %s312
    %p326 = scmp.eq.s32.totalorder %s73, 1
    %p327 = por %p325, %p326
    %p329 = scmp.ne.s32.totalorder %s312, %s328
    %p330 = scmp.eq.s32.totalorder %s73, 0
    %p331 = por %p329, %p330
    %s332 = ssub.s32 %s75, %s82
    %p333 = scmp.eq.s32.totalorder %s332, 0
    %s335 = sadd.s32 %s334, 1
    %s336 = scalar_select %p333, %s334, %s335
    %p339 = pneg %p333
    %p340 = scmp.eq.s32.totalorder %s67, 1
    %p341 = por %p339, %p340
    %p342 = scmp.ne.s32.totalorder %s334, %s337
    %p343 = scmp.eq.s32.totalorder %s67, 0
    %p344 = por %p342, %p343
    %p345 = scmp.ne.s32.totalorder %s334, %s337
    %p346 = scmp.eq.s32.totalorder %s72, 1
    %p347 = por %p345, %p346
    %p348 = scmp.ne.s32.totalorder %s337, %s338
    %p349 = scmp.eq.s32.totalorder %s72, 0
    %p350 = por %p348, %p349
    %p351 = scmp.ne.s32.totalorder %s337, %s338
    %p352 = scmp.eq.s32.totalorder %s73, 1
    %p353 = por %p351, %p352
    %p355 = scmp.ne.s32.totalorder %s338, %s354
    %p356 = scmp.eq.s32.totalorder %s73, 0
    %p357 = por %p355, %p356
    %s358 = ssub.s32 %s75, %s82
    %p359 = scmp.eq.s32.totalorder %s358, 0
    %s361 = sadd.s32 %s360, 1
    %s362 = scalar_select %p359, %s360, %s361
    %p365 = pneg %p359
    %p366 = scmp.eq.s32.totalorder %s67, 1
    %p367 = por %p365, %p366
    %p368 = scmp.ne.s32.totalorder %s360, %s363
    %p369 = scmp.eq.s32.totalorder %s67, 0
    %p370 = por %p368, %p369
    %p371 = scmp.ne.s32.totalorder %s360, %s363
    %p372 = scmp.eq.s32.totalorder %s72, 1
    %p373 = por %p371, %p372
    %p374 = scmp.ne.s32.totalorder %s363, %s364
    %p375 = scmp.eq.s32.totalorder %s72, 0
    %p376 = por %p374, %p375
    %p377 = scmp.ne.s32.totalorder %s363, %s364
    %p378 = scmp.eq.s32.totalorder %s73, 1
    %p379 = por %p377, %p378
    %p381 = scmp.ne.s32.totalorder %s364, %s380
    %p382 = scmp.eq.s32.totalorder %s73, 0
    %p383 = por %p381, %p382
    %s384 = ssub.s32 %s75, %s82
    %p385 = scmp.eq.s32.totalorder %s384, 0
    %s387 = sadd.s32 %s386, 1
    %s388 = scalar_select %p385, %s386, %s387
    %p391 = pneg %p385
    %p392 = scmp.eq.s32.totalorder %s67, 1
    %p393 = por %p391, %p392
    %p394 = scmp.ne.s32.totalorder %s386, %s389
    %p395 = scmp.eq.s32.totalorder %s67, 0
    %p396 = por %p394, %p395
    %p397 = scmp.ne.s32.totalorder %s386, %s389
    %p398 = scmp.eq.s32.totalorder %s72, 1
    %p399 = por %p397, %p398
    %p400 = scmp.ne.s32.totalorder %s389, %s390
    %p401 = scmp.eq.s32.totalorder %s72, 0
    %p402 = por %p400, %p401
    %p403 = scmp.ne.s32.totalorder %s389, %s390
    %p404 = scmp.eq.s32.totalorder %s73, 1
    %p405 = por %p403, %p404
    %p407 = scmp.ne.s32.totalorder %s390, %s406
    %p408 = scmp.eq.s32.totalorder %s73, 0
    %p409 = por %p407, %p408
    %s410 = ssub.s32 %s75, %s82
    %p411 = scmp.eq.s32.totalorder %s410, 0
    %s413 = sadd.s32 %s412, 1
    %s414 = scalar_select %p411, %s412, %s413
    %p417 = pneg %p411
    %p418 = scmp.eq.s32.totalorder %s67, 1
    %p419 = por %p417, %p418
    %p420 = scmp.ne.s32.totalorder %s412, %s415
    %p421 = scmp.eq.s32.totalorder %s67, 0
    %p422 = por %p420, %p421
    %p423 = scmp.ne.s32.totalorder %s412, %s415
    %p424 = scmp.eq.s32.totalorder %s72, 1
    %p425 = por %p423, %p424
    %p426 = scmp.ne.s32.totalorder %s415, %s416
    %p427 = scmp.eq.s32.totalorder %s72, 0
    %p428 = por %p426, %p427
    %p429 = scmp.ne.s32.totalorder %s415, %s416
    %p430 = scmp.eq.s32.totalorder %s73, 1
    %p431 = por %p429, %p430
    %p433 = scmp.ne.s32.totalorder %s416, %s432
    %p434 = scmp.eq.s32.totalorder %s73, 0
    %p435 = por %p433, %p434
    %s436 = ssub.s32 %s75, %s82
    %p437 = scmp.eq.s32.totalorder %s436, 0
    %s439 = sadd.s32 %s438, 1
    %s440 = scalar_select %p437, %s438, %s439
    %p443 = pneg %p437
    %p444 = scmp.eq.s32.totalorder %s67, 1
    %p445 = por %p443, %p444
    %p446 = scmp.ne.s32.totalorder %s438, %s441
    %p447 = scmp.eq.s32.totalorder %s67, 0
    %p448 = por %p446, %p447
    %p449 = scmp.ne.s32.totalorder %s438, %s441
    %p450 = scmp.eq.s32.totalorder %s72, 1
    %p451 = por %p449, %p450
    %p452 = scmp.ne.s32.totalorder %s441, %s442
    %p453 = scmp.eq.s32.totalorder %s72, 0
    %p454 = por %p452, %p453
    %p455 = scmp.ne.s32.totalorder %s441, %s442
    %p456 = scmp.eq.s32.totalorder %s73, 1
    %p457 = por %p455, %p456
    %p459 = scmp.ne.s32.totalorder %s442, %s458
    %p460 = scmp.eq.s32.totalorder %s73, 0
    %p461 = por %p459, %p460
    %s462 = ssub.s32 %s75, %s82
    %p463 = scmp.eq.s32.totalorder %s462, 0
    %s465 = sadd.s32 %s464, 1
    %s466 = scalar_select %p463, %s464, %s465
    %p469 = pneg %p463
    %p470 = scmp.eq.s32.totalorder %s67, 1
    %p471 = por %p469, %p470
    %p472 = scmp.ne.s32.totalorder %s464, %s467
    %p473 = scmp.eq.s32.totalorder %s67, 0
    %p474 = por %p472, %p473
    %p475 = scmp.ne.s32.totalorder %s464, %s467
    %p476 = scmp.eq.s32.totalorder %s72, 1
    %p477 = por %p475, %p476
    %p478 = scmp.ne.s32.totalorder %s467, %s468
    %p479 = scmp.eq.s32.totalorder %s72, 0
    %p480 = por %p478, %p479
    %p481 = scmp.ne.s32.totalorder %s467, %s468
    %p482 = scmp.eq.s32.totalorder %s73, 1
    %p483 = por %p481, %p482
    %p485 = scmp.ne.s32.totalorder %s468, %s484
    %p486 = scmp.eq.s32.totalorder %s73, 0
    %p487 = por %p485, %p486
    %s488 = ssub.s32 %s75, %s82
    %p489 = scmp.eq.s32.totalorder %s488, 0
    %s491 = sadd.s32 %s490, 1
    %s492 = scalar_select %p489, %s490, %s491
    %p495 = pneg %p489
    %p496 = scmp.eq.s32.totalorder %s67, 1
    %p497 = por %p495, %p496
    %p498 = scmp.ne.s32.totalorder %s490, %s493
    %p499 = scmp.eq.s32.totalorder %s67, 0
    %p500 = por %p498, %p499
    %p501 = scmp.ne.s32.totalorder %s490, %s493
    %p502 = scmp.eq.s32.totalorder %s72, 1
    %p503 = por %p501, %p502
    %p504 = scmp.ne.s32.totalorder %s493, %s494
    %p505 = scmp.eq.s32.totalorder %s72, 0
    %p506 = por %p504, %p505
    %p507 = scmp.ne.s32.totalorder %s493, %s494
    %p508 = scmp.eq.s32.totalorder %s73, 1
    %p509 = por %p507, %p508
    %p511 = scmp.ne.s32.totalorder %s494, %s510
    %p512 = scmp.eq.s32.totalorder %s73, 0
    %p513 = por %p511, %p512
    %s514 = ssub.s32 %s75, %s82
    %p515 = scmp.eq.s32.totalorder %s514, 0
    %s517 = sadd.s32 %s516, 1
    %s518 = scalar_select %p515, %s516, %s517
    %p521 = pneg %p515
    %p522 = scmp.eq.s32.totalorder %s67, 1
    %p523 = por %p521, %p522
    %p524 = scmp.ne.s32.totalorder %s516, %s519
    %p525 = scmp.eq.s32.totalorder %s67, 0
    %p526 = por %p524, %p525
    %p527 = scmp.ne.s32.totalorder %s516, %s519
    %p528 = scmp.eq.s32.totalorder %s72, 1
    %p529 = por %p527, %p528
    %p530 = scmp.ne.s32.totalorder %s519, %s520
    %p531 = scmp.eq.s32.totalorder %s72, 0
    %p532 = por %p530, %p531
    %p533 = scmp.ne.s32.totalorder %s519, %s520
    %p534 = scmp.eq.s32.totalorder %s73, 1
    %p535 = por %p533, %p534
    %p537 = scmp.ne.s32.totalorder %s520, %s536
    %p538 = scmp.eq.s32.totalorder %s73, 0
    %p539 = por %p537, %p538
    %s540 = ssub.s32 %s75, %s82
    %p541 = scmp.eq.s32.totalorder %s540, 0
    %s543 = sadd.s32 %s542, 1
    %s544 = scalar_select %p541, %s542, %s543
    %p547 = pneg %p541
    %p548 = scmp.eq.s32.totalorder %s67, 1
    %p549 = por %p547, %p548
    %p550 = scmp.ne.s32.totalorder %s542, %s545
    %p551 = scmp.eq.s32.totalorder %s67, 0
    %p552 = por %p550, %p551
    %p553 = scmp.ne.s32.totalorder %s542, %s545
    %p554 = scmp.eq.s32.totalorder %s72, 1
    %p555 = por %p553, %p554
    %p556 = scmp.ne.s32.totalorder %s545, %s546
    %p557 = scmp.eq.s32.totalorder %s72, 0
    %p558 = por %p556, %p557
    %p559 = scmp.ne.s32.totalorder %s545, %s546
    %p560 = scmp.eq.s32.totalorder %s73, 1
    %p561 = por %p559, %p560
    %p563 = scmp.ne.s32.totalorder %s546, %s562
    %p564 = scmp.eq.s32.totalorder %s73, 0
    %p565 = por %p563, %p564
    %s566 = ssub.s32 %s75, %s82
    %p567 = scmp.eq.s32.totalorder %s566, 0
    %s569 = sadd.s32 %s568, 1
    %s570 = scalar_select %p567, %s568, %s569
    %p573 = pneg %p567
    %p574 = scmp.eq.s32.totalorder %s67, 1
    %p575 = por %p573, %p574
    %p576 = scmp.ne.s32.totalorder %s568, %s571
    %p577 = scmp.eq.s32.totalorder %s67, 0
    %p578 = por %p576, %p577
    %p579 = scmp.ne.s32.totalorder %s568, %s571
    %p580 = scmp.eq.s32.totalorder %s72, 1
    %p581 = por %p579, %p580
    %p582 = scmp.ne.s32.totalorder %s571, %s572
    %p583 = scmp.eq.s32.totalorder %s72, 0
    %p584 = por %p582, %p583
    %p585 = scmp.ne.s32.totalorder %s571, %s572
    %p586 = scmp.eq.s32.totalorder %s73, 1
    %p587 = por %p585, %p586
    %p589 = scmp.ne.s32.totalorder %s572, %s588
    %p590 = scmp.eq.s32.totalorder %s73, 0
    %p591 = por %p589, %p590
    %s592 = ssub.s32 %s75, %s82
    %p593 = scmp.eq.s32.totalorder %s592, 0
    %s595 = sadd.s32 %s594, 1
    %s596 = scalar_select %p593, %s594, %s595
    %p599 = pneg %p593
    %p600 = scmp.eq.s32.totalorder %s67, 1
    %p601 = por %p599, %p600
    %p602 = scmp.ne.s32.totalorder %s594, %s597
    %p603 = scmp.eq.s32.totalorder %s67, 0
    %p604 = por %p602, %p603
    %p605 = scmp.ne.s32.totalorder %s594, %s597
    %p606 = scmp.eq.s32.totalorder %s72, 1
    %p607 = por %p605, %p606
    %p608 = scmp.ne.s32.totalorder %s597, %s598
    %p609 = scmp.eq.s32.totalorder %s72, 0
    %p610 = por %p608, %p609
    %p611 = scmp.ne.s32.totalorder %s597, %s598
    %p612 = scmp.eq.s32.totalorder %s73, 1
    %p613 = por %p611, %p612
    %p615 = scmp.ne.s32.totalorder %s598, %s614
    %p616 = scmp.eq.s32.totalorder %s73, 0
    %p617 = por %p615, %p616
    %s618 = ssub.s32 %s75, %s82
    %p619 = scmp.eq.s32.totalorder %s618, 0
    %s621 = sadd.s32 %s620, 1
    %s622 = scalar_select %p619, %s620, %s621
    %p625 = pneg %p619
    %p626 = scmp.eq.s32.totalorder %s67, 1
    %p627 = por %p625, %p626
    %p628 = scmp.ne.s32.totalorder %s620, %s623
    %p629 = scmp.eq.s32.totalorder %s67, 0
    %p630 = por %p628, %p629
    %p631 = scmp.ne.s32.totalorder %s620, %s623
    %p632 = scmp.eq.s32.totalorder %s72, 1
    %p633 = por %p631, %p632
    %p634 = scmp.ne.s32.totalorder %s623, %s624
    %p635 = scmp.eq.s32.totalorder %s72, 0
    %p636 = por %p634, %p635
    %p637 = scmp.ne.s32.totalorder %s623, %s624
    %p638 = scmp.eq.s32.totalorder %s73, 1
    %p639 = por %p637, %p638
    %p641 = scmp.ne.s32.totalorder %s624, %s640
    %p642 = scmp.eq.s32.totalorder %s73, 0
    %p643 = por %p641, %p642
    %s644 = ssub.s32 %s75, %s82
    %p645 = scmp.eq.s32.totalorder %s644, 0
    %s647 = sadd.s32 %s646, 1
    %s648 = scalar_select %p645, %s646, %s647
    %p651 = pneg %p645
    %p652 = scmp.eq.s32.totalorder %s67, 1
    %p653 = por %p651, %p652
    %p654 = scmp.ne.s32.totalorder %s646, %s649
    %p655 = scmp.eq.s32.totalorder %s67, 0
    %p656 = por %p654, %p655
    %p657 = scmp.ne.s32.totalorder %s646, %s649
    %p658 = scmp.eq.s32.totalorder %s72, 1
    %p659 = por %p657, %p658
    %p660 = scmp.ne.s32.totalorder %s649, %s650
    %p661 = scmp.eq.s32.totalorder %s72, 0
    %p662 = por %p660, %p661
    %p663 = scmp.ne.s32.totalorder %s649, %s650
    %p664 = scmp.eq.s32.totalorder %s73, 1
    %p665 = por %p663, %p664
    %p667 = scmp.ne.s32.totalorder %s650, %s666
    %p668 = scmp.eq.s32.totalorder %s73, 0
    %p669 = por %p667, %p668
    %s670 = ssub.s32 %s75, %s82
    %p671 = scmp.eq.s32.totalorder %s670, 0
    %s673 = sadd.s32 %s672, 1
    %s674 = scalar_select %p671, %s672, %s673
    %p677 = pneg %p671
    %p678 = scmp.eq.s32.totalorder %s67, 1
    %p679 = por %p677, %p678
    %p680 = scmp.ne.s32.totalorder %s672, %s675
    %p681 = scmp.eq.s32.totalorder %s67, 0
    %p682 = por %p680, %p681
    %p683 = scmp.ne.s32.totalorder %s672, %s675
    %p684 = scmp.eq.s32.totalorder %s72, 1
    %p685 = por %p683, %p684
    %p686 = scmp.ne.s32.totalorder %s675, %s676
    %p687 = scmp.eq.s32.totalorder %s72, 0
    %p688 = por %p686, %p687
    %p689 = scmp.ne.s32.totalorder %s675, %s676
    %p690 = scmp.eq.s32.totalorder %s73, 1
    %p691 = por %p689, %p690
    %p693 = scmp.ne.s32.totalorder %s676, %s692
    %p694 = scmp.eq.s32.totalorder %s73, 0
    %p695 = por %p693, %p694
    %s696 = ssub.s32 %s75, %s82
    %p697 = scmp.eq.s32.totalorder %s696, 0
    %s699 = sadd.s32 %s698, 1
    %s700 = scalar_select %p697, %s698, %s699
    %p703 = pneg %p697
    %p704 = scmp.eq.s32.totalorder %s67, 1
    %p705 = por %p703, %p704
    %p706 = scmp.ne.s32.totalorder %s698, %s701
    %p707 = scmp.eq.s32.totalorder %s67, 0
    %p708 = por %p706, %p707
    %p709 = scmp.ne.s32.totalorder %s698, %s701
    %p710 = scmp.eq.s32.totalorder %s72, 1
    %p711 = por %p709, %p710
    %p712 = scmp.ne.s32.totalorder %s701, %s702
    %p713 = scmp.eq.s32.totalorder %s72, 0
    %p714 = por %p712, %p713
    %p715 = scmp.ne.s32.totalorder %s701, %s702
    %p716 = scmp.eq.s32.totalorder %s73, 1
    %p717 = por %p715, %p716
    %p719 = scmp.ne.s32.totalorder %s702, %s718
    %p720 = scmp.eq.s32.totalorder %s73, 0
    %p721 = por %p719, %p720
    %s722 = ssub.s32 %s75, %s82
    %p723 = scmp.eq.s32.totalorder %s722, 0
    %s725 = sadd.s32 %s724, 1
    %s726 = scalar_select %p723, %s724, %s725
    %p729 = pneg %p723
    %p730 = scmp.eq.s32.totalorder %s67, 1
    %p731 = por %p729, %p730
    %p732 = scmp.ne.s32.totalorder %s724, %s727
    %p733 = scmp.eq.s32.totalorder %s67, 0
    %p734 = por %p732, %p733
    %p735 = scmp.ne.s32.totalorder %s724, %s727
    %p736 = scmp.eq.s32.totalorder %s72, 1
    %p737 = por %p735, %p736
    %p738 = scmp.ne.s32.totalorder %s727, %s728
    %p739 = scmp.eq.s32.totalorder %s72, 0
    %p740 = por %p738, %p739
    %p741 = scmp.ne.s32.totalorder %s727, %s728
    %p742 = scmp.eq.s32.totalorder %s73, 1
    %p743 = por %p741, %p742
    %p745 = scmp.ne.s32.totalorder %s728, %s744
    %p746 = scmp.eq.s32.totalorder %s73, 0
    %p747 = por %p745, %p746
    %s749 = sadd.s32 %s748, 1
    %p752 = scmp.eq.s32.totalorder %s67, 1
    %p753 = scmp.ne.s32.totalorder %s748, %s750
    %p754 = scmp.eq.s32.totalorder %s67, 0
    %p755 = por %p753, %p754
    %p756 = scmp.ne.s32.totalorder %s748, %s750
    %p757 = scmp.eq.s32.totalorder %s72, 1
    %p758 = por %p756, %p757
    %p759 = scmp.ne.s32.totalorder %s750, %s751
    %p760 = scmp.eq.s32.totalorder %s72, 0
    %p761 = por %p759, %p760
    %p762 = scmp.ne.s32.totalorder %s750, %s751
    %p763 = scmp.eq.s32.totalorder %s73, 1
    %p764 = por %p762, %p763
    %p766 = scmp.ne.s32.totalorder %s751, %s765
    %p767 = scmp.eq.s32.totalorder %s73, 0
    %p768 = por %p766, %p767
    %s770 = sadd.s32 %s769, 1
    %p773 = scmp.eq.s32.totalorder %s67, 1
    %p774 = scmp.ne.s32.totalorder %s769, %s771
    %p775 = scmp.eq.s32.totalorder %s67, 0
    %p776 = por %p774, %p775
    %p777 = scmp.ne.s32.totalorder %s769, %s771
    %p778 = scmp.eq.s32.totalorder %s72, 1
    %p779 = por %p777, %p778
    %p780 = scmp.ne.s32.totalorder %s771, %s772
    %p781 = scmp.eq.s32.totalorder %s72, 0
    %p782 = por %p780, %p781
    %p783 = scmp.ne.s32.totalorder %s771, %s772
    %p784 = scmp.eq.s32.totalorder %s73, 1
    %p785 = por %p783, %p784
    %p787 = scmp.ne.s32.totalorder %s772, %s786
    %p788 = scmp.eq.s32.totalorder %s73, 0
    %p789 = por %p787, %p788
    %s791 = sadd.s32 %s790, 1
    %p794 = scmp.eq.s32.totalorder %s67, 1
    %p795 = scmp.ne.s32.totalorder %s790, %s792
    %p796 = scmp.eq.s32.totalorder %s67, 0
    %p797 = por %p795, %p796
    %p798 = scmp.ne.s32.totalorder %s790, %s792
    %p799 = scmp.eq.s32.totalorder %s72, 1
    %p800 = por %p798, %p799
    %p801 = scmp.ne.s32.totalorder %s792, %s793
    %p802 = scmp.eq.s32.totalorder %s72, 0
    %p803 = por %p801, %p802
    %p804 = scmp.ne.s32.totalorder %s792, %s793
    %p805 = scmp.eq.s32.totalorder %s73, 1
    %p806 = por %p804, %p805
    %p808 = scmp.ne.s32.totalorder %s793, %s807
    %p809 = scmp.eq.s32.totalorder %s73, 0
    %p810 = por %p808, %p809
    %s812 = sadd.s32 %s811, 1
    %p815 = scmp.eq.s32.totalorder %s67, 1
    %p816 = scmp.ne.s32.totalorder %s811, %s813
    %p817 = scmp.eq.s32.totalorder %s67, 0
    %p818 = por %p816, %p817
    %p819 = scmp.ne.s32.totalorder %s811, %s813
    %p820 = scmp.eq.s32.totalorder %s72, 1
    %p821 = por %p819, %p820
    %p822 = scmp.ne.s32.totalorder %s813, %s814
    %p823 = scmp.eq.s32.totalorder %s72, 0
    %p824 = por %p822, %p823
    %p825 = scmp.ne.s32.totalorder %s813, %s814
    %p826 = scmp.eq.s32.totalorder %s73, 1
    %p827 = por %p825, %p826
    %p829 = scmp.ne.s32.totalorder %s814, %s828
    %p830 = scmp.eq.s32.totalorder %s73, 0
    %p831 = por %p829, %p830
    %s832 = ssub.s32 %s74, %s86
    %p833 = scmp.eq.s32.totalorder %s832, 0
    %s835 = sadd.s32 %s834, 1
    %s836 = scalar_select %p833, %s834, %s835
    %p839 = pneg %p833
    %p840 = scmp.eq.s32.totalorder %s67, 1
    %p841 = por %p839, %p840
    %p842 = scmp.ne.s32.totalorder %s834, %s837
    %p843 = scmp.eq.s32.totalorder %s67, 0
    %p844 = por %p842, %p843
    %p845 = scmp.ne.s32.totalorder %s834, %s837
    %p846 = scmp.eq.s32.totalorder %s72, 1
    %p847 = por %p845, %p846
    %p848 = scmp.ne.s32.totalorder %s837, %s838
    %p849 = scmp.eq.s32.totalorder %s72, 0
    %p850 = por %p848, %p849
    %p851 = scmp.ne.s32.totalorder %s837, %s838
    %p852 = scmp.eq.s32.totalorder %s73, 1
    %p853 = por %p851, %p852
    %p855 = scmp.ne.s32.totalorder %s838, %s854
    %p856 = scmp.eq.s32.totalorder %s73, 0
    %p857 = por %p855, %p856
    %p858 = scmp.le.s32.totalorder 1, %s67
    %p859 = scmp.lt.s32.totalorder %s67, 3
    %p860 = pnand %p858, %p859
    %p861 = pneg %p860
    // Predicated region
    $region9: #{model_forward.5} parent=5 // pred_check
      _
    $region10: #{model_forward.5} parent=5 // pred_check_branch
      %863 = sbr.rel (%p860) target = $region12
    $region11: #{model_forward.5} parent=5 // pred_region
      %s864 = ssub.s32 %s67, 1
      // Predicated region
      $region13: #{model_forward.5} parent=11 // pred_check
        %p865 = pneg %p152
      $region14: #{model_forward.5} parent=11 // pred_check_branch
        %867 = sbr.rel (%p865) target = $region16
      $region15: #{model_forward.5} parent=11 // pred_region
        _
      $region16: #{model_forward.5} parent=11 // pred_fallthru
        _
      // Predicated region
      $region17: #{model_forward.5} parent=11 // pred_check
        %p868 = pneg %p173
      $region18: #{model_forward.5} parent=11 // pred_check_branch
        %870 = sbr.rel (%p868) target = $region20
      $region19: #{model_forward.5} parent=11 // pred_region
        _
      $region20: #{model_forward.5} parent=11 // pred_fallthru
        _
      // Predicated region
      $region21: #{model_forward.5} parent=11 // pred_check
        %p871 = pneg %p194
      $region22: #{model_forward.5} parent=11 // pred_check_branch
        %873 = sbr.rel (%p871) target = $region24
      $region23: #{model_forward.5} parent=11 // pred_region
        _
      $region24: #{model_forward.5} parent=11 // pred_fallthru
        _
      // Predicated region
      $region25: #{model_forward.5} parent=11 // pred_check
        %p874 = pneg %p246
      $region26: #{model_forward.5} parent=11 // pred_check_branch
        %876 = sbr.rel (%p874) target = $region28
      $region27: #{model_forward.5} parent=11 // pred_region
        %p877 = scmp.lt.s32.totalorder %s77, 0
        %s878 = scalar_select %p877, %s77, 0
        %s879 = smul.addr %s878, 4
        %s880 = smul.addr %s879, 4
        %s881 = scalar_lea.vmem %s13, %s880
      $region28: #{model_forward.5} parent=11 // pred_fallthru
        _
      // Predicated region
      $region29: #{model_forward.5} parent=11 // pred_check
        %p882 = pneg %p272
      $region30: #{model_forward.5} parent=11 // pred_check_branch
        %884 = sbr.rel (%p882) target = $region32
      $region31: #{model_forward.5} parent=11 // pred_region
        %p885 = scmp.lt.s32.totalorder %s77, 0
        %s886 = scalar_select %p885, %s77, 0
        %s887 = scalar_lea.vmem %s15, %s886
      $region32: #{model_forward.5} parent=11 // pred_fallthru
        _
      // Predicated region
      $region33: #{model_forward.5} parent=11 // pred_check
        %p888 = pneg %p298
      $region34: #{model_forward.5} parent=11 // pred_check_branch
        %890 = sbr.rel (%p888) target = $region36
      $region35: #{model_forward.5} parent=11 // pred_region
        %p891 = scmp.lt.s32.totalorder %s77, 0
        %s892 = scalar_select %p891, %s77, 0
        %s893 = smul.addr %s892, 4
        %s894 = smul.addr %s893, 4
        %s895 = scalar_lea.vmem %s17, %s894
      $region36: #{model_forward.5} parent=11 // pred_fallthru
        _
      // Predicated region
      $region37: #{model_forward.5} parent=11 // pred_check
        %p896 = pneg %p324
      $region38: #{model_forward.5} parent=11 // pred_check_branch
        %898 = sbr.rel (%p896) target = $region40
      $region39: #{model_forward.5} parent=11 // pred_region
        %p899 = scmp.lt.s32.totalorder %s77, 0
        %s900 = scalar_select %p899, %s77, 0
        %s901 = scalar_lea.vmem %s19, %s900
      $region40: #{model_forward.5} parent=11 // pred_fallthru
        _
      // Predicated region
      $region41: #{model_forward.5} parent=11 // pred_check
        %p902 = pneg %p350
      $region42: #{model_forward.5} parent=11 // pred_check_branch
        %904 = sbr.rel (%p902) target = $region44
      $region43: #{model_forward.5} parent=11 // pred_region
        %p905 = scmp.lt.s32.totalorder %s77, 0
        %s906 = scalar_select %p905, %s77, 0
        %s907 = scalar_lea.vmem %s21, %s906
      $region44: #{model_forward.5} parent=11 // pred_fallthru
        _
      // Predicated region
      $region45: #{model_forward.5} parent=11 // pred_check
        %p908 = pneg %p376
      $region46: #{model_forward.5} parent=11 // pred_check_branch
        %910 = sbr.rel (%p908) target = $region48
      $region47: #{model_forward.5} parent=11 // pred_region
        %p911 = scmp.lt.s32.totalorder %s77, 0
        %s912 = scalar_select %p911, %s77, 0
        %s913 = scalar_lea.vmem %s23, %s912
      $region48: #{model_forward.5} parent=11 // pred_fallthru
        _
      // Predicated region
      $region49: #{model_forward.5} parent=11 // pred_check
        %p914 = pneg %p402
      $region50: #{model_forward.5} parent=11 // pred_check_branch
        %916 = sbr.rel (%p914) target = $region52
      $region51: #{model_forward.5} parent=11 // pred_region
        %p917 = scmp.lt.s32.totalorder %s77, 0
        %s918 = scalar_select %p917, %s77, 0
        %s919 = smul.addr %s918, 4
        %s920 = smul.addr %s919, 4
        %s921 = scalar_lea.vmem %s25, %s920
      $region52: #{model_forward.5} parent=11 // pred_fallthru
        _
      // Predicated region
      $region53: #{model_forward.5} parent=11 // pred_check
        %p922 = pneg %p428
      $region54: #{model_forward.5} parent=11 // pred_check_branch
        %924 = sbr.rel (%p922) target = $region56
      $region55: #{model_forward.5} parent=11 // pred_region
        %p925 = scmp.lt.s32.totalorder %s77, 0
        %s926 = scalar_select %p925, %s77, 0
        %s927 = scalar_lea.vmem %s27, %s926
      $region56: #{model_forward.5} parent=11 // pred_fallthru
        _
      // Predicated region
      $region57: #{model_forward.5} parent=11 // pred_check
        %p928 = pneg %p454
      $region58: #{model_forward.5} parent=11 // pred_check_branch
        %930 = sbr.rel (%p928) target = $region60
      $region59: #{model_forward.5} parent=11 // pred_region
        %p931 = scmp.lt.s32.totalorder %s77, 0
        %s932 = scalar_select %p931, %s77, 0
        %s933 = smul.addr %s932, 4
        %s934 = smul.addr %s933, 4
        %s935 = scalar_lea.vmem %s29, %s934
      $region60: #{model_forward.5} parent=11 // pred_fallthru
        _
      // Predicated region
      $region61: #{model_forward.5} parent=11 // pred_check
        %p936 = pneg %p480
      $region62: #{model_forward.5} parent=11 // pred_check_branch
        %938 = sbr.rel (%p936) target = $region64
      $region63: #{model_forward.5} parent=11 // pred_region
        %p939 = scmp.lt.s32.totalorder %s77, 0
        %s940 = scalar_select %p939, %s77, 0
        %s941 = scalar_lea.vmem %s31, %s940
      $region64: #{model_forward.5} parent=11 // pred_fallthru
        _
      // Predicated region
      $region65: #{model_forward.5} parent=11 // pred_check
        %p942 = pneg %p506
      $region66: #{model_forward.5} parent=11 // pred_check_branch
        %944 = sbr.rel (%p942) target = $region68
      $region67: #{model_forward.5} parent=11 // pred_region
        %p945 = scmp.lt.s32.totalorder %s77, 0
        %s946 = scalar_select %p945, %s77, 0
        %s947 = smul.addr %s946, 4
        %s948 = smul.addr %s947, 4
        %s949 = scalar_lea.vmem %s33, %s948
      $region68: #{model_forward.5} parent=11 // pred_fallthru
        _
      // Predicated region
      $region69: #{model_forward.5} parent=11 // pred_check
        %p950 = pneg %p532
      $region70: #{model_forward.5} parent=11 // pred_check_branch
        %952 = sbr.rel (%p950) target = $region72
      $region71: #{model_forward.5} parent=11 // pred_region
        %p953 = scmp.lt.s32.totalorder %s77, 0
        %s954 = scalar_select %p953, %s77, 0
        %s955 = scalar_lea.vmem %s35, %s954
      $region72: #{model_forward.5} parent=11 // pred_fallthru
        _
      // Predicated region
      $region73: #{model_forward.5} parent=11 // pred_check
        %p956 = pneg %p558
      $region74: #{model_forward.5} parent=11 // pred_check_branch
        %958 = sbr.rel (%p956) target = $region76
      $region75: #{model_forward.5} parent=11 // pred_region
        %p959 = scmp.lt.s32.totalorder %s77, 0
        %s960 = scalar_select %p959, %s77, 0
        %s961 = scalar_lea.vmem %s37, %s960
      $region76: #{model_forward.5} parent=11 // pred_fallthru
        _
      // Predicated region
      $region77: #{model_forward.5} parent=11 // pred_check
        %p962 = pneg %p584
      $region78: #{model_forward.5} parent=11 // pred_check_branch
        %964 = sbr.rel (%p962) target = $region80
      $region79: #{model_forward.5} parent=11 // pred_region
        %p965 = scmp.lt.s32.totalorder %s77, 0
        %s966 = scalar_select %p965, %s77, 0
        %s967 = scalar_lea.vmem %s39, %s966
      $region80: #{model_forward.5} parent=11 // pred_fallthru
        _
      // Predicated region
      $region81: #{model_forward.5} parent=11 // pred_check
        %p968 = pneg %p610
      $region82: #{model_forward.5} parent=11 // pred_check_branch
        %970 = sbr.rel (%p968) target = $region84
      $region83: #{model_forward.5} parent=11 // pred_region
        %p971 = scmp.lt.s32.totalorder %s77, 0
        %s972 = scalar_select %p971, %s77, 0
        %s973 = smul.addr %s972, 4
        %s974 = smul.addr %s973, 4
        %s975 = scalar_lea.vmem %s41, %s974
      $region84: #{model_forward.5} parent=11 // pred_fallthru
        _
      // Predicated region
      $region85: #{model_forward.5} parent=11 // pred_check
        %p976 = pneg %p636
      $region86: #{model_forward.5} parent=11 // pred_check_branch
        %978 = sbr.rel (%p976) target = $region88
      $region87: #{model_forward.5} parent=11 // pred_region
        %p979 = scmp.lt.s32.totalorder %s77, 0
        %s980 = scalar_select %p979, %s77, 0
        %s981 = scalar_lea.vmem %s43, %s980
      $region88: #{model_forward.5} parent=11 // pred_fallthru
        _
      // Predicated region
      $region89: #{model_forward.5} parent=11 // pred_check
        %p982 = pneg %p662
      $region90: #{model_forward.5} parent=11 // pred_check_branch
        %984 = sbr.rel (%p982) target = $region92
      $region91: #{model_forward.5} parent=11 // pred_region
        %p985 = scmp.lt.s32.totalorder %s77, 0
        %s986 = scalar_select %p985, %s77, 0
        %s987 = smul.addr %s986, 8
        %s988 = smul.addr %s987, 4
        %s989 = scalar_lea.vmem %s45, %s988
      $region92: #{model_forward.5} parent=11 // pred_fallthru
        _
      // Predicated region
      $region93: #{model_forward.5} parent=11 // pred_check
        %p990 = pneg %p688
      $region94: #{model_forward.5} parent=11 // pred_check_branch
        %992 = sbr.rel (%p990) target = $region96
      $region95: #{model_forward.5} parent=11 // pred_region
        %p993 = scmp.lt.s32.totalorder %s77, 0
        %s994 = scalar_select %p993, %s77, 0
        %s995 = scalar_lea.vmem %s47, %s994
      $region96: #{model_forward.5} parent=11 // pred_fallthru
        _
      // Predicated region
      $region97: #{model_forward.5} parent=11 // pred_check
        %p996 = pneg %p714
      $region98: #{model_forward.5} parent=11 // pred_check_branch
        %998 = sbr.rel (%p996) target = $region100
      $region99: #{model_forward.5} parent=11 // pred_region
        %p999 = scmp.lt.s32.totalorder %s77, 0
        %s1000 = scalar_select %p999, %s77, 0
        %s1001 = scalar_lea.vmem %s49, %s1000
      $region100: #{model_forward.5} parent=11 // pred_fallthru
        _
      // Predicated region
      $region101: #{model_forward.5} parent=11 // pred_check
        %p1002 = pneg %p740
      $region102: #{model_forward.5} parent=11 // pred_check_branch
        %1004 = sbr.rel (%p1002) target = $region104
      $region103: #{model_forward.5} parent=11 // pred_region
        %p1005 = scmp.lt.s32.totalorder %s77, 0
        %s1006 = scalar_select %p1005, %s77, 0
        %s1007 = scalar_lea.vmem %s51, %s1006
      $region104: #{model_forward.5} parent=11 // pred_fallthru
        _
      // Predicated region
      $region105: #{model_forward.5} parent=11 // pred_check
        %p1008 = pneg %p761
      $region106: #{model_forward.5} parent=11 // pred_check_branch
        %1010 = sbr.rel (%p1008) target = $region108
      $region107: #{model_forward.5} parent=11 // pred_region
        _
      $region108: #{model_forward.5} parent=11 // pred_fallthru
        _
      // Predicated region
      $region109: #{model_forward.5} parent=11 // pred_check
        %p1011 = pneg %p782
      $region110: #{model_forward.5} parent=11 // pred_check_branch
        %1013 = sbr.rel (%p1011) target = $region112
      $region111: #{model_forward.5} parent=11 // pred_region
        _
      $region112: #{model_forward.5} parent=11 // pred_fallthru
        _
      // Predicated region
      $region113: #{model_forward.5} parent=11 // pred_check
        %p1014 = pneg %p803
      $region114: #{model_forward.5} parent=11 // pred_check_branch
        %1016 = sbr.rel (%p1014) target = $region116
      $region115: #{model_forward.5} parent=11 // pred_region
        _
      $region116: #{model_forward.5} parent=11 // pred_fallthru
        _
      // Predicated region
      $region117: #{model_forward.5} parent=11 // pred_check
        %p1017 = pneg %p824
      $region118: #{model_forward.5} parent=11 // pred_check_branch
        %1019 = sbr.rel (%p1017) target = $region120
      $region119: #{model_forward.5} parent=11 // pred_region
        _
      $region120: #{model_forward.5} parent=11 // pred_fallthru
        _
    $region12: #{model_forward.5} parent=5 // pred_fallthru
      _
    %p1020 = scmp.lt.s32.totalorder %s67, 2
    // Predicated region
    $region121: #{model_forward.5} parent=5 // pred_check
      %p1021 = pneg %p1020
    $region122: #{model_forward.5} parent=5 // pred_check_branch
      %1023 = sbr.rel (%p1021) target = $region124
    $region123: #{model_forward.5} parent=5 // pred_region
      // Predicated region
      $region125: #{model_forward.5} parent=123 // pred_check
        %p1024 = pneg %p99
      $region126: #{model_forward.5} parent=123 // pred_check_branch
        %1026 = sbr.rel (%p1024) target = $region128
      $region127: #{model_forward.5} parent=123 // pred_region
        %p1027 = scmp.lt.s32.totalorder %s74, 1
        %s1028 = scalar_select %p1027, %s74, 1
        %s1029 = smul.addr %s1028, 2
        %s1030 = smul.addr %s1029, 8
        %s1031 = scalar_lea.vmem %s1, %s1030
      $region128: #{model_forward.5} parent=123 // pred_fallthru
        _
      // Predicated region
      $region129: #{model_forward.5} parent=123 // pred_check
        %p1032 = pneg %p125
      $region130: #{model_forward.5} parent=123 // pred_check_branch
        %1034 = sbr.rel (%p1032) target = $region132
      $region131: #{model_forward.5} parent=123 // pred_region
        %p1035 = scmp.lt.s32.totalorder %s74, 1
        %s1036 = scalar_select %p1035, %s74, 1
        %s1037 = smul.addr %s1036, 2
        %s1038 = smul.addr %s1037, 8
        %s1039 = scalar_lea.vmem %s3, %s1038
      $region132: #{model_forward.5} parent=123 // pred_fallthru
        _
      // Predicated region
      $region133: #{model_forward.5} parent=123 // pred_check
        %p1040 = pneg %p214
      $region134: #{model_forward.5} parent=123 // pred_check_branch
        %1042 = sbr.rel (%p1040) target = $region136
      $region135: #{model_forward.5} parent=123 // pred_region
        %p1043 = scmp.lt.s32.totalorder %s74, 1
        %s1044 = scalar_select %p1043, %s74, 1
        %s1045 = smul.addr %s1044, 2
        %s1046 = smul.addr %s1045, 8
        %s1047 = scalar_lea.vmem %s11, %s1046
      $region136: #{model_forward.5} parent=123 // pred_fallthru
        _
    $region124: #{model_forward.5} parent=5 // pred_fallthru
      _
    %p1048 = scmp.le.s32.totalorder 1, %s67
    %p1049 = scmp.lt.s32.totalorder %s67, 3
    %p1050 = pnand %p1048, %p1049
    %p1051 = pneg %p1050
    // Predicated region
    $region137: #{model_forward.5} parent=5 // pred_check
      _
    $region138: #{model_forward.5} parent=5 // pred_check_branch
      %1053 = sbr.rel (%p1050) target = $region140
    $region139: #{model_forward.5} parent=5 // pred_region
      %s1054 = ssub.s32 %s67, 1
      %p1055 = scmp.lt.s32.totalorder %s76, 1
      %s1056 = scalar_select %p1055, %s76, 1
      %s1057 = smul.addr %s1056, 2
      %s1058 = smul.addr %s1057, 8
      %s1059 = scalar_lea.vmem %s1, %s1058
      %p1060 = pneg %p105
      %p1061 = pneg %p102
      %p1062 = scmp.lt.s32.totalorder %s76, 1
      %s1063 = scalar_select %p1062, %s76, 1
      %s1064 = smul.addr %s1063, 2
      %s1065 = smul.addr %s1064, 8
      %s1066 = scalar_lea.vmem %s3, %s1065
      %p1067 = pneg %p131
      %p1068 = pneg %p128
      %p1069 = pneg %p152
      %p1070 = pneg %p149
      %p1071 = pneg %p173
      %p1072 = pneg %p170
      %p1073 = pneg %p194
      %p1074 = pneg %p191
      %p1075 = scmp.lt.s32.totalorder %s76, 1
      %s1076 = scalar_select %p1075, %s76, 1
      %s1077 = smul.addr %s1076, 2
      %s1078 = smul.addr %s1077, 8
      %s1079 = scalar_lea.vmem %s11, %s1078
      %p1080 = pneg %p220
      %p1081 = pneg %p217
      %p1082 = scmp.lt.s32.totalorder %s77, 0
      %s1083 = scalar_select %p1082, %s77, 0
      %s1084 = smul.addr %s1083, 4
      %s1085 = smul.addr %s1084, 4
      %s1086 = scalar_lea.vmem %s13, %s1085
      %p1087 = pneg %p246
      %p1088 = pneg %p243
      %p1089 = scmp.lt.s32.totalorder %s77, 0
      %s1090 = scalar_select %p1089, %s77, 0
      %s1091 = scalar_lea.vmem %s15, %s1090
      %p1092 = pneg %p272
      %p1093 = pneg %p269
      %p1094 = scmp.lt.s32.totalorder %s77, 0
      %s1095 = scalar_select %p1094, %s77, 0
      %s1096 = smul.addr %s1095, 4
      %s1097 = smul.addr %s1096, 4
      %s1098 = scalar_lea.vmem %s17, %s1097
      %p1099 = pneg %p298
      %p1100 = pneg %p295
      %p1101 = scmp.lt.s32.totalorder %s77, 0
      %s1102 = scalar_select %p1101, %s77, 0
      %s1103 = scalar_lea.vmem %s19, %s1102
      %p1104 = pneg %p324
      %p1105 = pneg %p321
      %p1106 = scmp.lt.s32.totalorder %s77, 0
      %s1107 = scalar_select %p1106, %s77, 0
      %s1108 = scalar_lea.vmem %s21, %s1107
      %p1109 = pneg %p350
      %p1110 = pneg %p347
      %p1111 = scmp.lt.s32.totalorder %s77, 0
      %s1112 = scalar_select %p1111, %s77, 0
      %s1113 = scalar_lea.vmem %s23, %s1112
      %p1114 = pneg %p376
      %p1115 = pneg %p373
      %p1116 = scmp.lt.s32.totalorder %s77, 0
      %s1117 = scalar_select %p1116, %s77, 0
      %s1118 = smul.addr %s1117, 4
      %s1119 = smul.addr %s1118, 4
      %s1120 = scalar_lea.vmem %s25, %s1119
      %p1121 = pneg %p402
      %p1122 = pneg %p399
      %p1123 = scmp.lt.s32.totalorder %s77, 0
      %s1124 = scalar_select %p1123, %s77, 0
      %s1125 = scalar_lea.vmem %s27, %s1124
      %p1126 = pneg %p428
      %p1127 = pneg %p425
      %p1128 = scmp.lt.s32.totalorder %s77, 0
      %s1129 = scalar_select %p1128, %s77, 0
      %s1130 = smul.addr %s1129, 4
      %s1131 = smul.addr %s1130, 4
      %s1132 = scalar_lea.vmem %s29, %s1131
      %p1133 = pneg %p454
      %p1134 = pneg %p451
      %p1135 = scmp.lt.s32.totalorder %s77, 0
      %s1136 = scalar_select %p1135, %s77, 0
      %s1137 = scalar_lea.vmem %s31, %s1136
      %p1138 = pneg %p480
      %p1139 = pneg %p477
      %p1140 = scmp.lt.s32.totalorder %s77, 0
      %s1141 = scalar_select %p1140, %s77, 0
      %s1142 = smul.addr %s1141, 4
      %s1143 = smul.addr %s1142, 4
      %s1144 = scalar_lea.vmem %s33, %s1143
      %p1145 = pneg %p506
      %p1146 = pneg %p503
      %p1147 = scmp.lt.s32.totalorder %s77, 0
      %s1148 = scalar_select %p1147, %s77, 0
      %s1149 = scalar_lea.vmem %s35, %s1148
      %p1150 = pneg %p532
      %p1151 = pneg %p529
      %p1152 = scmp.lt.s32.totalorder %s77, 0
      %s1153 = scalar_select %p1152, %s77, 0
      %s1154 = scalar_lea.vmem %s37, %s1153
      %p1155 = pneg %p558
      %p1156 = pneg %p555
      %p1157 = scmp.lt.s32.totalorder %s77, 0
      %s1158 = scalar_select %p1157, %s77, 0
      %s1159 = scalar_lea.vmem %s39, %s1158
      %p1160 = pneg %p584
      %p1161 = pneg %p581
      %p1162 = scmp.lt.s32.totalorder %s77, 0
      %s1163 = scalar_select %p1162, %s77, 0
      %s1164 = smul.addr %s1163, 4
      %s1165 = smul.addr %s1164, 4
      %s1166 = scalar_lea.vmem %s41, %s1165
      %p1167 = pneg %p610
      %p1168 = pneg %p607
      %p1169 = scmp.lt.s32.totalorder %s77, 0
      %s1170 = scalar_select %p1169, %s77, 0
      %s1171 = scalar_lea.vmem %s43, %s1170
      %p1172 = pneg %p636
      %p1173 = pneg %p633
      %p1174 = scmp.lt.s32.totalorder %s77, 0
      %s1175 = scalar_select %p1174, %s77, 0
      %s1176 = smul.addr %s1175, 8
      %s1177 = smul.addr %s1176, 4
      %s1178 = scalar_lea.vmem %s45, %s1177
      %p1179 = pneg %p662
      %p1180 = pneg %p659
      %p1181 = scmp.lt.s32.totalorder %s77, 0
      %s1182 = scalar_select %p1181, %s77, 0
      %s1183 = scalar_lea.vmem %s47, %s1182
      %p1184 = pneg %p688
      %p1185 = pneg %p685
      %p1186 = scmp.lt.s32.totalorder %s77, 0
      %s1187 = scalar_select %p1186, %s77, 0
      %s1188 = scalar_lea.vmem %s49, %s1187
      %p1189 = pneg %p714
      %p1190 = pneg %p711
      %p1191 = scmp.lt.s32.totalorder %s77, 0
      %s1192 = scalar_select %p1191, %s77, 0
      %s1193 = scalar_lea.vmem %s51, %s1192
      %p1194 = pneg %p740
      %p1195 = pneg %p737
      %p1196 = pneg %p761
      %p1197 = pneg %p758
      %p1198 = pneg %p782
      %p1199 = pneg %p779
      %p1200 = pneg %p803
      %p1201 = pneg %p800
      %p1202 = pneg %p824
      %p1203 = pneg %p821
      %p1204 = pneg %p850
      %p1205 = pneg %p847
      %p1206 = scmp.lt.s32.totalorder %s76, 1
      %s1207 = scalar_select %p1206, %s76, 1
      %s1208 = smul.addr %s1207, 2
      %s1209 = smul.addr %s1208, 8
      %s1210 = scalar_lea.vmem %s61, %s1209
      %p1211 = scmp.lt.s32.totalorder %s76, 1
      %s1212 = scalar_select %p1211, %s76, 1
      %s1213 = smul.addr %s1212, 2
      %s1214 = smul.addr %s1213, 8
      %s1215 = scalar_lea.vmem %s1, %s1214
      %p1216 = scmp.lt.s32.totalorder %s76, 1
      %s1217 = scalar_select %p1216, %s76, 1
      %s1218 = smul.addr %s1217, 2
      %s1219 = smul.addr %s1218, 8
      %s1220 = scalar_lea.vmem %s3, %s1219
      %p1221 = scmp.lt.s32.totalorder %s76, 1
      %s1222 = scalar_select %p1221, %s76, 1
      %s1223 = smul.addr %s1222, 2
      %s1224 = smul.addr %s1223, 8
      %s1225 = scalar_lea.vmem %s11, %s1224
      %p1226 = scmp.lt.s32.totalorder %s77, 0
      %s1227 = scalar_select %p1226, %s77, 0
      %s1228 = smul.addr %s1227, 4
      %s1229 = smul.addr %s1228, 4
      %s1230 = scalar_lea.vmem %s13, %s1229
      %p1231 = scmp.lt.s32.totalorder %s77, 0
      %s1232 = scalar_select %p1231, %s77, 0
      %s1233 = scalar_lea.vmem %s15, %s1232
      %p1234 = scmp.lt.s32.totalorder %s77, 0
      %s1235 = scalar_select %p1234, %s77, 0
      %s1236 = smul.addr %s1235, 4
      %s1237 = smul.addr %s1236, 4
      %s1238 = scalar_lea.vmem %s17, %s1237
      %p1239 = scmp.lt.s32.totalorder %s77, 0
      %s1240 = scalar_select %p1239, %s77, 0
      %s1241 = scalar_lea.vmem %s19, %s1240
      %p1242 = scmp.lt.s32.totalorder %s77, 0
      %s1243 = scalar_select %p1242, %s77, 0
      %s1244 = scalar_lea.vmem %s21, %s1243
      %p1245 = scmp.lt.s32.totalorder %s77, 0
      %s1246 = scalar_select %p1245, %s77, 0
      %s1247 = scalar_lea.vmem %s23, %s1246
      %p1248 = scmp.lt.s32.totalorder %s77, 0
      %s1249 = scalar_select %p1248, %s77, 0
      %s1250 = smul.addr %s1249, 4
      %s1251 = smul.addr %s1250, 4
      %s1252 = scalar_lea.vmem %s25, %s1251
      %p1253 = scmp.lt.s32.totalorder %s77, 0
      %s1254 = scalar_select %p1253, %s77, 0
      %s1255 = scalar_lea.vmem %s27, %s1254
      %p1256 = scmp.lt.s32.totalorder %s77, 0
      %s1257 = scalar_select %p1256, %s77, 0
      %s1258 = smul.addr %s1257, 4
      %s1259 = smul.addr %s1258, 4
      %s1260 = scalar_lea.vmem %s29, %s1259
      %p1261 = scmp.lt.s32.totalorder %s77, 0
      %s1262 = scalar_select %p1261, %s77, 0
      %s1263 = scalar_lea.vmem %s31, %s1262
      %p1264 = scmp.lt.s32.totalorder %s77, 0
      %s1265 = scalar_select %p1264, %s77, 0
      %s1266 = smul.addr %s1265, 4
      %s1267 = smul.addr %s1266, 4
      %s1268 = scalar_lea.vmem %s33, %s1267
      %p1269 = scmp.lt.s32.totalorder %s77, 0
      %s1270 = scalar_select %p1269, %s77, 0
      %s1271 = scalar_lea.vmem %s35, %s1270
      %p1272 = scmp.lt.s32.totalorder %s77, 0
      %s1273 = scalar_select %p1272, %s77, 0
      %s1274 = scalar_lea.vmem %s37, %s1273
      %p1275 = scmp.lt.s32.totalorder %s77, 0
      %s1276 = scalar_select %p1275, %s77, 0
      %s1277 = scalar_lea.vmem %s39, %s1276
      %p1278 = scmp.lt.s32.totalorder %s77, 0
      %s1279 = scalar_select %p1278, %s77, 0
      %s1280 = smul.addr %s1279, 4
      %s1281 = smul.addr %s1280, 4
      %s1282 = scalar_lea.vmem %s41, %s1281
      %p1283 = scmp.lt.s32.totalorder %s77, 0
      %s1284 = scalar_select %p1283, %s77, 0
      %s1285 = scalar_lea.vmem %s43, %s1284
      %p1286 = scmp.lt.s32.totalorder %s77, 0
      %s1287 = scalar_select %p1286, %s77, 0
      %s1288 = smul.addr %s1287, 8
      %s1289 = smul.addr %s1288, 4
      %s1290 = scalar_lea.vmem %s45, %s1289
      %p1291 = scmp.lt.s32.totalorder %s77, 0
      %s1292 = scalar_select %p1291, %s77, 0
      %s1293 = scalar_lea.vmem %s47, %s1292
      %p1294 = scmp.lt.s32.totalorder %s77, 0
      %s1295 = scalar_select %p1294, %s77, 0
      %s1296 = scalar_lea.vmem %s49, %s1295
      %p1297 = scmp.lt.s32.totalorder %s77, 0
      %s1298 = scalar_select %p1297, %s77, 0
      %s1299 = scalar_lea.vmem %s51, %s1298
      %p1300 = scmp.lt.s32.totalorder %s76, 1
      %s1301 = scalar_select %p1300, %s76, 1
      %s1302 = smul.addr %s1301, 2
      %s1303 = smul.addr %s1302, 8
      %s1304 = scalar_lea.vmem %s61, %s1303
      %p1306 = scmp.eq.s32.totalorder %s77, 0
      // Predicated region
      $region141: #{model_forward.5} parent=139 // pred_check
        %p1307 = pneg %p1306
      $region142: #{model_forward.5} parent=139 // pred_check_branch
        %1309 = sbr.rel (%p1307) target = $region144
      $region143: #{model_forward.5} parent=139 // pred_region
        %v1310 = vld [vmem:[%s1215] sm:$0xff]
        %v1311 = vld [vmem:[%s1215 + $0x8] sm:$0xf]
        %v1312 = vld [vmem:[%s5] sm:$0xf]
        %v1313 = vld [vmem:[%s5 + $0x4] sm:$0x3]
        %v1314 = vpack.c.bf16 %v1311, %v1310
        %v1315 = vld [vmem:[%s1220] sm:$0xff]
        %v1316 = vld [vmem:[%s1220 + $0x8] sm:$0xf]
        %v1317 = vld [vmem:[%s7] sm:$0x3]
        %v1318 = vpack.c.bf16 %v1316, %v1315
        %vm1319 = vcmask 31744
        %v1321 = vsel %vm1319, %v1318, 0
        %vm1323 = vcmask 1041408
        %v1325 = vsel %vm1323, %v1317, 0
        %1327 = vmatprep.subr.bf16.mxu0 0
        %1328 = vmatpush1.bf16.msra.mxu0 %v1325
        %1329 = vmatprep.subr.bf16.mxu0 0
        %1330 = vmatpush1.bf16.msra.mxu0 0
        %1331 = vmatprep.subr.bf16.mxu0 0
        %1332 = vmatpush1.bf16.msra.mxu0 0
        %1333 = vmatprep.subr.bf16.mxu0 0
        %1334 = vmatpush1.bf16.msra.mxu0 0
        %1335 = vmatprep.subr.bf16.mxu0 0
        %1336 = vmatpush1.bf16.msra.mxu0 0
        %1337 = vmatprep.subr.bf16.mxu0 0
        %1338 = vmatpush1.bf16.msra.mxu0 0
        %1339 = vmatprep.subr.bf16.mxu0 0
        %1340 = vmatpush1.bf16.msra.mxu0 0
        %1341 = vmatprep.subr.bf16.mxu0 0
        %1342 = vmatpush1.bf16.msra.mxu0 0
        %1343 = vmatprep.subr.bf16.mxu0 0
        %1344 = vmatpush1.bf16.msra.mxu0 0
        %1345 = vmatprep.subr.bf16.mxu0 0
        %1346 = vmatpush1.bf16.msra.mxu0 0
        %1347 = vmatprep.subr.bf16.mxu0 0
        %1348 = vmatpush1.bf16.msra.mxu0 0
        %1349 = vmatprep.subr.bf16.mxu0 0
        %1350 = vmatpush1.bf16.msra.mxu0 0
        %1351 = vmatprep.subr.bf16.mxu0 0
        %1352 = vmatpush1.bf16.msra.mxu0 0
        %1353 = vmatprep.subr.bf16.mxu0 0
        %1354 = vmatpush1.bf16.msra.mxu0 0
        %1355 = vmatprep.subr.bf16.mxu0 0
        %1356 = vmatpush1.bf16.msra.mxu0 0
        %1357 = vmatprep.subr.bf16.mxu0 0
        %1358 = vmatpush1.bf16.msra.mxu0 0
        %1359 = vmatprep.mubr.bf16.mxu0 0
        %1360 = vmatmul.mubr.bf16.gmra.mrb[0].mxu0 %v1321
        %v1361 = vpop.f32.mrb[0].mxu0
        %v1362 = vadd.f32 0.0, %v1361
        %v1363 = vpop.f32.mrb[0].mxu0
        %v1364 = vpop.f32.mrb[0].mxu0
        %v1365 = vadd.f32 0.0, %v1364
        %v1366 = vpop.f32.mrb[0].mxu0
        %1367 = vdwg.mxu0
        %v1370 = vunpack.c.l.b16 %v1312
        %v1371 = vunpack.c.l.b16 %v1313
        %v1372 = vpack.c.b16 %v1371, %v1370
        %vm1373 = vcmask 97280
        %v1375 = vsel %vm1373, %v1314, 0
        %vm1377 = vcmask 1045504
        %v1379 = vsel %vm1377, %v1372, 0
        %1381 = vmatprep.subr.bf16.mxu0 0
        %1382 = vmatpush1.bf16.msra.mxu0 %v1379
        %1383 = vmatprep.subr.bf16.mxu0 0
        %1384 = vmatpush1.bf16.msra.mxu0 0
        %1385 = vmatprep.subr.bf16.mxu0 0
        %1386 = vmatpush1.bf16.msra.mxu0 0
        %1387 = vmatprep.subr.bf16.mxu0 0
        %1388 = vmatpush1.bf16.msra.mxu0 0
        %1389 = vmatprep.subr.bf16.mxu0 0
        %1390 = vmatpush1.bf16.msra.mxu0 0
        %1391 = vmatprep.subr.bf16.mxu0 0
        %1392 = vmatpush1.bf16.msra.mxu0 0
        %1393 = vmatprep.subr.bf16.mxu0 0
        %1394 = vmatpush1.bf16.msra.mxu0 0
        %1395 = vmatprep.subr.bf16.mxu0 0
        %1396 = vmatpush1.bf16.msra.mxu0 0
        %1397 = vmatprep.subr.bf16.mxu0 0
        %1398 = vmatpush1.bf16.msra.mxu0 0
        %1399 = vmatprep.subr.bf16.mxu0 0
        %1400 = vmatpush1.bf16.msra.mxu0 0
        %1401 = vmatprep.subr.bf16.mxu0 0
        %1402 = vmatpush1.bf16.msra.mxu0 0
        %1403 = vmatprep.subr.bf16.mxu0 0
        %1404 = vmatpush1.bf16.msra.mxu0 0
        %1405 = vmatprep.subr.bf16.mxu0 0
        %1406 = vmatpush1.bf16.msra.mxu0 0
        %1407 = vmatprep.subr.bf16.mxu0 0
        %1408 = vmatpush1.bf16.msra.mxu0 0
        %1409 = vmatprep.subr.bf16.mxu0 0
        %1410 = vmatpush1.bf16.msra.mxu0 0
        %1411 = vmatprep.subr.bf16.mxu0 0
        %1412 = vmatpush1.bf16.msra.mxu0 0
        %1413 = vmatprep.mubr.bf16.mxu0 0
        %1414 = vmatmul.mubr.bf16.gmra.mrb[0].mxu0 %v1375
        %v1415 = vpop.f32.mrb[0].mxu0
        %v1416 = vadd.f32 %v1362, %v1415
        %v1417 = vpop.f32.mrb[0].mxu0
        %v1418 = vpop.f32.mrb[0].mxu0
        %v1419 = vadd.f32 %v1365, %v1418
        %v1420 = vpop.f32.mrb[0].mxu0
        %1421 = vdwg.mxu0
        %v1422 = vld [vmem:[%s9] sm:$0xff]
        %v1423 = vld [vmem:[%s9 + $0x8] sm:$0xf]
        %v1424 = vadd.f32 %v1416, %v1422
        %v1425 = vadd.f32 %v1419, %v1423
        %vm1426 = vcmask 261120
        %1427 = vst.msk [vmem:[#allocation2] sm:$0xff] %vm1426, %v1424
        %vm1428 = vcmask 257024
        %1429 = vst.msk [vmem:[#allocation2 + $0x8] sm:$0xf] %vm1428, %v1425
      $region144: #{model_forward.5} parent=139 // pred_fallthru
        _
      %v1430 = vld [vmem:[#allocation2] sm:$0xff]
      %v1431 = vld [vmem:[#allocation2 + $0x8] sm:$0xf]
      %v1432 = vlaneseq
      %v1433 = vshrl.u32 %v1432, 7
      %v1434 = vadd.s32 %v1433, 8
      %v1435 = vlaneseq
      %v1436 = vand.u32 %v1435, 127
      %vm1437 = vcmp.gt.s32.totalorder %v1436, %v1433
      %vm1438 = vcmp.gt.s32.totalorder %v1436, %v1434
      %v1439 = vsel %vm1437, -1e+30, 0.0
      %v1440 = vsel %vm1438, -1e+30, 0.0
      %v1441 = vld [vmem:[%s1230] sm:$0xf]
      %v1442 = vld [vmem:[%s1230 + $0x4] sm:$0xf]
      %v1443 = vld [vmem:[%s1230 + $0x8] sm:$0xf]
      %v1444 = vld [vmem:[%s1230 + $0xc] sm:$0xf]
      %v1445 = vpack.c.bf16 %v1431, %v1430
      %v1446 = vld [vmem:[%s1233] sm:$0x1]
      %v1448 = vlaneseq
      %v1449 = vshrl.u32 %v1448, 7
      %v1450 = vsub.s32 0, %v1449
      %v1451 = vrot.slane %v1446, %v1450
      %v1457 = vunpack.c.l.b16 %v1441
      %v1458 = vunpack.c.l.b16 %v1442
      %v1459 = vunpack.c.l.b16 %v1443
      %v1460 = vunpack.c.l.b16 %v1444
      %v1461 = vpack.c.b16 %v1458, %v1457
      %v1462 = vpack.c.b16 %v1460, %v1459
      %vm1465 = vcmask 261120
      %v1467 = vsel %vm1465, %v1445, 0
      %1469 = vmatprep.subr.bf16.mxu0 0
      %1470 = vmatpush1.bf16.msra.mxu0 %v1461
      %1471 = vmatprep.subr.bf16.mxu0 0
      %1472 = vmatpush1.bf16.msra.mxu0 %v1462
      %1473 = vmatprep.subr.bf16.mxu0 0
      %1474 = vmatpush1.bf16.msra.mxu0 0
      %1475 = vmatprep.subr.bf16.mxu0 0
      %1476 = vmatpush1.bf16.msra.mxu0 0
      %1477 = vmatprep.subr.bf16.mxu0 0
      %1478 = vmatpush1.bf16.msra.mxu0 0
      %1479 = vmatprep.subr.bf16.mxu0 0
      %1480 = vmatpush1.bf16.msra.mxu0 0
      %1481 = vmatprep.subr.bf16.mxu0 0
      %1482 = vmatpush1.bf16.msra.mxu0 0
      %1483 = vmatprep.subr.bf16.mxu0 0
      %1484 = vmatpush1.bf16.msra.mxu0 0
      %1485 = vmatprep.subr.bf16.mxu0 0
      %1486 = vmatpush1.bf16.msra.mxu0 0
      %1487 = vmatprep.subr.bf16.mxu0 0
      %1488 = vmatpush1.bf16.msra.mxu0 0
      %1489 = vmatprep.subr.bf16.mxu0 0
      %1490 = vmatpush1.bf16.msra.mxu0 0
      %1491 = vmatprep.subr.bf16.mxu0 0
      %1492 = vmatpush1.bf16.msra.mxu0 0
      %1493 = vmatprep.subr.bf16.mxu0 0
      %1494 = vmatpush1.bf16.msra.mxu0 0
      %1495 = vmatprep.subr.bf16.mxu0 0
      %1496 = vmatpush1.bf16.msra.mxu0 0
      %1497 = vmatprep.subr.bf16.mxu0 0
      %1498 = vmatpush1.bf16.msra.mxu0 0
      %1499 = vmatprep.subr.bf16.mxu0 0
      %1500 = vmatpush1.bf16.msra.mxu0 0
      %1501 = vmatprep.mubr.bf16.mxu0 0
      %1502 = vmatmul.mubr.bf16.gmra.mrb[0].mxu0 %v1467
      %v1503 = vpop.f32.mrb[0].mxu0
      %v1504 = vadd.f32 %v1451, %v1503
      %v1505 = vpop.f32.mrb[0].mxu0
      %v1506 = vpop.f32.mrb[0].mxu0
      %v1507 = vadd.f32 %v1451, %v1506
      %v1508 = vpop.f32.mrb[0].mxu0
      %1509 = vdwg.mxu0
      %v1510 = vld [vmem:[%s1238] sm:$0xf]
      %v1511 = vld [vmem:[%s1238 + $0x4] sm:$0xf]
      %v1512 = vld [vmem:[%s1238 + $0x8] sm:$0xf]
      %v1513 = vld [vmem:[%s1238 + $0xc] sm:$0xf]
      %v1514 = vld [vmem:[%s1241] sm:$0x1]
      %v1515 = vpack.c.bf16 %v1507, %v1504
      %1517 = vrot.lane.b32.xlu0 %v1515, 96
      %v1518 = vpop.permute.xlu0 %1517
      %vm1519 = vcmask 64512
      %v1521 = vsel %vm1519, %v1515, 0
      %v1524 = vsel %vm1519, %v1518, 0
      %1526 = vmatprep.subr.bf16.mxu0 0
      %1527 = vmatpush1.bf16.xpose.msra.mxu0 %v1524
      %1528 = vmatprep.subr.bf16.mxu0 0
      %1529 = vmatpush1.bf16.xpose.msra.mxu0 0
      %1530 = vmatprep.subr.bf16.mxu0 0
      %1531 = vmatpush1.bf16.xpose.msra.mxu0 0
      %1532 = vmatprep.subr.bf16.mxu0 0
      %1533 = vmatpush1.bf16.xpose.msra.mxu0 0
      %1534 = vmatprep.subr.bf16.mxu0 0
      %1535 = vmatpush1.bf16.xpose.msra.mxu0 0
      %1536 = vmatprep.subr.bf16.mxu0 0
      %1537 = vmatpush1.bf16.xpose.msra.mxu0 0
      %1538 = vmatprep.subr.bf16.mxu0 0
      %1539 = vmatpush1.bf16.xpose.msra.mxu0 0
      %1540 = vmatprep.subr.bf16.mxu0 0
      %1541 = vmatpush1.bf16.xpose.msra.mxu0 0
      %1542 = vmatprep.subr.bf16.mxu0 0
      %1543 = vmatpush1.bf16.xpose.msra.mxu0 0
      %1544 = vmatprep.subr.bf16.mxu0 0
      %1545 = vmatpush1.bf16.xpose.msra.mxu0 0
      %1546 = vmatprep.subr.bf16.mxu0 0
      %1547 = vmatpush1.bf16.xpose.msra.mxu0 0
      %1548 = vmatprep.subr.bf16.mxu0 0
      %1549 = vmatpush1.bf16.xpose.msra.mxu0 0
      %1550 = vmatprep.subr.bf16.mxu0 0
      %1551 = vmatpush1.bf16.xpose.msra.mxu0 0
      %1552 = vmatprep.subr.bf16.mxu0 0
      %1553 = vmatpush1.bf16.xpose.msra.mxu0 0
      %1554 = vmatprep.subr.bf16.mxu0 0
      %1555 = vmatpush1.bf16.xpose.msra.mxu0 0
      %1556 = vmatprep.subr.bf16.mxu0 0
      %1557 = vmatpush1.bf16.xpose.msra.mxu0 0
      %1558 = vmatprep.mubr.bf16.mxu0 0
      %1559 = vmatmul.mubr.bf16.gmra.mrb[0].mxu0 %v1521
      %v1560 = vpop.f32.mrb[0].mxu0
      %v1561 = vadd.f32 0.0, %v1560
      %v1562 = vpop.f32.mrb[0].mxu0
      %v1563 = vpop.f32.mrb[0].mxu0
      %v1564 = vadd.f32 0.0, %v1563
      %v1565 = vpop.f32.mrb[0].mxu0
      %1566 = vdwg.mxu0
      %v1567 = vmul.f32 %v1561, 0.35355338
      %v1568 = vmul.f32 %v1564, 0.35355338
      %v1569 = vadd.f32 %v1567, %v1439
      %v1570 = vadd.f32 %v1568, %v1440
      %vm1571 = vcmask 97280
      %v1572 = vsel %vm1571, %v1569, -inf
      %1573 = vmax.xlane.f32.xlu0 %v1572
      %v1574 = vpop.xlane.xlu0 %1573
      %vm1575 = vcmask 93184
      %v1576 = vsel %vm1575, %v1570, -inf
      %1577 = vmax.xlane.f32.xlu0 %v1576
      %v1578 = vpop.xlane.xlu0 %1577
      %v1579 = vsub.f32 %v1569, %v1574
      %v1580 = vsub.f32 %v1570, %v1578
      %v1581 = vmul.f32 %v1579, 1.442695
      %v1582 = vpow.pop %v1581
      %v1583 = vmul.f32 %v1580, 1.442695
      %v1584 = vpow.pop %v1583
      %v1585 = vsel %vm1571, %v1582, 0.0
      %1586 = vadd.xlane.f32.xlu0 %v1585
      %v1587 = vpop.xlane.xlu0 %1586
      %v1588 = vsel %vm1575, %v1584, 0.0
      %1589 = vadd.xlane.f32.xlu0 %v1588
      %v1590 = vpop.xlane.xlu0 %1589
      %v1591 = vrcp.pop %v1587
      %v1592 = vrcp.pop %v1590
      %v1593 = vmul.f32 %v1582, %v1591
      %v1594 = vmul.f32 %v1584, %v1592
      %v1595 = vpack.c.bf16 %v1594, %v1593
      %1596 = vrot.lane.b32.xlu0 %v1515, 64
      %v1597 = vpop.permute.xlu0 %1596
      %v1599 = vsel %vm1571, %v1595, 0
      %vm1601 = vcmask 1045504
      %v1603 = vsel %vm1601, %v1597, 0
      %1605 = vmatprep.subr.bf16.mxu0 0
      %1606 = vmatpush1.bf16.msra.mxu0 %v1603
      %1607 = vmatprep.subr.bf16.mxu0 0
      %1608 = vmatpush1.bf16.msra.mxu0 0
      %1609 = vmatprep.subr.bf16.mxu0 0
      %1610 = vmatpush1.bf16.msra.mxu0 0
      %1611 = vmatprep.subr.bf16.mxu0 0
      %1612 = vmatpush1.bf16.msra.mxu0 0
      %1613 = vmatprep.subr.bf16.mxu0 0
      %1614 = vmatpush1.bf16.msra.mxu0 0
      %1615 = vmatprep.subr.bf16.mxu0 0
      %1616 = vmatpush1.bf16.msra.mxu0 0
      %1617 = vmatprep.subr.bf16.mxu0 0
      %1618 = vmatpush1.bf16.msra.mxu0 0
      %1619 = vmatprep.subr.bf16.mxu0 0
      %1620 = vmatpush1.bf16.msra.mxu0 0
      %1621 = vmatprep.subr.bf16.mxu0 0
      %1622 = vmatpush1.bf16.msra.mxu0 0
      %1623 = vmatprep.subr.bf16.mxu0 0
      %1624 = vmatpush1.bf16.msra.mxu0 0
      %1625 = vmatprep.subr.bf16.mxu0 0
      %1626 = vmatpush1.bf16.msra.mxu0 0
      %1627 = vmatprep.subr.bf16.mxu0 0
      %1628 = vmatpush1.bf16.msra.mxu0 0
      %1629 = vmatprep.subr.bf16.mxu0 0
      %1630 = vmatpush1.bf16.msra.mxu0 0
      %1631 = vmatprep.subr.bf16.mxu0 0
      %1632 = vmatpush1.bf16.msra.mxu0 0
      %1633 = vmatprep.subr.bf16.mxu0 0
      %1634 = vmatpush1.bf16.msra.mxu0 0
      %1635 = vmatprep.subr.bf16.mxu0 0
      %1636 = vmatpush1.bf16.msra.mxu0 0
      %1637 = vmatprep.mubr.bf16.mxu0 0
      %1638 = vmatmul.mubr.bf16.gmra.mrb[0].mxu0 %v1599
      %v1639 = vpop.f32.mrb[0].mxu0
      %v1640 = vadd.f32 0.0, %v1639
      %v1641 = vpop.f32.mrb[0].mxu0
      %v1642 = vpop.f32.mrb[0].mxu0
      %v1643 = vadd.f32 0.0, %v1642
      %v1644 = vpop.f32.mrb[0].mxu0
      %1645 = vdwg.mxu0
      %1646 = vrot.lane.b32.xlu0 %v1515, 120
      %v1647 = vpop.permute.xlu0 %1646
      %1648 = vrot.lane.b32.xlu0 %v1515, 88
      %v1649 = vpop.permute.xlu0 %1648
      %v1651 = vsel %vm1519, %v1647, 0
      %v1654 = vsel %vm1519, %v1649, 0
      %1656 = vmatprep.subr.bf16.mxu0 0
      %1657 = vmatpush1.bf16.xpose.msra.mxu0 %v1654
      %1658 = vmatprep.subr.bf16.mxu0 0
      %1659 = vmatpush1.bf16.xpose.msra.mxu0 0
      %1660 = vmatprep.subr.bf16.mxu0 0
      %1661 = vmatpush1.bf16.xpose.msra.mxu0 0
      %1662 = vmatprep.subr.bf16.mxu0 0
      %1663 = vmatpush1.bf16.xpose.msra.mxu0 0
      %1664 = vmatprep.subr.bf16.mxu0 0
      %1665 = vmatpush1.bf16.xpose.msra.mxu0 0
      %1666 = vmatprep.subr.bf16.mxu0 0
      %1667 = vmatpush1.bf16.xpose.msra.mxu0 0
      %1668 = vmatprep.subr.bf16.mxu0 0
      %1669 = vmatpush1.bf16.xpose.msra.mxu0 0
      %1670 = vmatprep.subr.bf16.mxu0 0
      %1671 = vmatpush1.bf16.xpose.msra.mxu0 0
      %1672 = vmatprep.subr.bf16.mxu0 0
      %1673 = vmatpush1.bf16.xpose.msra.mxu0 0
      %1674 = vmatprep.subr.bf16.mxu0 0
      %1675 = vmatpush1.bf16.xpose.msra.mxu0 0
      %1676 = vmatprep.subr.bf16.mxu0 0
      %1677 = vmatpush1.bf16.xpose.msra.mxu0 0
      %1678 = vmatprep.subr.bf16.mxu0 0
      %1679 = vmatpush1.bf16.xpose.msra.mxu0 0
      %1680 = vmatprep.subr.bf16.mxu0 0
      %1681 = vmatpush1.bf16.xpose.msra.mxu0 0
      %1682 = vmatprep.subr.bf16.mxu0 0
      %1683 = vmatpush1.bf16.xpose.msra.mxu0 0
      %1684 = vmatprep.subr.bf16.mxu0 0
      %1685 = vmatpush1.bf16.xpose.msra.mxu0 0
      %1686 = vmatprep.subr.bf16.mxu0 0
      %1687 = vmatpush1.bf16.xpose.msra.mxu0 0
      %1688 = vmatprep.mubr.bf16.mxu0 0
      %1689 = vmatmul.mubr.bf16.gmra.mrb[0].mxu0 %v1651
      %v1690 = vpop.f32.mrb[0].mxu0
      %v1691 = vadd.f32 0.0, %v1690
      %v1692 = vpop.f32.mrb[0].mxu0
      %v1693 = vpop.f32.mrb[0].mxu0
      %v1694 = vadd.f32 0.0, %v1693
      %v1695 = vpop.f32.mrb[0].mxu0
      %1696 = vdwg.mxu0
      %v1697 = vmul.f32 %v1691, 0.35355338
      %v1698 = vmul.f32 %v1694, 0.35355338
      %v1699 = vadd.f32 %v1697, %v1439
      %v1700 = vadd.f32 %v1698, %v1440
      %v1701 = vsel %vm1571, %v1699, -inf
      %1702 = vmax.xlane.f32.xlu0 %v1701
      %v1703 = vpop.xlane.xlu0 %1702
      %v1704 = vsel %vm1575, %v1700, -inf
      %1705 = vmax.xlane.f32.xlu0 %v1704
      %v1706 = vpop.xlane.xlu0 %1705
      %v1707 = vsub.f32 %v1699, %v1703
      %v1708 = vsub.f32 %v1700, %v1706
      %v1709 = vmul.f32 %v1707, 1.442695
      %v1710 = vpow.pop %v1709
      %v1711 = vmul.f32 %v1708, 1.442695
      %v1712 = vpow.pop %v1711
      %v1713 = vsel %vm1571, %v1710, 0.0
      %1714 = vadd.xlane.f32.xlu0 %v1713
      %v1715 = vpop.xlane.xlu0 %1714
      %v1716 = vsel %vm1575, %v1712, 0.0
      %1717 = vadd.xlane.f32.xlu0 %v1716
      %v1718 = vpop.xlane.xlu0 %1717
      %v1719 = vrcp.pop %v1715
      %v1720 = vrcp.pop %v1718
      %v1721 = vmul.f32 %v1710, %v1719
      %v1722 = vmul.f32 %v1712, %v1720
      %v1723 = vpack.c.bf16 %v1722, %v1721
      %1724 = vrot.lane.b32.xlu0 %v1515, 56
      %v1725 = vpop.permute.xlu0 %1724
      %v1727 = vsel %vm1571, %v1723, 0
      %v1730 = vsel %vm1601, %v1725, 0
      %1732 = vmatprep.subr.bf16.mxu0 0
      %1733 = vmatpush1.bf16.msra.mxu0 %v1730
      %1734 = vmatprep.subr.bf16.mxu0 0
      %1735 = vmatpush1.bf16.msra.mxu0 0
      %1736 = vmatprep.subr.bf16.mxu0 0
      %1737 = vmatpush1.bf16.msra.mxu0 0
      %1738 = vmatprep.subr.bf16.mxu0 0
      %1739 = vmatpush1.bf16.msra.mxu0 0
      %1740 = vmatprep.subr.bf16.mxu0 0
      %1741 = vmatpush1.bf16.msra.mxu0 0
      %1742 = vmatprep.subr.bf16.mxu0 0
      %1743 = vmatpush1.bf16.msra.mxu0 0
      %1744 = vmatprep.subr.bf16.mxu0 0
      %1745 = vmatpush1.bf16.msra.mxu0 0
      %1746 = vmatprep.subr.bf16.mxu0 0
      %1747 = vmatpush1.bf16.msra.mxu0 0
      %1748 = vmatprep.subr.bf16.mxu0 0
      %1749 = vmatpush1.bf16.msra.mxu0 0
      %1750 = vmatprep.subr.bf16.mxu0 0
      %1751 = vmatpush1.bf16.msra.mxu0 0
      %1752 = vmatprep.subr.bf16.mxu0 0
      %1753 = vmatpush1.bf16.msra.mxu0 0
      %1754 = vmatprep.subr.bf16.mxu0 0
      %1755 = vmatpush1.bf16.msra.mxu0 0
      %1756 = vmatprep.subr.bf16.mxu0 0
      %1757 = vmatpush1.bf16.msra.mxu0 0
      %1758 = vmatprep.subr.bf16.mxu0 0
      %1759 = vmatpush1.bf16.msra.mxu0 0
      %1760 = vmatprep.subr.bf16.mxu0 0
      %1761 = vmatpush1.bf16.msra.mxu0 0
      %1762 = vmatprep.subr.bf16.mxu0 0
      %1763 = vmatpush1.bf16.msra.mxu0 0
      %1764 = vmatprep.mubr.bf16.mxu0 0
      %1765 = vmatmul.mubr.bf16.gmra.mrb[0].mxu0 %v1727
      %v1766 = vpop.f32.mrb[0].mxu0
      %v1767 = vadd.f32 0.0, %v1766
      %v1768 = vpop.f32.mrb[0].mxu0
      %v1769 = vpop.f32.mrb[0].mxu0
      %v1770 = vadd.f32 0.0, %v1769
      %v1771 = vpop.f32.mrb[0].mxu0
      %1772 = vdwg.mxu0
      %1773 = vrot.lane.b32.xlu0 %v1515, 112
      %v1774 = vpop.permute.xlu0 %1773
      %1775 = vrot.lane.b32.xlu0 %v1515, 80
      %v1776 = vpop.permute.xlu0 %1775
      %v1778 = vsel %vm1519, %v1774, 0
      %v1781 = vsel %vm1519, %v1776, 0
      %1783 = vmatprep.subr.bf16.mxu0 0
      %1784 = vmatpush1.bf16.xpose.msra.mxu0 %v1781
      %1785 = vmatprep.subr.bf16.mxu0 0
      %1786 = vmatpush1.bf16.xpose.msra.mxu0 0
      %1787 = vmatprep.subr.bf16.mxu0 0
      %1788 = vmatpush1.bf16.xpose.msra.mxu0 0
      %1789 = vmatprep.subr.bf16.mxu0 0
      %1790 = vmatpush1.bf16.xpose.msra.mxu0 0
      %1791 = vmatprep.subr.bf16.mxu0 0
      %1792 = vmatpush1.bf16.xpose.msra.mxu0 0
      %1793 = vmatprep.subr.bf16.mxu0 0
      %1794 = vmatpush1.bf16.xpose.msra.mxu0 0
      %1795 = vmatprep.subr.bf16.mxu0 0
      %1796 = vmatpush1.bf16.xpose.msra.mxu0 0
      %1797 = vmatprep.subr.bf16.mxu0 0
      %1798 = vmatpush1.bf16.xpose.msra.mxu0 0
      %1799 = vmatprep.subr.bf16.mxu0 0
      %1800 = vmatpush1.bf16.xpose.msra.mxu0 0
      %1801 = vmatprep.subr.bf16.mxu0 0
      %1802 = vmatpush1.bf16.xpose.msra.mxu0 0
      %1803 = vmatprep.subr.bf16.mxu0 0
      %1804 = vmatpush1.bf16.xpose.msra.mxu0 0
      %1805 = vmatprep.subr.bf16.mxu0 0
      %1806 = vmatpush1.bf16.xpose.msra.mxu0 0
      %1807 = vmatprep.subr.bf16.mxu0 0
      %1808 = vmatpush1.bf16.xpose.msra.mxu0 0
      %1809 = vmatprep.subr.bf16.mxu0 0
      %1810 = vmatpush1.bf16.xpose.msra.mxu0 0
      %1811 = vmatprep.subr.bf16.mxu0 0
      %1812 = vmatpush1.bf16.xpose.msra.mxu0 0
      %1813 = vmatprep.subr.bf16.mxu0 0
      %1814 = vmatpush1.bf16.xpose.msra.mxu0 0
      %1815 = vmatprep.mubr.bf16.mxu0 0
      %1816 = vmatmul.mubr.bf16.gmra.mrb[0].mxu0 %v1778
      %v1817 = vpop.f32.mrb[0].mxu0
      %v1818 = vadd.f32 0.0, %v1817
      %v1819 = vpop.f32.mrb[0].mxu0
      %v1820 = vpop.f32.mrb[0].mxu0
      %v1821 = vadd.f32 0.0, %v1820
      %v1822 = vpop.f32.mrb[0].mxu0
      %1823 = vdwg.mxu0
      %v1824 = vmul.f32 %v1818, 0.35355338
      %v1825 = vmul.f32 %v1821, 0.35355338
      %v1826 = vadd.f32 %v1824, %v1439
      %v1827 = vadd.f32 %v1825, %v1440
      %v1828 = vsel %vm1571, %v1826, -inf
      %1829 = vmax.xlane.f32.xlu0 %v1828
      %v1830 = vpop.xlane.xlu0 %1829
      %v1831 = vsel %vm1575, %v1827, -inf
      %1832 = vmax.xlane.f32.xlu0 %v1831
      %v1833 = vpop.xlane.xlu0 %1832
      %v1834 = vsub.f32 %v1826, %v1830
      %v1835 = vsub.f32 %v1827, %v1833
      %v1836 = vmul.f32 %v1834, 1.442695
      %v1837 = vpow.pop %v1836
      %v1838 = vmul.f32 %v1835, 1.442695
      %v1839 = vpow.pop %v1838
      %v1840 = vsel %vm1571, %v1837, 0.0
      %1841 = vadd.xlane.f32.xlu0 %v1840
      %v1842 = vpop.xlane.xlu0 %1841
      %v1843 = vsel %vm1575, %v1839, 0.0
      %1844 = vadd.xlane.f32.xlu0 %v1843
      %v1845 = vpop.xlane.xlu0 %1844
      %v1846 = vrcp.pop %v1842
      %v1847 = vrcp.pop %v1845
      %v1848 = vmul.f32 %v1837, %v1846
      %v1849 = vmul.f32 %v1839, %v1847
      %v1850 = vpack.c.bf16 %v1849, %v1848
      %1851 = vrot.lane.b32.xlu0 %v1515, 48
      %v1852 = vpop.permute.xlu0 %1851
      %v1854 = vsel %vm1571, %v1850, 0
      %v1857 = vsel %vm1601, %v1852, 0
      %1859 = vmatprep.subr.bf16.mxu0 0
      %1860 = vmatpush1.bf16.msra.mxu0 %v1857
      %1861 = vmatprep.subr.bf16.mxu0 0
      %1862 = vmatpush1.bf16.msra.mxu0 0
      %1863 = vmatprep.subr.bf16.mxu0 0
      %1864 = vmatpush1.bf16.msra.mxu0 0
      %1865 = vmatprep.subr.bf16.mxu0 0
      %1866 = vmatpush1.bf16.msra.mxu0 0
      %1867 = vmatprep.subr.bf16.mxu0 0
      %1868 = vmatpush1.bf16.msra.mxu0 0
      %1869 = vmatprep.subr.bf16.mxu0 0
      %1870 = vmatpush1.bf16.msra.mxu0 0
      %1871 = vmatprep.subr.bf16.mxu0 0
      %1872 = vmatpush1.bf16.msra.mxu0 0
      %1873 = vmatprep.subr.bf16.mxu0 0
      %1874 = vmatpush1.bf16.msra.mxu0 0
      %1875 = vmatprep.subr.bf16.mxu0 0
      %1876 = vmatpush1.bf16.msra.mxu0 0
      %1877 = vmatprep.subr.bf16.mxu0 0
      %1878 = vmatpush1.bf16.msra.mxu0 0
      %1879 = vmatprep.subr.bf16.mxu0 0
      %1880 = vmatpush1.bf16.msra.mxu0 0
      %1881 = vmatprep.subr.bf16.mxu0 0
      %1882 = vmatpush1.bf16.msra.mxu0 0
      %1883 = vmatprep.subr.bf16.mxu0 0
      %1884 = vmatpush1.bf16.msra.mxu0 0
      %1885 = vmatprep.subr.bf16.mxu0 0
      %1886 = vmatpush1.bf16.msra.mxu0 0
      %1887 = vmatprep.subr.bf16.mxu0 0
      %1888 = vmatpush1.bf16.msra.mxu0 0
      %1889 = vmatprep.subr.bf16.mxu0 0
      %1890 = vmatpush1.bf16.msra.mxu0 0
      %1891 = vmatprep.mubr.bf16.mxu0 0
      %1892 = vmatmul.mubr.bf16.gmra.mrb[0].mxu0 %v1854
      %v1893 = vpop.f32.mrb[0].mxu0
      %v1894 = vadd.f32 0.0, %v1893
      %v1895 = vpop.f32.mrb[0].mxu0
      %v1896 = vpop.f32.mrb[0].mxu0
      %v1897 = vadd.f32 0.0, %v1896
      %v1898 = vpop.f32.mrb[0].mxu0
      %1899 = vdwg.mxu0
      %1900 = vrot.lane.b32.xlu0 %v1515, 104
      %v1901 = vpop.permute.xlu0 %1900
      %1902 = vrot.lane.b32.xlu0 %v1515, 72
      %v1903 = vpop.permute.xlu0 %1902
      %v1905 = vsel %vm1519, %v1901, 0
      %v1908 = vsel %vm1519, %v1903, 0
      %1910 = vmatprep.subr.bf16.mxu0 0
      %1911 = vmatpush1.bf16.xpose.msra.mxu0 %v1908
      %1912 = vmatprep.subr.bf16.mxu0 0
      %1913 = vmatpush1.bf16.xpose.msra.mxu0 0
      %1914 = vmatprep.subr.bf16.mxu0 0
      %1915 = vmatpush1.bf16.xpose.msra.mxu0 0
      %1916 = vmatprep.subr.bf16.mxu0 0
      %1917 = vmatpush1.bf16.xpose.msra.mxu0 0
      %1918 = vmatprep.subr.bf16.mxu0 0
      %1919 = vmatpush1.bf16.xpose.msra.mxu0 0
      %1920 = vmatprep.subr.bf16.mxu0 0
      %1921 = vmatpush1.bf16.xpose.msra.mxu0 0
      %1922 = vmatprep.subr.bf16.mxu0 0
      %1923 = vmatpush1.bf16.xpose.msra.mxu0 0
      %1924 = vmatprep.subr.bf16.mxu0 0
      %1925 = vmatpush1.bf16.xpose.msra.mxu0 0
      %1926 = vmatprep.subr.bf16.mxu0 0
      %1927 = vmatpush1.bf16.xpose.msra.mxu0 0
      %1928 = vmatprep.subr.bf16.mxu0 0
      %1929 = vmatpush1.bf16.xpose.msra.mxu0 0
      %1930 = vmatprep.subr.bf16.mxu0 0
      %1931 = vmatpush1.bf16.xpose.msra.mxu0 0
      %1932 = vmatprep.subr.bf16.mxu0 0
      %1933 = vmatpush1.bf16.xpose.msra.mxu0 0
      %1934 = vmatprep.subr.bf16.mxu0 0
      %1935 = vmatpush1.bf16.xpose.msra.mxu0 0
      %1936 = vmatprep.subr.bf16.mxu0 0
      %1937 = vmatpush1.bf16.xpose.msra.mxu0 0
      %1938 = vmatprep.subr.bf16.mxu0 0
      %1939 = vmatpush1.bf16.xpose.msra.mxu0 0
      %1940 = vmatprep.subr.bf16.mxu0 0
      %1941 = vmatpush1.bf16.xpose.msra.mxu0 0
      %1942 = vmatprep.mubr.bf16.mxu0 0
      %1943 = vmatmul.mubr.bf16.gmra.mrb[0].mxu0 %v1905
      %v1944 = vpop.f32.mrb[0].mxu0
      %v1945 = vadd.f32 0.0, %v1944
      %v1946 = vpop.f32.mrb[0].mxu0
      %v1947 = vpop.f32.mrb[0].mxu0
      %v1948 = vadd.f32 0.0, %v1947
      %v1949 = vpop.f32.mrb[0].mxu0
      %1950 = vdwg.mxu0
      %v1951 = vmul.f32 %v1945, 0.35355338
      %v1952 = vmul.f32 %v1948, 0.35355338
      %v1953 = vadd.f32 %v1951, %v1439
      %v1954 = vadd.f32 %v1952, %v1440
      %v1955 = vsel %vm1571, %v1953, -inf
      %1956 = vmax.xlane.f32.xlu0 %v1955
      %v1957 = vpop.xlane.xlu0 %1956
      %v1958 = vsel %vm1575, %v1954, -inf
      %1959 = vmax.xlane.f32.xlu0 %v1958
      %v1960 = vpop.xlane.xlu0 %1959
      %v1961 = vsub.f32 %v1953, %v1957
      %v1962 = vsub.f32 %v1954, %v1960
      %v1963 = vmul.f32 %v1961, 1.442695
      %v1964 = vpow.pop %v1963
      %v1965 = vmul.f32 %v1962, 1.442695
      %v1966 = vpow.pop %v1965
      %v1967 = vsel %vm1571, %v1964, 0.0
      %1968 = vadd.xlane.f32.xlu0 %v1967
      %v1969 = vpop.xlane.xlu0 %1968
      %v1970 = vsel %vm1575, %v1966, 0.0
      %1971 = vadd.xlane.f32.xlu0 %v1970
      %v1972 = vpop.xlane.xlu0 %1971
      %v1973 = vrcp.pop %v1969
      %v1974 = vrcp.pop %v1972
      %v1975 = vmul.f32 %v1964, %v1973
      %v1976 = vmul.f32 %v1966, %v1974
      %v1977 = vpack.c.bf16 %v1976, %v1975
      %1978 = vrot.lane.b32.xlu0 %v1515, 40
      %v1979 = vpop.permute.xlu0 %1978
      %v1981 = vsel %vm1571, %v1977, 0
      %v1984 = vsel %vm1601, %v1979, 0
      %1986 = vmatprep.subr.bf16.mxu0 0
      %1987 = vmatpush1.bf16.msra.mxu0 %v1984
      %1988 = vmatprep.subr.bf16.mxu0 0
      %1989 = vmatpush1.bf16.msra.mxu0 0
      %1990 = vmatprep.subr.bf16.mxu0 0
      %1991 = vmatpush1.bf16.msra.mxu0 0
      %1992 = vmatprep.subr.bf16.mxu0 0
      %1993 = vmatpush1.bf16.msra.mxu0 0
      %1994 = vmatprep.subr.bf16.mxu0 0
      %1995 = vmatpush1.bf16.msra.mxu0 0
      %1996 = vmatprep.subr.bf16.mxu0 0
      %1997 = vmatpush1.bf16.msra.mxu0 0
      %1998 = vmatprep.subr.bf16.mxu0 0
      %1999 = vmatpush1.bf16.msra.mxu0 0
      %2000 = vmatprep.subr.bf16.mxu0 0
      %2001 = vmatpush1.bf16.msra.mxu0 0
      %2002 = vmatprep.subr.bf16.mxu0 0
      %2003 = vmatpush1.bf16.msra.mxu0 0
      %2004 = vmatprep.subr.bf16.mxu0 0
      %2005 = vmatpush1.bf16.msra.mxu0 0
      %2006 = vmatprep.subr.bf16.mxu0 0
      %2007 = vmatpush1.bf16.msra.mxu0 0
      %2008 = vmatprep.subr.bf16.mxu0 0
      %2009 = vmatpush1.bf16.msra.mxu0 0
      %2010 = vmatprep.subr.bf16.mxu0 0
      %2011 = vmatpush1.bf16.msra.mxu0 0
      %2012 = vmatprep.subr.bf16.mxu0 0
      %2013 = vmatpush1.bf16.msra.mxu0 0
      %2014 = vmatprep.subr.bf16.mxu0 0
      %2015 = vmatpush1.bf16.msra.mxu0 0
      %2016 = vmatprep.subr.bf16.mxu0 0
      %2017 = vmatpush1.bf16.msra.mxu0 0
      %2018 = vmatprep.mubr.bf16.mxu0 0
      %2019 = vmatmul.mubr.bf16.gmra.mrb[0].mxu0 %v1981
      %v2020 = vpop.f32.mrb[0].mxu0
      %v2021 = vadd.f32 0.0, %v2020
      %v2022 = vpop.f32.mrb[0].mxu0
      %v2023 = vpop.f32.mrb[0].mxu0
      %v2024 = vadd.f32 0.0, %v2023
      %v2025 = vpop.f32.mrb[0].mxu0
      %2026 = vdwg.mxu0
      %2029 = vrot.lane.b32.xlu0 %v1767, 8
      %v2030 = vpop.permute.xlu0 %2029
      %2031 = vrot.lane.b32.xlu0 %v1770, 8
      %v2032 = vpop.permute.xlu0 %2031
      %2037 = vrot.lane.b32.xlu0 %v1894, 16
      %v2038 = vpop.permute.xlu0 %2037
      %2039 = vrot.lane.b32.xlu0 %v1897, 16
      %v2040 = vpop.permute.xlu0 %2039
      %2045 = vrot.lane.b32.xlu0 %v2021, 24
      %v2046 = vpop.permute.xlu0 %2045
      %2047 = vrot.lane.b32.xlu0 %v2024, 24
      %v2048 = vpop.permute.xlu0 %2047
      %v2051 = vsel %vm1519, %v1640, %v2030
      %v2052 = vsel %vm1519, %v1643, %v2032
      %vm2053 = vcmask 130048
      %v2054 = vsel %vm2053, %v2051, %v2038
      %v2055 = vsel %vm2053, %v2052, %v2040
      %vm2056 = vcmask 195584
      %v2057 = vsel %vm2056, %v2054, %v2046
      %v2058 = vsel %vm2056, %v2055, %v2048
      %v2059 = vpack.c.bf16 %v2058, %v2057
      %v2061 = vlaneseq
      %v2062 = vshrl.u32 %v2061, 7
      %v2063 = vsub.s32 0, %v2062
      %v2064 = vrot.slane %v1514, %v2063
      %v2070 = vunpack.c.l.b16 %v1510
      %v2071 = vunpack.c.l.b16 %v1511
      %v2072 = vunpack.c.l.b16 %v1512
      %v2073 = vunpack.c.l.b16 %v1513
      %v2074 = vpack.c.b16 %v2071, %v2070
      %v2075 = vpack.c.b16 %v2073, %v2072
      %v2079 = vsel %vm1465, %v2059, 0
      %2081 = vmatprep.subr.bf16.mxu0 0
      %2082 = vmatpush1.bf16.msra.mxu0 %v2074
      %2083 = vmatprep.subr.bf16.mxu0 0
      %2084 = vmatpush1.bf16.msra.mxu0 %v2075
      %2085 = vmatprep.subr.bf16.mxu0 0
      %2086 = vmatpush1.bf16.msra.mxu0 0
      %2087 = vmatprep.subr.bf16.mxu0 0
      %2088 = vmatpush1.bf16.msra.mxu0 0
      %2089 = vmatprep.subr.bf16.mxu0 0
      %2090 = vmatpush1.bf16.msra.mxu0 0
      %2091 = vmatprep.subr.bf16.mxu0 0
      %2092 = vmatpush1.bf16.msra.mxu0 0
      %2093 = vmatprep.subr.bf16.mxu0 0
      %2094 = vmatpush1.bf16.msra.mxu0 0
      %2095 = vmatprep.subr.bf16.mxu0 0
      %2096 = vmatpush1.bf16.msra.mxu0 0
      %2097 = vmatprep.subr.bf16.mxu0 0
      %2098 = vmatpush1.bf16.msra.mxu0 0
      %2099 = vmatprep.subr.bf16.mxu0 0
      %2100 = vmatpush1.bf16.msra.mxu0 0
      %2101 = vmatprep.subr.bf16.mxu0 0
      %2102 = vmatpush1.bf16.msra.mxu0 0
      %2103 = vmatprep.subr.bf16.mxu0 0
      %2104 = vmatpush1.bf16.msra.mxu0 0
      %2105 = vmatprep.subr.bf16.mxu0 0
      %2106 = vmatpush1.bf16.msra.mxu0 0
      %2107 = vmatprep.subr.bf16.mxu0 0
      %2108 = vmatpush1.bf16.msra.mxu0 0
      %2109 = vmatprep.subr.bf16.mxu0 0
      %2110 = vmatpush1.bf16.msra.mxu0 0
      %2111 = vmatprep.subr.bf16.mxu0 0
      %2112 = vmatpush1.bf16.msra.mxu0 0
      %2113 = vmatprep.mubr.bf16.mxu0 0
      %2114 = vmatmul.mubr.bf16.gmra.mrb[0].mxu0 %v2079
      %v2115 = vpop.f32.mrb[0].mxu0
      %v2116 = vadd.f32 %v2064, %v2115
      %v2117 = vpop.f32.mrb[0].mxu0
      %v2118 = vpop.f32.mrb[0].mxu0
      %v2119 = vadd.f32 %v2064, %v2118
      %v2120 = vpop.f32.mrb[0].mxu0
      %2121 = vdwg.mxu0
      %v2122 = vadd.f32 %v1430, %v2116
      %v2123 = vadd.f32 %v1431, %v2119
      %v2124 = vld [vmem:[%s1244] sm:$0x1]
      %v2125 = vld [vmem:[%s1247] sm:$0x1]
      %v2126 = vsel %vm1465, %v2122, 0.0
      %2127 = vadd.xlane.f32.xlu0 %v2126
      %v2128 = vpop.xlane.xlu0 %2127
      %vm2129 = vcmask 257024
      %v2130 = vsel %vm2129, %v2123, 0.0
      %2131 = vadd.xlane.f32.xlu0 %v2130
      %v2132 = vpop.xlane.xlu0 %2131
      %v2133 = vrcp.pop 32.0
      %v2134 = vmul.f32 %v2128, %v2133
      %v2135 = vmul.f32 %v2132, %v2133
      %v2136 = vsub.f32 %v2122, %v2134
      %v2137 = vsub.f32 %v2123, %v2135
      %v2138 = vmul.f32 %v2136, %v2136
      %v2139 = vmul.f32 %v2137, %v2137
      %v2140 = vsel %vm1465, %v2138, 0.0
      %2141 = vadd.xlane.f32.xlu0 %v2140
      %v2142 = vpop.xlane.xlu0 %2141
      %v2143 = vsel %vm2129, %v2139, 0.0
      %2144 = vadd.xlane.f32.xlu0 %v2143
      %v2145 = vpop.xlane.xlu0 %2144
      %v2146 = vmul.f32 %v2142, %v2133
      %v2147 = vmul.f32 %v2145, %v2133
      %v2148 = vadd.f32 %v2146, 1e-05
      %v2149 = vadd.f32 %v2147, 1e-05
      %v2150 = vrsqrt.pop %v2148
      %v2151 = vrsqrt.pop %v2149
      %v2152 = vmul.f32 %v2136, %v2150
      %v2153 = vmul.f32 %v2137, %v2151
      %v2155 = vlaneseq
      %v2156 = vshrl.u32 %v2155, 7
      %v2157 = vsub.s32 0, %v2156
      %v2158 = vrot.slane %v2124, %v2157
      %v2160 = vmul.f32 %v2152, %v2158
      %v2161 = vmul.f32 %v2153, %v2158
      %v2163 = vlaneseq
      %v2164 = vshrl.u32 %v2163, 7
      %v2165 = vsub.s32 0, %v2164
      %v2166 = vrot.slane %v2125, %v2165
      %v2168 = vadd.f32 %v2160, %v2166
      %v2169 = vadd.f32 %v2161, %v2166
      %v2170 = vld [vmem:[%s1225] sm:$0xff]
      %v2171 = vld [vmem:[%s1225 + $0x8] sm:$0x1f]
      %v2172 = vld [vmem:[%s1252] sm:$0xf]
      %v2173 = vld [vmem:[%s1252 + $0x4] sm:$0xf]
      %v2174 = vld [vmem:[%s1252 + $0x8] sm:$0xf]
      %v2175 = vld [vmem:[%s1252 + $0xc] sm:$0xf]
      %v2176 = vpack.c.bf16 %v2169, %v2168
      %v2177 = vld [vmem:[%s1255] sm:$0x1]
      %v2179 = vlaneseq
      %v2180 = vshrl.u32 %v2179, 7
      %v2181 = vsub.s32 0, %v2180
      %v2182 = vrot.slane %v2177, %v2181
      %v2188 = vunpack.c.l.b16 %v2172
      %v2189 = vunpack.c.l.b16 %v2173
      %v2190 = vunpack.c.l.b16 %v2174
      %v2191 = vunpack.c.l.b16 %v2175
      %v2192 = vpack.c.b16 %v2189, %v2188
      %v2193 = vpack.c.b16 %v2191, %v2190
      %v2197 = vsel %vm1465, %v2176, 0
      %2199 = vmatprep.subr.bf16.mxu0 0
      %2200 = vmatpush1.bf16.msra.mxu0 %v2192
      %2201 = vmatprep.subr.bf16.mxu0 0
      %2202 = vmatpush1.bf16.msra.mxu0 %v2193
      %2203 = vmatprep.subr.bf16.mxu0 0
      %2204 = vmatpush1.bf16.msra.mxu0 0
      %2205 = vmatprep.subr.bf16.mxu0 0
      %2206 = vmatpush1.bf16.msra.mxu0 0
      %2207 = vmatprep.subr.bf16.mxu0 0
      %2208 = vmatpush1.bf16.msra.mxu0 0
      %2209 = vmatprep.subr.bf16.mxu0 0
      %2210 = vmatpush1.bf16.msra.mxu0 0
      %2211 = vmatprep.subr.bf16.mxu0 0
      %2212 = vmatpush1.bf16.msra.mxu0 0
      %2213 = vmatprep.subr.bf16.mxu0 0
      %2214 = vmatpush1.bf16.msra.mxu0 0
      %2215 = vmatprep.subr.bf16.mxu0 0
      %2216 = vmatpush1.bf16.msra.mxu0 0
      %2217 = vmatprep.subr.bf16.mxu0 0
      %2218 = vmatpush1.bf16.msra.mxu0 0
      %2219 = vmatprep.subr.bf16.mxu0 0
      %2220 = vmatpush1.bf16.msra.mxu0 0
      %2221 = vmatprep.subr.bf16.mxu0 0
      %2222 = vmatpush1.bf16.msra.mxu0 0
      %2223 = vmatprep.subr.bf16.mxu0 0
      %2224 = vmatpush1.bf16.msra.mxu0 0
      %2225 = vmatprep.subr.bf16.mxu0 0
      %2226 = vmatpush1.bf16.msra.mxu0 0
      %2227 = vmatprep.subr.bf16.mxu0 0
      %2228 = vmatpush1.bf16.msra.mxu0 0
      %2229 = vmatprep.subr.bf16.mxu0 0
      %2230 = vmatpush1.bf16.msra.mxu0 0
      %2231 = vmatprep.mubr.bf16.mxu0 0
      %2232 = vmatmul.mubr.bf16.gmra.mrb[0].mxu0 %v2197
      %v2233 = vpop.f32.mrb[0].mxu0
      %v2234 = vadd.f32 %v2182, %v2233
      %v2235 = vpop.f32.mrb[0].mxu0
      %v2236 = vpop.f32.mrb[0].mxu0
      %v2237 = vadd.f32 %v2182, %v2236
      %v2238 = vpop.f32.mrb[0].mxu0
      %2239 = vdwg.mxu0
      %v2240 = vld [vmem:[%s1260] sm:$0xf]
      %v2241 = vld [vmem:[%s1260 + $0x4] sm:$0xf]
      %v2242 = vld [vmem:[%s1260 + $0x8] sm:$0xf]
      %v2243 = vld [vmem:[%s1260 + $0xc] sm:$0xf]
      %v2244 = vpack.c.bf16 %v2171, %v2170
      %v2245 = vld [vmem:[%s1263] sm:$0x1]
      %v2247 = vlaneseq
      %v2248 = vshrl.u32 %v2247, 7
      %v2249 = vsub.s32 0, %v2248
      %v2250 = vrot.slane %v2245, %v2249
      %v2256 = vunpack.c.l.b16 %v2240
      %v2257 = vunpack.c.l.b16 %v2241
      %v2258 = vunpack.c.l.b16 %v2242
      %v2259 = vunpack.c.l.b16 %v2243
      %v2260 = vpack.c.b16 %v2257, %v2256
      %v2261 = vpack.c.b16 %v2259, %v2258
      %v2265 = vsel %vm1465, %v2244, 0
      %2267 = vmatprep.subr.bf16.mxu0 0
      %2268 = vmatpush1.bf16.msra.mxu0 %v2260
      %2269 = vmatprep.subr.bf16.mxu0 0
      %2270 = vmatpush1.bf16.msra.mxu0 %v2261
      %2271 = vmatprep.subr.bf16.mxu0 0
      %2272 = vmatpush1.bf16.msra.mxu0 0
      %2273 = vmatprep.subr.bf16.mxu0 0
      %2274 = vmatpush1.bf16.msra.mxu0 0
      %2275 = vmatprep.subr.bf16.mxu0 0
      %2276 = vmatpush1.bf16.msra.mxu0 0
      %2277 = vmatprep.subr.bf16.mxu0 0
      %2278 = vmatpush1.bf16.msra.mxu0 0
      %2279 = vmatprep.subr.bf16.mxu0 0
      %2280 = vmatpush1.bf16.msra.mxu0 0
      %2281 = vmatprep.subr.bf16.mxu0 0
      %2282 = vmatpush1.bf16.msra.mxu0 0
      %2283 = vmatprep.subr.bf16.mxu0 0
      %2284 = vmatpush1.bf16.msra.mxu0 0
      %2285 = vmatprep.subr.bf16.mxu0 0
      %2286 = vmatpush1.bf16.msra.mxu0 0
      %2287 = vmatprep.subr.bf16.mxu0 0
      %2288 = vmatpush1.bf16.msra.mxu0 0
      %2289 = vmatprep.subr.bf16.mxu0 0
      %2290 = vmatpush1.bf16.msra.mxu0 0
      %2291 = vmatprep.subr.bf16.mxu0 0
      %2292 = vmatpush1.bf16.msra.mxu0 0
      %2293 = vmatprep.subr.bf16.mxu0 0
      %2294 = vmatpush1.bf16.msra.mxu0 0
      %2295 = vmatprep.subr.bf16.mxu0 0
      %2296 = vmatpush1.bf16.msra.mxu0 0
      %2297 = vmatprep.subr.bf16.mxu0 0
      %2298 = vmatpush1.bf16.msra.mxu0 0
      %2299 = vmatprep.mubr.bf16.mxu0 0
      %2300 = vmatmul.mubr.bf16.gmra.mrb[0].mxu0 %v2265
      %v2301 = vpop.f32.mrb[0].mxu0
      %v2302 = vadd.f32 %v2250, %v2301
      %v2303 = vpop.f32.mrb[0].mxu0
      %v2304 = vpop.f32.mrb[0].mxu0
      %v2305 = vadd.f32 %v2250, %v2304
      %v2306 = vpop.f32.mrb[0].mxu0
      %2307 = vdwg.mxu0
      %v2308 = vld [vmem:[%s1268] sm:$0xf]
      %v2309 = vld [vmem:[%s1268 + $0x4] sm:$0xf]
      %v2310 = vld [vmem:[%s1268 + $0x8] sm:$0xf]
      %v2311 = vld [vmem:[%s1268 + $0xc] sm:$0xf]
      %v2312 = vld [vmem:[%s1271] sm:$0x1]
      %v2313 = vpack.c.bf16 %v2237, %v2234
      %v2314 = vpack.c.bf16 %v2305, %v2302
      %v2316 = vsel %vm1519, %v2313, 0
      %v2319 = vsel %vm1519, %v2314, 0
      %2321 = vmatprep.subr.bf16.mxu0 0
      %2322 = vmatpush1.bf16.xpose.msra.mxu0 %v2319
      %2323 = vmatprep.subr.bf16.mxu0 0
      %2324 = vmatpush1.bf16.xpose.msra.mxu0 0
      %2325 = vmatprep.subr.bf16.mxu0 0
      %2326 = vmatpush1.bf16.xpose.msra.mxu0 0
      %2327 = vmatprep.subr.bf16.mxu0 0
      %2328 = vmatpush1.bf16.xpose.msra.mxu0 0
      %2329 = vmatprep.subr.bf16.mxu0 0
      %2330 = vmatpush1.bf16.xpose.msra.mxu0 0
      %2331 = vmatprep.subr.bf16.mxu0 0
      %2332 = vmatpush1.bf16.xpose.msra.mxu0 0
      %2333 = vmatprep.subr.bf16.mxu0 0
      %2334 = vmatpush1.bf16.xpose.msra.mxu0 0
      %2335 = vmatprep.subr.bf16.mxu0 0
      %2336 = vmatpush1.bf16.xpose.msra.mxu0 0
      %2337 = vmatprep.subr.bf16.mxu0 0
      %2338 = vmatpush1.bf16.xpose.msra.mxu0 0
      %2339 = vmatprep.subr.bf16.mxu0 0
      %2340 = vmatpush1.bf16.xpose.msra.mxu0 0
      %2341 = vmatprep.subr.bf16.mxu0 0
      %2342 = vmatpush1.bf16.xpose.msra.mxu0 0
      %2343 = vmatprep.subr.bf16.mxu0 0
      %2344 = vmatpush1.bf16.xpose.msra.mxu0 0
      %2345 = vmatprep.subr.bf16.mxu0 0
      %2346 = vmatpush1.bf16.xpose.msra.mxu0 0
      %2347 = vmatprep.subr.bf16.mxu0 0
      %2348 = vmatpush1.bf16.xpose.msra.mxu0 0
      %2349 = vmatprep.subr.bf16.mxu0 0
      %2350 = vmatpush1.bf16.xpose.msra.mxu0 0
      %2351 = vmatprep.subr.bf16.mxu0 0
      %2352 = vmatpush1.bf16.xpose.msra.mxu0 0
      %2353 = vmatprep.mubr.bf16.mxu0 0
      %2354 = vmatmul.mubr.bf16.gmra.mrb[0].mxu0 %v2316
      %v2355 = vpop.f32.mrb[0].mxu0
      %v2356 = vadd.f32 0.0, %v2355
      %v2357 = vpop.f32.mrb[0].mxu0
      %v2358 = vpop.f32.mrb[0].mxu0
      %v2359 = vadd.f32 0.0, %v2358
      %v2360 = vpop.f32.mrb[0].mxu0
      %2361 = vdwg.mxu0
      %v2362 = vmul.f32 %v2356, 0.35355338
      %v2363 = vmul.f32 %v2359, 0.35355338
      %vm2364 = vcmask 105472
      %v2365 = vsel %vm2364, %v2362, -inf
      %2366 = vmax.xlane.f32.xlu0 %v2365
      %v2367 = vpop.xlane.xlu0 %2366
      %vm2368 = vcmask 101376
      %v2369 = vsel %vm2368, %v2363, -inf
      %2370 = vmax.xlane.f32.xlu0 %v2369
      %v2371 = vpop.xlane.xlu0 %2370
      %v2372 = vsub.f32 %v2362, %v2367
      %v2373 = vsub.f32 %v2363, %v2371
      %v2374 = vmul.f32 %v2372, 1.442695
      %v2375 = vpow.pop %v2374
      %v2376 = vmul.f32 %v2373, 1.442695
      %v2377 = vpow.pop %v2376
      %v2378 = vsel %vm2364, %v2375, 0.0
      %2379 = vadd.xlane.f32.xlu0 %v2378
      %v2380 = vpop.xlane.xlu0 %2379
      %v2381 = vsel %vm2368, %v2377, 0.0
      %2382 = vadd.xlane.f32.xlu0 %v2381
      %v2383 = vpop.xlane.xlu0 %2382
      %v2384 = vrcp.pop %v2380
      %v2385 = vrcp.pop %v2383
      %v2386 = vmul.f32 %v2375, %v2384
      %v2387 = vmul.f32 %v2377, %v2385
      %v2388 = vpack.c.bf16 %v2387, %v2386
      %2390 = vrot.lane.b32.xlu0 %v2314, 96
      %v2391 = vpop.permute.xlu0 %2390
      %v2393 = vsel %vm2364, %v2388, 0
      %vm2395 = vcmask 1046528
      %v2396 = vsel %vm1601, 4294967295, 65535
      %v2397 = vsel %vm2395, %v2396, 0
      %v2399 = vand.u32 %v2391, %v2397
      %2401 = vmatprep.subr.bf16.mxu0 0
      %2402 = vmatpush1.bf16.msra.mxu0 %v2399
      %2403 = vmatprep.subr.bf16.mxu0 0
      %2404 = vmatpush1.bf16.msra.mxu0 0
      %2405 = vmatprep.subr.bf16.mxu0 0
      %2406 = vmatpush1.bf16.msra.mxu0 0
      %2407 = vmatprep.subr.bf16.mxu0 0
      %2408 = vmatpush1.bf16.msra.mxu0 0
      %2409 = vmatprep.subr.bf16.mxu0 0
      %2410 = vmatpush1.bf16.msra.mxu0 0
      %2411 = vmatprep.subr.bf16.mxu0 0
      %2412 = vmatpush1.bf16.msra.mxu0 0
      %2413 = vmatprep.subr.bf16.mxu0 0
      %2414 = vmatpush1.bf16.msra.mxu0 0
      %2415 = vmatprep.subr.bf16.mxu0 0
      %2416 = vmatpush1.bf16.msra.mxu0 0
      %2417 = vmatprep.subr.bf16.mxu0 0
      %2418 = vmatpush1.bf16.msra.mxu0 0
      %2419 = vmatprep.subr.bf16.mxu0 0
      %2420 = vmatpush1.bf16.msra.mxu0 0
      %2421 = vmatprep.subr.bf16.mxu0 0
      %2422 = vmatpush1.bf16.msra.mxu0 0
      %2423 = vmatprep.subr.bf16.mxu0 0
      %2424 = vmatpush1.bf16.msra.mxu0 0
      %2425 = vmatprep.subr.bf16.mxu0 0
      %2426 = vmatpush1.bf16.msra.mxu0 0
      %2427 = vmatprep.subr.bf16.mxu0 0
      %2428 = vmatpush1.bf16.msra.mxu0 0
      %2429 = vmatprep.subr.bf16.mxu0 0
      %2430 = vmatpush1.bf16.msra.mxu0 0
      %2431 = vmatprep.subr.bf16.mxu0 0
      %2432 = vmatpush1.bf16.msra.mxu0 0
      %2433 = vmatprep.mubr.bf16.mxu0 0
      %2434 = vmatmul.mubr.bf16.gmra.mrb[0].mxu0 %v2393
      %v2435 = vpop.f32.mrb[0].mxu0
      %v2436 = vadd.f32 0.0, %v2435
      %v2437 = vpop.f32.mrb[0].mxu0
      %v2438 = vpop.f32.mrb[0].mxu0
      %v2439 = vadd.f32 0.0, %v2438
      %v2440 = vpop.f32.mrb[0].mxu0
      %2441 = vdwg.mxu0
      %2443 = vrot.lane.b32.xlu0 %v2313, 120
      %v2444 = vpop.permute.xlu0 %2443
      %2445 = vrot.lane.b32.xlu0 %v2314, 120
      %v2446 = vpop.permute.xlu0 %2445
      %v2448 = vsel %vm1519, %v2444, 0
      %v2451 = vsel %vm1519, %v2446, 0
      %2453 = vmatprep.subr.bf16.mxu0 0
      %2454 = vmatpush1.bf16.xpose.msra.mxu0 %v2451
      %2455 = vmatprep.subr.bf16.mxu0 0
      %2456 = vmatpush1.bf16.xpose.msra.mxu0 0
      %2457 = vmatprep.subr.bf16.mxu0 0
      %2458 = vmatpush1.bf16.xpose.msra.mxu0 0
      %2459 = vmatprep.subr.bf16.mxu0 0
      %2460 = vmatpush1.bf16.xpose.msra.mxu0 0
      %2461 = vmatprep.subr.bf16.mxu0 0
      %2462 = vmatpush1.bf16.xpose.msra.mxu0 0
      %2463 = vmatprep.subr.bf16.mxu0 0
      %2464 = vmatpush1.bf16.xpose.msra.mxu0 0
      %2465 = vmatprep.subr.bf16.mxu0 0
      %2466 = vmatpush1.bf16.xpose.msra.mxu0 0
      %2467 = vmatprep.subr.bf16.mxu0 0
      %2468 = vmatpush1.bf16.xpose.msra.mxu0 0
      %2469 = vmatprep.subr.bf16.mxu0 0
      %2470 = vmatpush1.bf16.xpose.msra.mxu0 0
      %2471 = vmatprep.subr.bf16.mxu0 0
      %2472 = vmatpush1.bf16.xpose.msra.mxu0 0
      %2473 = vmatprep.subr.bf16.mxu0 0
      %2474 = vmatpush1.bf16.xpose.msra.mxu0 0
      %2475 = vmatprep.subr.bf16.mxu0 0
      %2476 = vmatpush1.bf16.xpose.msra.mxu0 0
      %2477 = vmatprep.subr.bf16.mxu0 0
      %2478 = vmatpush1.bf16.xpose.msra.mxu0 0
      %2479 = vmatprep.subr.bf16.mxu0 0
      %2480 = vmatpush1.bf16.xpose.msra.mxu0 0
      %2481 = vmatprep.subr.bf16.mxu0 0
      %2482 = vmatpush1.bf16.xpose.msra.mxu0 0
      %2483 = vmatprep.subr.bf16.mxu0 0
      %2484 = vmatpush1.bf16.xpose.msra.mxu0 0
      %2485 = vmatprep.mubr.bf16.mxu0 0
      %2486 = vmatmul.mubr.bf16.gmra.mrb[0].mxu0 %v2448
      %v2487 = vpop.f32.mrb[0].mxu0
      %v2488 = vadd.f32 0.0, %v2487
      %v2489 = vpop.f32.mrb[0].mxu0
      %v2490 = vpop.f32.mrb[0].mxu0
      %v2491 = vadd.f32 0.0, %v2490
      %v2492 = vpop.f32.mrb[0].mxu0
      %2493 = vdwg.mxu0
      %v2494 = vmul.f32 %v2488, 0.35355338
      %v2495 = vmul.f32 %v2491, 0.35355338
      %v2496 = vsel %vm2364, %v2494, -inf
      %2497 = vmax.xlane.f32.xlu0 %v2496
      %v2498 = vpop.xlane.xlu0 %2497
      %v2499 = vsel %vm2368, %v2495, -inf
      %2500 = vmax.xlane.f32.xlu0 %v2499
      %v2501 = vpop.xlane.xlu0 %2500
      %v2502 = vsub.f32 %v2494, %v2498
      %v2503 = vsub.f32 %v2495, %v2501
      %v2504 = vmul.f32 %v2502, 1.442695
      %v2505 = vpow.pop %v2504
      %v2506 = vmul.f32 %v2503, 1.442695
      %v2507 = vpow.pop %v2506
      %v2508 = vsel %vm2364, %v2505, 0.0
      %2509 = vadd.xlane.f32.xlu0 %v2508
      %v2510 = vpop.xlane.xlu0 %2509
      %v2511 = vsel %vm2368, %v2507, 0.0
      %2512 = vadd.xlane.f32.xlu0 %v2511
      %v2513 = vpop.xlane.xlu0 %2512
      %v2514 = vrcp.pop %v2510
      %v2515 = vrcp.pop %v2513
      %v2516 = vmul.f32 %v2505, %v2514
      %v2517 = vmul.f32 %v2507, %v2515
      %v2518 = vpack.c.bf16 %v2517, %v2516
      %2519 = vrot.lane.b32.xlu0 %v2314, 88
      %v2520 = vpop.permute.xlu0 %2519
      %v2522 = vsel %vm2364, %v2518, 0
      %v2525 = vand.u32 %v2520, %v2397
      %2527 = vmatprep.subr.bf16.mxu0 0
      %2528 = vmatpush1.bf16.msra.mxu0 %v2525
      %2529 = vmatprep.subr.bf16.mxu0 0
      %2530 = vmatpush1.bf16.msra.mxu0 0
      %2531 = vmatprep.subr.bf16.mxu0 0
      %2532 = vmatpush1.bf16.msra.mxu0 0
      %2533 = vmatprep.subr.bf16.mxu0 0
      %2534 = vmatpush1.bf16.msra.mxu0 0
      %2535 = vmatprep.subr.bf16.mxu0 0
      %2536 = vmatpush1.bf16.msra.mxu0 0
      %2537 = vmatprep.subr.bf16.mxu0 0
      %2538 = vmatpush1.bf16.msra.mxu0 0
      %2539 = vmatprep.subr.bf16.mxu0 0
      %2540 = vmatpush1.bf16.msra.mxu0 0
      %2541 = vmatprep.subr.bf16.mxu0 0
      %2542 = vmatpush1.bf16.msra.mxu0 0
      %2543 = vmatprep.subr.bf16.mxu0 0
      %2544 = vmatpush1.bf16.msra.mxu0 0
      %2545 = vmatprep.subr.bf16.mxu0 0
      %2546 = vmatpush1.bf16.msra.mxu0 0
      %2547 = vmatprep.subr.bf16.mxu0 0
      %2548 = vmatpush1.bf16.msra.mxu0 0
      %2549 = vmatprep.subr.bf16.mxu0 0
      %2550 = vmatpush1.bf16.msra.mxu0 0
      %2551 = vmatprep.subr.bf16.mxu0 0
      %2552 = vmatpush1.bf16.msra.mxu0 0
      %2553 = vmatprep.subr.bf16.mxu0 0
      %2554 = vmatpush1.bf16.msra.mxu0 0
      %2555 = vmatprep.subr.bf16.mxu0 0
      %2556 = vmatpush1.bf16.msra.mxu0 0
      %2557 = vmatprep.subr.bf16.mxu0 0
      %2558 = vmatpush1.bf16.msra.mxu0 0
      %2559 = vmatprep.mubr.bf16.mxu0 0
      %2560 = vmatmul.mubr.bf16.gmra.mrb[0].mxu0 %v2522
      %v2561 = vpop.f32.mrb[0].mxu0
      %v2562 = vadd.f32 0.0, %v2561
      %v2563 = vpop.f32.mrb[0].mxu0
      %v2564 = vpop.f32.mrb[0].mxu0
      %v2565 = vadd.f32 0.0, %v2564
      %v2566 = vpop.f32.mrb[0].mxu0
      %2567 = vdwg.mxu0
      %2568 = vrot.lane.b32.xlu0 %v2313, 112
      %v2569 = vpop.permute.xlu0 %2568
      %2570 = vrot.lane.b32.xlu0 %v2314, 112
      %v2571 = vpop.permute.xlu0 %2570
      %v2573 = vsel %vm1519, %v2569, 0
      %v2576 = vsel %vm1519, %v2571, 0
      %2578 = vmatprep.subr.bf16.mxu0 0
      %2579 = vmatpush1.bf16.xpose.msra.mxu0 %v2576
      %2580 = vmatprep.subr.bf16.mxu0 0
      %2581 = vmatpush1.bf16.xpose.msra.mxu0 0
      %2582 = vmatprep.subr.bf16.mxu0 0
      %2583 = vmatpush1.bf16.xpose.msra.mxu0 0
      %2584 = vmatprep.subr.bf16.mxu0 0
      %2585 = vmatpush1.bf16.xpose.msra.mxu0 0
      %2586 = vmatprep.subr.bf16.mxu0 0
      %2587 = vmatpush1.bf16.xpose.msra.mxu0 0
      %2588 = vmatprep.subr.bf16.mxu0 0
      %2589 = vmatpush1.bf16.xpose.msra.mxu0 0
      %2590 = vmatprep.subr.bf16.mxu0 0
      %2591 = vmatpush1.bf16.xpose.msra.mxu0 0
      %2592 = vmatprep.subr.bf16.mxu0 0
      %2593 = vmatpush1.bf16.xpose.msra.mxu0 0
      %2594 = vmatprep.subr.bf16.mxu0 0
      %2595 = vmatpush1.bf16.xpose.msra.mxu0 0
      %2596 = vmatprep.subr.bf16.mxu0 0
      %2597 = vmatpush1.bf16.xpose.msra.mxu0 0
      %2598 = vmatprep.subr.bf16.mxu0 0
      %2599 = vmatpush1.bf16.xpose.msra.mxu0 0
      %2600 = vmatprep.subr.bf16.mxu0 0
      %2601 = vmatpush1.bf16.xpose.msra.mxu0 0
      %2602 = vmatprep.subr.bf16.mxu0 0
      %2603 = vmatpush1.bf16.xpose.msra.mxu0 0
      %2604 = vmatprep.subr.bf16.mxu0 0
      %2605 = vmatpush1.bf16.xpose.msra.mxu0 0
      %2606 = vmatprep.subr.bf16.mxu0 0
      %2607 = vmatpush1.bf16.xpose.msra.mxu0 0
      %2608 = vmatprep.subr.bf16.mxu0 0
      %2609 = vmatpush1.bf16.xpose.msra.mxu0 0
      %2610 = vmatprep.mubr.bf16.mxu0 0
      %2611 = vmatmul.mubr.bf16.gmra.mrb[0].mxu0 %v2573
      %v2612 = vpop.f32.mrb[0].mxu0
      %v2613 = vadd.f32 0.0, %v2612
      %v2614 = vpop.f32.mrb[0].mxu0
      %v2615 = vpop.f32.mrb[0].mxu0
      %v2616 = vadd.f32 0.0, %v2615
      %v2617 = vpop.f32.mrb[0].mxu0
      %2618 = vdwg.mxu0
      %v2619 = vmul.f32 %v2613, 0.35355338
      %v2620 = vmul.f32 %v2616, 0.35355338
      %v2621 = vsel %vm2364, %v2619, -inf
      %2622 = vmax.xlane.f32.xlu0 %v2621
      %v2623 = vpop.xlane.xlu0 %2622
      %v2624 = vsel %vm2368, %v2620, -inf
      %2625 = vmax.xlane.f32.xlu0 %v2624
      %v2626 = vpop.xlane.xlu0 %2625
      %v2627 = vsub.f32 %v2619, %v2623
      %v2628 = vsub.f32 %v2620, %v2626
      %v2629 = vmul.f32 %v2627, 1.442695
      %v2630 = vpow.pop %v2629
      %v2631 = vmul.f32 %v2628, 1.442695
      %v2632 = vpow.pop %v2631
      %v2633 = vsel %vm2364, %v2630, 0.0
      %2634 = vadd.xlane.f32.xlu0 %v2633
      %v2635 = vpop.xlane.xlu0 %2634
      %v2636 = vsel %vm2368, %v2632, 0.0
      %2637 = vadd.xlane.f32.xlu0 %v2636
      %v2638 = vpop.xlane.xlu0 %2637
      %v2639 = vrcp.pop %v2635
      %v2640 = vrcp.pop %v2638
      %v2641 = vmul.f32 %v2630, %v2639
      %v2642 = vmul.f32 %v2632, %v2640
      %v2643 = vpack.c.bf16 %v2642, %v2641
      %2644 = vrot.lane.b32.xlu0 %v2314, 80
      %v2645 = vpop.permute.xlu0 %2644
      %v2647 = vsel %vm2364, %v2643, 0
      %v2650 = vand.u32 %v2645, %v2397
      %2652 = vmatprep.subr.bf16.mxu0 0
      %2653 = vmatpush1.bf16.msra.mxu0 %v2650
      %2654 = vmatprep.subr.bf16.mxu0 0
      %2655 = vmatpush1.bf16.msra.mxu0 0
      %2656 = vmatprep.subr.bf16.mxu0 0
      %2657 = vmatpush1.bf16.msra.mxu0 0
      %2658 = vmatprep.subr.bf16.mxu0 0
      %2659 = vmatpush1.bf16.msra.mxu0 0
      %2660 = vmatprep.subr.bf16.mxu0 0
      %2661 = vmatpush1.bf16.msra.mxu0 0
      %2662 = vmatprep.subr.bf16.mxu0 0
      %2663 = vmatpush1.bf16.msra.mxu0 0
      %2664 = vmatprep.subr.bf16.mxu0 0
      %2665 = vmatpush1.bf16.msra.mxu0 0
      %2666 = vmatprep.subr.bf16.mxu0 0
      %2667 = vmatpush1.bf16.msra.mxu0 0
      %2668 = vmatprep.subr.bf16.mxu0 0
      %2669 = vmatpush1.bf16.msra.mxu0 0
      %2670 = vmatprep.subr.bf16.mxu0 0
      %2671 = vmatpush1.bf16.msra.mxu0 0
      %2672 = vmatprep.subr.bf16.mxu0 0
      %2673 = vmatpush1.bf16.msra.mxu0 0
      %2674 = vmatprep.subr.bf16.mxu0 0
      %2675 = vmatpush1.bf16.msra.mxu0 0
      %2676 = vmatprep.subr.bf16.mxu0 0
      %2677 = vmatpush1.bf16.msra.mxu0 0
      %2678 = vmatprep.subr.bf16.mxu0 0
      %2679 = vmatpush1.bf16.msra.mxu0 0
      %2680 = vmatprep.subr.bf16.mxu0 0
      %2681 = vmatpush1.bf16.msra.mxu0 0
      %2682 = vmatprep.subr.bf16.mxu0 0
      %2683 = vmatpush1.bf16.msra.mxu0 0
      %2684 = vmatprep.mubr.bf16.mxu0 0
      %2685 = vmatmul.mubr.bf16.gmra.mrb[0].mxu0 %v2647
      %v2686 = vpop.f32.mrb[0].mxu0
      %v2687 = vadd.f32 0.0, %v2686
      %v2688 = vpop.f32.mrb[0].mxu0
      %v2689 = vpop.f32.mrb[0].mxu0
      %v2690 = vadd.f32 0.0, %v2689
      %v2691 = vpop.f32.mrb[0].mxu0
      %2692 = vdwg.mxu0
      %2693 = vrot.lane.b32.xlu0 %v2313, 104
      %v2694 = vpop.permute.xlu0 %2693
      %2695 = vrot.lane.b32.xlu0 %v2314, 104
      %v2696 = vpop.permute.xlu0 %2695
      %v2698 = vsel %vm1519, %v2694, 0
      %v2701 = vsel %vm1519, %v2696, 0
      %2703 = vmatprep.subr.bf16.mxu0 0
      %2704 = vmatpush1.bf16.xpose.msra.mxu0 %v2701
      %2705 = vmatprep.subr.bf16.mxu0 0
      %2706 = vmatpush1.bf16.xpose.msra.mxu0 0
      %2707 = vmatprep.subr.bf16.mxu0 0
      %2708 = vmatpush1.bf16.xpose.msra.mxu0 0
      %2709 = vmatprep.subr.bf16.mxu0 0
      %2710 = vmatpush1.bf16.xpose.msra.mxu0 0
      %2711 = vmatprep.subr.bf16.mxu0 0
      %2712 = vmatpush1.bf16.xpose.msra.mxu0 0
      %2713 = vmatprep.subr.bf16.mxu0 0
      %2714 = vmatpush1.bf16.xpose.msra.mxu0 0
      %2715 = vmatprep.subr.bf16.mxu0 0
      %2716 = vmatpush1.bf16.xpose.msra.mxu0 0
      %2717 = vmatprep.subr.bf16.mxu0 0
      %2718 = vmatpush1.bf16.xpose.msra.mxu0 0
      %2719 = vmatprep.subr.bf16.mxu0 0
      %2720 = vmatpush1.bf16.xpose.msra.mxu0 0
      %2721 = vmatprep.subr.bf16.mxu0 0
      %2722 = vmatpush1.bf16.xpose.msra.mxu0 0
      %2723 = vmatprep.subr.bf16.mxu0 0
      %2724 = vmatpush1.bf16.xpose.msra.mxu0 0
      %2725 = vmatprep.subr.bf16.mxu0 0
      %2726 = vmatpush1.bf16.xpose.msra.mxu0 0
      %2727 = vmatprep.subr.bf16.mxu0 0
      %2728 = vmatpush1.bf16.xpose.msra.mxu0 0
      %2729 = vmatprep.subr.bf16.mxu0 0
      %2730 = vmatpush1.bf16.xpose.msra.mxu0 0
      %2731 = vmatprep.subr.bf16.mxu0 0
      %2732 = vmatpush1.bf16.xpose.msra.mxu0 0
      %2733 = vmatprep.subr.bf16.mxu0 0
      %2734 = vmatpush1.bf16.xpose.msra.mxu0 0
      %2735 = vmatprep.mubr.bf16.mxu0 0
      %2736 = vmatmul.mubr.bf16.gmra.mrb[0].mxu0 %v2698
      %v2737 = vpop.f32.mrb[0].mxu0
      %v2738 = vadd.f32 0.0, %v2737
      %v2739 = vpop.f32.mrb[0].mxu0
      %v2740 = vpop.f32.mrb[0].mxu0
      %v2741 = vadd.f32 0.0, %v2740
      %v2742 = vpop.f32.mrb[0].mxu0
      %2743 = vdwg.mxu0
      %v2744 = vmul.f32 %v2738, 0.35355338
      %v2745 = vmul.f32 %v2741, 0.35355338
      %v2746 = vsel %vm2364, %v2744, -inf
      %2747 = vmax.xlane.f32.xlu0 %v2746
      %v2748 = vpop.xlane.xlu0 %2747
      %v2749 = vsel %vm2368, %v2745, -inf
      %2750 = vmax.xlane.f32.xlu0 %v2749
      %v2751 = vpop.xlane.xlu0 %2750
      %v2752 = vsub.f32 %v2744, %v2748
      %v2753 = vsub.f32 %v2745, %v2751
      %v2754 = vmul.f32 %v2752, 1.442695
      %v2755 = vpow.pop %v2754
      %v2756 = vmul.f32 %v2753, 1.442695
      %v2757 = vpow.pop %v2756
      %v2758 = vsel %vm2364, %v2755, 0.0
      %2759 = vadd.xlane.f32.xlu0 %v2758
      %v2760 = vpop.xlane.xlu0 %2759
      %v2761 = vsel %vm2368, %v2757, 0.0
      %2762 = vadd.xlane.f32.xlu0 %v2761
      %v2763 = vpop.xlane.xlu0 %2762
      %v2764 = vrcp.pop %v2760
      %v2765 = vrcp.pop %v2763
      %v2766 = vmul.f32 %v2755, %v2764
      %v2767 = vmul.f32 %v2757, %v2765
      %v2768 = vpack.c.bf16 %v2767, %v2766
      %2769 = vrot.lane.b32.xlu0 %v2314, 72
      %v2770 = vpop.permute.xlu0 %2769
      %v2772 = vsel %vm2364, %v2768, 0
      %v2775 = vand.u32 %v2770, %v2397
      %2777 = vmatprep.subr.bf16.mxu0 0
      %2778 = vmatpush1.bf16.msra.mxu0 %v2775
      %2779 = vmatprep.subr.bf16.mxu0 0
      %2780 = vmatpush1.bf16.msra.mxu0 0
      %2781 = vmatprep.subr.bf16.mxu0 0
      %2782 = vmatpush1.bf16.msra.mxu0 0
      %2783 = vmatprep.subr.bf16.mxu0 0
      %2784 = vmatpush1.bf16.msra.mxu0 0
      %2785 = vmatprep.subr.bf16.mxu0 0
      %2786 = vmatpush1.bf16.msra.mxu0 0
      %2787 = vmatprep.subr.bf16.mxu0 0
      %2788 = vmatpush1.bf16.msra.mxu0 0
      %2789 = vmatprep.subr.bf16.mxu0 0
      %2790 = vmatpush1.bf16.msra.mxu0 0
      %2791 = vmatprep.subr.bf16.mxu0 0
      %2792 = vmatpush1.bf16.msra.mxu0 0
      %2793 = vmatprep.subr.bf16.mxu0 0
      %2794 = vmatpush1.bf16.msra.mxu0 0
      %2795 = vmatprep.subr.bf16.mxu0 0
      %2796 = vmatpush1.bf16.msra.mxu0 0
      %2797 = vmatprep.subr.bf16.mxu0 0
      %2798 = vmatpush1.bf16.msra.mxu0 0
      %2799 = vmatprep.subr.bf16.mxu0 0
      %2800 = vmatpush1.bf16.msra.mxu0 0
      %2801 = vmatprep.subr.bf16.mxu0 0
      %2802 = vmatpush1.bf16.msra.mxu0 0
      %2803 = vmatprep.subr.bf16.mxu0 0
      %2804 = vmatpush1.bf16.msra.mxu0 0
      %2805 = vmatprep.subr.bf16.mxu0 0
      %2806 = vmatpush1.bf16.msra.mxu0 0
      %2807 = vmatprep.subr.bf16.mxu0 0
      %2808 = vmatpush1.bf16.msra.mxu0 0
      %2809 = vmatprep.mubr.bf16.mxu0 0
      %2810 = vmatmul.mubr.bf16.gmra.mrb[0].mxu0 %v2772
      %v2811 = vpop.f32.mrb[0].mxu0
      %v2812 = vadd.f32 0.0, %v2811
      %v2813 = vpop.f32.mrb[0].mxu0
      %v2814 = vpop.f32.mrb[0].mxu0
      %v2815 = vadd.f32 0.0, %v2814
      %v2816 = vpop.f32.mrb[0].mxu0
      %2817 = vdwg.mxu0
      %2820 = vrot.lane.b32.xlu0 %v2562, 8
      %v2821 = vpop.permute.xlu0 %2820
      %2822 = vrot.lane.b32.xlu0 %v2565, 8
      %v2823 = vpop.permute.xlu0 %2822
      %2828 = vrot.lane.b32.xlu0 %v2687, 16
      %v2829 = vpop.permute.xlu0 %2828
      %2830 = vrot.lane.b32.xlu0 %v2690, 16
      %v2831 = vpop.permute.xlu0 %2830
      %2836 = vrot.lane.b32.xlu0 %v2812, 24
      %v2837 = vpop.permute.xlu0 %2836
      %2838 = vrot.lane.b32.xlu0 %v2815, 24
      %v2839 = vpop.permute.xlu0 %2838
      %v2842 = vsel %vm1519, %v2436, %v2821
      %v2843 = vsel %vm1519, %v2439, %v2823
      %v2844 = vsel %vm2053, %v2842, %v2829
      %v2845 = vsel %vm2053, %v2843, %v2831
      %v2846 = vsel %vm2056, %v2844, %v2837
      %v2847 = vsel %vm2056, %v2845, %v2839
      %v2848 = vpack.c.bf16 %v2847, %v2846
      %v2850 = vlaneseq
      %v2851 = vshrl.u32 %v2850, 7
      %v2852 = vsub.s32 0, %v2851
      %v2853 = vrot.slane %v2312, %v2852
      %v2859 = vunpack.c.l.b16 %v2308
      %v2860 = vunpack.c.l.b16 %v2309
      %v2861 = vunpack.c.l.b16 %v2310
      %v2862 = vunpack.c.l.b16 %v2311
      %v2863 = vpack.c.b16 %v2860, %v2859
      %v2864 = vpack.c.b16 %v2862, %v2861
      %v2868 = vsel %vm1465, %v2848, 0
      %2870 = vmatprep.subr.bf16.mxu0 0
      %2871 = vmatpush1.bf16.msra.mxu0 %v2863
      %2872 = vmatprep.subr.bf16.mxu0 0
      %2873 = vmatpush1.bf16.msra.mxu0 %v2864
      %2874 = vmatprep.subr.bf16.mxu0 0
      %2875 = vmatpush1.bf16.msra.mxu0 0
      %2876 = vmatprep.subr.bf16.mxu0 0
      %2877 = vmatpush1.bf16.msra.mxu0 0
      %2878 = vmatprep.subr.bf16.mxu0 0
      %2879 = vmatpush1.bf16.msra.mxu0 0
      %2880 = vmatprep.subr.bf16.mxu0 0
      %2881 = vmatpush1.bf16.msra.mxu0 0
      %2882 = vmatprep.subr.bf16.mxu0 0
      %2883 = vmatpush1.bf16.msra.mxu0 0
      %2884 = vmatprep.subr.bf16.mxu0 0
      %2885 = vmatpush1.bf16.msra.mxu0 0
      %2886 = vmatprep.subr.bf16.mxu0 0
      %2887 = vmatpush1.bf16.msra.mxu0 0
      %2888 = vmatprep.subr.bf16.mxu0 0
      %2889 = vmatpush1.bf16.msra.mxu0 0
      %2890 = vmatprep.subr.bf16.mxu0 0
      %2891 = vmatpush1.bf16.msra.mxu0 0
      %2892 = vmatprep.subr.bf16.mxu0 0
      %2893 = vmatpush1.bf16.msra.mxu0 0
      %2894 = vmatprep.subr.bf16.mxu0 0
      %2895 = vmatpush1.bf16.msra.mxu0 0
      %2896 = vmatprep.subr.bf16.mxu0 0
      %2897 = vmatpush1.bf16.msra.mxu0 0
      %2898 = vmatprep.subr.bf16.mxu0 0
      %2899 = vmatpush1.bf16.msra.mxu0 0
      %2900 = vmatprep.subr.bf16.mxu0 0
      %2901 = vmatpush1.bf16.msra.mxu0 0
      %2902 = vmatprep.mubr.bf16.mxu0 0
      %2903 = vmatmul.mubr.bf16.gmra.mrb[0].mxu0 %v2868
      %v2904 = vpop.f32.mrb[0].mxu0
      %v2905 = vadd.f32 %v2853, %v2904
      %v2906 = vpop.f32.mrb[0].mxu0
      %v2907 = vpop.f32.mrb[0].mxu0
      %v2908 = vadd.f32 %v2853, %v2907
      %v2909 = vpop.f32.mrb[0].mxu0
      %2910 = vdwg.mxu0
      %v2911 = vadd.f32 %v2168, %v2905
      %v2912 = vadd.f32 %v2169, %v2908
      %v2913 = vld [vmem:[%s1274] sm:$0x1]
      %v2914 = vld [vmem:[%s1277] sm:$0x1]
      %v2915 = vsel %vm1465, %v2911, 0.0
      %2916 = vadd.xlane.f32.xlu0 %v2915
      %v2917 = vpop.xlane.xlu0 %2916
      %v2918 = vsel %vm2129, %v2912, 0.0
      %2919 = vadd.xlane.f32.xlu0 %v2918
      %v2920 = vpop.xlane.xlu0 %2919
      %v2921 = vmul.f32 %v2917, %v2133
      %v2922 = vmul.f32 %v2920, %v2133
      %v2923 = vsub.f32 %v2911, %v2921
      %v2924 = vsub.f32 %v2912, %v2922
      %v2925 = vmul.f32 %v2923, %v2923
      %v2926 = vmul.f32 %v2924, %v2924
      %v2927 = vsel %vm1465, %v2925, 0.0
      %2928 = vadd.xlane.f32.xlu0 %v2927
      %v2929 = vpop.xlane.xlu0 %2928
      %v2930 = vsel %vm2129, %v2926, 0.0
      %2931 = vadd.xlane.f32.xlu0 %v2930
      %v2932 = vpop.xlane.xlu0 %2931
      %v2933 = vmul.f32 %v2929, %v2133
      %v2934 = vmul.f32 %v2932, %v2133
      %v2935 = vadd.f32 %v2933, 1e-05
      %v2936 = vadd.f32 %v2934, 1e-05
      %v2937 = vrsqrt.pop %v2935
      %v2938 = vrsqrt.pop %v2936
      %v2939 = vmul.f32 %v2923, %v2937
      %v2940 = vmul.f32 %v2924, %v2938
      %v2942 = vlaneseq
      %v2943 = vshrl.u32 %v2942, 7
      %v2944 = vsub.s32 0, %v2943
      %v2945 = vrot.slane %v2913, %v2944
      %v2947 = vmul.f32 %v2939, %v2945
      %v2948 = vmul.f32 %v2940, %v2945
      %v2950 = vlaneseq
      %v2951 = vshrl.u32 %v2950, 7
      %v2952 = vsub.s32 0, %v2951
      %v2953 = vrot.slane %v2914, %v2952
      %v2955 = vadd.f32 %v2947, %v2953
      %v2956 = vadd.f32 %v2948, %v2953
      %v2957 = vld [vmem:[%s1282] sm:$0xf]
      %v2958 = vld [vmem:[%s1282 + $0x4] sm:$0xf]
      %v2959 = vld [vmem:[%s1282 + $0x8] sm:$0xf]
      %v2960 = vld [vmem:[%s1282 + $0xc] sm:$0xf]
      %v2961 = vpack.c.bf16 %v2956, %v2955
      %v2962 = vld [vmem:[%s1285] sm:$0x1]
      %v2964 = vlaneseq
      %v2965 = vshrl.u32 %v2964, 7
      %v2966 = vsub.s32 0, %v2965
      %v2967 = vrot.slane %v2962, %v2966
      %v2973 = vunpack.c.l.b16 %v2957
      %v2974 = vunpack.c.l.b16 %v2958
      %v2975 = vunpack.c.l.b16 %v2959
      %v2976 = vunpack.c.l.b16 %v2960
      %v2977 = vpack.c.b16 %v2974, %v2973
      %v2978 = vpack.c.b16 %v2976, %v2975
      %v2982 = vsel %vm1465, %v2961, 0
      %2984 = vmatprep.subr.bf16.mxu0 0
      %2985 = vmatpush1.bf16.msra.mxu0 %v2977
      %2986 = vmatprep.subr.bf16.mxu0 0
      %2987 = vmatpush1.bf16.msra.mxu0 %v2978
      %2988 = vmatprep.subr.bf16.mxu0 0
      %2989 = vmatpush1.bf16.msra.mxu0 0
      %2990 = vmatprep.subr.bf16.mxu0 0
      %2991 = vmatpush1.bf16.msra.mxu0 0
      %2992 = vmatprep.subr.bf16.mxu0 0
      %2993 = vmatpush1.bf16.msra.mxu0 0
      %2994 = vmatprep.subr.bf16.mxu0 0
      %2995 = vmatpush1.bf16.msra.mxu0 0
      %2996 = vmatprep.subr.bf16.mxu0 0
      %2997 = vmatpush1.bf16.msra.mxu0 0
      %2998 = vmatprep.subr.bf16.mxu0 0
      %2999 = vmatpush1.bf16.msra.mxu0 0
      %3000 = vmatprep.subr.bf16.mxu0 0
      %3001 = vmatpush1.bf16.msra.mxu0 0
      %3002 = vmatprep.subr.bf16.mxu0 0
      %3003 = vmatpush1.bf16.msra.mxu0 0
      %3004 = vmatprep.subr.bf16.mxu0 0
      %3005 = vmatpush1.bf16.msra.mxu0 0
      %3006 = vmatprep.subr.bf16.mxu0 0
      %3007 = vmatpush1.bf16.msra.mxu0 0
      %3008 = vmatprep.subr.bf16.mxu0 0
      %3009 = vmatpush1.bf16.msra.mxu0 0
      %3010 = vmatprep.subr.bf16.mxu0 0
      %3011 = vmatpush1.bf16.msra.mxu0 0
      %3012 = vmatprep.subr.bf16.mxu0 0
      %3013 = vmatpush1.bf16.msra.mxu0 0
      %3014 = vmatprep.subr.bf16.mxu0 0
      %3015 = vmatpush1.bf16.msra.mxu0 0
      %3016 = vmatprep.mubr.bf16.mxu0 0
      %3017 = vmatmul.mubr.bf16.gmra.mrb[0].mxu0 %v2982
      %v3018 = vpop.f32.mrb[0].mxu0
      %v3019 = vadd.f32 %v2967, %v3018
      %v3020 = vpop.f32.mrb[0].mxu0
      %v3021 = vpop.f32.mrb[0].mxu0
      %v3022 = vadd.f32 %v2967, %v3021
      %v3023 = vpop.f32.mrb[0].mxu0
      %3024 = vdwg.mxu0
      %v3025 = vmax.f32 %v3019, 0.0
      %v3026 = vmax.f32 %v3022, 0.0
      %v3027 = vld [vmem:[%s1290] sm:$0xf]
      %v3028 = vld [vmem:[%s1290 + $0x4] sm:$0xf]
      %v3029 = vld [vmem:[%s1290 + $0x8] sm:$0xf]
      %v3030 = vld [vmem:[%s1290 + $0xc] sm:$0xf]
      %v3031 = vld [vmem:[%s1290 + $0x10] sm:$0xf]
      %v3032 = vld [vmem:[%s1290 + $0x14] sm:$0xf]
      %v3033 = vld [vmem:[%s1290 + $0x18] sm:$0xf]
      %v3034 = vld [vmem:[%s1290 + $0x1c] sm:$0xf]
      %v3035 = vpack.c.bf16 %v3026, %v3025
      %v3044 = vunpack.c.l.b16 %v3027
      %v3045 = vunpack.c.l.b16 %v3028
      %v3046 = vunpack.c.l.b16 %v3029
      %v3047 = vunpack.c.l.b16 %v3030
      %v3048 = vunpack.c.l.b16 %v3031
      %v3049 = vunpack.c.l.b16 %v3032
      %v3050 = vunpack.c.l.b16 %v3033
      %v3051 = vunpack.c.l.b16 %v3034
      %v3052 = vpack.c.b16 %v3045, %v3044
      %v3053 = vpack.c.b16 %v3047, %v3046
      %v3054 = vpack.c.b16 %v3049, %v3048
      %v3055 = vpack.c.b16 %v3051, %v3050
      %vm3060 = vcmask 523264
      %v3062 = vsel %vm3060, %v3035, 0
      %3064 = vmatprep.subr.bf16.mxu0 0
      %3065 = vmatpush1.bf16.msra.mxu0 %v3052
      %3066 = vmatprep.subr.bf16.mxu0 0
      %3067 = vmatpush1.bf16.msra.mxu0 %v3053
      %3068 = vmatprep.subr.bf16.mxu0 0
      %3069 = vmatpush1.bf16.msra.mxu0 %v3054
      %3070 = vmatprep.subr.bf16.mxu0 0
      %3071 = vmatpush1.bf16.msra.mxu0 %v3055
      %3072 = vmatprep.subr.bf16.mxu0 0
      %3073 = vmatpush1.bf16.msra.mxu0 0
      %3074 = vmatprep.subr.bf16.mxu0 0
      %3075 = vmatpush1.bf16.msra.mxu0 0
      %3076 = vmatprep.subr.bf16.mxu0 0
      %3077 = vmatpush1.bf16.msra.mxu0 0
      %3078 = vmatprep.subr.bf16.mxu0 0
      %3079 = vmatpush1.bf16.msra.mxu0 0
      %3080 = vmatprep.subr.bf16.mxu0 0
      %3081 = vmatpush1.bf16.msra.mxu0 0
      %3082 = vmatprep.subr.bf16.mxu0 0
      %3083 = vmatpush1.bf16.msra.mxu0 0
      %3084 = vmatprep.subr.bf16.mxu0 0
      %3085 = vmatpush1.bf16.msra.mxu0 0
      %3086 = vmatprep.subr.bf16.mxu0 0
      %3087 = vmatpush1.bf16.msra.mxu0 0
      %3088 = vmatprep.subr.bf16.mxu0 0
      %3089 = vmatpush1.bf16.msra.mxu0 0
      %3090 = vmatprep.subr.bf16.mxu0 0
      %3091 = vmatpush1.bf16.msra.mxu0 0
      %3092 = vmatprep.subr.bf16.mxu0 0
      %3093 = vmatpush1.bf16.msra.mxu0 0
      %3094 = vmatprep.subr.bf16.mxu0 0
      %3095 = vmatpush1.bf16.msra.mxu0 0
      %3096 = vmatprep.mubr.bf16.mxu0 0
      %3097 = vmatmul.mubr.bf16.gmra.mrb[0].mxu0 %v3062
      %v3098 = vpop.f32.mrb[0].mxu0
      %v3099 = vadd.f32 0.0, %v3098
      %v3100 = vpop.f32.mrb[0].mxu0
      %v3101 = vpop.f32.mrb[0].mxu0
      %v3102 = vadd.f32 0.0, %v3101
      %v3103 = vpop.f32.mrb[0].mxu0
      %3104 = vdwg.mxu0
      %v3105 = vadd.f32 %v2955, %v3099
      %v3106 = vadd.f32 %v2956, %v3102
      %v3107 = vld [vmem:[%s1293] sm:$0x1]
      %v3109 = vlaneseq
      %v3110 = vshrl.u32 %v3109, 7
      %v3111 = vsub.s32 0, %v3110
      %v3112 = vrot.slane %v3107, %v3111
      %v3114 = vadd.f32 %v3105, %v3112
      %v3115 = vadd.f32 %v3106, %v3112
      %v3116 = vld [vmem:[%s1296] sm:$0x1]
      %v3117 = vld [vmem:[%s1299] sm:$0x1]
      %v3118 = vsel %vm1465, %v3114, 0.0
      %3119 = vadd.xlane.f32.xlu0 %v3118
      %v3120 = vpop.xlane.xlu0 %3119
      %v3121 = vsel %vm2129, %v3115, 0.0
      %3122 = vadd.xlane.f32.xlu0 %v3121
      %v3123 = vpop.xlane.xlu0 %3122
      %v3124 = vmul.f32 %v3120, %v2133
      %v3125 = vmul.f32 %v3123, %v2133
      %v3126 = vsub.f32 %v3114, %v3124
      %v3127 = vsub.f32 %v3115, %v3125
      %v3128 = vmul.f32 %v3126, %v3126
      %v3129 = vmul.f32 %v3127, %v3127
      %v3130 = vsel %vm1465, %v3128, 0.0
      %3131 = vadd.xlane.f32.xlu0 %v3130
      %v3132 = vpop.xlane.xlu0 %3131
      %v3133 = vsel %vm2129, %v3129, 0.0
      %3134 = vadd.xlane.f32.xlu0 %v3133
      %v3135 = vpop.xlane.xlu0 %3134
      %v3136 = vmul.f32 %v3132, %v2133
      %v3137 = vmul.f32 %v3135, %v2133
      %v3138 = vadd.f32 %v3136, 1e-05
      %v3139 = vadd.f32 %v3137, 1e-05
      %v3140 = vrsqrt.pop %v3138
      %v3141 = vrsqrt.pop %v3139
      %v3142 = vmul.f32 %v3126, %v3140
      %v3143 = vmul.f32 %v3127, %v3141
      %v3145 = vlaneseq
      %v3146 = vshrl.u32 %v3145, 7
      %v3147 = vsub.s32 0, %v3146
      %v3148 = vrot.slane %v3116, %v3147
      %v3150 = vmul.f32 %v3142, %v3148
      %v3151 = vmul.f32 %v3143, %v3148
      %v3153 = vlaneseq
      %v3154 = vshrl.u32 %v3153, 7
      %v3155 = vsub.s32 0, %v3154
      %v3156 = vrot.slane %v3117, %v3155
      %v3158 = vadd.f32 %v3150, %v3156
      %v3159 = vadd.f32 %v3151, %v3156
      %3160 = vst.msk [vmem:[#allocation2] sm:$0xff] %vm1465, %v3158
      %3161 = vst.msk [vmem:[#allocation2 + $0x8] sm:$0xf] %vm2129, %v3159
      // Predicated region
      $region145: #{model_forward.5} parent=139 // pred_check
        %p3162 = pneg %p1306
      $region146: #{model_forward.5} parent=139 // pred_check_branch
        %3164 = sbr.rel (%p3162) target = $region148
      $region147: #{model_forward.5} parent=139 // pred_region
        %v3165 = vld [vmem:[%s53] sm:$0x1]
        %v3166 = vld [vmem:[%s55] sm:$0x1]
        %v3167 = vsel %vm1465, %v3158, 0.0
        %3168 = vadd.xlane.f32.xlu0 %v3167
        %v3169 = vpop.xlane.xlu0 %3168
        %v3170 = vsel %vm2129, %v3159, 0.0
        %3171 = vadd.xlane.f32.xlu0 %v3170
        %v3172 = vpop.xlane.xlu0 %3171
        %v3173 = vmul.f32 %v3169, %v2133
        %v3174 = vmul.f32 %v3172, %v2133
        %v3175 = vsub.f32 %v3158, %v3173
        %v3176 = vsub.f32 %v3159, %v3174
        %v3177 = vmul.f32 %v3175, %v3175
        %v3178 = vmul.f32 %v3176, %v3176
        %v3179 = vsel %vm1465, %v3177, 0.0
        %3180 = vadd.xlane.f32.xlu0 %v3179
        %v3181 = vpop.xlane.xlu0 %3180
        %v3182 = vsel %vm2129, %v3178, 0.0
        %3183 = vadd.xlane.f32.xlu0 %v3182
        %v3184 = vpop.xlane.xlu0 %3183
        %v3185 = vmul.f32 %v3181, %v2133
        %v3186 = vmul.f32 %v3184, %v2133
        %v3187 = vadd.f32 %v3185, 1e-05
        %v3188 = vadd.f32 %v3186, 1e-05
        %v3189 = vrsqrt.pop %v3187
        %v3190 = vrsqrt.pop %v3188
        %v3191 = vmul.f32 %v3175, %v3189
        %v3192 = vmul.f32 %v3176, %v3190
        %v3194 = vlaneseq
        %v3195 = vshrl.u32 %v3194, 7
        %v3196 = vsub.s32 0, %v3195
        %v3197 = vrot.slane %v3165, %v3196
        %v3199 = vmul.f32 %v3191, %v3197
        %v3200 = vmul.f32 %v3192, %v3197
        %v3202 = vlaneseq
        %v3203 = vshrl.u32 %v3202, 7
        %v3204 = vsub.s32 0, %v3203
        %v3205 = vrot.slane %v3166, %v3204
        %v3207 = vadd.f32 %v3199, %v3205
        %v3208 = vadd.f32 %v3200, %v3205
        %v3209 = vld [vmem:[%s57] sm:$0xf]
        %v3210 = vld [vmem:[%s57 + $0x4] sm:$0xf]
        %v3211 = vld [vmem:[%s57 + $0x8] sm:$0xf]
        %v3212 = vld [vmem:[%s57 + $0xc] sm:$0xf]
        %v3213 = vpack.c.bf16 %v3208, %v3207
        %v3214 = vld [vmem:[%s59] sm:$0x1]
        %v3216 = vlaneseq
        %v3217 = vshrl.u32 %v3216, 7
        %v3218 = vsub.s32 0, %v3217
        %v3219 = vrot.slane %v3214, %v3218
        %v3225 = vunpack.c.l.b16 %v3209
        %v3226 = vunpack.c.l.b16 %v3210
        %v3227 = vunpack.c.l.b16 %v3211
        %v3228 = vunpack.c.l.b16 %v3212
        %v3229 = vpack.c.b16 %v3226, %v3225
        %v3230 = vpack.c.b16 %v3228, %v3227
        %v3234 = vsel %vm1465, %v3213, 0
        %3236 = vmatprep.subr.bf16.mxu0 0
        %3237 = vmatpush1.bf16.msra.mxu0 %v3229
        %3238 = vmatprep.subr.bf16.mxu0 0
        %3239 = vmatpush1.bf16.msra.mxu0 %v3230
        %3240 = vmatprep.subr.bf16.mxu0 0
        %3241 = vmatpush1.bf16.msra.mxu0 0
        %3242 = vmatprep.subr.bf16.mxu0 0
        %3243 = vmatpush1.bf16.msra.mxu0 0
        %3244 = vmatprep.subr.bf16.mxu0 0
        %3245 = vmatpush1.bf16.msra.mxu0 0
        %3246 = vmatprep.subr.bf16.mxu0 0
        %3247 = vmatpush1.bf16.msra.mxu0 0
        %3248 = vmatprep.subr.bf16.mxu0 0
        %3249 = vmatpush1.bf16.msra.mxu0 0
        %3250 = vmatprep.subr.bf16.mxu0 0
        %3251 = vmatpush1.bf16.msra.mxu0 0
        %3252 = vmatprep.subr.bf16.mxu0 0
        %3253 = vmatpush1.bf16.msra.mxu0 0
        %3254 = vmatprep.subr.bf16.mxu0 0
        %3255 = vmatpush1.bf16.msra.mxu0 0
        %3256 = vmatprep.subr.bf16.mxu0 0
        %3257 = vmatpush1.bf16.msra.mxu0 0
        %3258 = vmatprep.subr.bf16.mxu0 0
        %3259 = vmatpush1.bf16.msra.mxu0 0
        %3260 = vmatprep.subr.bf16.mxu0 0
        %3261 = vmatpush1.bf16.msra.mxu0 0
        %3262 = vmatprep.subr.bf16.mxu0 0
        %3263 = vmatpush1.bf16.msra.mxu0 0
        %3264 = vmatprep.subr.bf16.mxu0 0
        %3265 = vmatpush1.bf16.msra.mxu0 0
        %3266 = vmatprep.subr.bf16.mxu0 0
        %3267 = vmatpush1.bf16.msra.mxu0 0
        %3268 = vmatprep.mubr.bf16.mxu0 0
        %3269 = vmatmul.mubr.bf16.gmra.mrb[0].mxu0 %v3234
        %v3270 = vpop.f32.mrb[0].mxu0
        %v3271 = vadd.f32 %v3219, %v3270
        %v3272 = vpop.f32.mrb[0].mxu0
        %v3273 = vpop.f32.mrb[0].mxu0
        %v3274 = vadd.f32 %v3219, %v3273
        %v3275 = vpop.f32.mrb[0].mxu0
        %3276 = vdwg.mxu0
        %vm3277 = vcmask 31744
        %3278 = vst.msk [vmem:[%s1304] sm:$0xff] %vm3277, %v3271
        %vm3279 = vcmask 27648
        %3280 = vst.msk [vmem:[%s1304 + $0x8] sm:$0xf] %vm3279, %v3274
      $region148: #{model_forward.5} parent=139 // pred_fallthru
        _
      %p3281 = scmp.lt.s32.totalorder %s76, 1
      %s3282 = scalar_select %p3281, %s76, 1
      %s3283 = smul.addr %s3282, 2
      %s3284 = smul.addr %s3283, 8
      %s3285 = scalar_lea.vmem %s61, %s3284
      // Predicated region
      $region149: #{model_forward.5} parent=139 // pred_check
        %p3286 = pneg %p847
      $region150: #{model_forward.5} parent=139 // pred_check_branch
        %3288 = sbr.rel (%p3286) target = $region152
      $region151: #{model_forward.5} parent=139 // pred_region
        _
      $region152: #{model_forward.5} parent=139 // pred_fallthru
        _
    $region140: #{model_forward.5} parent=5 // pred_fallthru
      _
    %p3289 = scmp.le.s32.totalorder 2, %s67
    // Predicated region
    $region153: #{model_forward.5} parent=5 // pred_check
      %p3290 = pneg %p3289
    $region154: #{model_forward.5} parent=5 // pred_check_branch
      %3292 = sbr.rel (%p3290) target = $region156
    $region155: #{model_forward.5} parent=5 // pred_region
      %s3293 = ssub.s32 %s67, 2
      // Predicated region
      $region157: #{model_forward.5} parent=155 // pred_check
        %p3294 = pneg %p853
      $region158: #{model_forward.5} parent=155 // pred_check_branch
        %3296 = sbr.rel (%p3294) target = $region160
      $region159: #{model_forward.5} parent=155 // pred_region
        %p3297 = scmp.lt.s32.totalorder %s78, 1
        %s3298 = scalar_select %p3297, %s78, 1
        %s3299 = smul.addr %s3298, 2
        %s3300 = smul.addr %s3299, 8
        %s3301 = scalar_lea.vmem %s61, %s3300
      $region160: #{model_forward.5} parent=155 // pred_fallthru
        _
    $region156: #{model_forward.5} parent=5 // pred_fallthru
      _
  $region6: #{model_forward.5} parent=0 // loop_footer
    %s71 = sadd.s32 1, %s67
  $region7: #{model_forward.5} parent=0 // loop_footer_branch
    %66 = sbr.rel target = $region3
  $region8: #{model_forward.5} parent=0 // loop_exit
    _

</llo_original>
